<compile_context>
chip_gen: v7x
topology: tpu7x:2x2x1
jax: 0.10.0
libtpu: 0.0.40
codegen_flags: <defaults>
</compile_context>

<pallas_src>
import functools

import jax
import jax.numpy as jnp
from jax.experimental import pallas as pl
from jax.experimental.pallas import tpu as pltpu

# ----------------------------- configuration --------------------------------
MAX_HASH_HOPS = 2            # args.max_hash_hops  -> num_layers
HIDDEN_CHANNELS = 32         # args.hidden_channels (out dim of last GCNConv)
CONV_HIDDEN = 64             # hard-coded hidden_channels=64 in _convolution_builder
NUM_PERM = 128               # args.minhash_num_perm
HLL_P = 7
HLL_M = 1 << HLL_P           # 128 HLL registers
NUM_NODES = 32
NUM_FEATURES = 16

_LN2 = 0.6931471805599453


def _vmem():
    return pl.BlockSpec(memory_space=pltpu.MemorySpace.VMEM)


# ------------------------------- kernel body ---------------------------------
def _hash_hop(n_src, sel_ref, mh_src_ref, hll_src_ref):
    """One hop of minhash_prop (scatter_min) + hll_prop (scatter_max).

    Fully unrolled static loop over sources; each iteration is one [N,1] mask
    load + two single-row loads from VMEM (vld slot) and a handful of
    min/max/select VALU ops on the running [N,128] accumulators.
    """
    n, p = mh_src_ref.shape
    m = hll_src_ref.shape[1]
    big = jnp.int32(jnp.iinfo(jnp.int32).max)
    mh_acc = jnp.full((n, p), big, jnp.int32)
    hll_acc = jnp.zeros((n, m), jnp.int32)
    for s in range(n_src):                       # static full unroll
        sel = sel_ref[s] > 0                     # [N, 1] bool: edge s -> dst (incl. self loop)
        mh_row = mh_src_ref[pl.ds(s, 1), :]      # [1, P]
        hll_row = hll_src_ref[pl.ds(s, 1), :]    # [1, M]
        mh_acc = jnp.where(sel, jnp.minimum(mh_acc, mh_row), mh_acc)
        hll_acc = jnp.where(sel, jnp.maximum(hll_acc, hll_row), hll_acc)
    return mh_acc, hll_acc


def _hll_card(hll_regs_i32):
    """HLL cardinality estimate from int32 registers (values already in vregs).

    TODO(synk): exact ElphHashes.hll_count bias-correction tables are not
    available in the reference; the canonical HLL estimator is used instead.
    """
    regs_f = hll_regs_i32.astype(jnp.float32)
    m_regs = hll_regs_i32.shape[-1]
    m_f = jnp.float32(m_regs)
    inv = jnp.exp(-regs_f * _LN2)                            # 2^{-reg}
    denom = jnp.sum(inv, axis=-1, keepdims=True)
    alpha = 0.7213 / (1.0 + 1.079 / m_regs)
    raw = (alpha * m_regs * m_regs) * pl.reciprocal(denom, approx=True)
    nz = jnp.sum((hll_regs_i32 == 0).astype(jnp.float32), axis=-1, keepdims=True)
    lc = m_f * jnp.log(m_f / jnp.maximum(nz, 1.0))
    return jnp.where((raw <= 2.5 * m_f) & (nz > 0.0), lc, raw)


def _elph_fused_kernel(num_hops, n_src, *refs):
    """Whole ELPH forward fused into one kernel.

    refs layout:
      inputs : sel[N,N,1] i32, mh0[N,P] i32, hll0[N,M] i32, adj[N,N] bf16,
               x[N,F] bf16, (w_k bf16, b_k f32) * num_hops
      outputs: (mh_k i32, hll_k i8) * num_hops, cards[N,num_hops] f32,
               x_out[N,out] f32
      scratch: hll int32 scratch [N,M]
    """
    n_in = 5 + 2 * num_hops
    n_out = 2 * num_hops + 2
    sel_ref, mh0_ref, hll0_ref, adj_ref, x_ref = refs[:5]
    wb_refs = refs[5:n_in]
    out_refs = refs[n_in:n_in + n_out]
    hll_scratch = refs[n_in + n_out]
    mh_hll_out = out_refs[:2 * num_hops]
    cards_ref = out_refs[2 * num_hops]
    x_out_ref = out_refs[2 * num_hops + 1]

    adj = adj_ref[...]                                       # bf16 [N, N]
    x = x_ref[...]                                           # bf16 [N, F]
    mh_src, hll_src = mh0_ref, hll0_ref
    card_cols = []

    for k in range(num_hops):                                # static (num_layers)
        w_ref, b_ref = wb_refs[2 * k], wb_refs[2 * k + 1]
        mh_out_ref, hll_out_ref = mh_hll_out[2 * k], mh_hll_out[2 * k + 1]

        # ---- hash propagation (scatter_min / scatter_max over in-edges) ----
        mh_new, hll_new = _hash_hop(n_src, sel_ref, mh_src, hll_src)
        mh_out_ref[...] = mh_new
        hll_out_ref[...] = hll_new.astype(jnp.int8)          # table stays int8
        card_cols.append(_hll_card(hll_new))

        # ---- GCNConv k: adj_norm @ (x @ W) + b  (encoder folded into k=0) ---
        # feature_dropout is identity in eval mode.
        h = jnp.dot(x.astype(jnp.bfloat16), w_ref[...],
                    preferred_element_type=jnp.float32)
        x = jnp.dot(adj, h.astype(jnp.bfloat16),
                    preferred_element_type=jnp.float32) + b_ref[...]
        if k < num_hops - 1:                                 # relu for k < num_layers
            x = jnp.maximum(x, 0.0)

        # next hop reads this hop's tables straight back from VMEM refs
        # (minhash from its int32 output, hll from an int32 scratch so the
        # int8 table is never read back).
        if k < num_hops - 1:
            hll_scratch[...] = hll_new
            mh_src, hll_src = mh_out_ref, hll_scratch

    cards_ref[...] = jnp.concatenate(card_cols, axis=1)      # [N, num_hops]
    x_out_ref[...] = x


# ------------------------------- kernel wrapper -------------------------------
def elph_fused(sel_mask, minhash0, hll0_i32, adj_bf16, x_bf16, conv_wb):
    n, p = minhash0.shape
    m = hll0_i32.shape[1]
    num_hops = len(conv_wb)
    n_out = conv_wb[-1][0].shape[1]

    out_shape = []
    for _ in range(num_hops):
        out_shape.append(jax.ShapeDtypeStruct((n, p), jnp.int32))   # minhash_k
        out_shape.append(jax.ShapeDtypeStruct((n, m), jnp.int8))    # hll_k (table)
    out_shape.append(jax.ShapeDtypeStruct((n, num_hops), jnp.float32))  # cards
    out_shape.append(jax.ShapeDtypeStruct((n, n_out), jnp.float32))     # x_out

    flat_wb = [a for wb in conv_wb for a in wb]
    n_inputs = 5 + len(flat_wb)

    return pl.pallas_call(
        functools.partial(_elph_fused_kernel, num_hops, n),
        out_shape=tuple(out_shape),
        in_specs=[_vmem() for _ in range(n_inputs)],
        out_specs=tuple(_vmem() for _ in range(len(out_shape))),
        scratch_shapes=[pltpu.VMEM((n, m), jnp.int32)],
        compiler_params=pltpu.CompilerParams(vmem_limit_bytes=32 * 1024 * 1024),
    )(sel_mask, minhash0, hll0_i32, adj_bf16, x_bf16, *flat_wb)


# ------------------------------ glue (plain JAX) ------------------------------
def build_graph(n):
    # deterministic undirected ring graph
    src = jnp.arange(n)
    dst = (src + 1) % n
    edge_index = jnp.stack(
        [jnp.concatenate([src, dst]), jnp.concatenate([dst, src])]
    )
    A = jnp.zeros((n, n), jnp.float32).at[edge_index[1], edge_index[0]].set(1.0)
    return edge_index, A  # A[dst, src]


def gcn_norm_dense(A):
    n = A.shape[0]
    A_hat = A + jnp.eye(n, dtype=A.dtype)
    deg = A_hat.sum(axis=1)
    dinv = jnp.where(deg > 0, 1.0 / jnp.sqrt(deg), 0.0)
    return dinv[:, None] * A_hat * dinv[None, :]


def init_linear(key, fin, fout):
    kw, kb = jax.random.split(key)
    lim = 1.0 / jnp.sqrt(jnp.float32(fin))
    W = jax.random.uniform(kw, (fin, fout), jnp.float32, -lim, lim)
    b = jax.random.uniform(kb, (fout,), jnp.float32, -lim, lim)
    return W, b


def init_params(key):
    k0, k1, k2 = jax.random.split(key, 3)
    return {
        # feature_prop='cat' => feature_encoder: Linear(num_features, 64)
        "feature_encoder": init_linear(k0, NUM_FEATURES, CONV_HIDDEN),
        # convs: [GCNConv(64, 64), GCNConv(64, hidden_channels)]
        "conv0": init_linear(k1, CONV_HIDDEN, CONV_HIDDEN),
        "conv1": init_linear(k2, CONV_HIDDEN, HIDDEN_CHANNELS),
    }


def init_minhash(key, n):
    # TODO(synk): reference ElphHashes uses 64-bit permutation hashes; TPU
    # kernels use int32 minhash signatures (scatter_min semantics preserved).
    return jax.random.randint(key, (n, NUM_PERM), 0, 2**31 - 1, dtype=jnp.int32)


def init_hll(key, n):
    # int32 registers (kept int32 through the hop loop; int8 only in the table)
    h = jax.random.randint(key, (n,), 0, 2**31 - 1, dtype=jnp.int32).astype(jnp.uint32)
    reg_idx = (h & (HLL_M - 1)).astype(jnp.int32)
    w = (h >> HLL_P).astype(jnp.uint32)
    bit_len = (32 - jax.lax.clz(w)).astype(jnp.int32)
    bit_len = jnp.where(w > 0, bit_len, 0)
    rank = (31 - HLL_P) - bit_len + 1
    onehot = jax.nn.one_hot(reg_idx, HLL_M, dtype=jnp.int32)
    return onehot * rank[:, None]                            # [n, HLL_M] int32


def elph_forward(x, A_dense, params, minhash0, hll0_i32):
    """Mirrors ELPH.forward: returns (x, node_hashings_table, cards)."""
    n = x.shape[0]
    # hash_edge_index = add_self_loops(edge_index)  ->  dense mask (A + I) > 0
    hash_mask = ((A_dense + jnp.eye(n, dtype=A_dense.dtype)) > 0).astype(jnp.int32)
    # [src, dst, 1] so the kernel loads the per-source selection vector with one vld
    sel_mask = jnp.transpose(hash_mask)[:, :, None]
    adj_norm = gcn_norm_dense(A_dense)                       # gcn_norm with self loops

    w_enc, b_enc = params["feature_encoder"]
    w0, b0 = params["conv0"]
    w1, b1 = params["conv1"]

    # feature_encoder folded into conv0 (exact, no nonlinearity in between):
    #   (x @ We + be) @ W0 = x @ (We W0) + be W0
    #   adj @ (... + be W0) = adj @ (x @ (We W0)) + rowsum(adj) * (be W0)
    w0_fused = w_enc @ w0                                     # [F, 64]
    b_inner = b_enc @ w0                                      # [64]
    b0_pernode = adj_norm.sum(axis=1, keepdims=True) * b_inner[None, :] + b0[None, :]

    conv_wb = [
        (w0_fused.astype(jnp.bfloat16), b0_pernode.astype(jnp.float32)),
        (w1.astype(jnp.bfloat16), b1.reshape(1, -1).astype(jnp.float32)),
    ]

    outs = elph_fused(sel_mask, minhash0, hll0_i32,
                      adj_norm.astype(jnp.bfloat16), x.astype(jnp.bfloat16),
                      conv_wb)

    num_hops = len(conv_wb)
    node_hashings_table = {0: {"minhash": minhash0,
                               "hll": hll0_i32.astype(jnp.int8)}}
    for k in range(num_hops):
        node_hashings_table[k + 1] = {"minhash": outs[2 * k],
                                      "hll": outs[2 * k + 1]}
    cards = outs[2 * num_hops]                                # [n, num_layers] f32
    x_out = outs[2 * num_hops + 1]                            # [n, hidden] f32
    return x_out, node_hashings_table, cards


# ---------------------------------- main --------------------------------------
if __name__ == "__main__":
    key = jax.random.PRNGKey(0)
    k_x, k_p, k_mh, k_hll = jax.random.split(key, 4)

    x = jax.random.normal(k_x, (NUM_NODES, NUM_FEATURES), jnp.float32)
    edge_index, A = build_graph(NUM_NODES)
    params = init_params(k_p)
    minhash0 = init_minhash(k_mh, NUM_NODES)
    hll0 = init_hll(k_hll, NUM_NODES)

    fwd = jax.jit(elph_forward)
    x_out, table, cards = fwd(x, A, params, minhash0, hll0)

    jax.block_until_ready(x_out)
    jax.block_until_ready(cards)
    for k in table:
        jax.block_until_ready(table[k]["minhash"])
        jax.block_until_ready(table[k]["hll"])

    assert x_out.shape == (NUM_NODES, HIDDEN_CHANNELS)
    assert x_out.dtype == jnp.float32
    assert cards.shape == (NUM_NODES, MAX_HASH_HOPS)
    assert table[MAX_HASH_HOPS]["minhash"].shape == (NUM_NODES, NUM_PERM)
    assert table[MAX_HASH_HOPS]["minhash"].dtype == jnp.int32
    assert table[MAX_HASH_HOPS]["hll"].shape == (NUM_NODES, HLL_M)
    assert table[MAX_HASH_HOPS]["hll"].dtype == jnp.int8
    assert bool(jnp.all(jnp.isfinite(x_out)))
    assert bool(jnp.all(jnp.isfinite(cards)))
    print("KERNEL_OK")
</pallas_src>

<mosaic_0001>
module attributes {stable_mosaic.version = 11 : i64} {
  func.func @_elph_fused_kernel(%arg0: memref<32x32x1xi32, #tpu.memory_space<vmem>>, %arg1: memref<32x128xi32, #tpu.memory_space<vmem>>, %arg2: memref<32x128xi32, #tpu.memory_space<vmem>>, %arg3: memref<32x32xbf16, #tpu.memory_space<vmem>>, %arg4: memref<32x16xbf16, #tpu.memory_space<vmem>>, %arg5: memref<16x64xbf16, #tpu.memory_space<vmem>>, %arg6: memref<32x64xf32, #tpu.memory_space<vmem>>, %arg7: memref<64x32xbf16, #tpu.memory_space<vmem>>, %arg8: memref<1x32xf32, #tpu.memory_space<vmem>>, %arg9: memref<32x128xi32, #tpu.memory_space<vmem>>, %arg10: memref<32x128xi8, #tpu.memory_space<vmem>>, %arg11: memref<32x128xi32, #tpu.memory_space<vmem>>, %arg12: memref<32x128xi8, #tpu.memory_space<vmem>>, %arg13: memref<32x2xf32, #tpu.memory_space<vmem>>, %arg14: memref<32x32xf32, #tpu.memory_space<vmem>>, %arg15: memref<32x128xi32, #tpu.memory_space<vmem>>) attributes {dimension_semantics = [], scalar_prefetch = 0 : i64, scratch_operands = 1 : i64, tpu.core_type = #tpu.core_type<tc>} {
    %c0 = arith.constant 0 : index
    %c0_0 = arith.constant 0 : index
    %0 = vector.load %arg3[%c0, %c0_0] : memref<32x32xbf16, #tpu.memory_space<vmem>>, vector<32x32xbf16>
    %c0_1 = arith.constant 0 : index
    %c0_2 = arith.constant 0 : index
    %1 = vector.load %arg4[%c0_1, %c0_2] : memref<32x16xbf16, #tpu.memory_space<vmem>>, vector<32x16xbf16>
    %c2147483647_i32 = arith.constant 2147483647 : i32
    %2 = vector.broadcast %c2147483647_i32 : i32 to vector<32x128xi32>
    %c0_i32 = arith.constant 0 : i32
    %3 = vector.broadcast %c0_i32 : i32 to vector<32x128xi32>
    %c0_3 = arith.constant 0 : index
    %c0_4 = arith.constant 0 : index
    %c0_5 = arith.constant 0 : index
    %4 = vector.load %arg0[%c0_3, %c0_4, %c0_5] : memref<32x32x1xi32, #tpu.memory_space<vmem>>, vector<1x32x1xi32>
    %5 = vector.shape_cast %4 : vector<1x32x1xi32> to vector<32x1xi32>
    %c0_i32_6 = arith.constant 0 : i32
    %6 = vector.broadcast %c0_i32_6 : i32 to vector<32x1xi32>
    %7 = arith.cmpi sgt, %5, %6 : vector<32x1xi32>
    %c0_7 = arith.constant 0 : index
    %c0_8 = arith.constant 0 : index
    %8 = vector.load %arg1[%c0_7, %c0_8] : memref<32x128xi32, #tpu.memory_space<vmem>>, vector<1x128xi32>
    %c0_9 = arith.constant 0 : index
    %c0_10 = arith.constant 0 : index
    %9 = vector.load %arg2[%c0_9, %c0_10] : memref<32x128xi32, #tpu.memory_space<vmem>>, vector<1x128xi32>
    %10 = vector.broadcast %8 : vector<1x128xi32> to vector<32x128xi32>
    %11 = arith.minsi %2, %10 : vector<32x128xi32>
    %12 = vector.shape_cast %7 : vector<32x1xi1> to vector<32x1xi1>
    %13 = vector.broadcast %12 : vector<32x1xi1> to vector<32x128xi1>
    %14 = arith.select %13, %11, %2 : vector<32x128xi1>, vector<32x128xi32>
    %15 = vector.broadcast %9 : vector<1x128xi32> to vector<32x128xi32>
    %16 = arith.maxsi %3, %15 : vector<32x128xi32>
    %17 = vector.shape_cast %7 : vector<32x1xi1> to vector<32x1xi1>
    %18 = vector.broadcast %17 : vector<32x1xi1> to vector<32x128xi1>
    %19 = arith.select %18, %16, %3 : vector<32x128xi1>, vector<32x128xi32>
    %c1 = arith.constant 1 : index
    %c0_11 = arith.constant 0 : index
    %c0_12 = arith.constant 0 : index
    %20 = vector.load %arg0[%c1, %c0_11, %c0_12] : memref<32x32x1xi32, #tpu.memory_space<vmem>>, vector<1x32x1xi32>
    %21 = vector.shape_cast %20 : vector<1x32x1xi32> to vector<32x1xi32>
    %c0_i32_13 = arith.constant 0 : i32
    %22 = vector.broadcast %c0_i32_13 : i32 to vector<32x1xi32>
    %23 = arith.cmpi sgt, %21, %22 : vector<32x1xi32>
    %c1_14 = arith.constant 1 : index
    %c0_15 = arith.constant 0 : index
    %24 = vector.load %arg1[%c1_14, %c0_15] : memref<32x128xi32, #tpu.memory_space<vmem>>, vector<1x128xi32>
    %c1_16 = arith.constant 1 : index
    %c0_17 = arith.constant 0 : index
    %25 = vector.load %arg2[%c1_16, %c0_17] : memref<32x128xi32, #tpu.memory_space<vmem>>, vector<1x128xi32>
    %26 = vector.broadcast %24 : vector<1x128xi32> to vector<32x128xi32>
    %27 = arith.minsi %14, %26 : vector<32x128xi32>
    %28 = vector.shape_cast %23 : vector<32x1xi1> to vector<32x1xi1>
    %29 = vector.broadcast %28 : vector<32x1xi1> to vector<32x128xi1>
    %30 = arith.select %29, %27, %14 : vector<32x128xi1>, vector<32x128xi32>
    %31 = vector.broadcast %25 : vector<1x128xi32> to vector<32x128xi32>
    %32 = arith.maxsi %19, %31 : vector<32x128xi32>
    %33 = vector.shape_cast %23 : vector<32x1xi1> to vector<32x1xi1>
    %34 = vector.broadcast %33 : vector<32x1xi1> to vector<32x128xi1>
    %35 = arith.select %34, %32, %19 : vector<32x128xi1>, vector<32x128xi32>
    %c2 = arith.constant 2 : index
    %c0_18 = arith.constant 0 : index
    %c0_19 = arith.constant 0 : index
    %36 = vector.load %arg0[%c2, %c0_18, %c0_19] : memref<32x32x1xi32, #tpu.memory_space<vmem>>, vector<1x32x1xi32>
    %37 = vector.shape_cast %36 : vector<1x32x1xi32> to vector<32x1xi32>
    %c0_i32_20 = arith.constant 0 : i32
    %38 = vector.broadcast %c0_i32_20 : i32 to vector<32x1xi32>
    %39 = arith.cmpi sgt, %37, %38 : vector<32x1xi32>
    %c2_21 = arith.constant 2 : index
    %c0_22 = arith.constant 0 : index
    %40 = vector.load %arg1[%c2_21, %c0_22] : memref<32x128xi32, #tpu.memory_space<vmem>>, vector<1x128xi32>
    %c2_23 = arith.constant 2 : index
    %c0_24 = arith.constant 0 : index
    %41 = vector.load %arg2[%c2_23, %c0_24] : memref<32x128xi32, #tpu.memory_space<vmem>>, vector<1x128xi32>
    %42 = vector.broadcast %40 : vector<1x128xi32> to vector<32x128xi32>
    %43 = arith.minsi %30, %42 : vector<32x128xi32>
    %44 = vector.shape_cast %39 : vector<32x1xi1> to vector<32x1xi1>
    %45 = vector.broadcast %44 : vector<32x1xi1> to vector<32x128xi1>
    %46 = arith.select %45, %43, %30 : vector<32x128xi1>, vector<32x128xi32>
    %47 = vector.broadcast %41 : vector<1x128xi32> to vector<32x128xi32>
    %48 = arith.maxsi %35, %47 : vector<32x128xi32>
    %49 = vector.shape_cast %39 : vector<32x1xi1> to vector<32x1xi1>
    %50 = vector.broadcast %49 : vector<32x1xi1> to vector<32x128xi1>
    %51 = arith.select %50, %48, %35 : vector<32x128xi1>, vector<32x128xi32>
    %c3 = arith.constant 3 : index
    %c0_25 = arith.constant 0 : index
    %c0_26 = arith.constant 0 : index
    %52 = vector.load %arg0[%c3, %c0_25, %c0_26] : memref<32x32x1xi32, #tpu.memory_space<vmem>>, vector<1x32x1xi32>
    %53 = vector.shape_cast %52 : vector<1x32x1xi32> to vector<32x1xi32>
    %c0_i32_27 = arith.constant 0 : i32
    %54 = vector.broadcast %c0_i32_27 : i32 to vector<32x1xi32>
    %55 = arith.cmpi sgt, %53, %54 : vector<32x1xi32>
    %c3_28 = arith.constant 3 : index
    %c0_29 = arith.constant 0 : index
    %56 = vector.load %arg1[%c3_28, %c0_29] : memref<32x128xi32, #tpu.memory_space<vmem>>, vector<1x128xi32>
    %c3_30 = arith.constant 3 : index
    %c0_31 = arith.constant 0 : index
    %57 = vector.load %arg2[%c3_30, %c0_31] : memref<32x128xi32, #tpu.memory_space<vmem>>, vector<1x128xi32>
    %58 = vector.broadcast %56 : vector<1x128xi32> to vector<32x128xi32>
    %59 = arith.minsi %46, %58 : vector<32x128xi32>
    %60 = vector.shape_cast %55 : vector<32x1xi1> to vector<32x1xi1>
    %61 = vector.broadcast %60 : vector<32x1xi1> to vector<32x128xi1>
    %62 = arith.select %61, %59, %46 : vector<32x128xi1>, vector<32x128xi32>
    %63 = vector.broadcast %57 : vector<1x128xi32> to vector<32x128xi32>
    %64 = arith.maxsi %51, %63 : vector<32x128xi32>
    %65 = vector.shape_cast %55 : vector<32x1xi1> to vector<32x1xi1>
    %66 = vector.broadcast %65 : vector<32x1xi1> to vector<32x128xi1>
    %67 = arith.select %66, %64, %51 : vector<32x128xi1>, vector<32x128xi32>
    %c4 = arith.constant 4 : index
    %c0_32 = arith.constant 0 : index
    %c0_33 = arith.constant 0 : index
    %68 = vector.load %arg0[%c4, %c0_32, %c0_33] : memref<32x32x1xi32, #tpu.memory_space<vmem>>, vector<1x32x1xi32>
    %69 = vector.shape_cast %68 : vector<1x32x1xi32> to vector<32x1xi32>
    %c0_i32_34 = arith.constant 0 : i32
    %70 = vector.broadcast %c0_i32_34 : i32 to vector<32x1xi32>
    %71 = arith.cmpi sgt, %69, %70 : vector<32x1xi32>
    %c4_35 = arith.constant 4 : index
    %c0_36 = arith.constant 0 : index
    %72 = vector.load %arg1[%c4_35, %c0_36] : memref<32x128xi32, #tpu.memory_space<vmem>>, vector<1x128xi32>
    %c4_37 = arith.constant 4 : index
    %c0_38 = arith.constant 0 : index
    %73 = vector.load %arg2[%c4_37, %c0_38] : memref<32x128xi32, #tpu.memory_space<vmem>>, vector<1x128xi32>
    %74 = vector.broadcast %72 : vector<1x128xi32> to vector<32x128xi32>
    %75 = arith.minsi %62, %74 : vector<32x128xi32>
    %76 = vector.shape_cast %71 : vector<32x1xi1> to vector<32x1xi1>
    %77 = vector.broadcast %76 : vector<32x1xi1> to vector<32x128xi1>
    %78 = arith.select %77, %75, %62 : vector<32x128xi1>, vector<32x128xi32>
    %79 = vector.broadcast %73 : vector<1x128xi32> to vector<32x128xi32>
    %80 = arith.maxsi %67, %79 : vector<32x128xi32>
    %81 = vector.shape_cast %71 : vector<32x1xi1> to vector<32x1xi1>
    %82 = vector.broadcast %81 : vector<32x1xi1> to vector<32x128xi1>
    %83 = arith.select %82, %80, %67 : vector<32x128xi1>, vector<32x128xi32>
    %c5 = arith.constant 5 : index
    %c0_39 = arith.constant 0 : index
    %c0_40 = arith.constant 0 : index
    %84 = vector.load %arg0[%c5, %c0_39, %c0_40] : memref<32x32x1xi32, #tpu.memory_space<vmem>>, vector<1x32x1xi32>
    %85 = vector.shape_cast %84 : vector<1x32x1xi32> to vector<32x1xi32>
    %c0_i32_41 = arith.constant 0 : i32
    %86 = vector.broadcast %c0_i32_41 : i32 to vector<32x1xi32>
    %87 = arith.cmpi sgt, %85, %86 : vector<32x1xi32>
    %c5_42 = arith.constant 5 : index
    %c0_43 = arith.constant 0 : index
    %88 = vector.load %arg1[%c5_42, %c0_43] : memref<32x128xi32, #tpu.memory_space<vmem>>, vector<1x128xi32>
    %c5_44 = arith.constant 5 : index
    %c0_45 = arith.constant 0 : index
    %89 = vector.load %arg2[%c5_44, %c0_45] : memref<32x128xi32, #tpu.memory_space<vmem>>, vector<1x128xi32>
    %90 = vector.broadcast %88 : vector<1x128xi32> to vector<32x128xi32>
    %91 = arith.minsi %78, %90 : vector<32x128xi32>
    %92 = vector.shape_cast %87 : vector<32x1xi1> to vector<32x1xi1>
    %93 = vector.broadcast %92 : vector<32x1xi1> to vector<32x128xi1>
    %94 = arith.select %93, %91, %78 : vector<32x128xi1>, vector<32x128xi32>
    %95 = vector.broadcast %89 : vector<1x128xi32> to vector<32x128xi32>
    %96 = arith.maxsi %83, %95 : vector<32x128xi32>
    %97 = vector.shape_cast %87 : vector<32x1xi1> to vector<32x1xi1>
    %98 = vector.broadcast %97 : vector<32x1xi1> to vector<32x128xi1>
    %99 = arith.select %98, %96, %83 : vector<32x128xi1>, vector<32x128xi32>
    %c6 = arith.constant 6 : index
    %c0_46 = arith.constant 0 : index
    %c0_47 = arith.constant 0 : index
    %100 = vector.load %arg0[%c6, %c0_46, %c0_47] : memref<32x32x1xi32, #tpu.memory_space<vmem>>, vector<1x32x1xi32>
    %101 = vector.shape_cast %100 : vector<1x32x1xi32> to vector<32x1xi32>
    %c0_i32_48 = arith.constant 0 : i32
    %102 = vector.broadcast %c0_i32_48 : i32 to vector<32x1xi32>
    %103 = arith.cmpi sgt, %101, %102 : vector<32x1xi32>
    %c6_49 = arith.constant 6 : index
    %c0_50 = arith.constant 0 : index
    %104 = vector.load %arg1[%c6_49, %c0_50] : memref<32x128xi32, #tpu.memory_space<vmem>>, vector<1x128xi32>
    %c6_51 = arith.constant 6 : index
    %c0_52 = arith.constant 0 : index
    %105 = vector.load %arg2[%c6_51, %c0_52] : memref<32x128xi32, #tpu.memory_space<vmem>>, vector<1x128xi32>
    %106 = vector.broadcast %104 : vector<1x128xi32> to vector<32x128xi32>
    %107 = arith.minsi %94, %106 : vector<32x128xi32>
    %108 = vector.shape_cast %103 : vector<32x1xi1> to vector<32x1xi1>
    %109 = vector.broadcast %108 : vector<32x1xi1> to vector<32x128xi1>
    %110 = arith.select %109, %107, %94 : vector<32x128xi1>, vector<32x128xi32>
    %111 = vector.broadcast %105 : vector<1x128xi32> to vector<32x128xi32>
    %112 = arith.maxsi %99, %111 : vector<32x128xi32>
    %113 = vector.shape_cast %103 : vector<32x1xi1> to vector<32x1xi1>
    %114 = vector.broadcast %113 : vector<32x1xi1> to vector<32x128xi1>
    %115 = arith.select %114, %112, %99 : vector<32x128xi1>, vector<32x128xi32>
    %c7 = arith.constant 7 : index
    %c0_53 = arith.constant 0 : index
    %c0_54 = arith.constant 0 : index
    %116 = vector.load %arg0[%c7, %c0_53, %c0_54] : memref<32x32x1xi32, #tpu.memory_space<vmem>>, vector<1x32x1xi32>
    %117 = vector.shape_cast %116 : vector<1x32x1xi32> to vector<32x1xi32>
    %c0_i32_55 = arith.constant 0 : i32
    %118 = vector.broadcast %c0_i32_55 : i32 to vector<32x1xi32>
    %119 = arith.cmpi sgt, %117, %118 : vector<32x1xi32>
    %c7_56 = arith.constant 7 : index
    %c0_57 = arith.constant 0 : index
    %120 = vector.load %arg1[%c7_56, %c0_57] : memref<32x128xi32, #tpu.memory_space<vmem>>, vector<1x128xi32>
    %c7_58 = arith.constant 7 : index
    %c0_59 = arith.constant 0 : index
    %121 = vector.load %arg2[%c7_58, %c0_59] : memref<32x128xi32, #tpu.memory_space<vmem>>, vector<1x128xi32>
    %122 = vector.broadcast %120 : vector<1x128xi32> to vector<32x128xi32>
    %123 = arith.minsi %110, %122 : vector<32x128xi32>
    %124 = vector.shape_cast %119 : vector<32x1xi1> to vector<32x1xi1>
    %125 = vector.broadcast %124 : vector<32x1xi1> to vector<32x128xi1>
    %126 = arith.select %125, %123, %110 : vector<32x128xi1>, vector<32x128xi32>
    %127 = vector.broadcast %121 : vector<1x128xi32> to vector<32x128xi32>
    %128 = arith.maxsi %115, %127 : vector<32x128xi32>
    %129 = vector.shape_cast %119 : vector<32x1xi1> to vector<32x1xi1>
    %130 = vector.broadcast %129 : vector<32x1xi1> to vector<32x128xi1>
    %131 = arith.select %130, %128, %115 : vector<32x128xi1>, vector<32x128xi32>
    %c8 = arith.constant 8 : index
    %c0_60 = arith.constant 0 : index
    %c0_61 = arith.constant 0 : index
    %132 = vector.load %arg0[%c8, %c0_60, %c0_61] : memref<32x32x1xi32, #tpu.memory_space<vmem>>, vector<1x32x1xi32>
    %133 = vector.shape_cast %132 : vector<1x32x1xi32> to vector<32x1xi32>
    %c0_i32_62 = arith.constant 0 : i32
    %134 = vector.broadcast %c0_i32_62 : i32 to vector<32x1xi32>
    %135 = arith.cmpi sgt, %133, %134 : vector<32x1xi32>
    %c8_63 = arith.constant 8 : index
    %c0_64 = arith.constant 0 : index
    %136 = vector.load %arg1[%c8_63, %c0_64] : memref<32x128xi32, #tpu.memory_space<vmem>>, vector<1x128xi32>
    %c8_65 = arith.constant 8 : index
    %c0_66 = arith.constant 0 : index
    %137 = vector.load %arg2[%c8_65, %c0_66] : memref<32x128xi32, #tpu.memory_space<vmem>>, vector<1x128xi32>
    %138 = vector.broadcast %136 : vector<1x128xi32> to vector<32x128xi32>
    %139 = arith.minsi %126, %138 : vector<32x128xi32>
    %140 = vector.shape_cast %135 : vector<32x1xi1> to vector<32x1xi1>
    %141 = vector.broadcast %140 : vector<32x1xi1> to vector<32x128xi1>
    %142 = arith.select %141, %139, %126 : vector<32x128xi1>, vector<32x128xi32>
    %143 = vector.broadcast %137 : vector<1x128xi32> to vector<32x128xi32>
    %144 = arith.maxsi %131, %143 : vector<32x128xi32>
    %145 = vector.shape_cast %135 : vector<32x1xi1> to vector<32x1xi1>
    %146 = vector.broadcast %145 : vector<32x1xi1> to vector<32x128xi1>
    %147 = arith.select %146, %144, %131 : vector<32x128xi1>, vector<32x128xi32>
    %c9 = arith.constant 9 : index
    %c0_67 = arith.constant 0 : index
    %c0_68 = arith.constant 0 : index
    %148 = vector.load %arg0[%c9, %c0_67, %c0_68] : memref<32x32x1xi32, #tpu.memory_space<vmem>>, vector<1x32x1xi32>
    %149 = vector.shape_cast %148 : vector<1x32x1xi32> to vector<32x1xi32>
    %c0_i32_69 = arith.constant 0 : i32
    %150 = vector.broadcast %c0_i32_69 : i32 to vector<32x1xi32>
    %151 = arith.cmpi sgt, %149, %150 : vector<32x1xi32>
    %c9_70 = arith.constant 9 : index
    %c0_71 = arith.constant 0 : index
    %152 = vector.load %arg1[%c9_70, %c0_71] : memref<32x128xi32, #tpu.memory_space<vmem>>, vector<1x128xi32>
    %c9_72 = arith.constant 9 : index
    %c0_73 = arith.constant 0 : index
    %153 = vector.load %arg2[%c9_72, %c0_73] : memref<32x128xi32, #tpu.memory_space<vmem>>, vector<1x128xi32>
    %154 = vector.broadcast %152 : vector<1x128xi32> to vector<32x128xi32>
    %155 = arith.minsi %142, %154 : vector<32x128xi32>
    %156 = vector.shape_cast %151 : vector<32x1xi1> to vector<32x1xi1>
    %157 = vector.broadcast %156 : vector<32x1xi1> to vector<32x128xi1>
    %158 = arith.select %157, %155, %142 : vector<32x128xi1>, vector<32x128xi32>
    %159 = vector.broadcast %153 : vector<1x128xi32> to vector<32x128xi32>
    %160 = arith.maxsi %147, %159 : vector<32x128xi32>
    %161 = vector.shape_cast %151 : vector<32x1xi1> to vector<32x1xi1>
    %162 = vector.broadcast %161 : vector<32x1xi1> to vector<32x128xi1>
    %163 = arith.select %162, %160, %147 : vector<32x128xi1>, vector<32x128xi32>
    %c10 = arith.constant 10 : index
    %c0_74 = arith.constant 0 : index
    %c0_75 = arith.constant 0 : index
    %164 = vector.load %arg0[%c10, %c0_74, %c0_75] : memref<32x32x1xi32, #tpu.memory_space<vmem>>, vector<1x32x1xi32>
    %165 = vector.shape_cast %164 : vector<1x32x1xi32> to vector<32x1xi32>
    %c0_i32_76 = arith.constant 0 : i32
    %166 = vector.broadcast %c0_i32_76 : i32 to vector<32x1xi32>
    %167 = arith.cmpi sgt, %165, %166 : vector<32x1xi32>
    %c10_77 = arith.constant 10 : index
    %c0_78 = arith.constant 0 : index
    %168 = vector.load %arg1[%c10_77, %c0_78] : memref<32x128xi32, #tpu.memory_space<vmem>>, vector<1x128xi32>
    %c10_79 = arith.constant 10 : index
    %c0_80 = arith.constant 0 : index
    %169 = vector.load %arg2[%c10_79, %c0_80] : memref<32x128xi32, #tpu.memory_space<vmem>>, vector<1x128xi32>
    %170 = vector.broadcast %168 : vector<1x128xi32> to vector<32x128xi32>
    %171 = arith.minsi %158, %170 : vector<32x128xi32>
    %172 = vector.shape_cast %167 : vector<32x1xi1> to vector<32x1xi1>
    %173 = vector.broadcast %172 : vector<32x1xi1> to vector<32x128xi1>
    %174 = arith.select %173, %171, %158 : vector<32x128xi1>, vector<32x128xi32>
    %175 = vector.broadcast %169 : vector<1x128xi32> to vector<32x128xi32>
    %176 = arith.maxsi %163, %175 : vector<32x128xi32>
    %177 = vector.shape_cast %167 : vector<32x1xi1> to vector<32x1xi1>
    %178 = vector.broadcast %177 : vector<32x1xi1> to vector<32x128xi1>
    %179 = arith.select %178, %176, %163 : vector<32x128xi1>, vector<32x128xi32>
    %c11 = arith.constant 11 : index
    %c0_81 = arith.constant 0 : index
    %c0_82 = arith.constant 0 : index
    %180 = vector.load %arg0[%c11, %c0_81, %c0_82] : memref<32x32x1xi32, #tpu.memory_space<vmem>>, vector<1x32x1xi32>
    %181 = vector.shape_cast %180 : vector<1x32x1xi32> to vector<32x1xi32>
    %c0_i32_83 = arith.constant 0 : i32
    %182 = vector.broadcast %c0_i32_83 : i32 to vector<32x1xi32>
    %183 = arith.cmpi sgt, %181, %182 : vector<32x1xi32>
    %c11_84 = arith.constant 11 : index
    %c0_85 = arith.constant 0 : index
    %184 = vector.load %arg1[%c11_84, %c0_85] : memref<32x128xi32, #tpu.memory_space<vmem>>, vector<1x128xi32>
    %c11_86 = arith.constant 11 : index
    %c0_87 = arith.constant 0 : index
    %185 = vector.load %arg2[%c11_86, %c0_87] : memref<32x128xi32, #tpu.memory_space<vmem>>, vector<1x128xi32>
    %186 = vector.broadcast %184 : vector<1x128xi32> to vector<32x128xi32>
    %187 = arith.minsi %174, %186 : vector<32x128xi32>
    %188 = vector.shape_cast %183 : vector<32x1xi1> to vector<32x1xi1>
    %189 = vector.broadcast %188 : vector<32x1xi1> to vector<32x128xi1>
    %190 = arith.select %189, %187, %174 : vector<32x128xi1>, vector<32x128xi32>
    %191 = vector.broadcast %185 : vector<1x128xi32> to vector<32x128xi32>
    %192 = arith.maxsi %179, %191 : vector<32x128xi32>
    %193 = vector.shape_cast %183 : vector<32x1xi1> to vector<32x1xi1>
    %194 = vector.broadcast %193 : vector<32x1xi1> to vector<32x128xi1>
    %195 = arith.select %194, %192, %179 : vector<32x128xi1>, vector<32x128xi32>
    %c12 = arith.constant 12 : index
    %c0_88 = arith.constant 0 : index
    %c0_89 = arith.constant 0 : index
    %196 = vector.load %arg0[%c12, %c0_88, %c0_89] : memref<32x32x1xi32, #tpu.memory_space<vmem>>, vector<1x32x1xi32>
    %197 = vector.shape_cast %196 : vector<1x32x1xi32> to vector<32x1xi32>
    %c0_i32_90 = arith.constant 0 : i32
    %198 = vector.broadcast %c0_i32_90 : i32 to vector<32x1xi32>
    %199 = arith.cmpi sgt, %197, %198 : vector<32x1xi32>
    %c12_91 = arith.constant 12 : index
    %c0_92 = arith.constant 0 : index
    %200 = vector.load %arg1[%c12_91, %c0_92] : memref<32x128xi32, #tpu.memory_space<vmem>>, vector<1x128xi32>
    %c12_93 = arith.constant 12 : index
    %c0_94 = arith.constant 0 : index
    %201 = vector.load %arg2[%c12_93, %c0_94] : memref<32x128xi32, #tpu.memory_space<vmem>>, vector<1x128xi32>
    %202 = vector.broadcast %200 : vector<1x128xi32> to vector<32x128xi32>
    %203 = arith.minsi %190, %202 : vector<32x128xi32>
    %204 = vector.shape_cast %199 : vector<32x1xi1> to vector<32x1xi1>
    %205 = vector.broadcast %204 : vector<32x1xi1> to vector<32x128xi1>
    %206 = arith.select %205, %203, %190 : vector<32x128xi1>, vector<32x128xi32>
    %207 = vector.broadcast %201 : vector<1x128xi32> to vector<32x128xi32>
    %208 = arith.maxsi %195, %207 : vector<32x128xi32>
    %209 = vector.shape_cast %199 : vector<32x1xi1> to vector<32x1xi1>
    %210 = vector.broadcast %209 : vector<32x1xi1> to vector<32x128xi1>
    %211 = arith.select %210, %208, %195 : vector<32x128xi1>, vector<32x128xi32>
    %c13 = arith.constant 13 : index
    %c0_95 = arith.constant 0 : index
    %c0_96 = arith.constant 0 : index
    %212 = vector.load %arg0[%c13, %c0_95, %c0_96] : memref<32x32x1xi32, #tpu.memory_space<vmem>>, vector<1x32x1xi32>
    %213 = vector.shape_cast %212 : vector<1x32x1xi32> to vector<32x1xi32>
    %c0_i32_97 = arith.constant 0 : i32
    %214 = vector.broadcast %c0_i32_97 : i32 to vector<32x1xi32>
    %215 = arith.cmpi sgt, %213, %214 : vector<32x1xi32>
    %c13_98 = arith.constant 13 : index
    %c0_99 = arith.constant 0 : index
    %216 = vector.load %arg1[%c13_98, %c0_99] : memref<32x128xi32, #tpu.memory_space<vmem>>, vector<1x128xi32>
    %c13_100 = arith.constant 13 : index
    %c0_101 = arith.constant 0 : index
    %217 = vector.load %arg2[%c13_100, %c0_101] : memref<32x128xi32, #tpu.memory_space<vmem>>, vector<1x128xi32>
    %218 = vector.broadcast %216 : vector<1x128xi32> to vector<32x128xi32>
    %219 = arith.minsi %206, %218 : vector<32x128xi32>
    %220 = vector.shape_cast %215 : vector<32x1xi1> to vector<32x1xi1>
    %221 = vector.broadcast %220 : vector<32x1xi1> to vector<32x128xi1>
    %222 = arith.select %221, %219, %206 : vector<32x128xi1>, vector<32x128xi32>
    %223 = vector.broadcast %217 : vector<1x128xi32> to vector<32x128xi32>
    %224 = arith.maxsi %211, %223 : vector<32x128xi32>
    %225 = vector.shape_cast %215 : vector<32x1xi1> to vector<32x1xi1>
    %226 = vector.broadcast %225 : vector<32x1xi1> to vector<32x128xi1>
    %227 = arith.select %226, %224, %211 : vector<32x128xi1>, vector<32x128xi32>
    %c14 = arith.constant 14 : index
    %c0_102 = arith.constant 0 : index
    %c0_103 = arith.constant 0 : index
    %228 = vector.load %arg0[%c14, %c0_102, %c0_103] : memref<32x32x1xi32, #tpu.memory_space<vmem>>, vector<1x32x1xi32>
    %229 = vector.shape_cast %228 : vector<1x32x1xi32> to vector<32x1xi32>
    %c0_i32_104 = arith.constant 0 : i32
    %230 = vector.broadcast %c0_i32_104 : i32 to vector<32x1xi32>
    %231 = arith.cmpi sgt, %229, %230 : vector<32x1xi32>
    %c14_105 = arith.constant 14 : index
    %c0_106 = arith.constant 0 : index
    %232 = vector.load %arg1[%c14_105, %c0_106] : memref<32x128xi32, #tpu.memory_space<vmem>>, vector<1x128xi32>
    %c14_107 = arith.constant 14 : index
    %c0_108 = arith.constant 0 : index
    %233 = vector.load %arg2[%c14_107, %c0_108] : memref<32x128xi32, #tpu.memory_space<vmem>>, vector<1x128xi32>
    %234 = vector.broadcast %232 : vector<1x128xi32> to vector<32x128xi32>
    %235 = arith.minsi %222, %234 : vector<32x128xi32>
    %236 = vector.shape_cast %231 : vector<32x1xi1> to vector<32x1xi1>
    %237 = vector.broadcast %236 : vector<32x1xi1> to vector<32x128xi1>
    %238 = arith.select %237, %235, %222 : vector<32x128xi1>, vector<32x128xi32>
    %239 = vector.broadcast %233 : vector<1x128xi32> to vector<32x128xi32>
    %240 = arith.maxsi %227, %239 : vector<32x128xi32>
    %241 = vector.shape_cast %231 : vector<32x1xi1> to vector<32x1xi1>
    %242 = vector.broadcast %241 : vector<32x1xi1> to vector<32x128xi1>
    %243 = arith.select %242, %240, %227 : vector<32x128xi1>, vector<32x128xi32>
    %c15 = arith.constant 15 : index
    %c0_109 = arith.constant 0 : index
    %c0_110 = arith.constant 0 : index
    %244 = vector.load %arg0[%c15, %c0_109, %c0_110] : memref<32x32x1xi32, #tpu.memory_space<vmem>>, vector<1x32x1xi32>
    %245 = vector.shape_cast %244 : vector<1x32x1xi32> to vector<32x1xi32>
    %c0_i32_111 = arith.constant 0 : i32
    %246 = vector.broadcast %c0_i32_111 : i32 to vector<32x1xi32>
    %247 = arith.cmpi sgt, %245, %246 : vector<32x1xi32>
    %c15_112 = arith.constant 15 : index
    %c0_113 = arith.constant 0 : index
    %248 = vector.load %arg1[%c15_112, %c0_113] : memref<32x128xi32, #tpu.memory_space<vmem>>, vector<1x128xi32>
    %c15_114 = arith.constant 15 : index
    %c0_115 = arith.constant 0 : index
    %249 = vector.load %arg2[%c15_114, %c0_115] : memref<32x128xi32, #tpu.memory_space<vmem>>, vector<1x128xi32>
    %250 = vector.broadcast %248 : vector<1x128xi32> to vector<32x128xi32>
    %251 = arith.minsi %238, %250 : vector<32x128xi32>
    %252 = vector.shape_cast %247 : vector<32x1xi1> to vector<32x1xi1>
    %253 = vector.broadcast %252 : vector<32x1xi1> to vector<32x128xi1>
    %254 = arith.select %253, %251, %238 : vector<32x128xi1>, vector<32x128xi32>
    %255 = vector.broadcast %249 : vector<1x128xi32> to vector<32x128xi32>
    %256 = arith.maxsi %243, %255 : vector<32x128xi32>
    %257 = vector.shape_cast %247 : vector<32x1xi1> to vector<32x1xi1>
    %258 = vector.broadcast %257 : vector<32x1xi1> to vector<32x128xi1>
    %259 = arith.select %258, %256, %243 : vector<32x128xi1>, vector<32x128xi32>
    %c16 = arith.constant 16 : index
    %c0_116 = arith.constant 0 : index
    %c0_117 = arith.constant 0 : index
    %260 = vector.load %arg0[%c16, %c0_116, %c0_117] : memref<32x32x1xi32, #tpu.memory_space<vmem>>, vector<1x32x1xi32>
    %261 = vector.shape_cast %260 : vector<1x32x1xi32> to vector<32x1xi32>
    %c0_i32_118 = arith.constant 0 : i32
    %262 = vector.broadcast %c0_i32_118 : i32 to vector<32x1xi32>
    %263 = arith.cmpi sgt, %261, %262 : vector<32x1xi32>
    %c16_119 = arith.constant 16 : index
    %c0_120 = arith.constant 0 : index
    %264 = vector.load %arg1[%c16_119, %c0_120] : memref<32x128xi32, #tpu.memory_space<vmem>>, vector<1x128xi32>
    %c16_121 = arith.constant 16 : index
    %c0_122 = arith.constant 0 : index
    %265 = vector.load %arg2[%c16_121, %c0_122] : memref<32x128xi32, #tpu.memory_space<vmem>>, vector<1x128xi32>
    %266 = vector.broadcast %264 : vector<1x128xi32> to vector<32x128xi32>
    %267 = arith.minsi %254, %266 : vector<32x128xi32>
    %268 = vector.shape_cast %263 : vector<32x1xi1> to vector<32x1xi1>
    %269 = vector.broadcast %268 : vector<32x1xi1> to vector<32x128xi1>
    %270 = arith.select %269, %267, %254 : vector<32x128xi1>, vector<32x128xi32>
    %271 = vector.broadcast %265 : vector<1x128xi32> to vector<32x128xi32>
    %272 = arith.maxsi %259, %271 : vector<32x128xi32>
    %273 = vector.shape_cast %263 : vector<32x1xi1> to vector<32x1xi1>
    %274 = vector.broadcast %273 : vector<32x1xi1> to vector<32x128xi1>
    %275 = arith.select %274, %272, %259 : vector<32x128xi1>, vector<32x128xi32>
    %c17 = arith.constant 17 : index
    %c0_123 = arith.constant 0 : index
    %c0_124 = arith.constant 0 : index
    %276 = vector.load %arg0[%c17, %c0_123, %c0_124] : memref<32x32x1xi32, #tpu.memory_space<vmem>>, vector<1x32x1xi32>
    %277 = vector.shape_cast %276 : vector<1x32x1xi32> to vector<32x1xi32>
    %c0_i32_125 = arith.constant 0 : i32
    %278 = vector.broadcast %c0_i32_125 : i32 to vector<32x1xi32>
    %279 = arith.cmpi sgt, %277, %278 : vector<32x1xi32>
    %c17_126 = arith.constant 17 : index
    %c0_127 = arith.constant 0 : index
    %280 = vector.load %arg1[%c17_126, %c0_127] : memref<32x128xi32, #tpu.memory_space<vmem>>, vector<1x128xi32>
    %c17_128 = arith.constant 17 : index
    %c0_129 = arith.constant 0 : index
    %281 = vector.load %arg2[%c17_128, %c0_129] : memref<32x128xi32, #tpu.memory_space<vmem>>, vector<1x128xi32>
    %282 = vector.broadcast %280 : vector<1x128xi32> to vector<32x128xi32>
    %283 = arith.minsi %270, %282 : vector<32x128xi32>
    %284 = vector.shape_cast %279 : vector<32x1xi1> to vector<32x1xi1>
    %285 = vector.broadcast %284 : vector<32x1xi1> to vector<32x128xi1>
    %286 = arith.select %285, %283, %270 : vector<32x128xi1>, vector<32x128xi32>
    %287 = vector.broadcast %281 : vector<1x128xi32> to vector<32x128xi32>
    %288 = arith.maxsi %275, %287 : vector<32x128xi32>
    %289 = vector.shape_cast %279 : vector<32x1xi1> to vector<32x1xi1>
    %290 = vector.broadcast %289 : vector<32x1xi1> to vector<32x128xi1>
    %291 = arith.select %290, %288, %275 : vector<32x128xi1>, vector<32x128xi32>
    %c18 = arith.constant 18 : index
    %c0_130 = arith.constant 0 : index
    %c0_131 = arith.constant 0 : index
    %292 = vector.load %arg0[%c18, %c0_130, %c0_131] : memref<32x32x1xi32, #tpu.memory_space<vmem>>, vector<1x32x1xi32>
    %293 = vector.shape_cast %292 : vector<1x32x1xi32> to vector<32x1xi32>
    %c0_i32_132 = arith.constant 0 : i32
    %294 = vector.broadcast %c0_i32_132 : i32 to vector<32x1xi32>
    %295 = arith.cmpi sgt, %293, %294 : vector<32x1xi32>
    %c18_133 = arith.constant 18 : index
    %c0_134 = arith.constant 0 : index
    %296 = vector.load %arg1[%c18_133, %c0_134] : memref<32x128xi32, #tpu.memory_space<vmem>>, vector<1x128xi32>
    %c18_135 = arith.constant 18 : index
    %c0_136 = arith.constant 0 : index
    %297 = vector.load %arg2[%c18_135, %c0_136] : memref<32x128xi32, #tpu.memory_space<vmem>>, vector<1x128xi32>
    %298 = vector.broadcast %296 : vector<1x128xi32> to vector<32x128xi32>
    %299 = arith.minsi %286, %298 : vector<32x128xi32>
    %300 = vector.shape_cast %295 : vector<32x1xi1> to vector<32x1xi1>
    %301 = vector.broadcast %300 : vector<32x1xi1> to vector<32x128xi1>
    %302 = arith.select %301, %299, %286 : vector<32x128xi1>, vector<32x128xi32>
    %303 = vector.broadcast %297 : vector<1x128xi32> to vector<32x128xi32>
    %304 = arith.maxsi %291, %303 : vector<32x128xi32>
    %305 = vector.shape_cast %295 : vector<32x1xi1> to vector<32x1xi1>
    %306 = vector.broadcast %305 : vector<32x1xi1> to vector<32x128xi1>
    %307 = arith.select %306, %304, %291 : vector<32x128xi1>, vector<32x128xi32>
    %c19 = arith.constant 19 : index
    %c0_137 = arith.constant 0 : index
    %c0_138 = arith.constant 0 : index
    %308 = vector.load %arg0[%c19, %c0_137, %c0_138] : memref<32x32x1xi32, #tpu.memory_space<vmem>>, vector<1x32x1xi32>
    %309 = vector.shape_cast %308 : vector<1x32x1xi32> to vector<32x1xi32>
    %c0_i32_139 = arith.constant 0 : i32
    %310 = vector.broadcast %c0_i32_139 : i32 to vector<32x1xi32>
    %311 = arith.cmpi sgt, %309, %310 : vector<32x1xi32>
    %c19_140 = arith.constant 19 : index
    %c0_141 = arith.constant 0 : index
    %312 = vector.load %arg1[%c19_140, %c0_141] : memref<32x128xi32, #tpu.memory_space<vmem>>, vector<1x128xi32>
    %c19_142 = arith.constant 19 : index
    %c0_143 = arith.constant 0 : index
    %313 = vector.load %arg2[%c19_142, %c0_143] : memref<32x128xi32, #tpu.memory_space<vmem>>, vector<1x128xi32>
    %314 = vector.broadcast %312 : vector<1x128xi32> to vector<32x128xi32>
    %315 = arith.minsi %302, %314 : vector<32x128xi32>
    %316 = vector.shape_cast %311 : vector<32x1xi1> to vector<32x1xi1>
    %317 = vector.broadcast %316 : vector<32x1xi1> to vector<32x128xi1>
    %318 = arith.select %317, %315, %302 : vector<32x128xi1>, vector<32x128xi32>
    %319 = vector.broadcast %313 : vector<1x128xi32> to vector<32x128xi32>
    %320 = arith.maxsi %307, %319 : vector<32x128xi32>
    %321 = vector.shape_cast %311 : vector<32x1xi1> to vector<32x1xi1>
    %322 = vector.broadcast %321 : vector<32x1xi1> to vector<32x128xi1>
    %323 = arith.select %322, %320, %307 : vector<32x128xi1>, vector<32x128xi32>
    %c20 = arith.constant 20 : index
    %c0_144 = arith.constant 0 : index
    %c0_145 = arith.constant 0 : index
    %324 = vector.load %arg0[%c20, %c0_144, %c0_145] : memref<32x32x1xi32, #tpu.memory_space<vmem>>, vector<1x32x1xi32>
    %325 = vector.shape_cast %324 : vector<1x32x1xi32> to vector<32x1xi32>
    %c0_i32_146 = arith.constant 0 : i32
    %326 = vector.broadcast %c0_i32_146 : i32 to vector<32x1xi32>
    %327 = arith.cmpi sgt, %325, %326 : vector<32x1xi32>
    %c20_147 = arith.constant 20 : index
    %c0_148 = arith.constant 0 : index
    %328 = vector.load %arg1[%c20_147, %c0_148] : memref<32x128xi32, #tpu.memory_space<vmem>>, vector<1x128xi32>
    %c20_149 = arith.constant 20 : index
    %c0_150 = arith.constant 0 : index
    %329 = vector.load %arg2[%c20_149, %c0_150] : memref<32x128xi32, #tpu.memory_space<vmem>>, vector<1x128xi32>
    %330 = vector.broadcast %328 : vector<1x128xi32> to vector<32x128xi32>
    %331 = arith.minsi %318, %330 : vector<32x128xi32>
    %332 = vector.shape_cast %327 : vector<32x1xi1> to vector<32x1xi1>
    %333 = vector.broadcast %332 : vector<32x1xi1> to vector<32x128xi1>
    %334 = arith.select %333, %331, %318 : vector<32x128xi1>, vector<32x128xi32>
    %335 = vector.broadcast %329 : vector<1x128xi32> to vector<32x128xi32>
    %336 = arith.maxsi %323, %335 : vector<32x128xi32>
    %337 = vector.shape_cast %327 : vector<32x1xi1> to vector<32x1xi1>
    %338 = vector.broadcast %337 : vector<32x1xi1> to vector<32x128xi1>
    %339 = arith.select %338, %336, %323 : vector<32x128xi1>, vector<32x128xi32>
    %c21 = arith.constant 21 : index
    %c0_151 = arith.constant 0 : index
    %c0_152 = arith.constant 0 : index
    %340 = vector.load %arg0[%c21, %c0_151, %c0_152] : memref<32x32x1xi32, #tpu.memory_space<vmem>>, vector<1x32x1xi32>
    %341 = vector.shape_cast %340 : vector<1x32x1xi32> to vector<32x1xi32>
    %c0_i32_153 = arith.constant 0 : i32
    %342 = vector.broadcast %c0_i32_153 : i32 to vector<32x1xi32>
    %343 = arith.cmpi sgt, %341, %342 : vector<32x1xi32>
    %c21_154 = arith.constant 21 : index
    %c0_155 = arith.constant 0 : index
    %344 = vector.load %arg1[%c21_154, %c0_155] : memref<32x128xi32, #tpu.memory_space<vmem>>, vector<1x128xi32>
    %c21_156 = arith.constant 21 : index
    %c0_157 = arith.constant 0 : index
    %345 = vector.load %arg2[%c21_156, %c0_157] : memref<32x128xi32, #tpu.memory_space<vmem>>, vector<1x128xi32>
    %346 = vector.broadcast %344 : vector<1x128xi32> to vector<32x128xi32>
    %347 = arith.minsi %334, %346 : vector<32x128xi32>
    %348 = vector.shape_cast %343 : vector<32x1xi1> to vector<32x1xi1>
    %349 = vector.broadcast %348 : vector<32x1xi1> to vector<32x128xi1>
    %350 = arith.select %349, %347, %334 : vector<32x128xi1>, vector<32x128xi32>
    %351 = vector.broadcast %345 : vector<1x128xi32> to vector<32x128xi32>
    %352 = arith.maxsi %339, %351 : vector<32x128xi32>
    %353 = vector.shape_cast %343 : vector<32x1xi1> to vector<32x1xi1>
    %354 = vector.broadcast %353 : vector<32x1xi1> to vector<32x128xi1>
    %355 = arith.select %354, %352, %339 : vector<32x128xi1>, vector<32x128xi32>
    %c22 = arith.constant 22 : index
    %c0_158 = arith.constant 0 : index
    %c0_159 = arith.constant 0 : index
    %356 = vector.load %arg0[%c22, %c0_158, %c0_159] : memref<32x32x1xi32, #tpu.memory_space<vmem>>, vector<1x32x1xi32>
    %357 = vector.shape_cast %356 : vector<1x32x1xi32> to vector<32x1xi32>
    %c0_i32_160 = arith.constant 0 : i32
    %358 = vector.broadcast %c0_i32_160 : i32 to vector<32x1xi32>
    %359 = arith.cmpi sgt, %357, %358 : vector<32x1xi32>
    %c22_161 = arith.constant 22 : index
    %c0_162 = arith.constant 0 : index
    %360 = vector.load %arg1[%c22_161, %c0_162] : memref<32x128xi32, #tpu.memory_space<vmem>>, vector<1x128xi32>
    %c22_163 = arith.constant 22 : index
    %c0_164 = arith.constant 0 : index
    %361 = vector.load %arg2[%c22_163, %c0_164] : memref<32x128xi32, #tpu.memory_space<vmem>>, vector<1x128xi32>
    %362 = vector.broadcast %360 : vector<1x128xi32> to vector<32x128xi32>
    %363 = arith.minsi %350, %362 : vector<32x128xi32>
    %364 = vector.shape_cast %359 : vector<32x1xi1> to vector<32x1xi1>
    %365 = vector.broadcast %364 : vector<32x1xi1> to vector<32x128xi1>
    %366 = arith.select %365, %363, %350 : vector<32x128xi1>, vector<32x128xi32>
    %367 = vector.broadcast %361 : vector<1x128xi32> to vector<32x128xi32>
    %368 = arith.maxsi %355, %367 : vector<32x128xi32>
    %369 = vector.shape_cast %359 : vector<32x1xi1> to vector<32x1xi1>
    %370 = vector.broadcast %369 : vector<32x1xi1> to vector<32x128xi1>
    %371 = arith.select %370, %368, %355 : vector<32x128xi1>, vector<32x128xi32>
    %c23 = arith.constant 23 : index
    %c0_165 = arith.constant 0 : index
    %c0_166 = arith.constant 0 : index
    %372 = vector.load %arg0[%c23, %c0_165, %c0_166] : memref<32x32x1xi32, #tpu.memory_space<vmem>>, vector<1x32x1xi32>
    %373 = vector.shape_cast %372 : vector<1x32x1xi32> to vector<32x1xi32>
    %c0_i32_167 = arith.constant 0 : i32
    %374 = vector.broadcast %c0_i32_167 : i32 to vector<32x1xi32>
    %375 = arith.cmpi sgt, %373, %374 : vector<32x1xi32>
    %c23_168 = arith.constant 23 : index
    %c0_169 = arith.constant 0 : index
    %376 = vector.load %arg1[%c23_168, %c0_169] : memref<32x128xi32, #tpu.memory_space<vmem>>, vector<1x128xi32>
    %c23_170 = arith.constant 23 : index
    %c0_171 = arith.constant 0 : index
    %377 = vector.load %arg2[%c23_170, %c0_171] : memref<32x128xi32, #tpu.memory_space<vmem>>, vector<1x128xi32>
    %378 = vector.broadcast %376 : vector<1x128xi32> to vector<32x128xi32>
    %379 = arith.minsi %366, %378 : vector<32x128xi32>
    %380 = vector.shape_cast %375 : vector<32x1xi1> to vector<32x1xi1>
    %381 = vector.broadcast %380 : vector<32x1xi1> to vector<32x128xi1>
    %382 = arith.select %381, %379, %366 : vector<32x128xi1>, vector<32x128xi32>
    %383 = vector.broadcast %377 : vector<1x128xi32> to vector<32x128xi32>
    %384 = arith.maxsi %371, %383 : vector<32x128xi32>
    %385 = vector.shape_cast %375 : vector<32x1xi1> to vector<32x1xi1>
    %386 = vector.broadcast %385 : vector<32x1xi1> to vector<32x128xi1>
    %387 = arith.select %386, %384, %371 : vector<32x128xi1>, vector<32x128xi32>
    %c24 = arith.constant 24 : index
    %c0_172 = arith.constant 0 : index
    %c0_173 = arith.constant 0 : index
    %388 = vector.load %arg0[%c24, %c0_172, %c0_173] : memref<32x32x1xi32, #tpu.memory_space<vmem>>, vector<1x32x1xi32>
    %389 = vector.shape_cast %388 : vector<1x32x1xi32> to vector<32x1xi32>
    %c0_i32_174 = arith.constant 0 : i32
    %390 = vector.broadcast %c0_i32_174 : i32 to vector<32x1xi32>
    %391 = arith.cmpi sgt, %389, %390 : vector<32x1xi32>
    %c24_175 = arith.constant 24 : index
    %c0_176 = arith.constant 0 : index
    %392 = vector.load %arg1[%c24_175, %c0_176] : memref<32x128xi32, #tpu.memory_space<vmem>>, vector<1x128xi32>
    %c24_177 = arith.constant 24 : index
    %c0_178 = arith.constant 0 : index
    %393 = vector.load %arg2[%c24_177, %c0_178] : memref<32x128xi32, #tpu.memory_space<vmem>>, vector<1x128xi32>
    %394 = vector.broadcast %392 : vector<1x128xi32> to vector<32x128xi32>
    %395 = arith.minsi %382, %394 : vector<32x128xi32>
    %396 = vector.shape_cast %391 : vector<32x1xi1> to vector<32x1xi1>
    %397 = vector.broadcast %396 : vector<32x1xi1> to vector<32x128xi1>
    %398 = arith.select %397, %395, %382 : vector<32x128xi1>, vector<32x128xi32>
    %399 = vector.broadcast %393 : vector<1x128xi32> to vector<32x128xi32>
    %400 = arith.maxsi %387, %399 : vector<32x128xi32>
    %401 = vector.shape_cast %391 : vector<32x1xi1> to vector<32x1xi1>
    %402 = vector.broadcast %401 : vector<32x1xi1> to vector<32x128xi1>
    %403 = arith.select %402, %400, %387 : vector<32x128xi1>, vector<32x128xi32>
    %c25 = arith.constant 25 : index
    %c0_179 = arith.constant 0 : index
    %c0_180 = arith.constant 0 : index
    %404 = vector.load %arg0[%c25, %c0_179, %c0_180] : memref<32x32x1xi32, #tpu.memory_space<vmem>>, vector<1x32x1xi32>
    %405 = vector.shape_cast %404 : vector<1x32x1xi32> to vector<32x1xi32>
    %c0_i32_181 = arith.constant 0 : i32
    %406 = vector.broadcast %c0_i32_181 : i32 to vector<32x1xi32>
    %407 = arith.cmpi sgt, %405, %406 : vector<32x1xi32>
    %c25_182 = arith.constant 25 : index
    %c0_183 = arith.constant 0 : index
    %408 = vector.load %arg1[%c25_182, %c0_183] : memref<32x128xi32, #tpu.memory_space<vmem>>, vector<1x128xi32>
    %c25_184 = arith.constant 25 : index
    %c0_185 = arith.constant 0 : index
    %409 = vector.load %arg2[%c25_184, %c0_185] : memref<32x128xi32, #tpu.memory_space<vmem>>, vector<1x128xi32>
    %410 = vector.broadcast %408 : vector<1x128xi32> to vector<32x128xi32>
    %411 = arith.minsi %398, %410 : vector<32x128xi32>
    %412 = vector.shape_cast %407 : vector<32x1xi1> to vector<32x1xi1>
    %413 = vector.broadcast %412 : vector<32x1xi1> to vector<32x128xi1>
    %414 = arith.select %413, %411, %398 : vector<32x128xi1>, vector<32x128xi32>
    %415 = vector.broadcast %409 : vector<1x128xi32> to vector<32x128xi32>
    %416 = arith.maxsi %403, %415 : vector<32x128xi32>
    %417 = vector.shape_cast %407 : vector<32x1xi1> to vector<32x1xi1>
    %418 = vector.broadcast %417 : vector<32x1xi1> to vector<32x128xi1>
    %419 = arith.select %418, %416, %403 : vector<32x128xi1>, vector<32x128xi32>
    %c26 = arith.constant 26 : index
    %c0_186 = arith.constant 0 : index
    %c0_187 = arith.constant 0 : index
    %420 = vector.load %arg0[%c26, %c0_186, %c0_187] : memref<32x32x1xi32, #tpu.memory_space<vmem>>, vector<1x32x1xi32>
    %421 = vector.shape_cast %420 : vector<1x32x1xi32> to vector<32x1xi32>
    %c0_i32_188 = arith.constant 0 : i32
    %422 = vector.broadcast %c0_i32_188 : i32 to vector<32x1xi32>
    %423 = arith.cmpi sgt, %421, %422 : vector<32x1xi32>
    %c26_189 = arith.constant 26 : index
    %c0_190 = arith.constant 0 : index
    %424 = vector.load %arg1[%c26_189, %c0_190] : memref<32x128xi32, #tpu.memory_space<vmem>>, vector<1x128xi32>
    %c26_191 = arith.constant 26 : index
    %c0_192 = arith.constant 0 : index
    %425 = vector.load %arg2[%c26_191, %c0_192] : memref<32x128xi32, #tpu.memory_space<vmem>>, vector<1x128xi32>
    %426 = vector.broadcast %424 : vector<1x128xi32> to vector<32x128xi32>
    %427 = arith.minsi %414, %426 : vector<32x128xi32>
    %428 = vector.shape_cast %423 : vector<32x1xi1> to vector<32x1xi1>
    %429 = vector.broadcast %428 : vector<32x1xi1> to vector<32x128xi1>
    %430 = arith.select %429, %427, %414 : vector<32x128xi1>, vector<32x128xi32>
    %431 = vector.broadcast %425 : vector<1x128xi32> to vector<32x128xi32>
    %432 = arith.maxsi %419, %431 : vector<32x128xi32>
    %433 = vector.shape_cast %423 : vector<32x1xi1> to vector<32x1xi1>
    %434 = vector.broadcast %433 : vector<32x1xi1> to vector<32x128xi1>
    %435 = arith.select %434, %432, %419 : vector<32x128xi1>, vector<32x128xi32>
    %c27 = arith.constant 27 : index
    %c0_193 = arith.constant 0 : index
    %c0_194 = arith.constant 0 : index
    %436 = vector.load %arg0[%c27, %c0_193, %c0_194] : memref<32x32x1xi32, #tpu.memory_space<vmem>>, vector<1x32x1xi32>
    %437 = vector.shape_cast %436 : vector<1x32x1xi32> to vector<32x1xi32>
    %c0_i32_195 = arith.constant 0 : i32
    %438 = vector.broadcast %c0_i32_195 : i32 to vector<32x1xi32>
    %439 = arith.cmpi sgt, %437, %438 : vector<32x1xi32>
    %c27_196 = arith.constant 27 : index
    %c0_197 = arith.constant 0 : index
    %440 = vector.load %arg1[%c27_196, %c0_197] : memref<32x128xi32, #tpu.memory_space<vmem>>, vector<1x128xi32>
    %c27_198 = arith.constant 27 : index
    %c0_199 = arith.constant 0 : index
    %441 = vector.load %arg2[%c27_198, %c0_199] : memref<32x128xi32, #tpu.memory_space<vmem>>, vector<1x128xi32>
    %442 = vector.broadcast %440 : vector<1x128xi32> to vector<32x128xi32>
    %443 = arith.minsi %430, %442 : vector<32x128xi32>
    %444 = vector.shape_cast %439 : vector<32x1xi1> to vector<32x1xi1>
    %445 = vector.broadcast %444 : vector<32x1xi1> to vector<32x128xi1>
    %446 = arith.select %445, %443, %430 : vector<32x128xi1>, vector<32x128xi32>
    %447 = vector.broadcast %441 : vector<1x128xi32> to vector<32x128xi32>
    %448 = arith.maxsi %435, %447 : vector<32x128xi32>
    %449 = vector.shape_cast %439 : vector<32x1xi1> to vector<32x1xi1>
    %450 = vector.broadcast %449 : vector<32x1xi1> to vector<32x128xi1>
    %451 = arith.select %450, %448, %435 : vector<32x128xi1>, vector<32x128xi32>
    %c28 = arith.constant 28 : index
    %c0_200 = arith.constant 0 : index
    %c0_201 = arith.constant 0 : index
    %452 = vector.load %arg0[%c28, %c0_200, %c0_201] : memref<32x32x1xi32, #tpu.memory_space<vmem>>, vector<1x32x1xi32>
    %453 = vector.shape_cast %452 : vector<1x32x1xi32> to vector<32x1xi32>
    %c0_i32_202 = arith.constant 0 : i32
    %454 = vector.broadcast %c0_i32_202 : i32 to vector<32x1xi32>
    %455 = arith.cmpi sgt, %453, %454 : vector<32x1xi32>
    %c28_203 = arith.constant 28 : index
    %c0_204 = arith.constant 0 : index
    %456 = vector.load %arg1[%c28_203, %c0_204] : memref<32x128xi32, #tpu.memory_space<vmem>>, vector<1x128xi32>
    %c28_205 = arith.constant 28 : index
    %c0_206 = arith.constant 0 : index
    %457 = vector.load %arg2[%c28_205, %c0_206] : memref<32x128xi32, #tpu.memory_space<vmem>>, vector<1x128xi32>
    %458 = vector.broadcast %456 : vector<1x128xi32> to vector<32x128xi32>
    %459 = arith.minsi %446, %458 : vector<32x128xi32>
    %460 = vector.shape_cast %455 : vector<32x1xi1> to vector<32x1xi1>
    %461 = vector.broadcast %460 : vector<32x1xi1> to vector<32x128xi1>
    %462 = arith.select %461, %459, %446 : vector<32x128xi1>, vector<32x128xi32>
    %463 = vector.broadcast %457 : vector<1x128xi32> to vector<32x128xi32>
    %464 = arith.maxsi %451, %463 : vector<32x128xi32>
    %465 = vector.shape_cast %455 : vector<32x1xi1> to vector<32x1xi1>
    %466 = vector.broadcast %465 : vector<32x1xi1> to vector<32x128xi1>
    %467 = arith.select %466, %464, %451 : vector<32x128xi1>, vector<32x128xi32>
    %c29 = arith.constant 29 : index
    %c0_207 = arith.constant 0 : index
    %c0_208 = arith.constant 0 : index
    %468 = vector.load %arg0[%c29, %c0_207, %c0_208] : memref<32x32x1xi32, #tpu.memory_space<vmem>>, vector<1x32x1xi32>
    %469 = vector.shape_cast %468 : vector<1x32x1xi32> to vector<32x1xi32>
    %c0_i32_209 = arith.constant 0 : i32
    %470 = vector.broadcast %c0_i32_209 : i32 to vector<32x1xi32>
    %471 = arith.cmpi sgt, %469, %470 : vector<32x1xi32>
    %c29_210 = arith.constant 29 : index
    %c0_211 = arith.constant 0 : index
    %472 = vector.load %arg1[%c29_210, %c0_211] : memref<32x128xi32, #tpu.memory_space<vmem>>, vector<1x128xi32>
    %c29_212 = arith.constant 29 : index
    %c0_213 = arith.constant 0 : index
    %473 = vector.load %arg2[%c29_212, %c0_213] : memref<32x128xi32, #tpu.memory_space<vmem>>, vector<1x128xi32>
    %474 = vector.broadcast %472 : vector<1x128xi32> to vector<32x128xi32>
    %475 = arith.minsi %462, %474 : vector<32x128xi32>
    %476 = vector.shape_cast %471 : vector<32x1xi1> to vector<32x1xi1>
    %477 = vector.broadcast %476 : vector<32x1xi1> to vector<32x128xi1>
    %478 = arith.select %477, %475, %462 : vector<32x128xi1>, vector<32x128xi32>
    %479 = vector.broadcast %473 : vector<1x128xi32> to vector<32x128xi32>
    %480 = arith.maxsi %467, %479 : vector<32x128xi32>
    %481 = vector.shape_cast %471 : vector<32x1xi1> to vector<32x1xi1>
    %482 = vector.broadcast %481 : vector<32x1xi1> to vector<32x128xi1>
    %483 = arith.select %482, %480, %467 : vector<32x128xi1>, vector<32x128xi32>
    %c30 = arith.constant 30 : index
    %c0_214 = arith.constant 0 : index
    %c0_215 = arith.constant 0 : index
    %484 = vector.load %arg0[%c30, %c0_214, %c0_215] : memref<32x32x1xi32, #tpu.memory_space<vmem>>, vector<1x32x1xi32>
    %485 = vector.shape_cast %484 : vector<1x32x1xi32> to vector<32x1xi32>
    %c0_i32_216 = arith.constant 0 : i32
    %486 = vector.broadcast %c0_i32_216 : i32 to vector<32x1xi32>
    %487 = arith.cmpi sgt, %485, %486 : vector<32x1xi32>
    %c30_217 = arith.constant 30 : index
    %c0_218 = arith.constant 0 : index
    %488 = vector.load %arg1[%c30_217, %c0_218] : memref<32x128xi32, #tpu.memory_space<vmem>>, vector<1x128xi32>
    %c30_219 = arith.constant 30 : index
    %c0_220 = arith.constant 0 : index
    %489 = vector.load %arg2[%c30_219, %c0_220] : memref<32x128xi32, #tpu.memory_space<vmem>>, vector<1x128xi32>
    %490 = vector.broadcast %488 : vector<1x128xi32> to vector<32x128xi32>
    %491 = arith.minsi %478, %490 : vector<32x128xi32>
    %492 = vector.shape_cast %487 : vector<32x1xi1> to vector<32x1xi1>
    %493 = vector.broadcast %492 : vector<32x1xi1> to vector<32x128xi1>
    %494 = arith.select %493, %491, %478 : vector<32x128xi1>, vector<32x128xi32>
    %495 = vector.broadcast %489 : vector<1x128xi32> to vector<32x128xi32>
    %496 = arith.maxsi %483, %495 : vector<32x128xi32>
    %497 = vector.shape_cast %487 : vector<32x1xi1> to vector<32x1xi1>
    %498 = vector.broadcast %497 : vector<32x1xi1> to vector<32x128xi1>
    %499 = arith.select %498, %496, %483 : vector<32x128xi1>, vector<32x128xi32>
    %c31 = arith.constant 31 : index
    %c0_221 = arith.constant 0 : index
    %c0_222 = arith.constant 0 : index
    %500 = vector.load %arg0[%c31, %c0_221, %c0_222] : memref<32x32x1xi32, #tpu.memory_space<vmem>>, vector<1x32x1xi32>
    %501 = vector.shape_cast %500 : vector<1x32x1xi32> to vector<32x1xi32>
    %c0_i32_223 = arith.constant 0 : i32
    %502 = vector.broadcast %c0_i32_223 : i32 to vector<32x1xi32>
    %503 = arith.cmpi sgt, %501, %502 : vector<32x1xi32>
    %c31_224 = arith.constant 31 : index
    %c0_225 = arith.constant 0 : index
    %504 = vector.load %arg1[%c31_224, %c0_225] : memref<32x128xi32, #tpu.memory_space<vmem>>, vector<1x128xi32>
    %c31_226 = arith.constant 31 : index
    %c0_227 = arith.constant 0 : index
    %505 = vector.load %arg2[%c31_226, %c0_227] : memref<32x128xi32, #tpu.memory_space<vmem>>, vector<1x128xi32>
    %506 = vector.broadcast %504 : vector<1x128xi32> to vector<32x128xi32>
    %507 = arith.minsi %494, %506 : vector<32x128xi32>
    %508 = vector.shape_cast %503 : vector<32x1xi1> to vector<32x1xi1>
    %509 = vector.broadcast %508 : vector<32x1xi1> to vector<32x128xi1>
    %510 = arith.select %509, %507, %494 : vector<32x128xi1>, vector<32x128xi32>
    %511 = vector.broadcast %505 : vector<1x128xi32> to vector<32x128xi32>
    %512 = arith.maxsi %499, %511 : vector<32x128xi32>
    %513 = vector.shape_cast %503 : vector<32x1xi1> to vector<32x1xi1>
    %514 = vector.broadcast %513 : vector<32x1xi1> to vector<32x128xi1>
    %515 = arith.select %514, %512, %499 : vector<32x128xi1>, vector<32x128xi32>
    %c0_228 = arith.constant 0 : index
    %c0_229 = arith.constant 0 : index
    %516 = vector.load %arg9[%c0_228, %c0_229] : memref<32x128xi32, #tpu.memory_space<vmem>>, vector<32x128xi32>
    tpu.vector_store %arg9[%c0_228, %c0_229], %510 {strides = array<i32>} : memref<32x128xi32, #tpu.memory_space<vmem>>, vector<32x128xi32>,
    %517 = arith.trunci %515 : vector<32x128xi32> to vector<32x128xi8>
    %c0_230 = arith.constant 0 : index
    %c0_231 = arith.constant 0 : index
    %518 = vector.load %arg10[%c0_230, %c0_231] : memref<32x128xi8, #tpu.memory_space<vmem>>, vector<32x128xi8>
    tpu.vector_store %arg10[%c0_230, %c0_231], %517 {strides = array<i32>} : memref<32x128xi8, #tpu.memory_space<vmem>>, vector<32x128xi8>,
    %519 = arith.sitofp %515 : vector<32x128xi32> to vector<32x128xf32>
    %cst = arith.constant 0.000000e+00 : f32
    %520 = vector.broadcast %cst : f32 to vector<32x128xf32>
    %521 = arith.subf %520, %519 : vector<32x128xf32>
    %cst_232 = arith.constant 0.693147182 : f32
    %522 = vector.broadcast %cst_232 : f32 to vector<32x128xf32>
    %523 = arith.mulf %521, %522 : vector<32x128xf32>
    %524 = math.exp %523 : vector<32x128xf32>
    %cst_233 = arith.constant dense<0.000000e+00> : vector<32xf32>
    %525 = vector.multi_reduction <add>, %524, %cst_233 [1] : vector<32x128xf32> to vector<32xf32>
    %526 = vector.shape_cast %525 : vector<32xf32> to vector<32x1xf32>
    %527 = tpu.reciprocal %526 {approx = true} : vector<32x1xf32> -> vector<32x1xf32>
    %cst_234 = arith.constant 11718.9922 : f32
    %528 = vector.broadcast %cst_234 : f32 to vector<32x1xf32>
    %529 = arith.mulf %528, %527 : vector<32x1xf32>
    %c0_i32_235 = arith.constant 0 : i32
    %530 = vector.broadcast %c0_i32_235 : i32 to vector<32x128xi32>
    %531 = arith.cmpi eq, %515, %530 : vector<32x128xi32>
    %532 = arith.extui %531 : vector<32x128xi1> to vector<32x128xi32>
    %533 = arith.sitofp %532 : vector<32x128xi32> to vector<32x128xf32>
    %cst_236 = arith.constant dense<0.000000e+00> : vector<32xf32>
    %534 = vector.multi_reduction <add>, %533, %cst_236 [1] : vector<32x128xf32> to vector<32xf32>
    %535 = vector.shape_cast %534 : vector<32xf32> to vector<32x1xf32>
    %cst_237 = arith.constant 1.000000e+00 : f32
    %536 = vector.broadcast %cst_237 : f32 to vector<32x1xf32>
    %537 = arith.maximumf %535, %536 : vector<32x1xf32>
    %cst_238 = arith.constant 1.280000e+02 : f32
    %538 = vector.broadcast %cst_238 : f32 to vector<32x1xf32>
    %539 = arith.divf %538, %537 : vector<32x1xf32>
    %540 = math.log %539 : vector<32x1xf32>
    %cst_239 = arith.constant 1.280000e+02 : f32
    %541 = vector.broadcast %cst_239 : f32 to vector<32x1xf32>
    %542 = arith.mulf %541, %540 : vector<32x1xf32>
    %cst_240 = arith.constant 2.500000e+00 : f32
    %cst_241 = arith.constant 1.280000e+02 : f32
    %543 = arith.mulf %cst_240, %cst_241 : f32
    %544 = vector.broadcast %543 : f32 to vector<32x1xf32>
    %545 = arith.cmpf ole, %529, %544 : vector<32x1xf32>
    %cst_242 = arith.constant 0.000000e+00 : f32
    %546 = vector.broadcast %cst_242 : f32 to vector<32x1xf32>
    %547 = arith.cmpf ogt, %535, %546 : vector<32x1xf32>
    %548 = arith.andi %545, %547 : vector<32x1xi1>
    %549 = arith.select %548, %542, %529 : vector<32x1xi1>, vector<32x1xf32>
    %c0_243 = arith.constant 0 : index
    %c0_244 = arith.constant 0 : index
    %550 = vector.load %arg5[%c0_243, %c0_244] : memref<16x64xbf16, #tpu.memory_space<vmem>>, vector<16x64xbf16>
    %cst_245 = arith.constant dense<0.000000e+00> : vector<32x64xf32>
    %551 = tpu.matmul %1, %550, %cst_245 {dimension_numbers = #tpu.dot_dimension_numbers<[1], [0], [0], [1], [0, 0, 1, 1], [], []>} : vector<32x16xbf16>, vector<16x64xbf16>, vector<32x64xf32> -> vector<32x64xf32>
    %552 = arith.truncf %551 : vector<32x64xf32> to vector<32x64xbf16>
    %cst_246 = arith.constant dense<0.000000e+00> : vector<32x64xf32>
    %553 = tpu.matmul %0, %552, %cst_246 {dimension_numbers = #tpu.dot_dimension_numbers<[1], [0], [0], [1], [0, 0, 1, 1], [], []>} : vector<32x32xbf16>, vector<32x64xbf16>, vector<32x64xf32> -> vector<32x64xf32>
    %c0_247 = arith.constant 0 : index
    %c0_248 = arith.constant 0 : index
    %554 = vector.load %arg6[%c0_247, %c0_248] : memref<32x64xf32, #tpu.memory_space<vmem>>, vector<32x64xf32>
    %555 = arith.addf %553, %554 : vector<32x64xf32>
    %cst_249 = arith.constant 0.000000e+00 : f32
    %556 = vector.broadcast %cst_249 : f32 to vector<32x64xf32>
    %557 = arith.maximumf %555, %556 : vector<32x64xf32>
    %c0_250 = arith.constant 0 : index
    %c0_251 = arith.constant 0 : index
    %558 = vector.load %arg15[%c0_250, %c0_251] : memref<32x128xi32, #tpu.memory_space<vmem>>, vector<32x128xi32>
    tpu.vector_store %arg15[%c0_250, %c0_251], %515 {strides = array<i32>} : memref<32x128xi32, #tpu.memory_space<vmem>>, vector<32x128xi32>,
    %c2147483647_i32_252 = arith.constant 2147483647 : i32
    %559 = vector.broadcast %c2147483647_i32_252 : i32 to vector<32x128xi32>
    %c0_i32_253 = arith.constant 0 : i32
    %560 = vector.broadcast %c0_i32_253 : i32 to vector<32x128xi32>
    %c0_254 = arith.constant 0 : index
    %c0_255 = arith.constant 0 : index
    %c0_256 = arith.constant 0 : index
    %561 = vector.load %arg0[%c0_254, %c0_255, %c0_256] : memref<32x32x1xi32, #tpu.memory_space<vmem>>, vector<1x32x1xi32>
    %562 = vector.shape_cast %561 : vector<1x32x1xi32> to vector<32x1xi32>
    %c0_i32_257 = arith.constant 0 : i32
    %563 = vector.broadcast %c0_i32_257 : i32 to vector<32x1xi32>
    %564 = arith.cmpi sgt, %562, %563 : vector<32x1xi32>
    %c0_258 = arith.constant 0 : index
    %c0_259 = arith.constant 0 : index
    %565 = vector.load %arg9[%c0_258, %c0_259] : memref<32x128xi32, #tpu.memory_space<vmem>>, vector<1x128xi32>
    %c0_260 = arith.constant 0 : index
    %c0_261 = arith.constant 0 : index
    %566 = vector.load %arg15[%c0_260, %c0_261] : memref<32x128xi32, #tpu.memory_space<vmem>>, vector<1x128xi32>
    %567 = vector.broadcast %565 : vector<1x128xi32> to vector<32x128xi32>
    %568 = arith.minsi %559, %567 : vector<32x128xi32>
    %569 = vector.shape_cast %564 : vector<32x1xi1> to vector<32x1xi1>
    %570 = vector.broadcast %569 : vector<32x1xi1> to vector<32x128xi1>
    %571 = arith.select %570, %568, %559 : vector<32x128xi1>, vector<32x128xi32>
    %572 = vector.broadcast %566 : vector<1x128xi32> to vector<32x128xi32>
    %573 = arith.maxsi %560, %572 : vector<32x128xi32>
    %574 = vector.shape_cast %564 : vector<32x1xi1> to vector<32x1xi1>
    %575 = vector.broadcast %574 : vector<32x1xi1> to vector<32x128xi1>
    %576 = arith.select %575, %573, %560 : vector<32x128xi1>, vector<32x128xi32>
    %c1_262 = arith.constant 1 : index
    %c0_263 = arith.constant 0 : index
    %c0_264 = arith.constant 0 : index
    %577 = vector.load %arg0[%c1_262, %c0_263, %c0_264] : memref<32x32x1xi32, #tpu.memory_space<vmem>>, vector<1x32x1xi32>
    %578 = vector.shape_cast %577 : vector<1x32x1xi32> to vector<32x1xi32>
    %c0_i32_265 = arith.constant 0 : i32
    %579 = vector.broadcast %c0_i32_265 : i32 to vector<32x1xi32>
    %580 = arith.cmpi sgt, %578, %579 : vector<32x1xi32>
    %c1_266 = arith.constant 1 : index
    %c0_267 = arith.constant 0 : index
    %581 = vector.load %arg9[%c1_266, %c0_267] : memref<32x128xi32, #tpu.memory_space<vmem>>, vector<1x128xi32>
    %c1_268 = arith.constant 1 : index
    %c0_269 = arith.constant 0 : index
    %582 = vector.load %arg15[%c1_268, %c0_269] : memref<32x128xi32, #tpu.memory_space<vmem>>, vector<1x128xi32>
    %583 = vector.broadcast %581 : vector<1x128xi32> to vector<32x128xi32>
    %584 = arith.minsi %571, %583 : vector<32x128xi32>
    %585 = vector.shape_cast %580 : vector<32x1xi1> to vector<32x1xi1>
    %586 = vector.broadcast %585 : vector<32x1xi1> to vector<32x128xi1>
    %587 = arith.select %586, %584, %571 : vector<32x128xi1>, vector<32x128xi32>
    %588 = vector.broadcast %582 : vector<1x128xi32> to vector<32x128xi32>
    %589 = arith.maxsi %576, %588 : vector<32x128xi32>
    %590 = vector.shape_cast %580 : vector<32x1xi1> to vector<32x1xi1>
    %591 = vector.broadcast %590 : vector<32x1xi1> to vector<32x128xi1>
    %592 = arith.select %591, %589, %576 : vector<32x128xi1>, vector<32x128xi32>
    %c2_270 = arith.constant 2 : index
    %c0_271 = arith.constant 0 : index
    %c0_272 = arith.constant 0 : index
    %593 = vector.load %arg0[%c2_270, %c0_271, %c0_272] : memref<32x32x1xi32, #tpu.memory_space<vmem>>, vector<1x32x1xi32>
    %594 = vector.shape_cast %593 : vector<1x32x1xi32> to vector<32x1xi32>
    %c0_i32_273 = arith.constant 0 : i32
    %595 = vector.broadcast %c0_i32_273 : i32 to vector<32x1xi32>
    %596 = arith.cmpi sgt, %594, %595 : vector<32x1xi32>
    %c2_274 = arith.constant 2 : index
    %c0_275 = arith.constant 0 : index
    %597 = vector.load %arg9[%c2_274, %c0_275] : memref<32x128xi32, #tpu.memory_space<vmem>>, vector<1x128xi32>
    %c2_276 = arith.constant 2 : index
    %c0_277 = arith.constant 0 : index
    %598 = vector.load %arg15[%c2_276, %c0_277] : memref<32x128xi32, #tpu.memory_space<vmem>>, vector<1x128xi32>
    %599 = vector.broadcast %597 : vector<1x128xi32> to vector<32x128xi32>
    %600 = arith.minsi %587, %599 : vector<32x128xi32>
    %601 = vector.shape_cast %596 : vector<32x1xi1> to vector<32x1xi1>
    %602 = vector.broadcast %601 : vector<32x1xi1> to vector<32x128xi1>
    %603 = arith.select %602, %600, %587 : vector<32x128xi1>, vector<32x128xi32>
    %604 = vector.broadcast %598 : vector<1x128xi32> to vector<32x128xi32>
    %605 = arith.maxsi %592, %604 : vector<32x128xi32>
    %606 = vector.shape_cast %596 : vector<32x1xi1> to vector<32x1xi1>
    %607 = vector.broadcast %606 : vector<32x1xi1> to vector<32x128xi1>
    %608 = arith.select %607, %605, %592 : vector<32x128xi1>, vector<32x128xi32>
    %c3_278 = arith.constant 3 : index
    %c0_279 = arith.constant 0 : index
    %c0_280 = arith.constant 0 : index
    %609 = vector.load %arg0[%c3_278, %c0_279, %c0_280] : memref<32x32x1xi32, #tpu.memory_space<vmem>>, vector<1x32x1xi32>
    %610 = vector.shape_cast %609 : vector<1x32x1xi32> to vector<32x1xi32>
    %c0_i32_281 = arith.constant 0 : i32
    %611 = vector.broadcast %c0_i32_281 : i32 to vector<32x1xi32>
    %612 = arith.cmpi sgt, %610, %611 : vector<32x1xi32>
    %c3_282 = arith.constant 3 : index
    %c0_283 = arith.constant 0 : index
    %613 = vector.load %arg9[%c3_282, %c0_283] : memref<32x128xi32, #tpu.memory_space<vmem>>, vector<1x128xi32>
    %c3_284 = arith.constant 3 : index
    %c0_285 = arith.constant 0 : index
    %614 = vector.load %arg15[%c3_284, %c0_285] : memref<32x128xi32, #tpu.memory_space<vmem>>, vector<1x128xi32>
    %615 = vector.broadcast %613 : vector<1x128xi32> to vector<32x128xi32>
    %616 = arith.minsi %603, %615 : vector<32x128xi32>
    %617 = vector.shape_cast %612 : vector<32x1xi1> to vector<32x1xi1>
    %618 = vector.broadcast %617 : vector<32x1xi1> to vector<32x128xi1>
    %619 = arith.select %618, %616, %603 : vector<32x128xi1>, vector<32x128xi32>
    %620 = vector.broadcast %614 : vector<1x128xi32> to vector<32x128xi32>
    %621 = arith.maxsi %608, %620 : vector<32x128xi32>
    %622 = vector.shape_cast %612 : vector<32x1xi1> to vector<32x1xi1>
    %623 = vector.broadcast %622 : vector<32x1xi1> to vector<32x128xi1>
    %624 = arith.select %623, %621, %608 : vector<32x128xi1>, vector<32x128xi32>
    %c4_286 = arith.constant 4 : index
    %c0_287 = arith.constant 0 : index
    %c0_288 = arith.constant 0 : index
    %625 = vector.load %arg0[%c4_286, %c0_287, %c0_288] : memref<32x32x1xi32, #tpu.memory_space<vmem>>, vector<1x32x1xi32>
    %626 = vector.shape_cast %625 : vector<1x32x1xi32> to vector<32x1xi32>
    %c0_i32_289 = arith.constant 0 : i32
    %627 = vector.broadcast %c0_i32_289 : i32 to vector<32x1xi32>
    %628 = arith.cmpi sgt, %626, %627 : vector<32x1xi32>
    %c4_290 = arith.constant 4 : index
    %c0_291 = arith.constant 0 : index
    %629 = vector.load %arg9[%c4_290, %c0_291] : memref<32x128xi32, #tpu.memory_space<vmem>>, vector<1x128xi32>
    %c4_292 = arith.constant 4 : index
    %c0_293 = arith.constant 0 : index
    %630 = vector.load %arg15[%c4_292, %c0_293] : memref<32x128xi32, #tpu.memory_space<vmem>>, vector<1x128xi32>
    %631 = vector.broadcast %629 : vector<1x128xi32> to vector<32x128xi32>
    %632 = arith.minsi %619, %631 : vector<32x128xi32>
    %633 = vector.shape_cast %628 : vector<32x1xi1> to vector<32x1xi1>
    %634 = vector.broadcast %633 : vector<32x1xi1> to vector<32x128xi1>
    %635 = arith.select %634, %632, %619 : vector<32x128xi1>, vector<32x128xi32>
    %636 = vector.broadcast %630 : vector<1x128xi32> to vector<32x128xi32>
    %637 = arith.maxsi %624, %636 : vector<32x128xi32>
    %638 = vector.shape_cast %628 : vector<32x1xi1> to vector<32x1xi1>
    %639 = vector.broadcast %638 : vector<32x1xi1> to vector<32x128xi1>
    %640 = arith.select %639, %637, %624 : vector<32x128xi1>, vector<32x128xi32>
    %c5_294 = arith.constant 5 : index
    %c0_295 = arith.constant 0 : index
    %c0_296 = arith.constant 0 : index
    %641 = vector.load %arg0[%c5_294, %c0_295, %c0_296] : memref<32x32x1xi32, #tpu.memory_space<vmem>>, vector<1x32x1xi32>
    %642 = vector.shape_cast %641 : vector<1x32x1xi32> to vector<32x1xi32>
    %c0_i32_297 = arith.constant 0 : i32
    %643 = vector.broadcast %c0_i32_297 : i32 to vector<32x1xi32>
    %644 = arith.cmpi sgt, %642, %643 : vector<32x1xi32>
    %c5_298 = arith.constant 5 : index
    %c0_299 = arith.constant 0 : index
    %645 = vector.load %arg9[%c5_298, %c0_299] : memref<32x128xi32, #tpu.memory_space<vmem>>, vector<1x128xi32>
    %c5_300 = arith.constant 5 : index
    %c0_301 = arith.constant 0 : index
    %646 = vector.load %arg15[%c5_300, %c0_301] : memref<32x128xi32, #tpu.memory_space<vmem>>, vector<1x128xi32>
    %647 = vector.broadcast %645 : vector<1x128xi32> to vector<32x128xi32>
    %648 = arith.minsi %635, %647 : vector<32x128xi32>
    %649 = vector.shape_cast %644 : vector<32x1xi1> to vector<32x1xi1>
    %650 = vector.broadcast %649 : vector<32x1xi1> to vector<32x128xi1>
    %651 = arith.select %650, %648, %635 : vector<32x128xi1>, vector<32x128xi32>
    %652 = vector.broadcast %646 : vector<1x128xi32> to vector<32x128xi32>
    %653 = arith.maxsi %640, %652 : vector<32x128xi32>
    %654 = vector.shape_cast %644 : vector<32x1xi1> to vector<32x1xi1>
    %655 = vector.broadcast %654 : vector<32x1xi1> to vector<32x128xi1>
    %656 = arith.select %655, %653, %640 : vector<32x128xi1>, vector<32x128xi32>
    %c6_302 = arith.constant 6 : index
    %c0_303 = arith.constant 0 : index
    %c0_304 = arith.constant 0 : index
    %657 = vector.load %arg0[%c6_302, %c0_303, %c0_304] : memref<32x32x1xi32, #tpu.memory_space<vmem>>, vector<1x32x1xi32>
    %658 = vector.shape_cast %657 : vector<1x32x1xi32> to vector<32x1xi32>
    %c0_i32_305 = arith.constant 0 : i32
    %659 = vector.broadcast %c0_i32_305 : i32 to vector<32x1xi32>
    %660 = arith.cmpi sgt, %658, %659 : vector<32x1xi32>
    %c6_306 = arith.constant 6 : index
    %c0_307 = arith.constant 0 : index
    %661 = vector.load %arg9[%c6_306, %c0_307] : memref<32x128xi32, #tpu.memory_space<vmem>>, vector<1x128xi32>
    %c6_308 = arith.constant 6 : index
    %c0_309 = arith.constant 0 : index
    %662 = vector.load %arg15[%c6_308, %c0_309] : memref<32x128xi32, #tpu.memory_space<vmem>>, vector<1x128xi32>
    %663 = vector.broadcast %661 : vector<1x128xi32> to vector<32x128xi32>
    %664 = arith.minsi %651, %663 : vector<32x128xi32>
    %665 = vector.shape_cast %660 : vector<32x1xi1> to vector<32x1xi1>
    %666 = vector.broadcast %665 : vector<32x1xi1> to vector<32x128xi1>
    %667 = arith.select %666, %664, %651 : vector<32x128xi1>, vector<32x128xi32>
    %668 = vector.broadcast %662 : vector<1x128xi32> to vector<32x128xi32>
    %669 = arith.maxsi %656, %668 : vector<32x128xi32>
    %670 = vector.shape_cast %660 : vector<32x1xi1> to vector<32x1xi1>
    %671 = vector.broadcast %670 : vector<32x1xi1> to vector<32x128xi1>
    %672 = arith.select %671, %669, %656 : vector<32x128xi1>, vector<32x128xi32>
    %c7_310 = arith.constant 7 : index
    %c0_311 = arith.constant 0 : index
    %c0_312 = arith.constant 0 : index
    %673 = vector.load %arg0[%c7_310, %c0_311, %c0_312] : memref<32x32x1xi32, #tpu.memory_space<vmem>>, vector<1x32x1xi32>
    %674 = vector.shape_cast %673 : vector<1x32x1xi32> to vector<32x1xi32>
    %c0_i32_313 = arith.constant 0 : i32
    %675 = vector.broadcast %c0_i32_313 : i32 to vector<32x1xi32>
    %676 = arith.cmpi sgt, %674, %675 : vector<32x1xi32>
    %c7_314 = arith.constant 7 : index
    %c0_315 = arith.constant 0 : index
    %677 = vector.load %arg9[%c7_314, %c0_315] : memref<32x128xi32, #tpu.memory_space<vmem>>, vector<1x128xi32>
    %c7_316 = arith.constant 7 : index
    %c0_317 = arith.constant 0 : index
    %678 = vector.load %arg15[%c7_316, %c0_317] : memref<32x128xi32, #tpu.memory_space<vmem>>, vector<1x128xi32>
    %679 = vector.broadcast %677 : vector<1x128xi32> to vector<32x128xi32>
    %680 = arith.minsi %667, %679 : vector<32x128xi32>
    %681 = vector.shape_cast %676 : vector<32x1xi1> to vector<32x1xi1>
    %682 = vector.broadcast %681 : vector<32x1xi1> to vector<32x128xi1>
    %683 = arith.select %682, %680, %667 : vector<32x128xi1>, vector<32x128xi32>
    %684 = vector.broadcast %678 : vector<1x128xi32> to vector<32x128xi32>
    %685 = arith.maxsi %672, %684 : vector<32x128xi32>
    %686 = vector.shape_cast %676 : vector<32x1xi1> to vector<32x1xi1>
    %687 = vector.broadcast %686 : vector<32x1xi1> to vector<32x128xi1>
    %688 = arith.select %687, %685, %672 : vector<32x128xi1>, vector<32x128xi32>
    %c8_318 = arith.constant 8 : index
    %c0_319 = arith.constant 0 : index
    %c0_320 = arith.constant 0 : index
    %689 = vector.load %arg0[%c8_318, %c0_319, %c0_320] : memref<32x32x1xi32, #tpu.memory_space<vmem>>, vector<1x32x1xi32>
    %690 = vector.shape_cast %689 : vector<1x32x1xi32> to vector<32x1xi32>
    %c0_i32_321 = arith.constant 0 : i32
    %691 = vector.broadcast %c0_i32_321 : i32 to vector<32x1xi32>
    %692 = arith.cmpi sgt, %690, %691 : vector<32x1xi32>
    %c8_322 = arith.constant 8 : index
    %c0_323 = arith.constant 0 : index
    %693 = vector.load %arg9[%c8_322, %c0_323] : memref<32x128xi32, #tpu.memory_space<vmem>>, vector<1x128xi32>
    %c8_324 = arith.constant 8 : index
    %c0_325 = arith.constant 0 : index
    %694 = vector.load %arg15[%c8_324, %c0_325] : memref<32x128xi32, #tpu.memory_space<vmem>>, vector<1x128xi32>
    %695 = vector.broadcast %693 : vector<1x128xi32> to vector<32x128xi32>
    %696 = arith.minsi %683, %695 : vector<32x128xi32>
    %697 = vector.shape_cast %692 : vector<32x1xi1> to vector<32x1xi1>
    %698 = vector.broadcast %697 : vector<32x1xi1> to vector<32x128xi1>
    %699 = arith.select %698, %696, %683 : vector<32x128xi1>, vector<32x128xi32>
    %700 = vector.broadcast %694 : vector<1x128xi32> to vector<32x128xi32>
    %701 = arith.maxsi %688, %700 : vector<32x128xi32>
    %702 = vector.shape_cast %692 : vector<32x1xi1> to vector<32x1xi1>
    %703 = vector.broadcast %702 : vector<32x1xi1> to vector<32x128xi1>
    %704 = arith.select %703, %701, %688 : vector<32x128xi1>, vector<32x128xi32>
    %c9_326 = arith.constant 9 : index
    %c0_327 = arith.constant 0 : index
    %c0_328 = arith.constant 0 : index
    %705 = vector.load %arg0[%c9_326, %c0_327, %c0_328] : memref<32x32x1xi32, #tpu.memory_space<vmem>>, vector<1x32x1xi32>
    %706 = vector.shape_cast %705 : vector<1x32x1xi32> to vector<32x1xi32>
    %c0_i32_329 = arith.constant 0 : i32
    %707 = vector.broadcast %c0_i32_329 : i32 to vector<32x1xi32>
    %708 = arith.cmpi sgt, %706, %707 : vector<32x1xi32>
    %c9_330 = arith.constant 9 : index
    %c0_331 = arith.constant 0 : index
    %709 = vector.load %arg9[%c9_330, %c0_331] : memref<32x128xi32, #tpu.memory_space<vmem>>, vector<1x128xi32>
    %c9_332 = arith.constant 9 : index
    %c0_333 = arith.constant 0 : index
    %710 = vector.load %arg15[%c9_332, %c0_333] : memref<32x128xi32, #tpu.memory_space<vmem>>, vector<1x128xi32>
    %711 = vector.broadcast %709 : vector<1x128xi32> to vector<32x128xi32>
    %712 = arith.minsi %699, %711 : vector<32x128xi32>
    %713 = vector.shape_cast %708 : vector<32x1xi1> to vector<32x1xi1>
    %714 = vector.broadcast %713 : vector<32x1xi1> to vector<32x128xi1>
    %715 = arith.select %714, %712, %699 : vector<32x128xi1>, vector<32x128xi32>
    %716 = vector.broadcast %710 : vector<1x128xi32> to vector<32x128xi32>
    %717 = arith.maxsi %704, %716 : vector<32x128xi32>
    %718 = vector.shape_cast %708 : vector<32x1xi1> to vector<32x1xi1>
    %719 = vector.broadcast %718 : vector<32x1xi1> to vector<32x128xi1>
    %720 = arith.select %719, %717, %704 : vector<32x128xi1>, vector<32x128xi32>
    %c10_334 = arith.constant 10 : index
    %c0_335 = arith.constant 0 : index
    %c0_336 = arith.constant 0 : index
    %721 = vector.load %arg0[%c10_334, %c0_335, %c0_336] : memref<32x32x1xi32, #tpu.memory_space<vmem>>, vector<1x32x1xi32>
    %722 = vector.shape_cast %721 : vector<1x32x1xi32> to vector<32x1xi32>
    %c0_i32_337 = arith.constant 0 : i32
    %723 = vector.broadcast %c0_i32_337 : i32 to vector<32x1xi32>
    %724 = arith.cmpi sgt, %722, %723 : vector<32x1xi32>
    %c10_338 = arith.constant 10 : index
    %c0_339 = arith.constant 0 : index
    %725 = vector.load %arg9[%c10_338, %c0_339] : memref<32x128xi32, #tpu.memory_space<vmem>>, vector<1x128xi32>
    %c10_340 = arith.constant 10 : index
    %c0_341 = arith.constant 0 : index
    %726 = vector.load %arg15[%c10_340, %c0_341] : memref<32x128xi32, #tpu.memory_space<vmem>>, vector<1x128xi32>
    %727 = vector.broadcast %725 : vector<1x128xi32> to vector<32x128xi32>
    %728 = arith.minsi %715, %727 : vector<32x128xi32>
    %729 = vector.shape_cast %724 : vector<32x1xi1> to vector<32x1xi1>
    %730 = vector.broadcast %729 : vector<32x1xi1> to vector<32x128xi1>
    %731 = arith.select %730, %728, %715 : vector<32x128xi1>, vector<32x128xi32>
    %732 = vector.broadcast %726 : vector<1x128xi32> to vector<32x128xi32>
    %733 = arith.maxsi %720, %732 : vector<32x128xi32>
    %734 = vector.shape_cast %724 : vector<32x1xi1> to vector<32x1xi1>
    %735 = vector.broadcast %734 : vector<32x1xi1> to vector<32x128xi1>
    %736 = arith.select %735, %733, %720 : vector<32x128xi1>, vector<32x128xi32>
    %c11_342 = arith.constant 11 : index
    %c0_343 = arith.constant 0 : index
    %c0_344 = arith.constant 0 : index
    %737 = vector.load %arg0[%c11_342, %c0_343, %c0_344] : memref<32x32x1xi32, #tpu.memory_space<vmem>>, vector<1x32x1xi32>
    %738 = vector.shape_cast %737 : vector<1x32x1xi32> to vector<32x1xi32>
    %c0_i32_345 = arith.constant 0 : i32
    %739 = vector.broadcast %c0_i32_345 : i32 to vector<32x1xi32>
    %740 = arith.cmpi sgt, %738, %739 : vector<32x1xi32>
    %c11_346 = arith.constant 11 : index
    %c0_347 = arith.constant 0 : index
    %741 = vector.load %arg9[%c11_346, %c0_347] : memref<32x128xi32, #tpu.memory_space<vmem>>, vector<1x128xi32>
    %c11_348 = arith.constant 11 : index
    %c0_349 = arith.constant 0 : index
    %742 = vector.load %arg15[%c11_348, %c0_349] : memref<32x128xi32, #tpu.memory_space<vmem>>, vector<1x128xi32>
    %743 = vector.broadcast %741 : vector<1x128xi32> to vector<32x128xi32>
    %744 = arith.minsi %731, %743 : vector<32x128xi32>
    %745 = vector.shape_cast %740 : vector<32x1xi1> to vector<32x1xi1>
    %746 = vector.broadcast %745 : vector<32x1xi1> to vector<32x128xi1>
    %747 = arith.select %746, %744, %731 : vector<32x128xi1>, vector<32x128xi32>
    %748 = vector.broadcast %742 : vector<1x128xi32> to vector<32x128xi32>
    %749 = arith.maxsi %736, %748 : vector<32x128xi32>
    %750 = vector.shape_cast %740 : vector<32x1xi1> to vector<32x1xi1>
    %751 = vector.broadcast %750 : vector<32x1xi1> to vector<32x128xi1>
    %752 = arith.select %751, %749, %736 : vector<32x128xi1>, vector<32x128xi32>
    %c12_350 = arith.constant 12 : index
    %c0_351 = arith.constant 0 : index
    %c0_352 = arith.constant 0 : index
    %753 = vector.load %arg0[%c12_350, %c0_351, %c0_352] : memref<32x32x1xi32, #tpu.memory_space<vmem>>, vector<1x32x1xi32>
    %754 = vector.shape_cast %753 : vector<1x32x1xi32> to vector<32x1xi32>
    %c0_i32_353 = arith.constant 0 : i32
    %755 = vector.broadcast %c0_i32_353 : i32 to vector<32x1xi32>
    %756 = arith.cmpi sgt, %754, %755 : vector<32x1xi32>
    %c12_354 = arith.constant 12 : index
    %c0_355 = arith.constant 0 : index
    %757 = vector.load %arg9[%c12_354, %c0_355] : memref<32x128xi32, #tpu.memory_space<vmem>>, vector<1x128xi32>
    %c12_356 = arith.constant 12 : index
    %c0_357 = arith.constant 0 : index
    %758 = vector.load %arg15[%c12_356, %c0_357] : memref<32x128xi32, #tpu.memory_space<vmem>>, vector<1x128xi32>
    %759 = vector.broadcast %757 : vector<1x128xi32> to vector<32x128xi32>
    %760 = arith.minsi %747, %759 : vector<32x128xi32>
    %761 = vector.shape_cast %756 : vector<32x1xi1> to vector<32x1xi1>
    %762 = vector.broadcast %761 : vector<32x1xi1> to vector<32x128xi1>
    %763 = arith.select %762, %760, %747 : vector<32x128xi1>, vector<32x128xi32>
    %764 = vector.broadcast %758 : vector<1x128xi32> to vector<32x128xi32>
    %765 = arith.maxsi %752, %764 : vector<32x128xi32>
    %766 = vector.shape_cast %756 : vector<32x1xi1> to vector<32x1xi1>
    %767 = vector.broadcast %766 : vector<32x1xi1> to vector<32x128xi1>
    %768 = arith.select %767, %765, %752 : vector<32x128xi1>, vector<32x128xi32>
    %c13_358 = arith.constant 13 : index
    %c0_359 = arith.constant 0 : index
    %c0_360 = arith.constant 0 : index
    %769 = vector.load %arg0[%c13_358, %c0_359, %c0_360] : memref<32x32x1xi32, #tpu.memory_space<vmem>>, vector<1x32x1xi32>
    %770 = vector.shape_cast %769 : vector<1x32x1xi32> to vector<32x1xi32>
    %c0_i32_361 = arith.constant 0 : i32
    %771 = vector.broadcast %c0_i32_361 : i32 to vector<32x1xi32>
    %772 = arith.cmpi sgt, %770, %771 : vector<32x1xi32>
    %c13_362 = arith.constant 13 : index
    %c0_363 = arith.constant 0 : index
    %773 = vector.load %arg9[%c13_362, %c0_363] : memref<32x128xi32, #tpu.memory_space<vmem>>, vector<1x128xi32>
    %c13_364 = arith.constant 13 : index
    %c0_365 = arith.constant 0 : index
    %774 = vector.load %arg15[%c13_364, %c0_365] : memref<32x128xi32, #tpu.memory_space<vmem>>, vector<1x128xi32>
    %775 = vector.broadcast %773 : vector<1x128xi32> to vector<32x128xi32>
    %776 = arith.minsi %763, %775 : vector<32x128xi32>
    %777 = vector.shape_cast %772 : vector<32x1xi1> to vector<32x1xi1>
    %778 = vector.broadcast %777 : vector<32x1xi1> to vector<32x128xi1>
    %779 = arith.select %778, %776, %763 : vector<32x128xi1>, vector<32x128xi32>
    %780 = vector.broadcast %774 : vector<1x128xi32> to vector<32x128xi32>
    %781 = arith.maxsi %768, %780 : vector<32x128xi32>
    %782 = vector.shape_cast %772 : vector<32x1xi1> to vector<32x1xi1>
    %783 = vector.broadcast %782 : vector<32x1xi1> to vector<32x128xi1>
    %784 = arith.select %783, %781, %768 : vector<32x128xi1>, vector<32x128xi32>
    %c14_366 = arith.constant 14 : index
    %c0_367 = arith.constant 0 : index
    %c0_368 = arith.constant 0 : index
    %785 = vector.load %arg0[%c14_366, %c0_367, %c0_368] : memref<32x32x1xi32, #tpu.memory_space<vmem>>, vector<1x32x1xi32>
    %786 = vector.shape_cast %785 : vector<1x32x1xi32> to vector<32x1xi32>
    %c0_i32_369 = arith.constant 0 : i32
    %787 = vector.broadcast %c0_i32_369 : i32 to vector<32x1xi32>
    %788 = arith.cmpi sgt, %786, %787 : vector<32x1xi32>
    %c14_370 = arith.constant 14 : index
    %c0_371 = arith.constant 0 : index
    %789 = vector.load %arg9[%c14_370, %c0_371] : memref<32x128xi32, #tpu.memory_space<vmem>>, vector<1x128xi32>
    %c14_372 = arith.constant 14 : index
    %c0_373 = arith.constant 0 : index
    %790 = vector.load %arg15[%c14_372, %c0_373] : memref<32x128xi32, #tpu.memory_space<vmem>>, vector<1x128xi32>
    %791 = vector.broadcast %789 : vector<1x128xi32> to vector<32x128xi32>
    %792 = arith.minsi %779, %791 : vector<32x128xi32>
    %793 = vector.shape_cast %788 : vector<32x1xi1> to vector<32x1xi1>
    %794 = vector.broadcast %793 : vector<32x1xi1> to vector<32x128xi1>
    %795 = arith.select %794, %792, %779 : vector<32x128xi1>, vector<32x128xi32>
    %796 = vector.broadcast %790 : vector<1x128xi32> to vector<32x128xi32>
    %797 = arith.maxsi %784, %796 : vector<32x128xi32>
    %798 = vector.shape_cast %788 : vector<32x1xi1> to vector<32x1xi1>
    %799 = vector.broadcast %798 : vector<32x1xi1> to vector<32x128xi1>
    %800 = arith.select %799, %797, %784 : vector<32x128xi1>, vector<32x128xi32>
    %c15_374 = arith.constant 15 : index
    %c0_375 = arith.constant 0 : index
    %c0_376 = arith.constant 0 : index
    %801 = vector.load %arg0[%c15_374, %c0_375, %c0_376] : memref<32x32x1xi32, #tpu.memory_space<vmem>>, vector<1x32x1xi32>
    %802 = vector.shape_cast %801 : vector<1x32x1xi32> to vector<32x1xi32>
    %c0_i32_377 = arith.constant 0 : i32
    %803 = vector.broadcast %c0_i32_377 : i32 to vector<32x1xi32>
    %804 = arith.cmpi sgt, %802, %803 : vector<32x1xi32>
    %c15_378 = arith.constant 15 : index
    %c0_379 = arith.constant 0 : index
    %805 = vector.load %arg9[%c15_378, %c0_379] : memref<32x128xi32, #tpu.memory_space<vmem>>, vector<1x128xi32>
    %c15_380 = arith.constant 15 : index
    %c0_381 = arith.constant 0 : index
    %806 = vector.load %arg15[%c15_380, %c0_381] : memref<32x128xi32, #tpu.memory_space<vmem>>, vector<1x128xi32>
    %807 = vector.broadcast %805 : vector<1x128xi32> to vector<32x128xi32>
    %808 = arith.minsi %795, %807 : vector<32x128xi32>
    %809 = vector.shape_cast %804 : vector<32x1xi1> to vector<32x1xi1>
    %810 = vector.broadcast %809 : vector<32x1xi1> to vector<32x128xi1>
    %811 = arith.select %810, %808, %795 : vector<32x128xi1>, vector<32x128xi32>
    %812 = vector.broadcast %806 : vector<1x128xi32> to vector<32x128xi32>
    %813 = arith.maxsi %800, %812 : vector<32x128xi32>
    %814 = vector.shape_cast %804 : vector<32x1xi1> to vector<32x1xi1>
    %815 = vector.broadcast %814 : vector<32x1xi1> to vector<32x128xi1>
    %816 = arith.select %815, %813, %800 : vector<32x128xi1>, vector<32x128xi32>
    %c16_382 = arith.constant 16 : index
    %c0_383 = arith.constant 0 : index
    %c0_384 = arith.constant 0 : index
    %817 = vector.load %arg0[%c16_382, %c0_383, %c0_384] : memref<32x32x1xi32, #tpu.memory_space<vmem>>, vector<1x32x1xi32>
    %818 = vector.shape_cast %817 : vector<1x32x1xi32> to vector<32x1xi32>
    %c0_i32_385 = arith.constant 0 : i32
    %819 = vector.broadcast %c0_i32_385 : i32 to vector<32x1xi32>
    %820 = arith.cmpi sgt, %818, %819 : vector<32x1xi32>
    %c16_386 = arith.constant 16 : index
    %c0_387 = arith.constant 0 : index
    %821 = vector.load %arg9[%c16_386, %c0_387] : memref<32x128xi32, #tpu.memory_space<vmem>>, vector<1x128xi32>
    %c16_388 = arith.constant 16 : index
    %c0_389 = arith.constant 0 : index
    %822 = vector.load %arg15[%c16_388, %c0_389] : memref<32x128xi32, #tpu.memory_space<vmem>>, vector<1x128xi32>
    %823 = vector.broadcast %821 : vector<1x128xi32> to vector<32x128xi32>
    %824 = arith.minsi %811, %823 : vector<32x128xi32>
    %825 = vector.shape_cast %820 : vector<32x1xi1> to vector<32x1xi1>
    %826 = vector.broadcast %825 : vector<32x1xi1> to vector<32x128xi1>
    %827 = arith.select %826, %824, %811 : vector<32x128xi1>, vector<32x128xi32>
    %828 = vector.broadcast %822 : vector<1x128xi32> to vector<32x128xi32>
    %829 = arith.maxsi %816, %828 : vector<32x128xi32>
    %830 = vector.shape_cast %820 : vector<32x1xi1> to vector<32x1xi1>
    %831 = vector.broadcast %830 : vector<32x1xi1> to vector<32x128xi1>
    %832 = arith.select %831, %829, %816 : vector<32x128xi1>, vector<32x128xi32>
    %c17_390 = arith.constant 17 : index
    %c0_391 = arith.constant 0 : index
    %c0_392 = arith.constant 0 : index
    %833 = vector.load %arg0[%c17_390, %c0_391, %c0_392] : memref<32x32x1xi32, #tpu.memory_space<vmem>>, vector<1x32x1xi32>
    %834 = vector.shape_cast %833 : vector<1x32x1xi32> to vector<32x1xi32>
    %c0_i32_393 = arith.constant 0 : i32
    %835 = vector.broadcast %c0_i32_393 : i32 to vector<32x1xi32>
    %836 = arith.cmpi sgt, %834, %835 : vector<32x1xi32>
    %c17_394 = arith.constant 17 : index
    %c0_395 = arith.constant 0 : index
    %837 = vector.load %arg9[%c17_394, %c0_395] : memref<32x128xi32, #tpu.memory_space<vmem>>, vector<1x128xi32>
    %c17_396 = arith.constant 17 : index
    %c0_397 = arith.constant 0 : index
    %838 = vector.load %arg15[%c17_396, %c0_397] : memref<32x128xi32, #tpu.memory_space<vmem>>, vector<1x128xi32>
    %839 = vector.broadcast %837 : vector<1x128xi32> to vector<32x128xi32>
    %840 = arith.minsi %827, %839 : vector<32x128xi32>
    %841 = vector.shape_cast %836 : vector<32x1xi1> to vector<32x1xi1>
    %842 = vector.broadcast %841 : vector<32x1xi1> to vector<32x128xi1>
    %843 = arith.select %842, %840, %827 : vector<32x128xi1>, vector<32x128xi32>
    %844 = vector.broadcast %838 : vector<1x128xi32> to vector<32x128xi32>
    %845 = arith.maxsi %832, %844 : vector<32x128xi32>
    %846 = vector.shape_cast %836 : vector<32x1xi1> to vector<32x1xi1>
    %847 = vector.broadcast %846 : vector<32x1xi1> to vector<32x128xi1>
    %848 = arith.select %847, %845, %832 : vector<32x128xi1>, vector<32x128xi32>
    %c18_398 = arith.constant 18 : index
    %c0_399 = arith.constant 0 : index
    %c0_400 = arith.constant 0 : index
    %849 = vector.load %arg0[%c18_398, %c0_399, %c0_400] : memref<32x32x1xi32, #tpu.memory_space<vmem>>, vector<1x32x1xi32>
    %850 = vector.shape_cast %849 : vector<1x32x1xi32> to vector<32x1xi32>
    %c0_i32_401 = arith.constant 0 : i32
    %851 = vector.broadcast %c0_i32_401 : i32 to vector<32x1xi32>
    %852 = arith.cmpi sgt, %850, %851 : vector<32x1xi32>
    %c18_402 = arith.constant 18 : index
    %c0_403 = arith.constant 0 : index
    %853 = vector.load %arg9[%c18_402, %c0_403] : memref<32x128xi32, #tpu.memory_space<vmem>>, vector<1x128xi32>
    %c18_404 = arith.constant 18 : index
    %c0_405 = arith.constant 0 : index
    %854 = vector.load %arg15[%c18_404, %c0_405] : memref<32x128xi32, #tpu.memory_space<vmem>>, vector<1x128xi32>
    %855 = vector.broadcast %853 : vector<1x128xi32> to vector<32x128xi32>
    %856 = arith.minsi %843, %855 : vector<32x128xi32>
    %857 = vector.shape_cast %852 : vector<32x1xi1> to vector<32x1xi1>
    %858 = vector.broadcast %857 : vector<32x1xi1> to vector<32x128xi1>
    %859 = arith.select %858, %856, %843 : vector<32x128xi1>, vector<32x128xi32>
    %860 = vector.broadcast %854 : vector<1x128xi32> to vector<32x128xi32>
    %861 = arith.maxsi %848, %860 : vector<32x128xi32>
    %862 = vector.shape_cast %852 : vector<32x1xi1> to vector<32x1xi1>
    %863 = vector.broadcast %862 : vector<32x1xi1> to vector<32x128xi1>
    %864 = arith.select %863, %861, %848 : vector<32x128xi1>, vector<32x128xi32>
    %c19_406 = arith.constant 19 : index
    %c0_407 = arith.constant 0 : index
    %c0_408 = arith.constant 0 : index
    %865 = vector.load %arg0[%c19_406, %c0_407, %c0_408] : memref<32x32x1xi32, #tpu.memory_space<vmem>>, vector<1x32x1xi32>
    %866 = vector.shape_cast %865 : vector<1x32x1xi32> to vector<32x1xi32>
    %c0_i32_409 = arith.constant 0 : i32
    %867 = vector.broadcast %c0_i32_409 : i32 to vector<32x1xi32>
    %868 = arith.cmpi sgt, %866, %867 : vector<32x1xi32>
    %c19_410 = arith.constant 19 : index
    %c0_411 = arith.constant 0 : index
    %869 = vector.load %arg9[%c19_410, %c0_411] : memref<32x128xi32, #tpu.memory_space<vmem>>, vector<1x128xi32>
    %c19_412 = arith.constant 19 : index
    %c0_413 = arith.constant 0 : index
    %870 = vector.load %arg15[%c19_412, %c0_413] : memref<32x128xi32, #tpu.memory_space<vmem>>, vector<1x128xi32>
    %871 = vector.broadcast %869 : vector<1x128xi32> to vector<32x128xi32>
    %872 = arith.minsi %859, %871 : vector<32x128xi32>
    %873 = vector.shape_cast %868 : vector<32x1xi1> to vector<32x1xi1>
    %874 = vector.broadcast %873 : vector<32x1xi1> to vector<32x128xi1>
    %875 = arith.select %874, %872, %859 : vector<32x128xi1>, vector<32x128xi32>
    %876 = vector.broadcast %870 : vector<1x128xi32> to vector<32x128xi32>
    %877 = arith.maxsi %864, %876 : vector<32x128xi32>
    %878 = vector.shape_cast %868 : vector<32x1xi1> to vector<32x1xi1>
    %879 = vector.broadcast %878 : vector<32x1xi1> to vector<32x128xi1>
    %880 = arith.select %879, %877, %864 : vector<32x128xi1>, vector<32x128xi32>
    %c20_414 = arith.constant 20 : index
    %c0_415 = arith.constant 0 : index
    %c0_416 = arith.constant 0 : index
    %881 = vector.load %arg0[%c20_414, %c0_415, %c0_416] : memref<32x32x1xi32, #tpu.memory_space<vmem>>, vector<1x32x1xi32>
    %882 = vector.shape_cast %881 : vector<1x32x1xi32> to vector<32x1xi32>
    %c0_i32_417 = arith.constant 0 : i32
    %883 = vector.broadcast %c0_i32_417 : i32 to vector<32x1xi32>
    %884 = arith.cmpi sgt, %882, %883 : vector<32x1xi32>
    %c20_418 = arith.constant 20 : index
    %c0_419 = arith.constant 0 : index
    %885 = vector.load %arg9[%c20_418, %c0_419] : memref<32x128xi32, #tpu.memory_space<vmem>>, vector<1x128xi32>
    %c20_420 = arith.constant 20 : index
    %c0_421 = arith.constant 0 : index
    %886 = vector.load %arg15[%c20_420, %c0_421] : memref<32x128xi32, #tpu.memory_space<vmem>>, vector<1x128xi32>
    %887 = vector.broadcast %885 : vector<1x128xi32> to vector<32x128xi32>
    %888 = arith.minsi %875, %887 : vector<32x128xi32>
    %889 = vector.shape_cast %884 : vector<32x1xi1> to vector<32x1xi1>
    %890 = vector.broadcast %889 : vector<32x1xi1> to vector<32x128xi1>
    %891 = arith.select %890, %888, %875 : vector<32x128xi1>, vector<32x128xi32>
    %892 = vector.broadcast %886 : vector<1x128xi32> to vector<32x128xi32>
    %893 = arith.maxsi %880, %892 : vector<32x128xi32>
    %894 = vector.shape_cast %884 : vector<32x1xi1> to vector<32x1xi1>
    %895 = vector.broadcast %894 : vector<32x1xi1> to vector<32x128xi1>
    %896 = arith.select %895, %893, %880 : vector<32x128xi1>, vector<32x128xi32>
    %c21_422 = arith.constant 21 : index
    %c0_423 = arith.constant 0 : index
    %c0_424 = arith.constant 0 : index
    %897 = vector.load %arg0[%c21_422, %c0_423, %c0_424] : memref<32x32x1xi32, #tpu.memory_space<vmem>>, vector<1x32x1xi32>
    %898 = vector.shape_cast %897 : vector<1x32x1xi32> to vector<32x1xi32>
    %c0_i32_425 = arith.constant 0 : i32
    %899 = vector.broadcast %c0_i32_425 : i32 to vector<32x1xi32>
    %900 = arith.cmpi sgt, %898, %899 : vector<32x1xi32>
    %c21_426 = arith.constant 21 : index
    %c0_427 = arith.constant 0 : index
    %901 = vector.load %arg9[%c21_426, %c0_427] : memref<32x128xi32, #tpu.memory_space<vmem>>, vector<1x128xi32>
    %c21_428 = arith.constant 21 : index
    %c0_429 = arith.constant 0 : index
    %902 = vector.load %arg15[%c21_428, %c0_429] : memref<32x128xi32, #tpu.memory_space<vmem>>, vector<1x128xi32>
    %903 = vector.broadcast %901 : vector<1x128xi32> to vector<32x128xi32>
    %904 = arith.minsi %891, %903 : vector<32x128xi32>
    %905 = vector.shape_cast %900 : vector<32x1xi1> to vector<32x1xi1>
    %906 = vector.broadcast %905 : vector<32x1xi1> to vector<32x128xi1>
    %907 = arith.select %906, %904, %891 : vector<32x128xi1>, vector<32x128xi32>
    %908 = vector.broadcast %902 : vector<1x128xi32> to vector<32x128xi32>
    %909 = arith.maxsi %896, %908 : vector<32x128xi32>
    %910 = vector.shape_cast %900 : vector<32x1xi1> to vector<32x1xi1>
    %911 = vector.broadcast %910 : vector<32x1xi1> to vector<32x128xi1>
    %912 = arith.select %911, %909, %896 : vector<32x128xi1>, vector<32x128xi32>
    %c22_430 = arith.constant 22 : index
    %c0_431 = arith.constant 0 : index
    %c0_432 = arith.constant 0 : index
    %913 = vector.load %arg0[%c22_430, %c0_431, %c0_432] : memref<32x32x1xi32, #tpu.memory_space<vmem>>, vector<1x32x1xi32>
    %914 = vector.shape_cast %913 : vector<1x32x1xi32> to vector<32x1xi32>
    %c0_i32_433 = arith.constant 0 : i32
    %915 = vector.broadcast %c0_i32_433 : i32 to vector<32x1xi32>
    %916 = arith.cmpi sgt, %914, %915 : vector<32x1xi32>
    %c22_434 = arith.constant 22 : index
    %c0_435 = arith.constant 0 : index
    %917 = vector.load %arg9[%c22_434, %c0_435] : memref<32x128xi32, #tpu.memory_space<vmem>>, vector<1x128xi32>
    %c22_436 = arith.constant 22 : index
    %c0_437 = arith.constant 0 : index
    %918 = vector.load %arg15[%c22_436, %c0_437] : memref<32x128xi32, #tpu.memory_space<vmem>>, vector<1x128xi32>
    %919 = vector.broadcast %917 : vector<1x128xi32> to vector<32x128xi32>
    %920 = arith.minsi %907, %919 : vector<32x128xi32>
    %921 = vector.shape_cast %916 : vector<32x1xi1> to vector<32x1xi1>
    %922 = vector.broadcast %921 : vector<32x1xi1> to vector<32x128xi1>
    %923 = arith.select %922, %920, %907 : vector<32x128xi1>, vector<32x128xi32>
    %924 = vector.broadcast %918 : vector<1x128xi32> to vector<32x128xi32>
    %925 = arith.maxsi %912, %924 : vector<32x128xi32>
    %926 = vector.shape_cast %916 : vector<32x1xi1> to vector<32x1xi1>
    %927 = vector.broadcast %926 : vector<32x1xi1> to vector<32x128xi1>
    %928 = arith.select %927, %925, %912 : vector<32x128xi1>, vector<32x128xi32>
    %c23_438 = arith.constant 23 : index
    %c0_439 = arith.constant 0 : index
    %c0_440 = arith.constant 0 : index
    %929 = vector.load %arg0[%c23_438, %c0_439, %c0_440] : memref<32x32x1xi32, #tpu.memory_space<vmem>>, vector<1x32x1xi32>
    %930 = vector.shape_cast %929 : vector<1x32x1xi32> to vector<32x1xi32>
    %c0_i32_441 = arith.constant 0 : i32
    %931 = vector.broadcast %c0_i32_441 : i32 to vector<32x1xi32>
    %932 = arith.cmpi sgt, %930, %931 : vector<32x1xi32>
    %c23_442 = arith.constant 23 : index
    %c0_443 = arith.constant 0 : index
    %933 = vector.load %arg9[%c23_442, %c0_443] : memref<32x128xi32, #tpu.memory_space<vmem>>, vector<1x128xi32>
    %c23_444 = arith.constant 23 : index
    %c0_445 = arith.constant 0 : index
    %934 = vector.load %arg15[%c23_444, %c0_445] : memref<32x128xi32, #tpu.memory_space<vmem>>, vector<1x128xi32>
    %935 = vector.broadcast %933 : vector<1x128xi32> to vector<32x128xi32>
    %936 = arith.minsi %923, %935 : vector<32x128xi32>
    %937 = vector.shape_cast %932 : vector<32x1xi1> to vector<32x1xi1>
    %938 = vector.broadcast %937 : vector<32x1xi1> to vector<32x128xi1>
    %939 = arith.select %938, %936, %923 : vector<32x128xi1>, vector<32x128xi32>
    %940 = vector.broadcast %934 : vector<1x128xi32> to vector<32x128xi32>
    %941 = arith.maxsi %928, %940 : vector<32x128xi32>
    %942 = vector.shape_cast %932 : vector<32x1xi1> to vector<32x1xi1>
    %943 = vector.broadcast %942 : vector<32x1xi1> to vector<32x128xi1>
    %944 = arith.select %943, %941, %928 : vector<32x128xi1>, vector<32x128xi32>
    %c24_446 = arith.constant 24 : index
    %c0_447 = arith.constant 0 : index
    %c0_448 = arith.constant 0 : index
    %945 = vector.load %arg0[%c24_446, %c0_447, %c0_448] : memref<32x32x1xi32, #tpu.memory_space<vmem>>, vector<1x32x1xi32>
    %946 = vector.shape_cast %945 : vector<1x32x1xi32> to vector<32x1xi32>
    %c0_i32_449 = arith.constant 0 : i32
    %947 = vector.broadcast %c0_i32_449 : i32 to vector<32x1xi32>
    %948 = arith.cmpi sgt, %946, %947 : vector<32x1xi32>
    %c24_450 = arith.constant 24 : index
    %c0_451 = arith.constant 0 : index
    %949 = vector.load %arg9[%c24_450, %c0_451] : memref<32x128xi32, #tpu.memory_space<vmem>>, vector<1x128xi32>
    %c24_452 = arith.constant 24 : index
    %c0_453 = arith.constant 0 : index
    %950 = vector.load %arg15[%c24_452, %c0_453] : memref<32x128xi32, #tpu.memory_space<vmem>>, vector<1x128xi32>
    %951 = vector.broadcast %949 : vector<1x128xi32> to vector<32x128xi32>
    %952 = arith.minsi %939, %951 : vector<32x128xi32>
    %953 = vector.shape_cast %948 : vector<32x1xi1> to vector<32x1xi1>
    %954 = vector.broadcast %953 : vector<32x1xi1> to vector<32x128xi1>
    %955 = arith.select %954, %952, %939 : vector<32x128xi1>, vector<32x128xi32>
    %956 = vector.broadcast %950 : vector<1x128xi32> to vector<32x128xi32>
    %957 = arith.maxsi %944, %956 : vector<32x128xi32>
    %958 = vector.shape_cast %948 : vector<32x1xi1> to vector<32x1xi1>
    %959 = vector.broadcast %958 : vector<32x1xi1> to vector<32x128xi1>
    %960 = arith.select %959, %957, %944 : vector<32x128xi1>, vector<32x128xi32>
    %c25_454 = arith.constant 25 : index
    %c0_455 = arith.constant 0 : index
    %c0_456 = arith.constant 0 : index
    %961 = vector.load %arg0[%c25_454, %c0_455, %c0_456] : memref<32x32x1xi32, #tpu.memory_space<vmem>>, vector<1x32x1xi32>
    %962 = vector.shape_cast %961 : vector<1x32x1xi32> to vector<32x1xi32>
    %c0_i32_457 = arith.constant 0 : i32
    %963 = vector.broadcast %c0_i32_457 : i32 to vector<32x1xi32>
    %964 = arith.cmpi sgt, %962, %963 : vector<32x1xi32>
    %c25_458 = arith.constant 25 : index
    %c0_459 = arith.constant 0 : index
    %965 = vector.load %arg9[%c25_458, %c0_459] : memref<32x128xi32, #tpu.memory_space<vmem>>, vector<1x128xi32>
    %c25_460 = arith.constant 25 : index
    %c0_461 = arith.constant 0 : index
    %966 = vector.load %arg15[%c25_460, %c0_461] : memref<32x128xi32, #tpu.memory_space<vmem>>, vector<1x128xi32>
    %967 = vector.broadcast %965 : vector<1x128xi32> to vector<32x128xi32>
    %968 = arith.minsi %955, %967 : vector<32x128xi32>
    %969 = vector.shape_cast %964 : vector<32x1xi1> to vector<32x1xi1>
    %970 = vector.broadcast %969 : vector<32x1xi1> to vector<32x128xi1>
    %971 = arith.select %970, %968, %955 : vector<32x128xi1>, vector<32x128xi32>
    %972 = vector.broadcast %966 : vector<1x128xi32> to vector<32x128xi32>
    %973 = arith.maxsi %960, %972 : vector<32x128xi32>
    %974 = vector.shape_cast %964 : vector<32x1xi1> to vector<32x1xi1>
    %975 = vector.broadcast %974 : vector<32x1xi1> to vector<32x128xi1>
    %976 = arith.select %975, %973, %960 : vector<32x128xi1>, vector<32x128xi32>
    %c26_462 = arith.constant 26 : index
    %c0_463 = arith.constant 0 : index
    %c0_464 = arith.constant 0 : index
    %977 = vector.load %arg0[%c26_462, %c0_463, %c0_464] : memref<32x32x1xi32, #tpu.memory_space<vmem>>, vector<1x32x1xi32>
    %978 = vector.shape_cast %977 : vector<1x32x1xi32> to vector<32x1xi32>
    %c0_i32_465 = arith.constant 0 : i32
    %979 = vector.broadcast %c0_i32_465 : i32 to vector<32x1xi32>
    %980 = arith.cmpi sgt, %978, %979 : vector<32x1xi32>
    %c26_466 = arith.constant 26 : index
    %c0_467 = arith.constant 0 : index
    %981 = vector.load %arg9[%c26_466, %c0_467] : memref<32x128xi32, #tpu.memory_space<vmem>>, vector<1x128xi32>
    %c26_468 = arith.constant 26 : index
    %c0_469 = arith.constant 0 : index
    %982 = vector.load %arg15[%c26_468, %c0_469] : memref<32x128xi32, #tpu.memory_space<vmem>>, vector<1x128xi32>
    %983 = vector.broadcast %981 : vector<1x128xi32> to vector<32x128xi32>
    %984 = arith.minsi %971, %983 : vector<32x128xi32>
    %985 = vector.shape_cast %980 : vector<32x1xi1> to vector<32x1xi1>
    %986 = vector.broadcast %985 : vector<32x1xi1> to vector<32x128xi1>
    %987 = arith.select %986, %984, %971 : vector<32x128xi1>, vector<32x128xi32>
    %988 = vector.broadcast %982 : vector<1x128xi32> to vector<32x128xi32>
    %989 = arith.maxsi %976, %988 : vector<32x128xi32>
    %990 = vector.shape_cast %980 : vector<32x1xi1> to vector<32x1xi1>
    %991 = vector.broadcast %990 : vector<32x1xi1> to vector<32x128xi1>
    %992 = arith.select %991, %989, %976 : vector<32x128xi1>, vector<32x128xi32>
    %c27_470 = arith.constant 27 : index
    %c0_471 = arith.constant 0 : index
    %c0_472 = arith.constant 0 : index
    %993 = vector.load %arg0[%c27_470, %c0_471, %c0_472] : memref<32x32x1xi32, #tpu.memory_space<vmem>>, vector<1x32x1xi32>
    %994 = vector.shape_cast %993 : vector<1x32x1xi32> to vector<32x1xi32>
    %c0_i32_473 = arith.constant 0 : i32
    %995 = vector.broadcast %c0_i32_473 : i32 to vector<32x1xi32>
    %996 = arith.cmpi sgt, %994, %995 : vector<32x1xi32>
    %c27_474 = arith.constant 27 : index
    %c0_475 = arith.constant 0 : index
    %997 = vector.load %arg9[%c27_474, %c0_475] : memref<32x128xi32, #tpu.memory_space<vmem>>, vector<1x128xi32>
    %c27_476 = arith.constant 27 : index
    %c0_477 = arith.constant 0 : index
    %998 = vector.load %arg15[%c27_476, %c0_477] : memref<32x128xi32, #tpu.memory_space<vmem>>, vector<1x128xi32>
    %999 = vector.broadcast %997 : vector<1x128xi32> to vector<32x128xi32>
    %1000 = arith.minsi %987, %999 : vector<32x128xi32>
    %1001 = vector.shape_cast %996 : vector<32x1xi1> to vector<32x1xi1>
    %1002 = vector.broadcast %1001 : vector<32x1xi1> to vector<32x128xi1>
    %1003 = arith.select %1002, %1000, %987 : vector<32x128xi1>, vector<32x128xi32>
    %1004 = vector.broadcast %998 : vector<1x128xi32> to vector<32x128xi32>
    %1005 = arith.maxsi %992, %1004 : vector<32x128xi32>
    %1006 = vector.shape_cast %996 : vector<32x1xi1> to vector<32x1xi1>
    %1007 = vector.broadcast %1006 : vector<32x1xi1> to vector<32x128xi1>
    %1008 = arith.select %1007, %1005, %992 : vector<32x128xi1>, vector<32x128xi32>
    %c28_478 = arith.constant 28 : index
    %c0_479 = arith.constant 0 : index
    %c0_480 = arith.constant 0 : index
    %1009 = vector.load %arg0[%c28_478, %c0_479, %c0_480] : memref<32x32x1xi32, #tpu.memory_space<vmem>>, vector<1x32x1xi32>
    %1010 = vector.shape_cast %1009 : vector<1x32x1xi32> to vector<32x1xi32>
    %c0_i32_481 = arith.constant 0 : i32
    %1011 = vector.broadcast %c0_i32_481 : i32 to vector<32x1xi32>
    %1012 = arith.cmpi sgt, %1010, %1011 : vector<32x1xi32>
    %c28_482 = arith.constant 28 : index
    %c0_483 = arith.constant 0 : index
    %1013 = vector.load %arg9[%c28_482, %c0_483] : memref<32x128xi32, #tpu.memory_space<vmem>>, vector<1x128xi32>
    %c28_484 = arith.constant 28 : index
    %c0_485 = arith.constant 0 : index
    %1014 = vector.load %arg15[%c28_484, %c0_485] : memref<32x128xi32, #tpu.memory_space<vmem>>, vector<1x128xi32>
    %1015 = vector.broadcast %1013 : vector<1x128xi32> to vector<32x128xi32>
    %1016 = arith.minsi %1003, %1015 : vector<32x128xi32>
    %1017 = vector.shape_cast %1012 : vector<32x1xi1> to vector<32x1xi1>
    %1018 = vector.broadcast %1017 : vector<32x1xi1> to vector<32x128xi1>
    %1019 = arith.select %1018, %1016, %1003 : vector<32x128xi1>, vector<32x128xi32>
    %1020 = vector.broadcast %1014 : vector<1x128xi32> to vector<32x128xi32>
    %1021 = arith.maxsi %1008, %1020 : vector<32x128xi32>
    %1022 = vector.shape_cast %1012 : vector<32x1xi1> to vector<32x1xi1>
    %1023 = vector.broadcast %1022 : vector<32x1xi1> to vector<32x128xi1>
    %1024 = arith.select %1023, %1021, %1008 : vector<32x128xi1>, vector<32x128xi32>
    %c29_486 = arith.constant 29 : index
    %c0_487 = arith.constant 0 : index
    %c0_488 = arith.constant 0 : index
    %1025 = vector.load %arg0[%c29_486, %c0_487, %c0_488] : memref<32x32x1xi32, #tpu.memory_space<vmem>>, vector<1x32x1xi32>
    %1026 = vector.shape_cast %1025 : vector<1x32x1xi32> to vector<32x1xi32>
    %c0_i32_489 = arith.constant 0 : i32
    %1027 = vector.broadcast %c0_i32_489 : i32 to vector<32x1xi32>
    %1028 = arith.cmpi sgt, %1026, %1027 : vector<32x1xi32>
    %c29_490 = arith.constant 29 : index
    %c0_491 = arith.constant 0 : index
    %1029 = vector.load %arg9[%c29_490, %c0_491] : memref<32x128xi32, #tpu.memory_space<vmem>>, vector<1x128xi32>
    %c29_492 = arith.constant 29 : index
    %c0_493 = arith.constant 0 : index
    %1030 = vector.load %arg15[%c29_492, %c0_493] : memref<32x128xi32, #tpu.memory_space<vmem>>, vector<1x128xi32>
    %1031 = vector.broadcast %1029 : vector<1x128xi32> to vector<32x128xi32>
    %1032 = arith.minsi %1019, %1031 : vector<32x128xi32>
    %1033 = vector.shape_cast %1028 : vector<32x1xi1> to vector<32x1xi1>
    %1034 = vector.broadcast %1033 : vector<32x1xi1> to vector<32x128xi1>
    %1035 = arith.select %1034, %1032, %1019 : vector<32x128xi1>, vector<32x128xi32>
    %1036 = vector.broadcast %1030 : vector<1x128xi32> to vector<32x128xi32>
    %1037 = arith.maxsi %1024, %1036 : vector<32x128xi32>
    %1038 = vector.shape_cast %1028 : vector<32x1xi1> to vector<32x1xi1>
    %1039 = vector.broadcast %1038 : vector<32x1xi1> to vector<32x128xi1>
    %1040 = arith.select %1039, %1037, %1024 : vector<32x128xi1>, vector<32x128xi32>
    %c30_494 = arith.constant 30 : index
    %c0_495 = arith.constant 0 : index
    %c0_496 = arith.constant 0 : index
    %1041 = vector.load %arg0[%c30_494, %c0_495, %c0_496] : memref<32x32x1xi32, #tpu.memory_space<vmem>>, vector<1x32x1xi32>
    %1042 = vector.shape_cast %1041 : vector<1x32x1xi32> to vector<32x1xi32>
    %c0_i32_497 = arith.constant 0 : i32
    %1043 = vector.broadcast %c0_i32_497 : i32 to vector<32x1xi32>
    %1044 = arith.cmpi sgt, %1042, %1043 : vector<32x1xi32>
    %c30_498 = arith.constant 30 : index
    %c0_499 = arith.constant 0 : index
    %1045 = vector.load %arg9[%c30_498, %c0_499] : memref<32x128xi32, #tpu.memory_space<vmem>>, vector<1x128xi32>
    %c30_500 = arith.constant 30 : index
    %c0_501 = arith.constant 0 : index
    %1046 = vector.load %arg15[%c30_500, %c0_501] : memref<32x128xi32, #tpu.memory_space<vmem>>, vector<1x128xi32>
    %1047 = vector.broadcast %1045 : vector<1x128xi32> to vector<32x128xi32>
    %1048 = arith.minsi %1035, %1047 : vector<32x128xi32>
    %1049 = vector.shape_cast %1044 : vector<32x1xi1> to vector<32x1xi1>
    %1050 = vector.broadcast %1049 : vector<32x1xi1> to vector<32x128xi1>
    %1051 = arith.select %1050, %1048, %1035 : vector<32x128xi1>, vector<32x128xi32>
    %1052 = vector.broadcast %1046 : vector<1x128xi32> to vector<32x128xi32>
    %1053 = arith.maxsi %1040, %1052 : vector<32x128xi32>
    %1054 = vector.shape_cast %1044 : vector<32x1xi1> to vector<32x1xi1>
    %1055 = vector.broadcast %1054 : vector<32x1xi1> to vector<32x128xi1>
    %1056 = arith.select %1055, %1053, %1040 : vector<32x128xi1>, vector<32x128xi32>
    %c31_502 = arith.constant 31 : index
    %c0_503 = arith.constant 0 : index
    %c0_504 = arith.constant 0 : index
    %1057 = vector.load %arg0[%c31_502, %c0_503, %c0_504] : memref<32x32x1xi32, #tpu.memory_space<vmem>>, vector<1x32x1xi32>
    %1058 = vector.shape_cast %1057 : vector<1x32x1xi32> to vector<32x1xi32>
    %c0_i32_505 = arith.constant 0 : i32
    %1059 = vector.broadcast %c0_i32_505 : i32 to vector<32x1xi32>
    %1060 = arith.cmpi sgt, %1058, %1059 : vector<32x1xi32>
    %c31_506 = arith.constant 31 : index
    %c0_507 = arith.constant 0 : index
    %1061 = vector.load %arg9[%c31_506, %c0_507] : memref<32x128xi32, #tpu.memory_space<vmem>>, vector<1x128xi32>
    %c31_508 = arith.constant 31 : index
    %c0_509 = arith.constant 0 : index
    %1062 = vector.load %arg15[%c31_508, %c0_509] : memref<32x128xi32, #tpu.memory_space<vmem>>, vector<1x128xi32>
    %1063 = vector.broadcast %1061 : vector<1x128xi32> to vector<32x128xi32>
    %1064 = arith.minsi %1051, %1063 : vector<32x128xi32>
    %1065 = vector.shape_cast %1060 : vector<32x1xi1> to vector<32x1xi1>
    %1066 = vector.broadcast %1065 : vector<32x1xi1> to vector<32x128xi1>
    %1067 = arith.select %1066, %1064, %1051 : vector<32x128xi1>, vector<32x128xi32>
    %1068 = vector.broadcast %1062 : vector<1x128xi32> to vector<32x128xi32>
    %1069 = arith.maxsi %1056, %1068 : vector<32x128xi32>
    %1070 = vector.shape_cast %1060 : vector<32x1xi1> to vector<32x1xi1>
    %1071 = vector.broadcast %1070 : vector<32x1xi1> to vector<32x128xi1>
    %1072 = arith.select %1071, %1069, %1056 : vector<32x128xi1>, vector<32x128xi32>
    %c0_510 = arith.constant 0 : index
    %c0_511 = arith.constant 0 : index
    %1073 = vector.load %arg11[%c0_510, %c0_511] : memref<32x128xi32, #tpu.memory_space<vmem>>, vector<32x128xi32>
    tpu.vector_store %arg11[%c0_510, %c0_511], %1067 {strides = array<i32>} : memref<32x128xi32, #tpu.memory_space<vmem>>, vector<32x128xi32>,
    %1074 = arith.trunci %1072 : vector<32x128xi32> to vector<32x128xi8>
    %c0_512 = arith.constant 0 : index
    %c0_513 = arith.constant 0 : index
    %1075 = vector.load %arg12[%c0_512, %c0_513] : memref<32x128xi8, #tpu.memory_space<vmem>>, vector<32x128xi8>
    tpu.vector_store %arg12[%c0_512, %c0_513], %1074 {strides = array<i32>} : memref<32x128xi8, #tpu.memory_space<vmem>>, vector<32x128xi8>,
    %1076 = arith.sitofp %1072 : vector<32x128xi32> to vector<32x128xf32>
    %cst_514 = arith.constant 0.000000e+00 : f32
    %1077 = vector.broadcast %cst_514 : f32 to vector<32x128xf32>
    %1078 = arith.subf %1077, %1076 : vector<32x128xf32>
    %cst_515 = arith.constant 0.693147182 : f32
    %1079 = vector.broadcast %cst_515 : f32 to vector<32x128xf32>
    %1080 = arith.mulf %1078, %1079 : vector<32x128xf32>
    %1081 = math.exp %1080 : vector<32x128xf32>
    %cst_516 = arith.constant dense<0.000000e+00> : vector<32xf32>
    %1082 = vector.multi_reduction <add>, %1081, %cst_516 [1] : vector<32x128xf32> to vector<32xf32>
    %1083 = vector.shape_cast %1082 : vector<32xf32> to vector<32x1xf32>
    %1084 = tpu.reciprocal %1083 {approx = true} : vector<32x1xf32> -> vector<32x1xf32>
    %cst_517 = arith.constant 11718.9922 : f32
    %1085 = vector.broadcast %cst_517 : f32 to vector<32x1xf32>
    %1086 = arith.mulf %1085, %1084 : vector<32x1xf32>
    %c0_i32_518 = arith.constant 0 : i32
    %1087 = vector.broadcast %c0_i32_518 : i32 to vector<32x128xi32>
    %1088 = arith.cmpi eq, %1072, %1087 : vector<32x128xi32>
    %1089 = arith.extui %1088 : vector<32x128xi1> to vector<32x128xi32>
    %1090 = arith.sitofp %1089 : vector<32x128xi32> to vector<32x128xf32>
    %cst_519 = arith.constant dense<0.000000e+00> : vector<32xf32>
    %1091 = vector.multi_reduction <add>, %1090, %cst_519 [1] : vector<32x128xf32> to vector<32xf32>
    %1092 = vector.shape_cast %1091 : vector<32xf32> to vector<32x1xf32>
    %cst_520 = arith.constant 1.000000e+00 : f32
    %1093 = vector.broadcast %cst_520 : f32 to vector<32x1xf32>
    %1094 = arith.maximumf %1092, %1093 : vector<32x1xf32>
    %cst_521 = arith.constant 1.280000e+02 : f32
    %1095 = vector.broadcast %cst_521 : f32 to vector<32x1xf32>
    %1096 = arith.divf %1095, %1094 : vector<32x1xf32>
    %1097 = math.log %1096 : vector<32x1xf32>
    %cst_522 = arith.constant 1.280000e+02 : f32
    %1098 = vector.broadcast %cst_522 : f32 to vector<32x1xf32>
    %1099 = arith.mulf %1098, %1097 : vector<32x1xf32>
    %cst_523 = arith.constant 2.500000e+00 : f32
    %cst_524 = arith.constant 1.280000e+02 : f32
    %1100 = arith.mulf %cst_523, %cst_524 : f32
    %1101 = vector.broadcast %1100 : f32 to vector<32x1xf32>
    %1102 = arith.cmpf ole, %1086, %1101 : vector<32x1xf32>
    %cst_525 = arith.constant 0.000000e+00 : f32
    %1103 = vector.broadcast %cst_525 : f32 to vector<32x1xf32>
    %1104 = arith.cmpf ogt, %1092, %1103 : vector<32x1xf32>
    %1105 = arith.andi %1102, %1104 : vector<32x1xi1>
    %1106 = arith.select %1105, %1099, %1086 : vector<32x1xi1>, vector<32x1xf32>
    %1107 = arith.truncf %557 : vector<32x64xf32> to vector<32x64xbf16>
    %c0_526 = arith.constant 0 : index
    %c0_527 = arith.constant 0 : index
    %1108 = vector.load %arg7[%c0_526, %c0_527] : memref<64x32xbf16, #tpu.memory_space<vmem>>, vector<64x32xbf16>
    %cst_528 = arith.constant dense<0.000000e+00> : vector<32x32xf32>
    %1109 = tpu.matmul %1107, %1108, %cst_528 {dimension_numbers = #tpu.dot_dimension_numbers<[1], [0], [0], [1], [0, 0, 1, 1], [], []>} : vector<32x64xbf16>, vector<64x32xbf16>, vector<32x32xf32> -> vector<32x32xf32>
    %1110 = arith.truncf %1109 : vector<32x32xf32> to vector<32x32xbf16>
    %cst_529 = arith.constant dense<0.000000e+00> : vector<32x32xf32>
    %1111 = tpu.matmul %0, %1110, %cst_529 {dimension_numbers = #tpu.dot_dimension_numbers<[1], [0], [0], [1], [0, 0, 1, 1], [], []>} : vector<32x32xbf16>, vector<32x32xbf16>, vector<32x32xf32> -> vector<32x32xf32>
    %c0_530 = arith.constant 0 : index
    %c0_531 = arith.constant 0 : index
    %1112 = vector.load %arg8[%c0_530, %c0_531] : memref<1x32xf32, #tpu.memory_space<vmem>>, vector<1x32xf32>
    %1113 = vector.broadcast %1112 : vector<1x32xf32> to vector<32x32xf32>
    %1114 = arith.addf %1111, %1113 : vector<32x32xf32>
    %1115 = tpu.concatenate %549, %1106 in 1 : vector<32x1xf32>, vector<32x1xf32> -> vector<32x2xf32>
    %c0_532 = arith.constant 0 : index
    %c0_533 = arith.constant 0 : index
    %1116 = vector.load %arg13[%c0_532, %c0_533] : memref<32x2xf32, #tpu.memory_space<vmem>>, vector<32x2xf32>
    tpu.vector_store %arg13[%c0_532, %c0_533], %1115 {strides = array<i32>} : memref<32x2xf32, #tpu.memory_space<vmem>>, vector<32x2xf32>,
    %c0_534 = arith.constant 0 : index
    %c0_535 = arith.constant 0 : index
    %1117 = vector.load %arg14[%c0_534, %c0_535] : memref<32x32xf32, #tpu.memory_space<vmem>>, vector<32x32xf32>
    tpu.vector_store %arg14[%c0_534, %c0_535], %1114 {strides = array<i32>} : memref<32x32xf32, #tpu.memory_space<vmem>>, vector<32x32xf32>,
    return
  }
}

</mosaic_0001>

<llo_original>
// kernel: elph_forward.1
$region0: #{elph_forward.1}
  #allocation0 [shape = 'u32[]', space=smem, size = 0x4, offset = 0x4, fixed_abs, tag = 'smem constant byte address 0x4 - core index']
  #allocation1 [shape = 'u32[144,128]{1,0:T(1,128)}', space=vmem, size = 0x12000, scoped, tag = 'internal scratch']
  #allocation2 [shape = 's32[32,128]{1,0:T(8,128)}', space=vmem, size = 0x4000, scoped, tag = 'scratch operand']
  %s0 = inlined_call_operand.vmem [shape: s32[32,32,1], index: 0, kind: input, shape index: {}]
  %s1 = inlined_call_operand.vmem [shape: s32[32,128], index: 1, kind: input, shape index: {}]
  %s2 = inlined_call_operand.vmem [shape: s32[32,128], index: 2, kind: input, shape index: {}]
  %s3 = inlined_call_operand.vmem [shape: bf16[32,32], index: 3, kind: input, shape index: {}]
  %s4 = inlined_call_operand.vmem [shape: bf16[32,16], index: 4, kind: input, shape index: {}]
  %s5 = inlined_call_operand.vmem [shape: bf16[16,64], index: 5, kind: input, shape index: {}]
  %s6 = inlined_call_operand.vmem [shape: f32[32,64], index: 6, kind: input, shape index: {}]
  %s7 = inlined_call_operand.vmem [shape: bf16[64,32], index: 7, kind: input, shape index: {}]
  %s8 = inlined_call_operand.vmem [shape: f32[1,32], index: 8, kind: input, shape index: {}]
  %s9 = inlined_call_operand.hbm [shape: s32[32,128], index: 9, kind: output, shape index: {0}]
  %s10 = inlined_call_operand.hbm [shape: s8[32,128], index: 10, kind: output, shape index: {1}]
  %s11 = inlined_call_operand.hbm [shape: s32[32,128], index: 11, kind: output, shape index: {2}]
  %s12 = inlined_call_operand.hbm [shape: s8[32,128], index: 12, kind: output, shape index: {3}]
  %s13 = inlined_call_operand.vmem [shape: f32[32,2], index: 13, kind: output, shape index: {4}]
  %s14 = inlined_call_operand.hbm [shape: f32[32,32], index: 14, kind: output, shape index: {5}]
  %15 = xla_tuple %s9, %s10, %s11, %s12, %s13, %s14
  %s16 = sld [smem:[#allocation0]]
  $region86: #{elph_forward.1} parent=0
    _
  %s18 = ssub.s32 1, %s16
  %s19 = scalar_select 0, %s18, %s16
  $region1: #{elph_forward.1} parent=0
    #allocation3 [shape = 'u8[16384]{0}', space=vmem, size = 0x4000, scoped, tag = 'output window, operand 0, single buffered']
    #allocation4 [shape = 's32[1]{0}', space=sflag, size = 0x4, scoped, tag = 'scoped memory for elph_forward.1']
    #allocation5 [shape = 'u8[4096]{0}', space=vmem, size = 0x1000, scoped, tag = 'output window, operand 1, single buffered']
    #allocation6 [shape = 's32[1]{0}', space=sflag, size = 0x4, scoped, tag = 'scoped memory for elph_forward.1']
    #allocation7 [shape = 'u8[16384]{0}', space=vmem, size = 0x4000, scoped, tag = 'output window, operand 2, single buffered']
    #allocation8 [shape = 'u8[4096]{0}', space=vmem, size = 0x1000, scoped, tag = 'output window, operand 3, single buffered']
    #allocation9 [shape = 's32[1]{0}', space=sflag, size = 0x4, scoped, tag = 'scoped memory for elph_forward.1']
    #allocation10 [shape = 'u8[16384]{0}', space=vmem, size = 0x4000, scoped, tag = 'output window, operand 5, single buffered']
    %20 = vsyncpa [#allocation4], 0
    %21 = vsyncpa [#allocation6], 0
    %22 = vsyncpa [#allocation9], 0
    // Predicated region
    $region2: #{elph_forward.1} parent=1 // pred_check
      _
    $region3: #{elph_forward.1} parent=1 // pred_check_branch
      %24 = sbr.rel (0) target = $region5
    $region4: #{elph_forward.1} parent=1 // pred_region
      _
    $region5: #{elph_forward.1} parent=1 // pred_fallthru
      _
    // Predicated region
    $region6: #{elph_forward.1} parent=1 // pred_check
      _
    $region7: #{elph_forward.1} parent=1 // pred_check_branch
      %26 = sbr.rel (0) target = $region9
    $region8: #{elph_forward.1} parent=1 // pred_region
      _
    $region9: #{elph_forward.1} parent=1 // pred_fallthru
      _
    // Predicated region
    $region10: #{elph_forward.1} parent=1 // pred_check
      _
    $region11: #{elph_forward.1} parent=1 // pred_check_branch
      %28 = sbr.rel (0) target = $region13
    $region12: #{elph_forward.1} parent=1 // pred_region
      _
    $region13: #{elph_forward.1} parent=1 // pred_fallthru
      _
    // Predicated region
    $region14: #{elph_forward.1} parent=1 // pred_check
      _
    $region15: #{elph_forward.1} parent=1 // pred_check_branch
      %30 = sbr.rel (0) target = $region17
    $region16: #{elph_forward.1} parent=1 // pred_region
      _
    $region17: #{elph_forward.1} parent=1 // pred_fallthru
      _
    // Predicated region
    $region18: #{elph_forward.1} parent=1 // pred_check
      _
    $region19: #{elph_forward.1} parent=1 // pred_check_branch
      %32 = sbr.rel (0) target = $region21
    $region20: #{elph_forward.1} parent=1 // pred_region
      _
    $region21: #{elph_forward.1} parent=1 // pred_fallthru
      _
    // Predicated region
    $region22: #{elph_forward.1} parent=1 // pred_check
      _
    $region23: #{elph_forward.1} parent=1 // pred_check_branch
      %34 = sbr.rel (0) target = $region25
    $region24: #{elph_forward.1} parent=1 // pred_region
      _
    $region25: #{elph_forward.1} parent=1 // pred_fallthru
      _
    // Predicated region
    $region26: #{elph_forward.1} parent=1 // pred_check
      _
    $region27: #{elph_forward.1} parent=1 // pred_check_branch
      %36 = sbr.rel (0) target = $region29
    $region28: #{elph_forward.1} parent=1 // pred_region
      _
    $region29: #{elph_forward.1} parent=1 // pred_fallthru
      _
    // Predicated region
    $region30: #{elph_forward.1} parent=1 // pred_check
      _
    $region31: #{elph_forward.1} parent=1 // pred_check_branch
      %38 = sbr.rel (0) target = $region33
    $region32: #{elph_forward.1} parent=1 // pred_region
      _
    $region33: #{elph_forward.1} parent=1 // pred_fallthru
      _
    // Predicated region
    $region34: #{elph_forward.1} parent=1 // pred_check
      _
    $region35: #{elph_forward.1} parent=1 // pred_check_branch
      %40 = sbr.rel (0) target = $region37
    $region36: #{elph_forward.1} parent=1 // pred_region
      _
    $region37: #{elph_forward.1} parent=1 // pred_fallthru
      _
    %v42 = vld [vmem:[%s3] sm:$0xf]
    %v43 = vld [vmem:[%s3 + $0x4] sm:$0xf]
    %v44 = vld [vmem:[%s3 + $0x8] sm:$0xf]
    %v45 = vld [vmem:[%s3 + $0xc] sm:$0xf]
    %v46 = vld [vmem:[%s4] sm:$0xf]
    %v47 = vld [vmem:[%s4 + $0x4] sm:$0xf]
    %v48 = vld [vmem:[%s4 + $0x8] sm:$0xf]
    %v49 = vld [vmem:[%s4 + $0xc] sm:$0xf]
    %v50 = vld [vmem:[%s0] sm:$0xff]
    %v51 = vld [vmem:[%s0 + $0x8] sm:$0xff]
    %v52 = vld [vmem:[%s0 + $0x10] sm:$0xff]
    %v53 = vld [vmem:[%s0 + $0x18] sm:$0xff]
    %vm54 = vcmp.gt.s32.totalorder %v50, 0
    %vm55 = vcmp.gt.s32.totalorder %v51, 0
    %vm56 = vcmp.gt.s32.totalorder %v52, 0
    %vm57 = vcmp.gt.s32.totalorder %v53, 0
    %v58 = vld [vmem:[%s1] sm:$0x1]
    %v59 = vld [vmem:[%s2] sm:$0x1]
    %v60 = vlaneseq
    %v61 = vshrl.u32 %v60, 7
    %v62 = vsub.s32 0, %v61
    %v63 = vrot.slane %v58, %v62
    %v64 = vsel %vm54, 1, 0
    %v65 = vsel %vm55, 1, 0
    %v66 = vsel %vm56, 1, 0
    %v67 = vsel %vm57, 1, 0
    %68 = vset.pattern.permute.xlu0 0
    %69 = vperm.xlu0 %68, %v64
    %v70 = vpop.permute.xlu0 %69
    %71 = vset.pattern.permute.xlu0 0
    %72 = vperm.xlu0 %71, %v65
    %v73 = vpop.permute.xlu0 %72
    %74 = vset.pattern.permute.xlu0 0
    %75 = vperm.xlu0 %74, %v66
    %v76 = vpop.permute.xlu0 %75
    %77 = vset.pattern.permute.xlu0 0
    %78 = vperm.xlu0 %77, %v67
    %v79 = vpop.permute.xlu0 %78
    %vm80 = vcmp.eq.s32.totalorder %v70, 1
    %vm81 = vcmp.eq.s32.totalorder %v73, 1
    %vm82 = vcmp.eq.s32.totalorder %v76, 1
    %vm83 = vcmp.eq.s32.totalorder %v79, 1
    %v84 = vsel %vm80, %v63, 2147483647
    %v85 = vsel %vm81, %v63, 2147483647
    %v86 = vsel %vm82, %v63, 2147483647
    %v87 = vsel %vm83, %v63, 2147483647
    %v88 = vlaneseq
    %v89 = vshrl.u32 %v88, 7
    %v90 = vsub.s32 0, %v89
    %v91 = vrot.slane %v59, %v90
    %vm92 = vcmp.gt.s32.totalorder %v91, 0
    %v93 = vsel %vm92, %v91, 0
    %v94 = vsel %vm80, %v93, 0
    %v95 = vsel %vm81, %v93, 0
    %v96 = vsel %vm82, %v93, 0
    %v97 = vsel %vm83, %v93, 0
    %s98 = scalar_lea.vmem %s0, 32
    %v99 = vld [vmem:[%s98] sm:$0xff]
    %v100 = vld [vmem:[%s98 + $0x8] sm:$0xff]
    %v101 = vld [vmem:[%s98 + $0x10] sm:$0xff]
    %v102 = vld [vmem:[%s98 + $0x18] sm:$0xff]
    %vm103 = vcmp.gt.s32.totalorder %v99, 0
    %vm104 = vcmp.gt.s32.totalorder %v100, 0
    %vm105 = vcmp.gt.s32.totalorder %v101, 0
    %vm106 = vcmp.gt.s32.totalorder %v102, 0
    %v107 = vld [vmem:[%s1 + $0x1] sm:$0x1]
    %v108 = vld [vmem:[%s2 + $0x1] sm:$0x1]
    %v109 = vlaneseq
    %v110 = vshrl.u32 %v109, 7
    %v111 = vsub.s32 0, %v110
    %v112 = vrot.slane %v107, %v111
    %vm113 = vcmp.lt.s32.totalorder %v84, %v112
    %v114 = vsel %vm113, %v84, %v112
    %vm115 = vcmp.lt.s32.totalorder %v85, %v112
    %v116 = vsel %vm115, %v85, %v112
    %vm117 = vcmp.lt.s32.totalorder %v86, %v112
    %v118 = vsel %vm117, %v86, %v112
    %vm119 = vcmp.lt.s32.totalorder %v87, %v112
    %v120 = vsel %vm119, %v87, %v112
    %v121 = vsel %vm103, 1, 0
    %v122 = vsel %vm104, 1, 0
    %v123 = vsel %vm105, 1, 0
    %v124 = vsel %vm106, 1, 0
    %125 = vset.pattern.permute.xlu0 0
    %126 = vperm.xlu0 %125, %v121
    %v127 = vpop.permute.xlu0 %126
    %128 = vset.pattern.permute.xlu0 0
    %129 = vperm.xlu0 %128, %v122
    %v130 = vpop.permute.xlu0 %129
    %131 = vset.pattern.permute.xlu0 0
    %132 = vperm.xlu0 %131, %v123
    %v133 = vpop.permute.xlu0 %132
    %134 = vset.pattern.permute.xlu0 0
    %135 = vperm.xlu0 %134, %v124
    %v136 = vpop.permute.xlu0 %135
    %vm137 = vcmp.eq.s32.totalorder %v127, 1
    %vm138 = vcmp.eq.s32.totalorder %v130, 1
    %vm139 = vcmp.eq.s32.totalorder %v133, 1
    %vm140 = vcmp.eq.s32.totalorder %v136, 1
    %v141 = vsel %vm137, %v114, %v84
    %v142 = vsel %vm138, %v116, %v85
    %v143 = vsel %vm139, %v118, %v86
    %v144 = vsel %vm140, %v120, %v87
    %v145 = vlaneseq
    %v146 = vshrl.u32 %v145, 7
    %v147 = vsub.s32 0, %v146
    %v148 = vrot.slane %v108, %v147
    %vm149 = vcmp.gt.s32.totalorder %v94, %v148
    %v150 = vsel %vm149, %v94, %v148
    %vm151 = vcmp.gt.s32.totalorder %v95, %v148
    %v152 = vsel %vm151, %v95, %v148
    %vm153 = vcmp.gt.s32.totalorder %v96, %v148
    %v154 = vsel %vm153, %v96, %v148
    %vm155 = vcmp.gt.s32.totalorder %v97, %v148
    %v156 = vsel %vm155, %v97, %v148
    %v157 = vsel %vm137, %v150, %v94
    %v158 = vsel %vm138, %v152, %v95
    %v159 = vsel %vm139, %v154, %v96
    %v160 = vsel %vm140, %v156, %v97
    %s161 = scalar_lea.vmem %s0, 64
    %v162 = vld [vmem:[%s161] sm:$0xff]
    %v163 = vld [vmem:[%s161 + $0x8] sm:$0xff]
    %v164 = vld [vmem:[%s161 + $0x10] sm:$0xff]
    %v165 = vld [vmem:[%s161 + $0x18] sm:$0xff]
    %vm166 = vcmp.gt.s32.totalorder %v162, 0
    %vm167 = vcmp.gt.s32.totalorder %v163, 0
    %vm168 = vcmp.gt.s32.totalorder %v164, 0
    %vm169 = vcmp.gt.s32.totalorder %v165, 0
    %v170 = vld [vmem:[%s1 + $0x2] sm:$0x1]
    %v171 = vld [vmem:[%s2 + $0x2] sm:$0x1]
    %v172 = vlaneseq
    %v173 = vshrl.u32 %v172, 7
    %v174 = vsub.s32 0, %v173
    %v175 = vrot.slane %v170, %v174
    %vm176 = vcmp.lt.s32.totalorder %v141, %v175
    %v177 = vsel %vm176, %v141, %v175
    %vm178 = vcmp.lt.s32.totalorder %v142, %v175
    %v179 = vsel %vm178, %v142, %v175
    %vm180 = vcmp.lt.s32.totalorder %v143, %v175
    %v181 = vsel %vm180, %v143, %v175
    %vm182 = vcmp.lt.s32.totalorder %v144, %v175
    %v183 = vsel %vm182, %v144, %v175
    %v184 = vsel %vm166, 1, 0
    %v185 = vsel %vm167, 1, 0
    %v186 = vsel %vm168, 1, 0
    %v187 = vsel %vm169, 1, 0
    %188 = vset.pattern.permute.xlu0 0
    %189 = vperm.xlu0 %188, %v184
    %v190 = vpop.permute.xlu0 %189
    %191 = vset.pattern.permute.xlu0 0
    %192 = vperm.xlu0 %191, %v185
    %v193 = vpop.permute.xlu0 %192
    %194 = vset.pattern.permute.xlu0 0
    %195 = vperm.xlu0 %194, %v186
    %v196 = vpop.permute.xlu0 %195
    %197 = vset.pattern.permute.xlu0 0
    %198 = vperm.xlu0 %197, %v187
    %v199 = vpop.permute.xlu0 %198
    %vm200 = vcmp.eq.s32.totalorder %v190, 1
    %vm201 = vcmp.eq.s32.totalorder %v193, 1
    %vm202 = vcmp.eq.s32.totalorder %v196, 1
    %vm203 = vcmp.eq.s32.totalorder %v199, 1
    %v204 = vsel %vm200, %v177, %v141
    %v205 = vsel %vm201, %v179, %v142
    %v206 = vsel %vm202, %v181, %v143
    %v207 = vsel %vm203, %v183, %v144
    %v208 = vlaneseq
    %v209 = vshrl.u32 %v208, 7
    %v210 = vsub.s32 0, %v209
    %v211 = vrot.slane %v171, %v210
    %vm212 = vcmp.gt.s32.totalorder %v157, %v211
    %v213 = vsel %vm212, %v157, %v211
    %vm214 = vcmp.gt.s32.totalorder %v158, %v211
    %v215 = vsel %vm214, %v158, %v211
    %vm216 = vcmp.gt.s32.totalorder %v159, %v211
    %v217 = vsel %vm216, %v159, %v211
    %vm218 = vcmp.gt.s32.totalorder %v160, %v211
    %v219 = vsel %vm218, %v160, %v211
    %v220 = vsel %vm200, %v213, %v157
    %v221 = vsel %vm201, %v215, %v158
    %v222 = vsel %vm202, %v217, %v159
    %v223 = vsel %vm203, %v219, %v160
    %s224 = scalar_lea.vmem %s0, 96
    %v225 = vld [vmem:[%s224] sm:$0xff]
    %v226 = vld [vmem:[%s224 + $0x8] sm:$0xff]
    %v227 = vld [vmem:[%s224 + $0x10] sm:$0xff]
    %v228 = vld [vmem:[%s224 + $0x18] sm:$0xff]
    %vm229 = vcmp.gt.s32.totalorder %v225, 0
    %vm230 = vcmp.gt.s32.totalorder %v226, 0
    %vm231 = vcmp.gt.s32.totalorder %v227, 0
    %vm232 = vcmp.gt.s32.totalorder %v228, 0
    %v233 = vld [vmem:[%s1 + $0x3] sm:$0x1]
    %v234 = vld [vmem:[%s2 + $0x3] sm:$0x1]
    %v235 = vlaneseq
    %v236 = vshrl.u32 %v235, 7
    %v237 = vsub.s32 0, %v236
    %v238 = vrot.slane %v233, %v237
    %vm239 = vcmp.lt.s32.totalorder %v204, %v238
    %v240 = vsel %vm239, %v204, %v238
    %vm241 = vcmp.lt.s32.totalorder %v205, %v238
    %v242 = vsel %vm241, %v205, %v238
    %vm243 = vcmp.lt.s32.totalorder %v206, %v238
    %v244 = vsel %vm243, %v206, %v238
    %vm245 = vcmp.lt.s32.totalorder %v207, %v238
    %v246 = vsel %vm245, %v207, %v238
    %v247 = vsel %vm229, 1, 0
    %v248 = vsel %vm230, 1, 0
    %v249 = vsel %vm231, 1, 0
    %v250 = vsel %vm232, 1, 0
    %251 = vset.pattern.permute.xlu0 0
    %252 = vperm.xlu0 %251, %v247
    %v253 = vpop.permute.xlu0 %252
    %254 = vset.pattern.permute.xlu0 0
    %255 = vperm.xlu0 %254, %v248
    %v256 = vpop.permute.xlu0 %255
    %257 = vset.pattern.permute.xlu0 0
    %258 = vperm.xlu0 %257, %v249
    %v259 = vpop.permute.xlu0 %258
    %260 = vset.pattern.permute.xlu0 0
    %261 = vperm.xlu0 %260, %v250
    %v262 = vpop.permute.xlu0 %261
    %vm263 = vcmp.eq.s32.totalorder %v253, 1
    %vm264 = vcmp.eq.s32.totalorder %v256, 1
    %vm265 = vcmp.eq.s32.totalorder %v259, 1
    %vm266 = vcmp.eq.s32.totalorder %v262, 1
    %v267 = vsel %vm263, %v240, %v204
    %v268 = vsel %vm264, %v242, %v205
    %v269 = vsel %vm265, %v244, %v206
    %v270 = vsel %vm266, %v246, %v207
    %v271 = vlaneseq
    %v272 = vshrl.u32 %v271, 7
    %v273 = vsub.s32 0, %v272
    %v274 = vrot.slane %v234, %v273
    %vm275 = vcmp.gt.s32.totalorder %v220, %v274
    %v276 = vsel %vm275, %v220, %v274
    %vm277 = vcmp.gt.s32.totalorder %v221, %v274
    %v278 = vsel %vm277, %v221, %v274
    %vm279 = vcmp.gt.s32.totalorder %v222, %v274
    %v280 = vsel %vm279, %v222, %v274
    %vm281 = vcmp.gt.s32.totalorder %v223, %v274
    %v282 = vsel %vm281, %v223, %v274
    %v283 = vsel %vm263, %v276, %v220
    %v284 = vsel %vm264, %v278, %v221
    %v285 = vsel %vm265, %v280, %v222
    %v286 = vsel %vm266, %v282, %v223
    %s287 = scalar_lea.vmem %s0, 128
    %v288 = vld [vmem:[%s287] sm:$0xff]
    %v289 = vld [vmem:[%s287 + $0x8] sm:$0xff]
    %v290 = vld [vmem:[%s287 + $0x10] sm:$0xff]
    %v291 = vld [vmem:[%s287 + $0x18] sm:$0xff]
    %vm292 = vcmp.gt.s32.totalorder %v288, 0
    %vm293 = vcmp.gt.s32.totalorder %v289, 0
    %vm294 = vcmp.gt.s32.totalorder %v290, 0
    %vm295 = vcmp.gt.s32.totalorder %v291, 0
    %v296 = vld [vmem:[%s1 + $0x4] sm:$0x1]
    %v297 = vld [vmem:[%s2 + $0x4] sm:$0x1]
    %v298 = vlaneseq
    %v299 = vshrl.u32 %v298, 7
    %v300 = vsub.s32 0, %v299
    %v301 = vrot.slane %v296, %v300
    %vm302 = vcmp.lt.s32.totalorder %v267, %v301
    %v303 = vsel %vm302, %v267, %v301
    %vm304 = vcmp.lt.s32.totalorder %v268, %v301
    %v305 = vsel %vm304, %v268, %v301
    %vm306 = vcmp.lt.s32.totalorder %v269, %v301
    %v307 = vsel %vm306, %v269, %v301
    %vm308 = vcmp.lt.s32.totalorder %v270, %v301
    %v309 = vsel %vm308, %v270, %v301
    %v310 = vsel %vm292, 1, 0
    %v311 = vsel %vm293, 1, 0
    %v312 = vsel %vm294, 1, 0
    %v313 = vsel %vm295, 1, 0
    %314 = vset.pattern.permute.xlu0 0
    %315 = vperm.xlu0 %314, %v310
    %v316 = vpop.permute.xlu0 %315
    %317 = vset.pattern.permute.xlu0 0
    %318 = vperm.xlu0 %317, %v311
    %v319 = vpop.permute.xlu0 %318
    %320 = vset.pattern.permute.xlu0 0
    %321 = vperm.xlu0 %320, %v312
    %v322 = vpop.permute.xlu0 %321
    %323 = vset.pattern.permute.xlu0 0
    %324 = vperm.xlu0 %323, %v313
    %v325 = vpop.permute.xlu0 %324
    %vm326 = vcmp.eq.s32.totalorder %v316, 1
    %vm327 = vcmp.eq.s32.totalorder %v319, 1
    %vm328 = vcmp.eq.s32.totalorder %v322, 1
    %vm329 = vcmp.eq.s32.totalorder %v325, 1
    %v330 = vsel %vm326, %v303, %v267
    %v331 = vsel %vm327, %v305, %v268
    %v332 = vsel %vm328, %v307, %v269
    %v333 = vsel %vm329, %v309, %v270
    %v334 = vlaneseq
    %v335 = vshrl.u32 %v334, 7
    %v336 = vsub.s32 0, %v335
    %v337 = vrot.slane %v297, %v336
    %vm338 = vcmp.gt.s32.totalorder %v283, %v337
    %v339 = vsel %vm338, %v283, %v337
    %vm340 = vcmp.gt.s32.totalorder %v284, %v337
    %v341 = vsel %vm340, %v284, %v337
    %vm342 = vcmp.gt.s32.totalorder %v285, %v337
    %v343 = vsel %vm342, %v285, %v337
    %vm344 = vcmp.gt.s32.totalorder %v286, %v337
    %v345 = vsel %vm344, %v286, %v337
    %v346 = vsel %vm326, %v339, %v283
    %v347 = vsel %vm327, %v341, %v284
    %v348 = vsel %vm328, %v343, %v285
    %v349 = vsel %vm329, %v345, %v286
    %s350 = scalar_lea.vmem %s0, 160
    %v351 = vld [vmem:[%s350] sm:$0xff]
    %v352 = vld [vmem:[%s350 + $0x8] sm:$0xff]
    %v353 = vld [vmem:[%s350 + $0x10] sm:$0xff]
    %v354 = vld [vmem:[%s350 + $0x18] sm:$0xff]
    %vm355 = vcmp.gt.s32.totalorder %v351, 0
    %vm356 = vcmp.gt.s32.totalorder %v352, 0
    %vm357 = vcmp.gt.s32.totalorder %v353, 0
    %vm358 = vcmp.gt.s32.totalorder %v354, 0
    %v359 = vld [vmem:[%s1 + $0x5] sm:$0x1]
    %v360 = vld [vmem:[%s2 + $0x5] sm:$0x1]
    %v361 = vlaneseq
    %v362 = vshrl.u32 %v361, 7
    %v363 = vsub.s32 0, %v362
    %v364 = vrot.slane %v359, %v363
    %vm365 = vcmp.lt.s32.totalorder %v330, %v364
    %v366 = vsel %vm365, %v330, %v364
    %vm367 = vcmp.lt.s32.totalorder %v331, %v364
    %v368 = vsel %vm367, %v331, %v364
    %vm369 = vcmp.lt.s32.totalorder %v332, %v364
    %v370 = vsel %vm369, %v332, %v364
    %vm371 = vcmp.lt.s32.totalorder %v333, %v364
    %v372 = vsel %vm371, %v333, %v364
    %v373 = vsel %vm355, 1, 0
    %v374 = vsel %vm356, 1, 0
    %v375 = vsel %vm357, 1, 0
    %v376 = vsel %vm358, 1, 0
    %377 = vset.pattern.permute.xlu0 0
    %378 = vperm.xlu0 %377, %v373
    %v379 = vpop.permute.xlu0 %378
    %380 = vset.pattern.permute.xlu0 0
    %381 = vperm.xlu0 %380, %v374
    %v382 = vpop.permute.xlu0 %381
    %383 = vset.pattern.permute.xlu0 0
    %384 = vperm.xlu0 %383, %v375
    %v385 = vpop.permute.xlu0 %384
    %386 = vset.pattern.permute.xlu0 0
    %387 = vperm.xlu0 %386, %v376
    %v388 = vpop.permute.xlu0 %387
    %vm389 = vcmp.eq.s32.totalorder %v379, 1
    %vm390 = vcmp.eq.s32.totalorder %v382, 1
    %vm391 = vcmp.eq.s32.totalorder %v385, 1
    %vm392 = vcmp.eq.s32.totalorder %v388, 1
    %v393 = vsel %vm389, %v366, %v330
    %v394 = vsel %vm390, %v368, %v331
    %v395 = vsel %vm391, %v370, %v332
    %v396 = vsel %vm392, %v372, %v333
    %v397 = vlaneseq
    %v398 = vshrl.u32 %v397, 7
    %v399 = vsub.s32 0, %v398
    %v400 = vrot.slane %v360, %v399
    %vm401 = vcmp.gt.s32.totalorder %v346, %v400
    %v402 = vsel %vm401, %v346, %v400
    %vm403 = vcmp.gt.s32.totalorder %v347, %v400
    %v404 = vsel %vm403, %v347, %v400
    %vm405 = vcmp.gt.s32.totalorder %v348, %v400
    %v406 = vsel %vm405, %v348, %v400
    %vm407 = vcmp.gt.s32.totalorder %v349, %v400
    %v408 = vsel %vm407, %v349, %v400
    %v409 = vsel %vm389, %v402, %v346
    %v410 = vsel %vm390, %v404, %v347
    %v411 = vsel %vm391, %v406, %v348
    %v412 = vsel %vm392, %v408, %v349
    %s413 = scalar_lea.vmem %s0, 192
    %v414 = vld [vmem:[%s413] sm:$0xff]
    %v415 = vld [vmem:[%s413 + $0x8] sm:$0xff]
    %v416 = vld [vmem:[%s413 + $0x10] sm:$0xff]
    %v417 = vld [vmem:[%s413 + $0x18] sm:$0xff]
    %vm418 = vcmp.gt.s32.totalorder %v414, 0
    %vm419 = vcmp.gt.s32.totalorder %v415, 0
    %vm420 = vcmp.gt.s32.totalorder %v416, 0
    %vm421 = vcmp.gt.s32.totalorder %v417, 0
    %v422 = vld [vmem:[%s1 + $0x6] sm:$0x1]
    %v423 = vld [vmem:[%s2 + $0x6] sm:$0x1]
    %v424 = vlaneseq
    %v425 = vshrl.u32 %v424, 7
    %v426 = vsub.s32 0, %v425
    %v427 = vrot.slane %v422, %v426
    %vm428 = vcmp.lt.s32.totalorder %v393, %v427
    %v429 = vsel %vm428, %v393, %v427
    %vm430 = vcmp.lt.s32.totalorder %v394, %v427
    %v431 = vsel %vm430, %v394, %v427
    %vm432 = vcmp.lt.s32.totalorder %v395, %v427
    %v433 = vsel %vm432, %v395, %v427
    %vm434 = vcmp.lt.s32.totalorder %v396, %v427
    %v435 = vsel %vm434, %v396, %v427
    %v436 = vsel %vm418, 1, 0
    %v437 = vsel %vm419, 1, 0
    %v438 = vsel %vm420, 1, 0
    %v439 = vsel %vm421, 1, 0
    %440 = vset.pattern.permute.xlu0 0
    %441 = vperm.xlu0 %440, %v436
    %v442 = vpop.permute.xlu0 %441
    %443 = vset.pattern.permute.xlu0 0
    %444 = vperm.xlu0 %443, %v437
    %v445 = vpop.permute.xlu0 %444
    %446 = vset.pattern.permute.xlu0 0
    %447 = vperm.xlu0 %446, %v438
    %v448 = vpop.permute.xlu0 %447
    %449 = vset.pattern.permute.xlu0 0
    %450 = vperm.xlu0 %449, %v439
    %v451 = vpop.permute.xlu0 %450
    %vm452 = vcmp.eq.s32.totalorder %v442, 1
    %vm453 = vcmp.eq.s32.totalorder %v445, 1
    %vm454 = vcmp.eq.s32.totalorder %v448, 1
    %vm455 = vcmp.eq.s32.totalorder %v451, 1
    %v456 = vsel %vm452, %v429, %v393
    %v457 = vsel %vm453, %v431, %v394
    %v458 = vsel %vm454, %v433, %v395
    %v459 = vsel %vm455, %v435, %v396
    %v460 = vlaneseq
    %v461 = vshrl.u32 %v460, 7
    %v462 = vsub.s32 0, %v461
    %v463 = vrot.slane %v423, %v462
    %vm464 = vcmp.gt.s32.totalorder %v409, %v463
    %v465 = vsel %vm464, %v409, %v463
    %vm466 = vcmp.gt.s32.totalorder %v410, %v463
    %v467 = vsel %vm466, %v410, %v463
    %vm468 = vcmp.gt.s32.totalorder %v411, %v463
    %v469 = vsel %vm468, %v411, %v463
    %vm470 = vcmp.gt.s32.totalorder %v412, %v463
    %v471 = vsel %vm470, %v412, %v463
    %v472 = vsel %vm452, %v465, %v409
    %v473 = vsel %vm453, %v467, %v410
    %v474 = vsel %vm454, %v469, %v411
    %v475 = vsel %vm455, %v471, %v412
    %s476 = scalar_lea.vmem %s0, 224
    %v477 = vld [vmem:[%s476] sm:$0xff]
    %v478 = vld [vmem:[%s476 + $0x8] sm:$0xff]
    %v479 = vld [vmem:[%s476 + $0x10] sm:$0xff]
    %v480 = vld [vmem:[%s476 + $0x18] sm:$0xff]
    %vm481 = vcmp.gt.s32.totalorder %v477, 0
    %vm482 = vcmp.gt.s32.totalorder %v478, 0
    %vm483 = vcmp.gt.s32.totalorder %v479, 0
    %vm484 = vcmp.gt.s32.totalorder %v480, 0
    %v485 = vld [vmem:[%s1 + $0x7] sm:$0x1]
    %v486 = vld [vmem:[%s2 + $0x7] sm:$0x1]
    %v487 = vlaneseq
    %v488 = vshrl.u32 %v487, 7
    %v489 = vsub.s32 0, %v488
    %v490 = vrot.slane %v485, %v489
    %vm491 = vcmp.lt.s32.totalorder %v456, %v490
    %v492 = vsel %vm491, %v456, %v490
    %vm493 = vcmp.lt.s32.totalorder %v457, %v490
    %v494 = vsel %vm493, %v457, %v490
    %vm495 = vcmp.lt.s32.totalorder %v458, %v490
    %v496 = vsel %vm495, %v458, %v490
    %vm497 = vcmp.lt.s32.totalorder %v459, %v490
    %v498 = vsel %vm497, %v459, %v490
    %v499 = vsel %vm481, 1, 0
    %v500 = vsel %vm482, 1, 0
    %v501 = vsel %vm483, 1, 0
    %v502 = vsel %vm484, 1, 0
    %503 = vset.pattern.permute.xlu0 0
    %504 = vperm.xlu0 %503, %v499
    %v505 = vpop.permute.xlu0 %504
    %506 = vset.pattern.permute.xlu0 0
    %507 = vperm.xlu0 %506, %v500
    %v508 = vpop.permute.xlu0 %507
    %509 = vset.pattern.permute.xlu0 0
    %510 = vperm.xlu0 %509, %v501
    %v511 = vpop.permute.xlu0 %510
    %512 = vset.pattern.permute.xlu0 0
    %513 = vperm.xlu0 %512, %v502
    %v514 = vpop.permute.xlu0 %513
    %vm515 = vcmp.eq.s32.totalorder %v505, 1
    %vm516 = vcmp.eq.s32.totalorder %v508, 1
    %vm517 = vcmp.eq.s32.totalorder %v511, 1
    %vm518 = vcmp.eq.s32.totalorder %v514, 1
    %v519 = vsel %vm515, %v492, %v456
    %v520 = vsel %vm516, %v494, %v457
    %v521 = vsel %vm517, %v496, %v458
    %v522 = vsel %vm518, %v498, %v459
    %v523 = vlaneseq
    %v524 = vshrl.u32 %v523, 7
    %v525 = vsub.s32 0, %v524
    %v526 = vrot.slane %v486, %v525
    %vm527 = vcmp.gt.s32.totalorder %v472, %v526
    %v528 = vsel %vm527, %v472, %v526
    %vm529 = vcmp.gt.s32.totalorder %v473, %v526
    %v530 = vsel %vm529, %v473, %v526
    %vm531 = vcmp.gt.s32.totalorder %v474, %v526
    %v532 = vsel %vm531, %v474, %v526
    %vm533 = vcmp.gt.s32.totalorder %v475, %v526
    %v534 = vsel %vm533, %v475, %v526
    %v535 = vsel %vm515, %v528, %v472
    %v536 = vsel %vm516, %v530, %v473
    %v537 = vsel %vm517, %v532, %v474
    %v538 = vsel %vm518, %v534, %v475
    %s539 = scalar_lea.vmem %s0, 256
    %v540 = vld [vmem:[%s539] sm:$0xff]
    %v541 = vld [vmem:[%s539 + $0x8] sm:$0xff]
    %v542 = vld [vmem:[%s539 + $0x10] sm:$0xff]
    %v543 = vld [vmem:[%s539 + $0x18] sm:$0xff]
    %vm544 = vcmp.gt.s32.totalorder %v540, 0
    %vm545 = vcmp.gt.s32.totalorder %v541, 0
    %vm546 = vcmp.gt.s32.totalorder %v542, 0
    %vm547 = vcmp.gt.s32.totalorder %v543, 0
    %v548 = vld [vmem:[%s1 + $0x8] sm:$0x1]
    %v549 = vld [vmem:[%s2 + $0x8] sm:$0x1]
    %v550 = vlaneseq
    %v551 = vshrl.u32 %v550, 7
    %v552 = vsub.s32 0, %v551
    %v553 = vrot.slane %v548, %v552
    %vm554 = vcmp.lt.s32.totalorder %v519, %v553
    %v555 = vsel %vm554, %v519, %v553
    %vm556 = vcmp.lt.s32.totalorder %v520, %v553
    %v557 = vsel %vm556, %v520, %v553
    %vm558 = vcmp.lt.s32.totalorder %v521, %v553
    %v559 = vsel %vm558, %v521, %v553
    %vm560 = vcmp.lt.s32.totalorder %v522, %v553
    %v561 = vsel %vm560, %v522, %v553
    %v562 = vsel %vm544, 1, 0
    %v563 = vsel %vm545, 1, 0
    %v564 = vsel %vm546, 1, 0
    %v565 = vsel %vm547, 1, 0
    %566 = vset.pattern.permute.xlu0 0
    %567 = vperm.xlu0 %566, %v562
    %v568 = vpop.permute.xlu0 %567
    %569 = vset.pattern.permute.xlu0 0
    %570 = vperm.xlu0 %569, %v563
    %v571 = vpop.permute.xlu0 %570
    %572 = vset.pattern.permute.xlu0 0
    %573 = vperm.xlu0 %572, %v564
    %v574 = vpop.permute.xlu0 %573
    %575 = vset.pattern.permute.xlu0 0
    %576 = vperm.xlu0 %575, %v565
    %v577 = vpop.permute.xlu0 %576
    %vm578 = vcmp.eq.s32.totalorder %v568, 1
    %vm579 = vcmp.eq.s32.totalorder %v571, 1
    %vm580 = vcmp.eq.s32.totalorder %v574, 1
    %vm581 = vcmp.eq.s32.totalorder %v577, 1
    %v582 = vsel %vm578, %v555, %v519
    %v583 = vsel %vm579, %v557, %v520
    %v584 = vsel %vm580, %v559, %v521
    %v585 = vsel %vm581, %v561, %v522
    %v586 = vlaneseq
    %v587 = vshrl.u32 %v586, 7
    %v588 = vsub.s32 0, %v587
    %v589 = vrot.slane %v549, %v588
    %vm590 = vcmp.gt.s32.totalorder %v535, %v589
    %v591 = vsel %vm590, %v535, %v589
    %vm592 = vcmp.gt.s32.totalorder %v536, %v589
    %v593 = vsel %vm592, %v536, %v589
    %vm594 = vcmp.gt.s32.totalorder %v537, %v589
    %v595 = vsel %vm594, %v537, %v589
    %vm596 = vcmp.gt.s32.totalorder %v538, %v589
    %v597 = vsel %vm596, %v538, %v589
    %v598 = vsel %vm578, %v591, %v535
    %v599 = vsel %vm579, %v593, %v536
    %v600 = vsel %vm580, %v595, %v537
    %v601 = vsel %vm581, %v597, %v538
    %s602 = scalar_lea.vmem %s0, 288
    %v603 = vld [vmem:[%s602] sm:$0xff]
    %v604 = vld [vmem:[%s602 + $0x8] sm:$0xff]
    %v605 = vld [vmem:[%s602 + $0x10] sm:$0xff]
    %v606 = vld [vmem:[%s602 + $0x18] sm:$0xff]
    %vm607 = vcmp.gt.s32.totalorder %v603, 0
    %vm608 = vcmp.gt.s32.totalorder %v604, 0
    %vm609 = vcmp.gt.s32.totalorder %v605, 0
    %vm610 = vcmp.gt.s32.totalorder %v606, 0
    %v611 = vld [vmem:[%s1 + $0x9] sm:$0x1]
    %v612 = vld [vmem:[%s2 + $0x9] sm:$0x1]
    %v613 = vlaneseq
    %v614 = vshrl.u32 %v613, 7
    %v615 = vsub.s32 0, %v614
    %v616 = vrot.slane %v611, %v615
    %vm617 = vcmp.lt.s32.totalorder %v582, %v616
    %v618 = vsel %vm617, %v582, %v616
    %vm619 = vcmp.lt.s32.totalorder %v583, %v616
    %v620 = vsel %vm619, %v583, %v616
    %vm621 = vcmp.lt.s32.totalorder %v584, %v616
    %v622 = vsel %vm621, %v584, %v616
    %vm623 = vcmp.lt.s32.totalorder %v585, %v616
    %v624 = vsel %vm623, %v585, %v616
    %v625 = vsel %vm607, 1, 0
    %v626 = vsel %vm608, 1, 0
    %v627 = vsel %vm609, 1, 0
    %v628 = vsel %vm610, 1, 0
    %629 = vset.pattern.permute.xlu0 0
    %630 = vperm.xlu0 %629, %v625
    %v631 = vpop.permute.xlu0 %630
    %632 = vset.pattern.permute.xlu0 0
    %633 = vperm.xlu0 %632, %v626
    %v634 = vpop.permute.xlu0 %633
    %635 = vset.pattern.permute.xlu0 0
    %636 = vperm.xlu0 %635, %v627
    %v637 = vpop.permute.xlu0 %636
    %638 = vset.pattern.permute.xlu0 0
    %639 = vperm.xlu0 %638, %v628
    %v640 = vpop.permute.xlu0 %639
    %vm641 = vcmp.eq.s32.totalorder %v631, 1
    %vm642 = vcmp.eq.s32.totalorder %v634, 1
    %vm643 = vcmp.eq.s32.totalorder %v637, 1
    %vm644 = vcmp.eq.s32.totalorder %v640, 1
    %v645 = vsel %vm641, %v618, %v582
    %v646 = vsel %vm642, %v620, %v583
    %v647 = vsel %vm643, %v622, %v584
    %v648 = vsel %vm644, %v624, %v585
    %v649 = vlaneseq
    %v650 = vshrl.u32 %v649, 7
    %v651 = vsub.s32 0, %v650
    %v652 = vrot.slane %v612, %v651
    %vm653 = vcmp.gt.s32.totalorder %v598, %v652
    %v654 = vsel %vm653, %v598, %v652
    %vm655 = vcmp.gt.s32.totalorder %v599, %v652
    %v656 = vsel %vm655, %v599, %v652
    %vm657 = vcmp.gt.s32.totalorder %v600, %v652
    %v658 = vsel %vm657, %v600, %v652
    %vm659 = vcmp.gt.s32.totalorder %v601, %v652
    %v660 = vsel %vm659, %v601, %v652
    %v661 = vsel %vm641, %v654, %v598
    %v662 = vsel %vm642, %v656, %v599
    %v663 = vsel %vm643, %v658, %v600
    %v664 = vsel %vm644, %v660, %v601
    %s665 = scalar_lea.vmem %s0, 320
    %v666 = vld [vmem:[%s665] sm:$0xff]
    %v667 = vld [vmem:[%s665 + $0x8] sm:$0xff]
    %v668 = vld [vmem:[%s665 + $0x10] sm:$0xff]
    %v669 = vld [vmem:[%s665 + $0x18] sm:$0xff]
    %vm670 = vcmp.gt.s32.totalorder %v666, 0
    %vm671 = vcmp.gt.s32.totalorder %v667, 0
    %vm672 = vcmp.gt.s32.totalorder %v668, 0
    %vm673 = vcmp.gt.s32.totalorder %v669, 0
    %v674 = vld [vmem:[%s1 + $0xa] sm:$0x1]
    %v675 = vld [vmem:[%s2 + $0xa] sm:$0x1]
    %v676 = vlaneseq
    %v677 = vshrl.u32 %v676, 7
    %v678 = vsub.s32 0, %v677
    %v679 = vrot.slane %v674, %v678
    %vm680 = vcmp.lt.s32.totalorder %v645, %v679
    %v681 = vsel %vm680, %v645, %v679
    %vm682 = vcmp.lt.s32.totalorder %v646, %v679
    %v683 = vsel %vm682, %v646, %v679
    %vm684 = vcmp.lt.s32.totalorder %v647, %v679
    %v685 = vsel %vm684, %v647, %v679
    %vm686 = vcmp.lt.s32.totalorder %v648, %v679
    %v687 = vsel %vm686, %v648, %v679
    %v688 = vsel %vm670, 1, 0
    %v689 = vsel %vm671, 1, 0
    %v690 = vsel %vm672, 1, 0
    %v691 = vsel %vm673, 1, 0
    %692 = vset.pattern.permute.xlu0 0
    %693 = vperm.xlu0 %692, %v688
    %v694 = vpop.permute.xlu0 %693
    %695 = vset.pattern.permute.xlu0 0
    %696 = vperm.xlu0 %695, %v689
    %v697 = vpop.permute.xlu0 %696
    %698 = vset.pattern.permute.xlu0 0
    %699 = vperm.xlu0 %698, %v690
    %v700 = vpop.permute.xlu0 %699
    %701 = vset.pattern.permute.xlu0 0
    %702 = vperm.xlu0 %701, %v691
    %v703 = vpop.permute.xlu0 %702
    %vm704 = vcmp.eq.s32.totalorder %v694, 1
    %vm705 = vcmp.eq.s32.totalorder %v697, 1
    %vm706 = vcmp.eq.s32.totalorder %v700, 1
    %vm707 = vcmp.eq.s32.totalorder %v703, 1
    %v708 = vsel %vm704, %v681, %v645
    %v709 = vsel %vm705, %v683, %v646
    %v710 = vsel %vm706, %v685, %v647
    %v711 = vsel %vm707, %v687, %v648
    %v712 = vlaneseq
    %v713 = vshrl.u32 %v712, 7
    %v714 = vsub.s32 0, %v713
    %v715 = vrot.slane %v675, %v714
    %vm716 = vcmp.gt.s32.totalorder %v661, %v715
    %v717 = vsel %vm716, %v661, %v715
    %vm718 = vcmp.gt.s32.totalorder %v662, %v715
    %v719 = vsel %vm718, %v662, %v715
    %vm720 = vcmp.gt.s32.totalorder %v663, %v715
    %v721 = vsel %vm720, %v663, %v715
    %vm722 = vcmp.gt.s32.totalorder %v664, %v715
    %v723 = vsel %vm722, %v664, %v715
    %v724 = vsel %vm704, %v717, %v661
    %v725 = vsel %vm705, %v719, %v662
    %v726 = vsel %vm706, %v721, %v663
    %v727 = vsel %vm707, %v723, %v664
    %s728 = scalar_lea.vmem %s0, 352
    %v729 = vld [vmem:[%s728] sm:$0xff]
    %v730 = vld [vmem:[%s728 + $0x8] sm:$0xff]
    %v731 = vld [vmem:[%s728 + $0x10] sm:$0xff]
    %v732 = vld [vmem:[%s728 + $0x18] sm:$0xff]
    %vm733 = vcmp.gt.s32.totalorder %v729, 0
    %vm734 = vcmp.gt.s32.totalorder %v730, 0
    %vm735 = vcmp.gt.s32.totalorder %v731, 0
    %vm736 = vcmp.gt.s32.totalorder %v732, 0
    %v737 = vld [vmem:[%s1 + $0xb] sm:$0x1]
    %v738 = vld [vmem:[%s2 + $0xb] sm:$0x1]
    %v739 = vlaneseq
    %v740 = vshrl.u32 %v739, 7
    %v741 = vsub.s32 0, %v740
    %v742 = vrot.slane %v737, %v741
    %vm743 = vcmp.lt.s32.totalorder %v708, %v742
    %v744 = vsel %vm743, %v708, %v742
    %vm745 = vcmp.lt.s32.totalorder %v709, %v742
    %v746 = vsel %vm745, %v709, %v742
    %vm747 = vcmp.lt.s32.totalorder %v710, %v742
    %v748 = vsel %vm747, %v710, %v742
    %vm749 = vcmp.lt.s32.totalorder %v711, %v742
    %v750 = vsel %vm749, %v711, %v742
    %v751 = vsel %vm733, 1, 0
    %v752 = vsel %vm734, 1, 0
    %v753 = vsel %vm735, 1, 0
    %v754 = vsel %vm736, 1, 0
    %755 = vset.pattern.permute.xlu0 0
    %756 = vperm.xlu0 %755, %v751
    %v757 = vpop.permute.xlu0 %756
    %758 = vset.pattern.permute.xlu0 0
    %759 = vperm.xlu0 %758, %v752
    %v760 = vpop.permute.xlu0 %759
    %761 = vset.pattern.permute.xlu0 0
    %762 = vperm.xlu0 %761, %v753
    %v763 = vpop.permute.xlu0 %762
    %764 = vset.pattern.permute.xlu0 0
    %765 = vperm.xlu0 %764, %v754
    %v766 = vpop.permute.xlu0 %765
    %vm767 = vcmp.eq.s32.totalorder %v757, 1
    %vm768 = vcmp.eq.s32.totalorder %v760, 1
    %vm769 = vcmp.eq.s32.totalorder %v763, 1
    %vm770 = vcmp.eq.s32.totalorder %v766, 1
    %v771 = vsel %vm767, %v744, %v708
    %v772 = vsel %vm768, %v746, %v709
    %v773 = vsel %vm769, %v748, %v710
    %v774 = vsel %vm770, %v750, %v711
    %v775 = vlaneseq
    %v776 = vshrl.u32 %v775, 7
    %v777 = vsub.s32 0, %v776
    %v778 = vrot.slane %v738, %v777
    %vm779 = vcmp.gt.s32.totalorder %v724, %v778
    %v780 = vsel %vm779, %v724, %v778
    %vm781 = vcmp.gt.s32.totalorder %v725, %v778
    %v782 = vsel %vm781, %v725, %v778
    %vm783 = vcmp.gt.s32.totalorder %v726, %v778
    %v784 = vsel %vm783, %v726, %v778
    %vm785 = vcmp.gt.s32.totalorder %v727, %v778
    %v786 = vsel %vm785, %v727, %v778
    %v787 = vsel %vm767, %v780, %v724
    %v788 = vsel %vm768, %v782, %v725
    %v789 = vsel %vm769, %v784, %v726
    %v790 = vsel %vm770, %v786, %v727
    %s791 = scalar_lea.vmem %s0, 384
    %v792 = vld [vmem:[%s791] sm:$0xff]
    %v793 = vld [vmem:[%s791 + $0x8] sm:$0xff]
    %v794 = vld [vmem:[%s791 + $0x10] sm:$0xff]
    %v795 = vld [vmem:[%s791 + $0x18] sm:$0xff]
    %vm796 = vcmp.gt.s32.totalorder %v792, 0
    %vm797 = vcmp.gt.s32.totalorder %v793, 0
    %vm798 = vcmp.gt.s32.totalorder %v794, 0
    %vm799 = vcmp.gt.s32.totalorder %v795, 0
    %v800 = vld [vmem:[%s1 + $0xc] sm:$0x1]
    %v801 = vld [vmem:[%s2 + $0xc] sm:$0x1]
    %v802 = vlaneseq
    %v803 = vshrl.u32 %v802, 7
    %v804 = vsub.s32 0, %v803
    %v805 = vrot.slane %v800, %v804
    %vm806 = vcmp.lt.s32.totalorder %v771, %v805
    %v807 = vsel %vm806, %v771, %v805
    %vm808 = vcmp.lt.s32.totalorder %v772, %v805
    %v809 = vsel %vm808, %v772, %v805
    %vm810 = vcmp.lt.s32.totalorder %v773, %v805
    %v811 = vsel %vm810, %v773, %v805
    %vm812 = vcmp.lt.s32.totalorder %v774, %v805
    %v813 = vsel %vm812, %v774, %v805
    %v814 = vsel %vm796, 1, 0
    %v815 = vsel %vm797, 1, 0
    %v816 = vsel %vm798, 1, 0
    %v817 = vsel %vm799, 1, 0
    %818 = vset.pattern.permute.xlu0 0
    %819 = vperm.xlu0 %818, %v814
    %v820 = vpop.permute.xlu0 %819
    %821 = vset.pattern.permute.xlu0 0
    %822 = vperm.xlu0 %821, %v815
    %v823 = vpop.permute.xlu0 %822
    %824 = vset.pattern.permute.xlu0 0
    %825 = vperm.xlu0 %824, %v816
    %v826 = vpop.permute.xlu0 %825
    %827 = vset.pattern.permute.xlu0 0
    %828 = vperm.xlu0 %827, %v817
    %v829 = vpop.permute.xlu0 %828
    %vm830 = vcmp.eq.s32.totalorder %v820, 1
    %vm831 = vcmp.eq.s32.totalorder %v823, 1
    %vm832 = vcmp.eq.s32.totalorder %v826, 1
    %vm833 = vcmp.eq.s32.totalorder %v829, 1
    %v834 = vsel %vm830, %v807, %v771
    %v835 = vsel %vm831, %v809, %v772
    %v836 = vsel %vm832, %v811, %v773
    %v837 = vsel %vm833, %v813, %v774
    %v838 = vlaneseq
    %v839 = vshrl.u32 %v838, 7
    %v840 = vsub.s32 0, %v839
    %v841 = vrot.slane %v801, %v840
    %vm842 = vcmp.gt.s32.totalorder %v787, %v841
    %v843 = vsel %vm842, %v787, %v841
    %vm844 = vcmp.gt.s32.totalorder %v788, %v841
    %v845 = vsel %vm844, %v788, %v841
    %vm846 = vcmp.gt.s32.totalorder %v789, %v841
    %v847 = vsel %vm846, %v789, %v841
    %vm848 = vcmp.gt.s32.totalorder %v790, %v841
    %v849 = vsel %vm848, %v790, %v841
    %v850 = vsel %vm830, %v843, %v787
    %v851 = vsel %vm831, %v845, %v788
    %v852 = vsel %vm832, %v847, %v789
    %v853 = vsel %vm833, %v849, %v790
    %s854 = scalar_lea.vmem %s0, 416
    %v855 = vld [vmem:[%s854] sm:$0xff]
    %v856 = vld [vmem:[%s854 + $0x8] sm:$0xff]
    %v857 = vld [vmem:[%s854 + $0x10] sm:$0xff]
    %v858 = vld [vmem:[%s854 + $0x18] sm:$0xff]
    %vm859 = vcmp.gt.s32.totalorder %v855, 0
    %vm860 = vcmp.gt.s32.totalorder %v856, 0
    %vm861 = vcmp.gt.s32.totalorder %v857, 0
    %vm862 = vcmp.gt.s32.totalorder %v858, 0
    %v863 = vld [vmem:[%s1 + $0xd] sm:$0x1]
    %v864 = vld [vmem:[%s2 + $0xd] sm:$0x1]
    %v865 = vlaneseq
    %v866 = vshrl.u32 %v865, 7
    %v867 = vsub.s32 0, %v866
    %v868 = vrot.slane %v863, %v867
    %vm869 = vcmp.lt.s32.totalorder %v834, %v868
    %v870 = vsel %vm869, %v834, %v868
    %vm871 = vcmp.lt.s32.totalorder %v835, %v868
    %v872 = vsel %vm871, %v835, %v868
    %vm873 = vcmp.lt.s32.totalorder %v836, %v868
    %v874 = vsel %vm873, %v836, %v868
    %vm875 = vcmp.lt.s32.totalorder %v837, %v868
    %v876 = vsel %vm875, %v837, %v868
    %v877 = vsel %vm859, 1, 0
    %v878 = vsel %vm860, 1, 0
    %v879 = vsel %vm861, 1, 0
    %v880 = vsel %vm862, 1, 0
    %881 = vset.pattern.permute.xlu0 0
    %882 = vperm.xlu0 %881, %v877
    %v883 = vpop.permute.xlu0 %882
    %884 = vset.pattern.permute.xlu0 0
    %885 = vperm.xlu0 %884, %v878
    %v886 = vpop.permute.xlu0 %885
    %887 = vset.pattern.permute.xlu0 0
    %888 = vperm.xlu0 %887, %v879
    %v889 = vpop.permute.xlu0 %888
    %890 = vset.pattern.permute.xlu0 0
    %891 = vperm.xlu0 %890, %v880
    %v892 = vpop.permute.xlu0 %891
    %vm893 = vcmp.eq.s32.totalorder %v883, 1
    %vm894 = vcmp.eq.s32.totalorder %v886, 1
    %vm895 = vcmp.eq.s32.totalorder %v889, 1
    %vm896 = vcmp.eq.s32.totalorder %v892, 1
    %v897 = vsel %vm893, %v870, %v834
    %v898 = vsel %vm894, %v872, %v835
    %v899 = vsel %vm895, %v874, %v836
    %v900 = vsel %vm896, %v876, %v837
    %v901 = vlaneseq
    %v902 = vshrl.u32 %v901, 7
    %v903 = vsub.s32 0, %v902
    %v904 = vrot.slane %v864, %v903
    %vm905 = vcmp.gt.s32.totalorder %v850, %v904
    %v906 = vsel %vm905, %v850, %v904
    %vm907 = vcmp.gt.s32.totalorder %v851, %v904
    %v908 = vsel %vm907, %v851, %v904
    %vm909 = vcmp.gt.s32.totalorder %v852, %v904
    %v910 = vsel %vm909, %v852, %v904
    %vm911 = vcmp.gt.s32.totalorder %v853, %v904
    %v912 = vsel %vm911, %v853, %v904
    %v913 = vsel %vm893, %v906, %v850
    %v914 = vsel %vm894, %v908, %v851
    %v915 = vsel %vm895, %v910, %v852
    %v916 = vsel %vm896, %v912, %v853
    %s917 = scalar_lea.vmem %s0, 448
    %v918 = vld [vmem:[%s917] sm:$0xff]
    %v919 = vld [vmem:[%s917 + $0x8] sm:$0xff]
    %v920 = vld [vmem:[%s917 + $0x10] sm:$0xff]
    %v921 = vld [vmem:[%s917 + $0x18] sm:$0xff]
    %vm922 = vcmp.gt.s32.totalorder %v918, 0
    %vm923 = vcmp.gt.s32.totalorder %v919, 0
    %vm924 = vcmp.gt.s32.totalorder %v920, 0
    %vm925 = vcmp.gt.s32.totalorder %v921, 0
    %v926 = vld [vmem:[%s1 + $0xe] sm:$0x1]
    %v927 = vld [vmem:[%s2 + $0xe] sm:$0x1]
    %v928 = vlaneseq
    %v929 = vshrl.u32 %v928, 7
    %v930 = vsub.s32 0, %v929
    %v931 = vrot.slane %v926, %v930
    %vm932 = vcmp.lt.s32.totalorder %v897, %v931
    %v933 = vsel %vm932, %v897, %v931
    %vm934 = vcmp.lt.s32.totalorder %v898, %v931
    %v935 = vsel %vm934, %v898, %v931
    %vm936 = vcmp.lt.s32.totalorder %v899, %v931
    %v937 = vsel %vm936, %v899, %v931
    %vm938 = vcmp.lt.s32.totalorder %v900, %v931
    %v939 = vsel %vm938, %v900, %v931
    %v940 = vsel %vm922, 1, 0
    %v941 = vsel %vm923, 1, 0
    %v942 = vsel %vm924, 1, 0
    %v943 = vsel %vm925, 1, 0
    %944 = vset.pattern.permute.xlu0 0
    %945 = vperm.xlu0 %944, %v940
    %v946 = vpop.permute.xlu0 %945
    %947 = vset.pattern.permute.xlu0 0
    %948 = vperm.xlu0 %947, %v941
    %v949 = vpop.permute.xlu0 %948
    %950 = vset.pattern.permute.xlu0 0
    %951 = vperm.xlu0 %950, %v942
    %v952 = vpop.permute.xlu0 %951
    %953 = vset.pattern.permute.xlu0 0
    %954 = vperm.xlu0 %953, %v943
    %v955 = vpop.permute.xlu0 %954
    %vm956 = vcmp.eq.s32.totalorder %v946, 1
    %vm957 = vcmp.eq.s32.totalorder %v949, 1
    %vm958 = vcmp.eq.s32.totalorder %v952, 1
    %vm959 = vcmp.eq.s32.totalorder %v955, 1
    %v960 = vsel %vm956, %v933, %v897
    %v961 = vsel %vm957, %v935, %v898
    %v962 = vsel %vm958, %v937, %v899
    %v963 = vsel %vm959, %v939, %v900
    %v964 = vlaneseq
    %v965 = vshrl.u32 %v964, 7
    %v966 = vsub.s32 0, %v965
    %v967 = vrot.slane %v927, %v966
    %vm968 = vcmp.gt.s32.totalorder %v913, %v967
    %v969 = vsel %vm968, %v913, %v967
    %vm970 = vcmp.gt.s32.totalorder %v914, %v967
    %v971 = vsel %vm970, %v914, %v967
    %vm972 = vcmp.gt.s32.totalorder %v915, %v967
    %v973 = vsel %vm972, %v915, %v967
    %vm974 = vcmp.gt.s32.totalorder %v916, %v967
    %v975 = vsel %vm974, %v916, %v967
    %v976 = vsel %vm956, %v969, %v913
    %v977 = vsel %vm957, %v971, %v914
    %v978 = vsel %vm958, %v973, %v915
    %v979 = vsel %vm959, %v975, %v916
    %s980 = scalar_lea.vmem %s0, 480
    %v981 = vld [vmem:[%s980] sm:$0xff]
    %v982 = vld [vmem:[%s980 + $0x8] sm:$0xff]
    %v983 = vld [vmem:[%s980 + $0x10] sm:$0xff]
    %v984 = vld [vmem:[%s980 + $0x18] sm:$0xff]
    %vm985 = vcmp.gt.s32.totalorder %v981, 0
    %vm986 = vcmp.gt.s32.totalorder %v982, 0
    %vm987 = vcmp.gt.s32.totalorder %v983, 0
    %vm988 = vcmp.gt.s32.totalorder %v984, 0
    %v989 = vld [vmem:[%s1 + $0xf] sm:$0x1]
    %v990 = vld [vmem:[%s2 + $0xf] sm:$0x1]
    %v991 = vlaneseq
    %v992 = vshrl.u32 %v991, 7
    %v993 = vsub.s32 0, %v992
    %v994 = vrot.slane %v989, %v993
    %vm995 = vcmp.lt.s32.totalorder %v960, %v994
    %v996 = vsel %vm995, %v960, %v994
    %vm997 = vcmp.lt.s32.totalorder %v961, %v994
    %v998 = vsel %vm997, %v961, %v994
    %vm999 = vcmp.lt.s32.totalorder %v962, %v994
    %v1000 = vsel %vm999, %v962, %v994
    %vm1001 = vcmp.lt.s32.totalorder %v963, %v994
    %v1002 = vsel %vm1001, %v963, %v994
    %v1003 = vsel %vm985, 1, 0
    %v1004 = vsel %vm986, 1, 0
    %v1005 = vsel %vm987, 1, 0
    %v1006 = vsel %vm988, 1, 0
    %1007 = vset.pattern.permute.xlu0 0
    %1008 = vperm.xlu0 %1007, %v1003
    %v1009 = vpop.permute.xlu0 %1008
    %1010 = vset.pattern.permute.xlu0 0
    %1011 = vperm.xlu0 %1010, %v1004
    %v1012 = vpop.permute.xlu0 %1011
    %1013 = vset.pattern.permute.xlu0 0
    %1014 = vperm.xlu0 %1013, %v1005
    %v1015 = vpop.permute.xlu0 %1014
    %1016 = vset.pattern.permute.xlu0 0
    %1017 = vperm.xlu0 %1016, %v1006
    %v1018 = vpop.permute.xlu0 %1017
    %vm1019 = vcmp.eq.s32.totalorder %v1009, 1
    %vm1020 = vcmp.eq.s32.totalorder %v1012, 1
    %vm1021 = vcmp.eq.s32.totalorder %v1015, 1
    %vm1022 = vcmp.eq.s32.totalorder %v1018, 1
    %v1023 = vsel %vm1019, %v996, %v960
    %v1024 = vsel %vm1020, %v998, %v961
    %v1025 = vsel %vm1021, %v1000, %v962
    %v1026 = vsel %vm1022, %v1002, %v963
    %v1027 = vlaneseq
    %v1028 = vshrl.u32 %v1027, 7
    %v1029 = vsub.s32 0, %v1028
    %v1030 = vrot.slane %v990, %v1029
    %vm1031 = vcmp.gt.s32.totalorder %v976, %v1030
    %v1032 = vsel %vm1031, %v976, %v1030
    %vm1033 = vcmp.gt.s32.totalorder %v977, %v1030
    %v1034 = vsel %vm1033, %v977, %v1030
    %vm1035 = vcmp.gt.s32.totalorder %v978, %v1030
    %v1036 = vsel %vm1035, %v978, %v1030
    %vm1037 = vcmp.gt.s32.totalorder %v979, %v1030
    %v1038 = vsel %vm1037, %v979, %v1030
    %v1039 = vsel %vm1019, %v1032, %v976
    %v1040 = vsel %vm1020, %v1034, %v977
    %v1041 = vsel %vm1021, %v1036, %v978
    %v1042 = vsel %vm1022, %v1038, %v979
    %s1043 = scalar_lea.vmem %s0, 512
    %v1044 = vld [vmem:[%s1043] sm:$0xff]
    %v1045 = vld [vmem:[%s1043 + $0x8] sm:$0xff]
    %v1046 = vld [vmem:[%s1043 + $0x10] sm:$0xff]
    %v1047 = vld [vmem:[%s1043 + $0x18] sm:$0xff]
    %vm1048 = vcmp.gt.s32.totalorder %v1044, 0
    %vm1049 = vcmp.gt.s32.totalorder %v1045, 0
    %vm1050 = vcmp.gt.s32.totalorder %v1046, 0
    %vm1051 = vcmp.gt.s32.totalorder %v1047, 0
    %v1052 = vld [vmem:[%s1 + $0x10] sm:$0x1]
    %v1053 = vld [vmem:[%s2 + $0x10] sm:$0x1]
    %v1054 = vlaneseq
    %v1055 = vshrl.u32 %v1054, 7
    %v1056 = vsub.s32 0, %v1055
    %v1057 = vrot.slane %v1052, %v1056
    %vm1058 = vcmp.lt.s32.totalorder %v1023, %v1057
    %v1059 = vsel %vm1058, %v1023, %v1057
    %vm1060 = vcmp.lt.s32.totalorder %v1024, %v1057
    %v1061 = vsel %vm1060, %v1024, %v1057
    %vm1062 = vcmp.lt.s32.totalorder %v1025, %v1057
    %v1063 = vsel %vm1062, %v1025, %v1057
    %vm1064 = vcmp.lt.s32.totalorder %v1026, %v1057
    %v1065 = vsel %vm1064, %v1026, %v1057
    %v1066 = vsel %vm1048, 1, 0
    %v1067 = vsel %vm1049, 1, 0
    %v1068 = vsel %vm1050, 1, 0
    %v1069 = vsel %vm1051, 1, 0
    %1070 = vset.pattern.permute.xlu0 0
    %1071 = vperm.xlu0 %1070, %v1066
    %v1072 = vpop.permute.xlu0 %1071
    %1073 = vset.pattern.permute.xlu0 0
    %1074 = vperm.xlu0 %1073, %v1067
    %v1075 = vpop.permute.xlu0 %1074
    %1076 = vset.pattern.permute.xlu0 0
    %1077 = vperm.xlu0 %1076, %v1068
    %v1078 = vpop.permute.xlu0 %1077
    %1079 = vset.pattern.permute.xlu0 0
    %1080 = vperm.xlu0 %1079, %v1069
    %v1081 = vpop.permute.xlu0 %1080
    %vm1082 = vcmp.eq.s32.totalorder %v1072, 1
    %vm1083 = vcmp.eq.s32.totalorder %v1075, 1
    %vm1084 = vcmp.eq.s32.totalorder %v1078, 1
    %vm1085 = vcmp.eq.s32.totalorder %v1081, 1
    %v1086 = vsel %vm1082, %v1059, %v1023
    %v1087 = vsel %vm1083, %v1061, %v1024
    %v1088 = vsel %vm1084, %v1063, %v1025
    %v1089 = vsel %vm1085, %v1065, %v1026
    %v1090 = vlaneseq
    %v1091 = vshrl.u32 %v1090, 7
    %v1092 = vsub.s32 0, %v1091
    %v1093 = vrot.slane %v1053, %v1092
    %vm1094 = vcmp.gt.s32.totalorder %v1039, %v1093
    %v1095 = vsel %vm1094, %v1039, %v1093
    %vm1096 = vcmp.gt.s32.totalorder %v1040, %v1093
    %v1097 = vsel %vm1096, %v1040, %v1093
    %vm1098 = vcmp.gt.s32.totalorder %v1041, %v1093
    %v1099 = vsel %vm1098, %v1041, %v1093
    %vm1100 = vcmp.gt.s32.totalorder %v1042, %v1093
    %v1101 = vsel %vm1100, %v1042, %v1093
    %v1102 = vsel %vm1082, %v1095, %v1039
    %v1103 = vsel %vm1083, %v1097, %v1040
    %v1104 = vsel %vm1084, %v1099, %v1041
    %v1105 = vsel %vm1085, %v1101, %v1042
    %s1106 = scalar_lea.vmem %s0, 544
    %v1107 = vld [vmem:[%s1106] sm:$0xff]
    %v1108 = vld [vmem:[%s1106 + $0x8] sm:$0xff]
    %v1109 = vld [vmem:[%s1106 + $0x10] sm:$0xff]
    %v1110 = vld [vmem:[%s1106 + $0x18] sm:$0xff]
    %vm1111 = vcmp.gt.s32.totalorder %v1107, 0
    %vm1112 = vcmp.gt.s32.totalorder %v1108, 0
    %vm1113 = vcmp.gt.s32.totalorder %v1109, 0
    %vm1114 = vcmp.gt.s32.totalorder %v1110, 0
    %v1115 = vld [vmem:[%s1 + $0x11] sm:$0x1]
    %v1116 = vld [vmem:[%s2 + $0x11] sm:$0x1]
    %v1117 = vlaneseq
    %v1118 = vshrl.u32 %v1117, 7
    %v1119 = vsub.s32 0, %v1118
    %v1120 = vrot.slane %v1115, %v1119
    %vm1121 = vcmp.lt.s32.totalorder %v1086, %v1120
    %v1122 = vsel %vm1121, %v1086, %v1120
    %vm1123 = vcmp.lt.s32.totalorder %v1087, %v1120
    %v1124 = vsel %vm1123, %v1087, %v1120
    %vm1125 = vcmp.lt.s32.totalorder %v1088, %v1120
    %v1126 = vsel %vm1125, %v1088, %v1120
    %vm1127 = vcmp.lt.s32.totalorder %v1089, %v1120
    %v1128 = vsel %vm1127, %v1089, %v1120
    %v1129 = vsel %vm1111, 1, 0
    %v1130 = vsel %vm1112, 1, 0
    %v1131 = vsel %vm1113, 1, 0
    %v1132 = vsel %vm1114, 1, 0
    %1133 = vset.pattern.permute.xlu0 0
    %1134 = vperm.xlu0 %1133, %v1129
    %v1135 = vpop.permute.xlu0 %1134
    %1136 = vset.pattern.permute.xlu0 0
    %1137 = vperm.xlu0 %1136, %v1130
    %v1138 = vpop.permute.xlu0 %1137
    %1139 = vset.pattern.permute.xlu0 0
    %1140 = vperm.xlu0 %1139, %v1131
    %v1141 = vpop.permute.xlu0 %1140
    %1142 = vset.pattern.permute.xlu0 0
    %1143 = vperm.xlu0 %1142, %v1132
    %v1144 = vpop.permute.xlu0 %1143
    %vm1145 = vcmp.eq.s32.totalorder %v1135, 1
    %vm1146 = vcmp.eq.s32.totalorder %v1138, 1
    %vm1147 = vcmp.eq.s32.totalorder %v1141, 1
    %vm1148 = vcmp.eq.s32.totalorder %v1144, 1
    %v1149 = vsel %vm1145, %v1122, %v1086
    %v1150 = vsel %vm1146, %v1124, %v1087
    %v1151 = vsel %vm1147, %v1126, %v1088
    %v1152 = vsel %vm1148, %v1128, %v1089
    %v1153 = vlaneseq
    %v1154 = vshrl.u32 %v1153, 7
    %v1155 = vsub.s32 0, %v1154
    %v1156 = vrot.slane %v1116, %v1155
    %vm1157 = vcmp.gt.s32.totalorder %v1102, %v1156
    %v1158 = vsel %vm1157, %v1102, %v1156
    %vm1159 = vcmp.gt.s32.totalorder %v1103, %v1156
    %v1160 = vsel %vm1159, %v1103, %v1156
    %vm1161 = vcmp.gt.s32.totalorder %v1104, %v1156
    %v1162 = vsel %vm1161, %v1104, %v1156
    %vm1163 = vcmp.gt.s32.totalorder %v1105, %v1156
    %v1164 = vsel %vm1163, %v1105, %v1156
    %v1165 = vsel %vm1145, %v1158, %v1102
    %v1166 = vsel %vm1146, %v1160, %v1103
    %v1167 = vsel %vm1147, %v1162, %v1104
    %v1168 = vsel %vm1148, %v1164, %v1105
    %s1169 = scalar_lea.vmem %s0, 576
    %v1170 = vld [vmem:[%s1169] sm:$0xff]
    %v1171 = vld [vmem:[%s1169 + $0x8] sm:$0xff]
    %v1172 = vld [vmem:[%s1169 + $0x10] sm:$0xff]
    %v1173 = vld [vmem:[%s1169 + $0x18] sm:$0xff]
    %vm1174 = vcmp.gt.s32.totalorder %v1170, 0
    %vm1175 = vcmp.gt.s32.totalorder %v1171, 0
    %vm1176 = vcmp.gt.s32.totalorder %v1172, 0
    %vm1177 = vcmp.gt.s32.totalorder %v1173, 0
    %v1178 = vld [vmem:[%s1 + $0x12] sm:$0x1]
    %v1179 = vld [vmem:[%s2 + $0x12] sm:$0x1]
    %v1180 = vlaneseq
    %v1181 = vshrl.u32 %v1180, 7
    %v1182 = vsub.s32 0, %v1181
    %v1183 = vrot.slane %v1178, %v1182
    %vm1184 = vcmp.lt.s32.totalorder %v1149, %v1183
    %v1185 = vsel %vm1184, %v1149, %v1183
    %vm1186 = vcmp.lt.s32.totalorder %v1150, %v1183
    %v1187 = vsel %vm1186, %v1150, %v1183
    %vm1188 = vcmp.lt.s32.totalorder %v1151, %v1183
    %v1189 = vsel %vm1188, %v1151, %v1183
    %vm1190 = vcmp.lt.s32.totalorder %v1152, %v1183
    %v1191 = vsel %vm1190, %v1152, %v1183
    %v1192 = vsel %vm1174, 1, 0
    %v1193 = vsel %vm1175, 1, 0
    %v1194 = vsel %vm1176, 1, 0
    %v1195 = vsel %vm1177, 1, 0
    %1196 = vset.pattern.permute.xlu0 0
    %1197 = vperm.xlu0 %1196, %v1192
    %v1198 = vpop.permute.xlu0 %1197
    %1199 = vset.pattern.permute.xlu0 0
    %1200 = vperm.xlu0 %1199, %v1193
    %v1201 = vpop.permute.xlu0 %1200
    %1202 = vset.pattern.permute.xlu0 0
    %1203 = vperm.xlu0 %1202, %v1194
    %v1204 = vpop.permute.xlu0 %1203
    %1205 = vset.pattern.permute.xlu0 0
    %1206 = vperm.xlu0 %1205, %v1195
    %v1207 = vpop.permute.xlu0 %1206
    %vm1208 = vcmp.eq.s32.totalorder %v1198, 1
    %vm1209 = vcmp.eq.s32.totalorder %v1201, 1
    %vm1210 = vcmp.eq.s32.totalorder %v1204, 1
    %vm1211 = vcmp.eq.s32.totalorder %v1207, 1
    %v1212 = vsel %vm1208, %v1185, %v1149
    %v1213 = vsel %vm1209, %v1187, %v1150
    %v1214 = vsel %vm1210, %v1189, %v1151
    %v1215 = vsel %vm1211, %v1191, %v1152
    %v1216 = vlaneseq
    %v1217 = vshrl.u32 %v1216, 7
    %v1218 = vsub.s32 0, %v1217
    %v1219 = vrot.slane %v1179, %v1218
    %vm1220 = vcmp.gt.s32.totalorder %v1165, %v1219
    %v1221 = vsel %vm1220, %v1165, %v1219
    %vm1222 = vcmp.gt.s32.totalorder %v1166, %v1219
    %v1223 = vsel %vm1222, %v1166, %v1219
    %vm1224 = vcmp.gt.s32.totalorder %v1167, %v1219
    %v1225 = vsel %vm1224, %v1167, %v1219
    %vm1226 = vcmp.gt.s32.totalorder %v1168, %v1219
    %v1227 = vsel %vm1226, %v1168, %v1219
    %v1228 = vsel %vm1208, %v1221, %v1165
    %v1229 = vsel %vm1209, %v1223, %v1166
    %v1230 = vsel %vm1210, %v1225, %v1167
    %v1231 = vsel %vm1211, %v1227, %v1168
    %s1232 = scalar_lea.vmem %s0, 608
    %v1233 = vld [vmem:[%s1232] sm:$0xff]
    %v1234 = vld [vmem:[%s1232 + $0x8] sm:$0xff]
    %v1235 = vld [vmem:[%s1232 + $0x10] sm:$0xff]
    %v1236 = vld [vmem:[%s1232 + $0x18] sm:$0xff]
    %vm1237 = vcmp.gt.s32.totalorder %v1233, 0
    %vm1238 = vcmp.gt.s32.totalorder %v1234, 0
    %vm1239 = vcmp.gt.s32.totalorder %v1235, 0
    %vm1240 = vcmp.gt.s32.totalorder %v1236, 0
    %v1241 = vld [vmem:[%s1 + $0x13] sm:$0x1]
    %v1242 = vld [vmem:[%s2 + $0x13] sm:$0x1]
    %v1243 = vlaneseq
    %v1244 = vshrl.u32 %v1243, 7
    %v1245 = vsub.s32 0, %v1244
    %v1246 = vrot.slane %v1241, %v1245
    %vm1247 = vcmp.lt.s32.totalorder %v1212, %v1246
    %v1248 = vsel %vm1247, %v1212, %v1246
    %vm1249 = vcmp.lt.s32.totalorder %v1213, %v1246
    %v1250 = vsel %vm1249, %v1213, %v1246
    %vm1251 = vcmp.lt.s32.totalorder %v1214, %v1246
    %v1252 = vsel %vm1251, %v1214, %v1246
    %vm1253 = vcmp.lt.s32.totalorder %v1215, %v1246
    %v1254 = vsel %vm1253, %v1215, %v1246
    %v1255 = vsel %vm1237, 1, 0
    %v1256 = vsel %vm1238, 1, 0
    %v1257 = vsel %vm1239, 1, 0
    %v1258 = vsel %vm1240, 1, 0
    %1259 = vset.pattern.permute.xlu0 0
    %1260 = vperm.xlu0 %1259, %v1255
    %v1261 = vpop.permute.xlu0 %1260
    %1262 = vset.pattern.permute.xlu0 0
    %1263 = vperm.xlu0 %1262, %v1256
    %v1264 = vpop.permute.xlu0 %1263
    %1265 = vset.pattern.permute.xlu0 0
    %1266 = vperm.xlu0 %1265, %v1257
    %v1267 = vpop.permute.xlu0 %1266
    %1268 = vset.pattern.permute.xlu0 0
    %1269 = vperm.xlu0 %1268, %v1258
    %v1270 = vpop.permute.xlu0 %1269
    %vm1271 = vcmp.eq.s32.totalorder %v1261, 1
    %vm1272 = vcmp.eq.s32.totalorder %v1264, 1
    %vm1273 = vcmp.eq.s32.totalorder %v1267, 1
    %vm1274 = vcmp.eq.s32.totalorder %v1270, 1
    %v1275 = vsel %vm1271, %v1248, %v1212
    %v1276 = vsel %vm1272, %v1250, %v1213
    %v1277 = vsel %vm1273, %v1252, %v1214
    %v1278 = vsel %vm1274, %v1254, %v1215
    %v1279 = vlaneseq
    %v1280 = vshrl.u32 %v1279, 7
    %v1281 = vsub.s32 0, %v1280
    %v1282 = vrot.slane %v1242, %v1281
    %vm1283 = vcmp.gt.s32.totalorder %v1228, %v1282
    %v1284 = vsel %vm1283, %v1228, %v1282
    %vm1285 = vcmp.gt.s32.totalorder %v1229, %v1282
    %v1286 = vsel %vm1285, %v1229, %v1282
    %vm1287 = vcmp.gt.s32.totalorder %v1230, %v1282
    %v1288 = vsel %vm1287, %v1230, %v1282
    %vm1289 = vcmp.gt.s32.totalorder %v1231, %v1282
    %v1290 = vsel %vm1289, %v1231, %v1282
    %v1291 = vsel %vm1271, %v1284, %v1228
    %v1292 = vsel %vm1272, %v1286, %v1229
    %v1293 = vsel %vm1273, %v1288, %v1230
    %v1294 = vsel %vm1274, %v1290, %v1231
    %s1295 = scalar_lea.vmem %s0, 640
    %v1296 = vld [vmem:[%s1295] sm:$0xff]
    %v1297 = vld [vmem:[%s1295 + $0x8] sm:$0xff]
    %v1298 = vld [vmem:[%s1295 + $0x10] sm:$0xff]
    %v1299 = vld [vmem:[%s1295 + $0x18] sm:$0xff]
    %vm1300 = vcmp.gt.s32.totalorder %v1296, 0
    %vm1301 = vcmp.gt.s32.totalorder %v1297, 0
    %vm1302 = vcmp.gt.s32.totalorder %v1298, 0
    %vm1303 = vcmp.gt.s32.totalorder %v1299, 0
    %v1304 = vld [vmem:[%s1 + $0x14] sm:$0x1]
    %v1305 = vld [vmem:[%s2 + $0x14] sm:$0x1]
    %v1306 = vlaneseq
    %v1307 = vshrl.u32 %v1306, 7
    %v1308 = vsub.s32 0, %v1307
    %v1309 = vrot.slane %v1304, %v1308
    %vm1310 = vcmp.lt.s32.totalorder %v1275, %v1309
    %v1311 = vsel %vm1310, %v1275, %v1309
    %vm1312 = vcmp.lt.s32.totalorder %v1276, %v1309
    %v1313 = vsel %vm1312, %v1276, %v1309
    %vm1314 = vcmp.lt.s32.totalorder %v1277, %v1309
    %v1315 = vsel %vm1314, %v1277, %v1309
    %vm1316 = vcmp.lt.s32.totalorder %v1278, %v1309
    %v1317 = vsel %vm1316, %v1278, %v1309
    %v1318 = vsel %vm1300, 1, 0
    %v1319 = vsel %vm1301, 1, 0
    %v1320 = vsel %vm1302, 1, 0
    %v1321 = vsel %vm1303, 1, 0
    %1322 = vset.pattern.permute.xlu0 0
    %1323 = vperm.xlu0 %1322, %v1318
    %v1324 = vpop.permute.xlu0 %1323
    %1325 = vset.pattern.permute.xlu0 0
    %1326 = vperm.xlu0 %1325, %v1319
    %v1327 = vpop.permute.xlu0 %1326
    %1328 = vset.pattern.permute.xlu0 0
    %1329 = vperm.xlu0 %1328, %v1320
    %v1330 = vpop.permute.xlu0 %1329
    %1331 = vset.pattern.permute.xlu0 0
    %1332 = vperm.xlu0 %1331, %v1321
    %v1333 = vpop.permute.xlu0 %1332
    %vm1334 = vcmp.eq.s32.totalorder %v1324, 1
    %vm1335 = vcmp.eq.s32.totalorder %v1327, 1
    %vm1336 = vcmp.eq.s32.totalorder %v1330, 1
    %vm1337 = vcmp.eq.s32.totalorder %v1333, 1
    %v1338 = vsel %vm1334, %v1311, %v1275
    %v1339 = vsel %vm1335, %v1313, %v1276
    %v1340 = vsel %vm1336, %v1315, %v1277
    %v1341 = vsel %vm1337, %v1317, %v1278
    %v1342 = vlaneseq
    %v1343 = vshrl.u32 %v1342, 7
    %v1344 = vsub.s32 0, %v1343
    %v1345 = vrot.slane %v1305, %v1344
    %vm1346 = vcmp.gt.s32.totalorder %v1291, %v1345
    %v1347 = vsel %vm1346, %v1291, %v1345
    %vm1348 = vcmp.gt.s32.totalorder %v1292, %v1345
    %v1349 = vsel %vm1348, %v1292, %v1345
    %vm1350 = vcmp.gt.s32.totalorder %v1293, %v1345
    %v1351 = vsel %vm1350, %v1293, %v1345
    %vm1352 = vcmp.gt.s32.totalorder %v1294, %v1345
    %v1353 = vsel %vm1352, %v1294, %v1345
    %v1354 = vsel %vm1334, %v1347, %v1291
    %v1355 = vsel %vm1335, %v1349, %v1292
    %v1356 = vsel %vm1336, %v1351, %v1293
    %v1357 = vsel %vm1337, %v1353, %v1294
    %s1358 = scalar_lea.vmem %s0, 672
    %v1359 = vld [vmem:[%s1358] sm:$0xff]
    %v1360 = vld [vmem:[%s1358 + $0x8] sm:$0xff]
    %v1361 = vld [vmem:[%s1358 + $0x10] sm:$0xff]
    %v1362 = vld [vmem:[%s1358 + $0x18] sm:$0xff]
    %vm1363 = vcmp.gt.s32.totalorder %v1359, 0
    %vm1364 = vcmp.gt.s32.totalorder %v1360, 0
    %vm1365 = vcmp.gt.s32.totalorder %v1361, 0
    %vm1366 = vcmp.gt.s32.totalorder %v1362, 0
    %v1367 = vld [vmem:[%s1 + $0x15] sm:$0x1]
    %v1368 = vld [vmem:[%s2 + $0x15] sm:$0x1]
    %v1369 = vlaneseq
    %v1370 = vshrl.u32 %v1369, 7
    %v1371 = vsub.s32 0, %v1370
    %v1372 = vrot.slane %v1367, %v1371
    %vm1373 = vcmp.lt.s32.totalorder %v1338, %v1372
    %v1374 = vsel %vm1373, %v1338, %v1372
    %vm1375 = vcmp.lt.s32.totalorder %v1339, %v1372
    %v1376 = vsel %vm1375, %v1339, %v1372
    %vm1377 = vcmp.lt.s32.totalorder %v1340, %v1372
    %v1378 = vsel %vm1377, %v1340, %v1372
    %vm1379 = vcmp.lt.s32.totalorder %v1341, %v1372
    %v1380 = vsel %vm1379, %v1341, %v1372
    %v1381 = vsel %vm1363, 1, 0
    %v1382 = vsel %vm1364, 1, 0
    %v1383 = vsel %vm1365, 1, 0
    %v1384 = vsel %vm1366, 1, 0
    %1385 = vset.pattern.permute.xlu0 0
    %1386 = vperm.xlu0 %1385, %v1381
    %v1387 = vpop.permute.xlu0 %1386
    %1388 = vset.pattern.permute.xlu0 0
    %1389 = vperm.xlu0 %1388, %v1382
    %v1390 = vpop.permute.xlu0 %1389
    %1391 = vset.pattern.permute.xlu0 0
    %1392 = vperm.xlu0 %1391, %v1383
    %v1393 = vpop.permute.xlu0 %1392
    %1394 = vset.pattern.permute.xlu0 0
    %1395 = vperm.xlu0 %1394, %v1384
    %v1396 = vpop.permute.xlu0 %1395
    %vm1397 = vcmp.eq.s32.totalorder %v1387, 1
    %vm1398 = vcmp.eq.s32.totalorder %v1390, 1
    %vm1399 = vcmp.eq.s32.totalorder %v1393, 1
    %vm1400 = vcmp.eq.s32.totalorder %v1396, 1
    %v1401 = vsel %vm1397, %v1374, %v1338
    %v1402 = vsel %vm1398, %v1376, %v1339
    %v1403 = vsel %vm1399, %v1378, %v1340
    %v1404 = vsel %vm1400, %v1380, %v1341
    %v1405 = vlaneseq
    %v1406 = vshrl.u32 %v1405, 7
    %v1407 = vsub.s32 0, %v1406
    %v1408 = vrot.slane %v1368, %v1407
    %vm1409 = vcmp.gt.s32.totalorder %v1354, %v1408
    %v1410 = vsel %vm1409, %v1354, %v1408
    %vm1411 = vcmp.gt.s32.totalorder %v1355, %v1408
    %v1412 = vsel %vm1411, %v1355, %v1408
    %vm1413 = vcmp.gt.s32.totalorder %v1356, %v1408
    %v1414 = vsel %vm1413, %v1356, %v1408
    %vm1415 = vcmp.gt.s32.totalorder %v1357, %v1408
    %v1416 = vsel %vm1415, %v1357, %v1408
    %v1417 = vsel %vm1397, %v1410, %v1354
    %v1418 = vsel %vm1398, %v1412, %v1355
    %v1419 = vsel %vm1399, %v1414, %v1356
    %v1420 = vsel %vm1400, %v1416, %v1357
    %s1421 = scalar_lea.vmem %s0, 704
    %v1422 = vld [vmem:[%s1421] sm:$0xff]
    %v1423 = vld [vmem:[%s1421 + $0x8] sm:$0xff]
    %v1424 = vld [vmem:[%s1421 + $0x10] sm:$0xff]
    %v1425 = vld [vmem:[%s1421 + $0x18] sm:$0xff]
    %vm1426 = vcmp.gt.s32.totalorder %v1422, 0
    %vm1427 = vcmp.gt.s32.totalorder %v1423, 0
    %vm1428 = vcmp.gt.s32.totalorder %v1424, 0
    %vm1429 = vcmp.gt.s32.totalorder %v1425, 0
    %v1430 = vld [vmem:[%s1 + $0x16] sm:$0x1]
    %v1431 = vld [vmem:[%s2 + $0x16] sm:$0x1]
    %v1432 = vlaneseq
    %v1433 = vshrl.u32 %v1432, 7
    %v1434 = vsub.s32 0, %v1433
    %v1435 = vrot.slane %v1430, %v1434
    %vm1436 = vcmp.lt.s32.totalorder %v1401, %v1435
    %v1437 = vsel %vm1436, %v1401, %v1435
    %vm1438 = vcmp.lt.s32.totalorder %v1402, %v1435
    %v1439 = vsel %vm1438, %v1402, %v1435
    %vm1440 = vcmp.lt.s32.totalorder %v1403, %v1435
    %v1441 = vsel %vm1440, %v1403, %v1435
    %vm1442 = vcmp.lt.s32.totalorder %v1404, %v1435
    %v1443 = vsel %vm1442, %v1404, %v1435
    %v1444 = vsel %vm1426, 1, 0
    %v1445 = vsel %vm1427, 1, 0
    %v1446 = vsel %vm1428, 1, 0
    %v1447 = vsel %vm1429, 1, 0
    %1448 = vset.pattern.permute.xlu0 0
    %1449 = vperm.xlu0 %1448, %v1444
    %v1450 = vpop.permute.xlu0 %1449
    %1451 = vset.pattern.permute.xlu0 0
    %1452 = vperm.xlu0 %1451, %v1445
    %v1453 = vpop.permute.xlu0 %1452
    %1454 = vset.pattern.permute.xlu0 0
    %1455 = vperm.xlu0 %1454, %v1446
    %v1456 = vpop.permute.xlu0 %1455
    %1457 = vset.pattern.permute.xlu0 0
    %1458 = vperm.xlu0 %1457, %v1447
    %v1459 = vpop.permute.xlu0 %1458
    %vm1460 = vcmp.eq.s32.totalorder %v1450, 1
    %vm1461 = vcmp.eq.s32.totalorder %v1453, 1
    %vm1462 = vcmp.eq.s32.totalorder %v1456, 1
    %vm1463 = vcmp.eq.s32.totalorder %v1459, 1
    %v1464 = vsel %vm1460, %v1437, %v1401
    %v1465 = vsel %vm1461, %v1439, %v1402
    %v1466 = vsel %vm1462, %v1441, %v1403
    %v1467 = vsel %vm1463, %v1443, %v1404
    %v1468 = vlaneseq
    %v1469 = vshrl.u32 %v1468, 7
    %v1470 = vsub.s32 0, %v1469
    %v1471 = vrot.slane %v1431, %v1470
    %vm1472 = vcmp.gt.s32.totalorder %v1417, %v1471
    %v1473 = vsel %vm1472, %v1417, %v1471
    %vm1474 = vcmp.gt.s32.totalorder %v1418, %v1471
    %v1475 = vsel %vm1474, %v1418, %v1471
    %vm1476 = vcmp.gt.s32.totalorder %v1419, %v1471
    %v1477 = vsel %vm1476, %v1419, %v1471
    %vm1478 = vcmp.gt.s32.totalorder %v1420, %v1471
    %v1479 = vsel %vm1478, %v1420, %v1471
    %v1480 = vsel %vm1460, %v1473, %v1417
    %v1481 = vsel %vm1461, %v1475, %v1418
    %v1482 = vsel %vm1462, %v1477, %v1419
    %v1483 = vsel %vm1463, %v1479, %v1420
    %s1484 = scalar_lea.vmem %s0, 736
    %v1485 = vld [vmem:[%s1484] sm:$0xff]
    %v1486 = vld [vmem:[%s1484 + $0x8] sm:$0xff]
    %v1487 = vld [vmem:[%s1484 + $0x10] sm:$0xff]
    %v1488 = vld [vmem:[%s1484 + $0x18] sm:$0xff]
    %vm1489 = vcmp.gt.s32.totalorder %v1485, 0
    %vm1490 = vcmp.gt.s32.totalorder %v1486, 0
    %vm1491 = vcmp.gt.s32.totalorder %v1487, 0
    %vm1492 = vcmp.gt.s32.totalorder %v1488, 0
    %v1493 = vld [vmem:[%s1 + $0x17] sm:$0x1]
    %v1494 = vld [vmem:[%s2 + $0x17] sm:$0x1]
    %v1495 = vlaneseq
    %v1496 = vshrl.u32 %v1495, 7
    %v1497 = vsub.s32 0, %v1496
    %v1498 = vrot.slane %v1493, %v1497
    %vm1499 = vcmp.lt.s32.totalorder %v1464, %v1498
    %v1500 = vsel %vm1499, %v1464, %v1498
    %vm1501 = vcmp.lt.s32.totalorder %v1465, %v1498
    %v1502 = vsel %vm1501, %v1465, %v1498
    %vm1503 = vcmp.lt.s32.totalorder %v1466, %v1498
    %v1504 = vsel %vm1503, %v1466, %v1498
    %vm1505 = vcmp.lt.s32.totalorder %v1467, %v1498
    %v1506 = vsel %vm1505, %v1467, %v1498
    %v1507 = vsel %vm1489, 1, 0
    %v1508 = vsel %vm1490, 1, 0
    %v1509 = vsel %vm1491, 1, 0
    %v1510 = vsel %vm1492, 1, 0
    %1511 = vset.pattern.permute.xlu0 0
    %1512 = vperm.xlu0 %1511, %v1507
    %v1513 = vpop.permute.xlu0 %1512
    %1514 = vset.pattern.permute.xlu0 0
    %1515 = vperm.xlu0 %1514, %v1508
    %v1516 = vpop.permute.xlu0 %1515
    %1517 = vset.pattern.permute.xlu0 0
    %1518 = vperm.xlu0 %1517, %v1509
    %v1519 = vpop.permute.xlu0 %1518
    %1520 = vset.pattern.permute.xlu0 0
    %1521 = vperm.xlu0 %1520, %v1510
    %v1522 = vpop.permute.xlu0 %1521
    %vm1523 = vcmp.eq.s32.totalorder %v1513, 1
    %vm1524 = vcmp.eq.s32.totalorder %v1516, 1
    %vm1525 = vcmp.eq.s32.totalorder %v1519, 1
    %vm1526 = vcmp.eq.s32.totalorder %v1522, 1
    %v1527 = vsel %vm1523, %v1500, %v1464
    %v1528 = vsel %vm1524, %v1502, %v1465
    %v1529 = vsel %vm1525, %v1504, %v1466
    %v1530 = vsel %vm1526, %v1506, %v1467
    %v1531 = vlaneseq
    %v1532 = vshrl.u32 %v1531, 7
    %v1533 = vsub.s32 0, %v1532
    %v1534 = vrot.slane %v1494, %v1533
    %vm1535 = vcmp.gt.s32.totalorder %v1480, %v1534
    %v1536 = vsel %vm1535, %v1480, %v1534
    %vm1537 = vcmp.gt.s32.totalorder %v1481, %v1534
    %v1538 = vsel %vm1537, %v1481, %v1534
    %vm1539 = vcmp.gt.s32.totalorder %v1482, %v1534
    %v1540 = vsel %vm1539, %v1482, %v1534
    %vm1541 = vcmp.gt.s32.totalorder %v1483, %v1534
    %v1542 = vsel %vm1541, %v1483, %v1534
    %v1543 = vsel %vm1523, %v1536, %v1480
    %v1544 = vsel %vm1524, %v1538, %v1481
    %v1545 = vsel %vm1525, %v1540, %v1482
    %v1546 = vsel %vm1526, %v1542, %v1483
    %s1547 = scalar_lea.vmem %s0, 768
    %v1548 = vld [vmem:[%s1547] sm:$0xff]
    %v1549 = vld [vmem:[%s1547 + $0x8] sm:$0xff]
    %v1550 = vld [vmem:[%s1547 + $0x10] sm:$0xff]
    %v1551 = vld [vmem:[%s1547 + $0x18] sm:$0xff]
    %vm1552 = vcmp.gt.s32.totalorder %v1548, 0
    %vm1553 = vcmp.gt.s32.totalorder %v1549, 0
    %vm1554 = vcmp.gt.s32.totalorder %v1550, 0
    %vm1555 = vcmp.gt.s32.totalorder %v1551, 0
    %v1556 = vld [vmem:[%s1 + $0x18] sm:$0x1]
    %v1557 = vld [vmem:[%s2 + $0x18] sm:$0x1]
    %v1558 = vlaneseq
    %v1559 = vshrl.u32 %v1558, 7
    %v1560 = vsub.s32 0, %v1559
    %v1561 = vrot.slane %v1556, %v1560
    %vm1562 = vcmp.lt.s32.totalorder %v1527, %v1561
    %v1563 = vsel %vm1562, %v1527, %v1561
    %vm1564 = vcmp.lt.s32.totalorder %v1528, %v1561
    %v1565 = vsel %vm1564, %v1528, %v1561
    %vm1566 = vcmp.lt.s32.totalorder %v1529, %v1561
    %v1567 = vsel %vm1566, %v1529, %v1561
    %vm1568 = vcmp.lt.s32.totalorder %v1530, %v1561
    %v1569 = vsel %vm1568, %v1530, %v1561
    %v1570 = vsel %vm1552, 1, 0
    %v1571 = vsel %vm1553, 1, 0
    %v1572 = vsel %vm1554, 1, 0
    %v1573 = vsel %vm1555, 1, 0
    %1574 = vset.pattern.permute.xlu0 0
    %1575 = vperm.xlu0 %1574, %v1570
    %v1576 = vpop.permute.xlu0 %1575
    %1577 = vset.pattern.permute.xlu0 0
    %1578 = vperm.xlu0 %1577, %v1571
    %v1579 = vpop.permute.xlu0 %1578
    %1580 = vset.pattern.permute.xlu0 0
    %1581 = vperm.xlu0 %1580, %v1572
    %v1582 = vpop.permute.xlu0 %1581
    %1583 = vset.pattern.permute.xlu0 0
    %1584 = vperm.xlu0 %1583, %v1573
    %v1585 = vpop.permute.xlu0 %1584
    %vm1586 = vcmp.eq.s32.totalorder %v1576, 1
    %vm1587 = vcmp.eq.s32.totalorder %v1579, 1
    %vm1588 = vcmp.eq.s32.totalorder %v1582, 1
    %vm1589 = vcmp.eq.s32.totalorder %v1585, 1
    %v1590 = vsel %vm1586, %v1563, %v1527
    %v1591 = vsel %vm1587, %v1565, %v1528
    %v1592 = vsel %vm1588, %v1567, %v1529
    %v1593 = vsel %vm1589, %v1569, %v1530
    %v1594 = vlaneseq
    %v1595 = vshrl.u32 %v1594, 7
    %v1596 = vsub.s32 0, %v1595
    %v1597 = vrot.slane %v1557, %v1596
    %vm1598 = vcmp.gt.s32.totalorder %v1543, %v1597
    %v1599 = vsel %vm1598, %v1543, %v1597
    %vm1600 = vcmp.gt.s32.totalorder %v1544, %v1597
    %v1601 = vsel %vm1600, %v1544, %v1597
    %vm1602 = vcmp.gt.s32.totalorder %v1545, %v1597
    %v1603 = vsel %vm1602, %v1545, %v1597
    %vm1604 = vcmp.gt.s32.totalorder %v1546, %v1597
    %v1605 = vsel %vm1604, %v1546, %v1597
    %v1606 = vsel %vm1586, %v1599, %v1543
    %v1607 = vsel %vm1587, %v1601, %v1544
    %v1608 = vsel %vm1588, %v1603, %v1545
    %v1609 = vsel %vm1589, %v1605, %v1546
    %s1610 = scalar_lea.vmem %s0, 800
    %v1611 = vld [vmem:[%s1610] sm:$0xff]
    %v1612 = vld [vmem:[%s1610 + $0x8] sm:$0xff]
    %v1613 = vld [vmem:[%s1610 + $0x10] sm:$0xff]
    %v1614 = vld [vmem:[%s1610 + $0x18] sm:$0xff]
    %vm1615 = vcmp.gt.s32.totalorder %v1611, 0
    %vm1616 = vcmp.gt.s32.totalorder %v1612, 0
    %vm1617 = vcmp.gt.s32.totalorder %v1613, 0
    %vm1618 = vcmp.gt.s32.totalorder %v1614, 0
    %v1619 = vld [vmem:[%s1 + $0x19] sm:$0x1]
    %v1620 = vld [vmem:[%s2 + $0x19] sm:$0x1]
    %v1621 = vlaneseq
    %v1622 = vshrl.u32 %v1621, 7
    %v1623 = vsub.s32 0, %v1622
    %v1624 = vrot.slane %v1619, %v1623
    %vm1625 = vcmp.lt.s32.totalorder %v1590, %v1624
    %v1626 = vsel %vm1625, %v1590, %v1624
    %vm1627 = vcmp.lt.s32.totalorder %v1591, %v1624
    %v1628 = vsel %vm1627, %v1591, %v1624
    %vm1629 = vcmp.lt.s32.totalorder %v1592, %v1624
    %v1630 = vsel %vm1629, %v1592, %v1624
    %vm1631 = vcmp.lt.s32.totalorder %v1593, %v1624
    %v1632 = vsel %vm1631, %v1593, %v1624
    %v1633 = vsel %vm1615, 1, 0
    %v1634 = vsel %vm1616, 1, 0
    %v1635 = vsel %vm1617, 1, 0
    %v1636 = vsel %vm1618, 1, 0
    %1637 = vset.pattern.permute.xlu0 0
    %1638 = vperm.xlu0 %1637, %v1633
    %v1639 = vpop.permute.xlu0 %1638
    %1640 = vset.pattern.permute.xlu0 0
    %1641 = vperm.xlu0 %1640, %v1634
    %v1642 = vpop.permute.xlu0 %1641
    %1643 = vset.pattern.permute.xlu0 0
    %1644 = vperm.xlu0 %1643, %v1635
    %v1645 = vpop.permute.xlu0 %1644
    %1646 = vset.pattern.permute.xlu0 0
    %1647 = vperm.xlu0 %1646, %v1636
    %v1648 = vpop.permute.xlu0 %1647
    %vm1649 = vcmp.eq.s32.totalorder %v1639, 1
    %vm1650 = vcmp.eq.s32.totalorder %v1642, 1
    %vm1651 = vcmp.eq.s32.totalorder %v1645, 1
    %vm1652 = vcmp.eq.s32.totalorder %v1648, 1
    %v1653 = vsel %vm1649, %v1626, %v1590
    %v1654 = vsel %vm1650, %v1628, %v1591
    %v1655 = vsel %vm1651, %v1630, %v1592
    %v1656 = vsel %vm1652, %v1632, %v1593
    %v1657 = vlaneseq
    %v1658 = vshrl.u32 %v1657, 7
    %v1659 = vsub.s32 0, %v1658
    %v1660 = vrot.slane %v1620, %v1659
    %vm1661 = vcmp.gt.s32.totalorder %v1606, %v1660
    %v1662 = vsel %vm1661, %v1606, %v1660
    %vm1663 = vcmp.gt.s32.totalorder %v1607, %v1660
    %v1664 = vsel %vm1663, %v1607, %v1660
    %vm1665 = vcmp.gt.s32.totalorder %v1608, %v1660
    %v1666 = vsel %vm1665, %v1608, %v1660
    %vm1667 = vcmp.gt.s32.totalorder %v1609, %v1660
    %v1668 = vsel %vm1667, %v1609, %v1660
    %v1669 = vsel %vm1649, %v1662, %v1606
    %v1670 = vsel %vm1650, %v1664, %v1607
    %v1671 = vsel %vm1651, %v1666, %v1608
    %v1672 = vsel %vm1652, %v1668, %v1609
    %s1673 = scalar_lea.vmem %s0, 832
    %v1674 = vld [vmem:[%s1673] sm:$0xff]
    %v1675 = vld [vmem:[%s1673 + $0x8] sm:$0xff]
    %v1676 = vld [vmem:[%s1673 + $0x10] sm:$0xff]
    %v1677 = vld [vmem:[%s1673 + $0x18] sm:$0xff]
    %vm1678 = vcmp.gt.s32.totalorder %v1674, 0
    %vm1679 = vcmp.gt.s32.totalorder %v1675, 0
    %vm1680 = vcmp.gt.s32.totalorder %v1676, 0
    %vm1681 = vcmp.gt.s32.totalorder %v1677, 0
    %v1682 = vld [vmem:[%s1 + $0x1a] sm:$0x1]
    %v1683 = vld [vmem:[%s2 + $0x1a] sm:$0x1]
    %v1684 = vlaneseq
    %v1685 = vshrl.u32 %v1684, 7
    %v1686 = vsub.s32 0, %v1685
    %v1687 = vrot.slane %v1682, %v1686
    %vm1688 = vcmp.lt.s32.totalorder %v1653, %v1687
    %v1689 = vsel %vm1688, %v1653, %v1687
    %vm1690 = vcmp.lt.s32.totalorder %v1654, %v1687
    %v1691 = vsel %vm1690, %v1654, %v1687
    %vm1692 = vcmp.lt.s32.totalorder %v1655, %v1687
    %v1693 = vsel %vm1692, %v1655, %v1687
    %vm1694 = vcmp.lt.s32.totalorder %v1656, %v1687
    %v1695 = vsel %vm1694, %v1656, %v1687
    %v1696 = vsel %vm1678, 1, 0
    %v1697 = vsel %vm1679, 1, 0
    %v1698 = vsel %vm1680, 1, 0
    %v1699 = vsel %vm1681, 1, 0
    %1700 = vset.pattern.permute.xlu0 0
    %1701 = vperm.xlu0 %1700, %v1696
    %v1702 = vpop.permute.xlu0 %1701
    %1703 = vset.pattern.permute.xlu0 0
    %1704 = vperm.xlu0 %1703, %v1697
    %v1705 = vpop.permute.xlu0 %1704
    %1706 = vset.pattern.permute.xlu0 0
    %1707 = vperm.xlu0 %1706, %v1698
    %v1708 = vpop.permute.xlu0 %1707
    %1709 = vset.pattern.permute.xlu0 0
    %1710 = vperm.xlu0 %1709, %v1699
    %v1711 = vpop.permute.xlu0 %1710
    %vm1712 = vcmp.eq.s32.totalorder %v1702, 1
    %vm1713 = vcmp.eq.s32.totalorder %v1705, 1
    %vm1714 = vcmp.eq.s32.totalorder %v1708, 1
    %vm1715 = vcmp.eq.s32.totalorder %v1711, 1
    %v1716 = vsel %vm1712, %v1689, %v1653
    %v1717 = vsel %vm1713, %v1691, %v1654
    %v1718 = vsel %vm1714, %v1693, %v1655
    %v1719 = vsel %vm1715, %v1695, %v1656
    %v1720 = vlaneseq
    %v1721 = vshrl.u32 %v1720, 7
    %v1722 = vsub.s32 0, %v1721
    %v1723 = vrot.slane %v1683, %v1722
    %vm1724 = vcmp.gt.s32.totalorder %v1669, %v1723
    %v1725 = vsel %vm1724, %v1669, %v1723
    %vm1726 = vcmp.gt.s32.totalorder %v1670, %v1723
    %v1727 = vsel %vm1726, %v1670, %v1723
    %vm1728 = vcmp.gt.s32.totalorder %v1671, %v1723
    %v1729 = vsel %vm1728, %v1671, %v1723
    %vm1730 = vcmp.gt.s32.totalorder %v1672, %v1723
    %v1731 = vsel %vm1730, %v1672, %v1723
    %v1732 = vsel %vm1712, %v1725, %v1669
    %v1733 = vsel %vm1713, %v1727, %v1670
    %v1734 = vsel %vm1714, %v1729, %v1671
    %v1735 = vsel %vm1715, %v1731, %v1672
    %s1736 = scalar_lea.vmem %s0, 864
    %v1737 = vld [vmem:[%s1736] sm:$0xff]
    %v1738 = vld [vmem:[%s1736 + $0x8] sm:$0xff]
    %v1739 = vld [vmem:[%s1736 + $0x10] sm:$0xff]
    %v1740 = vld [vmem:[%s1736 + $0x18] sm:$0xff]
    %vm1741 = vcmp.gt.s32.totalorder %v1737, 0
    %vm1742 = vcmp.gt.s32.totalorder %v1738, 0
    %vm1743 = vcmp.gt.s32.totalorder %v1739, 0
    %vm1744 = vcmp.gt.s32.totalorder %v1740, 0
    %v1745 = vld [vmem:[%s1 + $0x1b] sm:$0x1]
    %v1746 = vld [vmem:[%s2 + $0x1b] sm:$0x1]
    %v1747 = vlaneseq
    %v1748 = vshrl.u32 %v1747, 7
    %v1749 = vsub.s32 0, %v1748
    %v1750 = vrot.slane %v1745, %v1749
    %vm1751 = vcmp.lt.s32.totalorder %v1716, %v1750
    %v1752 = vsel %vm1751, %v1716, %v1750
    %vm1753 = vcmp.lt.s32.totalorder %v1717, %v1750
    %v1754 = vsel %vm1753, %v1717, %v1750
    %vm1755 = vcmp.lt.s32.totalorder %v1718, %v1750
    %v1756 = vsel %vm1755, %v1718, %v1750
    %vm1757 = vcmp.lt.s32.totalorder %v1719, %v1750
    %v1758 = vsel %vm1757, %v1719, %v1750
    %v1759 = vsel %vm1741, 1, 0
    %v1760 = vsel %vm1742, 1, 0
    %v1761 = vsel %vm1743, 1, 0
    %v1762 = vsel %vm1744, 1, 0
    %1763 = vset.pattern.permute.xlu0 0
    %1764 = vperm.xlu0 %1763, %v1759
    %v1765 = vpop.permute.xlu0 %1764
    %1766 = vset.pattern.permute.xlu0 0
    %1767 = vperm.xlu0 %1766, %v1760
    %v1768 = vpop.permute.xlu0 %1767
    %1769 = vset.pattern.permute.xlu0 0
    %1770 = vperm.xlu0 %1769, %v1761
    %v1771 = vpop.permute.xlu0 %1770
    %1772 = vset.pattern.permute.xlu0 0
    %1773 = vperm.xlu0 %1772, %v1762
    %v1774 = vpop.permute.xlu0 %1773
    %vm1775 = vcmp.eq.s32.totalorder %v1765, 1
    %vm1776 = vcmp.eq.s32.totalorder %v1768, 1
    %vm1777 = vcmp.eq.s32.totalorder %v1771, 1
    %vm1778 = vcmp.eq.s32.totalorder %v1774, 1
    %v1779 = vsel %vm1775, %v1752, %v1716
    %v1780 = vsel %vm1776, %v1754, %v1717
    %v1781 = vsel %vm1777, %v1756, %v1718
    %v1782 = vsel %vm1778, %v1758, %v1719
    %v1783 = vlaneseq
    %v1784 = vshrl.u32 %v1783, 7
    %v1785 = vsub.s32 0, %v1784
    %v1786 = vrot.slane %v1746, %v1785
    %vm1787 = vcmp.gt.s32.totalorder %v1732, %v1786
    %v1788 = vsel %vm1787, %v1732, %v1786
    %vm1789 = vcmp.gt.s32.totalorder %v1733, %v1786
    %v1790 = vsel %vm1789, %v1733, %v1786
    %vm1791 = vcmp.gt.s32.totalorder %v1734, %v1786
    %v1792 = vsel %vm1791, %v1734, %v1786
    %vm1793 = vcmp.gt.s32.totalorder %v1735, %v1786
    %v1794 = vsel %vm1793, %v1735, %v1786
    %v1795 = vsel %vm1775, %v1788, %v1732
    %v1796 = vsel %vm1776, %v1790, %v1733
    %v1797 = vsel %vm1777, %v1792, %v1734
    %v1798 = vsel %vm1778, %v1794, %v1735
    %s1799 = scalar_lea.vmem %s0, 896
    %v1800 = vld [vmem:[%s1799] sm:$0xff]
    %v1801 = vld [vmem:[%s1799 + $0x8] sm:$0xff]
    %v1802 = vld [vmem:[%s1799 + $0x10] sm:$0xff]
    %v1803 = vld [vmem:[%s1799 + $0x18] sm:$0xff]
    %vm1804 = vcmp.gt.s32.totalorder %v1800, 0
    %vm1805 = vcmp.gt.s32.totalorder %v1801, 0
    %vm1806 = vcmp.gt.s32.totalorder %v1802, 0
    %vm1807 = vcmp.gt.s32.totalorder %v1803, 0
    %v1808 = vld [vmem:[%s1 + $0x1c] sm:$0x1]
    %v1809 = vld [vmem:[%s2 + $0x1c] sm:$0x1]
    %v1810 = vlaneseq
    %v1811 = vshrl.u32 %v1810, 7
    %v1812 = vsub.s32 0, %v1811
    %v1813 = vrot.slane %v1808, %v1812
    %vm1814 = vcmp.lt.s32.totalorder %v1779, %v1813
    %v1815 = vsel %vm1814, %v1779, %v1813
    %vm1816 = vcmp.lt.s32.totalorder %v1780, %v1813
    %v1817 = vsel %vm1816, %v1780, %v1813
    %vm1818 = vcmp.lt.s32.totalorder %v1781, %v1813
    %v1819 = vsel %vm1818, %v1781, %v1813
    %vm1820 = vcmp.lt.s32.totalorder %v1782, %v1813
    %v1821 = vsel %vm1820, %v1782, %v1813
    %v1822 = vsel %vm1804, 1, 0
    %v1823 = vsel %vm1805, 1, 0
    %v1824 = vsel %vm1806, 1, 0
    %v1825 = vsel %vm1807, 1, 0
    %1826 = vset.pattern.permute.xlu0 0
    %1827 = vperm.xlu0 %1826, %v1822
    %v1828 = vpop.permute.xlu0 %1827
    %1829 = vset.pattern.permute.xlu0 0
    %1830 = vperm.xlu0 %1829, %v1823
    %v1831 = vpop.permute.xlu0 %1830
    %1832 = vset.pattern.permute.xlu0 0
    %1833 = vperm.xlu0 %1832, %v1824
    %v1834 = vpop.permute.xlu0 %1833
    %1835 = vset.pattern.permute.xlu0 0
    %1836 = vperm.xlu0 %1835, %v1825
    %v1837 = vpop.permute.xlu0 %1836
    %vm1838 = vcmp.eq.s32.totalorder %v1828, 1
    %vm1839 = vcmp.eq.s32.totalorder %v1831, 1
    %vm1840 = vcmp.eq.s32.totalorder %v1834, 1
    %vm1841 = vcmp.eq.s32.totalorder %v1837, 1
    %v1842 = vsel %vm1838, %v1815, %v1779
    %v1843 = vsel %vm1839, %v1817, %v1780
    %v1844 = vsel %vm1840, %v1819, %v1781
    %v1845 = vsel %vm1841, %v1821, %v1782
    %v1846 = vlaneseq
    %v1847 = vshrl.u32 %v1846, 7
    %v1848 = vsub.s32 0, %v1847
    %v1849 = vrot.slane %v1809, %v1848
    %vm1850 = vcmp.gt.s32.totalorder %v1795, %v1849
    %v1851 = vsel %vm1850, %v1795, %v1849
    %vm1852 = vcmp.gt.s32.totalorder %v1796, %v1849
    %v1853 = vsel %vm1852, %v1796, %v1849
    %vm1854 = vcmp.gt.s32.totalorder %v1797, %v1849
    %v1855 = vsel %vm1854, %v1797, %v1849
    %vm1856 = vcmp.gt.s32.totalorder %v1798, %v1849
    %v1857 = vsel %vm1856, %v1798, %v1849
    %v1858 = vsel %vm1838, %v1851, %v1795
    %v1859 = vsel %vm1839, %v1853, %v1796
    %v1860 = vsel %vm1840, %v1855, %v1797
    %v1861 = vsel %vm1841, %v1857, %v1798
    %s1862 = scalar_lea.vmem %s0, 928
    %v1863 = vld [vmem:[%s1862] sm:$0xff]
    %v1864 = vld [vmem:[%s1862 + $0x8] sm:$0xff]
    %v1865 = vld [vmem:[%s1862 + $0x10] sm:$0xff]
    %v1866 = vld [vmem:[%s1862 + $0x18] sm:$0xff]
    %vm1867 = vcmp.gt.s32.totalorder %v1863, 0
    %vm1868 = vcmp.gt.s32.totalorder %v1864, 0
    %vm1869 = vcmp.gt.s32.totalorder %v1865, 0
    %vm1870 = vcmp.gt.s32.totalorder %v1866, 0
    %v1871 = vld [vmem:[%s1 + $0x1d] sm:$0x1]
    %v1872 = vld [vmem:[%s2 + $0x1d] sm:$0x1]
    %v1873 = vlaneseq
    %v1874 = vshrl.u32 %v1873, 7
    %v1875 = vsub.s32 0, %v1874
    %v1876 = vrot.slane %v1871, %v1875
    %vm1877 = vcmp.lt.s32.totalorder %v1842, %v1876
    %v1878 = vsel %vm1877, %v1842, %v1876
    %vm1879 = vcmp.lt.s32.totalorder %v1843, %v1876
    %v1880 = vsel %vm1879, %v1843, %v1876
    %vm1881 = vcmp.lt.s32.totalorder %v1844, %v1876
    %v1882 = vsel %vm1881, %v1844, %v1876
    %vm1883 = vcmp.lt.s32.totalorder %v1845, %v1876
    %v1884 = vsel %vm1883, %v1845, %v1876
    %v1885 = vsel %vm1867, 1, 0
    %v1886 = vsel %vm1868, 1, 0
    %v1887 = vsel %vm1869, 1, 0
    %v1888 = vsel %vm1870, 1, 0
    %1889 = vset.pattern.permute.xlu0 0
    %1890 = vperm.xlu0 %1889, %v1885
    %v1891 = vpop.permute.xlu0 %1890
    %1892 = vset.pattern.permute.xlu0 0
    %1893 = vperm.xlu0 %1892, %v1886
    %v1894 = vpop.permute.xlu0 %1893
    %1895 = vset.pattern.permute.xlu0 0
    %1896 = vperm.xlu0 %1895, %v1887
    %v1897 = vpop.permute.xlu0 %1896
    %1898 = vset.pattern.permute.xlu0 0
    %1899 = vperm.xlu0 %1898, %v1888
    %v1900 = vpop.permute.xlu0 %1899
    %vm1901 = vcmp.eq.s32.totalorder %v1891, 1
    %vm1902 = vcmp.eq.s32.totalorder %v1894, 1
    %vm1903 = vcmp.eq.s32.totalorder %v1897, 1
    %vm1904 = vcmp.eq.s32.totalorder %v1900, 1
    %v1905 = vsel %vm1901, %v1878, %v1842
    %v1906 = vsel %vm1902, %v1880, %v1843
    %v1907 = vsel %vm1903, %v1882, %v1844
    %v1908 = vsel %vm1904, %v1884, %v1845
    %v1909 = vlaneseq
    %v1910 = vshrl.u32 %v1909, 7
    %v1911 = vsub.s32 0, %v1910
    %v1912 = vrot.slane %v1872, %v1911
    %vm1913 = vcmp.gt.s32.totalorder %v1858, %v1912
    %v1914 = vsel %vm1913, %v1858, %v1912
    %vm1915 = vcmp.gt.s32.totalorder %v1859, %v1912
    %v1916 = vsel %vm1915, %v1859, %v1912
    %vm1917 = vcmp.gt.s32.totalorder %v1860, %v1912
    %v1918 = vsel %vm1917, %v1860, %v1912
    %vm1919 = vcmp.gt.s32.totalorder %v1861, %v1912
    %v1920 = vsel %vm1919, %v1861, %v1912
    %v1921 = vsel %vm1901, %v1914, %v1858
    %v1922 = vsel %vm1902, %v1916, %v1859
    %v1923 = vsel %vm1903, %v1918, %v1860
    %v1924 = vsel %vm1904, %v1920, %v1861
    %s1925 = scalar_lea.vmem %s0, 960
    %v1926 = vld [vmem:[%s1925] sm:$0xff]
    %v1927 = vld [vmem:[%s1925 + $0x8] sm:$0xff]
    %v1928 = vld [vmem:[%s1925 + $0x10] sm:$0xff]
    %v1929 = vld [vmem:[%s1925 + $0x18] sm:$0xff]
    %vm1930 = vcmp.gt.s32.totalorder %v1926, 0
    %vm1931 = vcmp.gt.s32.totalorder %v1927, 0
    %vm1932 = vcmp.gt.s32.totalorder %v1928, 0
    %vm1933 = vcmp.gt.s32.totalorder %v1929, 0
    %v1934 = vld [vmem:[%s1 + $0x1e] sm:$0x1]
    %v1935 = vld [vmem:[%s2 + $0x1e] sm:$0x1]
    %v1936 = vlaneseq
    %v1937 = vshrl.u32 %v1936, 7
    %v1938 = vsub.s32 0, %v1937
    %v1939 = vrot.slane %v1934, %v1938
    %vm1940 = vcmp.lt.s32.totalorder %v1905, %v1939
    %v1941 = vsel %vm1940, %v1905, %v1939
    %vm1942 = vcmp.lt.s32.totalorder %v1906, %v1939
    %v1943 = vsel %vm1942, %v1906, %v1939
    %vm1944 = vcmp.lt.s32.totalorder %v1907, %v1939
    %v1945 = vsel %vm1944, %v1907, %v1939
    %vm1946 = vcmp.lt.s32.totalorder %v1908, %v1939
    %v1947 = vsel %vm1946, %v1908, %v1939
    %v1948 = vsel %vm1930, 1, 0
    %v1949 = vsel %vm1931, 1, 0
    %v1950 = vsel %vm1932, 1, 0
    %v1951 = vsel %vm1933, 1, 0
    %1952 = vset.pattern.permute.xlu0 0
    %1953 = vperm.xlu0 %1952, %v1948
    %v1954 = vpop.permute.xlu0 %1953
    %1955 = vset.pattern.permute.xlu0 0
    %1956 = vperm.xlu0 %1955, %v1949
    %v1957 = vpop.permute.xlu0 %1956
    %1958 = vset.pattern.permute.xlu0 0
    %1959 = vperm.xlu0 %1958, %v1950
    %v1960 = vpop.permute.xlu0 %1959
    %1961 = vset.pattern.permute.xlu0 0
    %1962 = vperm.xlu0 %1961, %v1951
    %v1963 = vpop.permute.xlu0 %1962
    %vm1964 = vcmp.eq.s32.totalorder %v1954, 1
    %vm1965 = vcmp.eq.s32.totalorder %v1957, 1
    %vm1966 = vcmp.eq.s32.totalorder %v1960, 1
    %vm1967 = vcmp.eq.s32.totalorder %v1963, 1
    %v1968 = vsel %vm1964, %v1941, %v1905
    %v1969 = vsel %vm1965, %v1943, %v1906
    %v1970 = vsel %vm1966, %v1945, %v1907
    %v1971 = vsel %vm1967, %v1947, %v1908
    %v1972 = vlaneseq
    %v1973 = vshrl.u32 %v1972, 7
    %v1974 = vsub.s32 0, %v1973
    %v1975 = vrot.slane %v1935, %v1974
    %vm1976 = vcmp.gt.s32.totalorder %v1921, %v1975
    %v1977 = vsel %vm1976, %v1921, %v1975
    %vm1978 = vcmp.gt.s32.totalorder %v1922, %v1975
    %v1979 = vsel %vm1978, %v1922, %v1975
    %vm1980 = vcmp.gt.s32.totalorder %v1923, %v1975
    %v1981 = vsel %vm1980, %v1923, %v1975
    %vm1982 = vcmp.gt.s32.totalorder %v1924, %v1975
    %v1983 = vsel %vm1982, %v1924, %v1975
    %v1984 = vsel %vm1964, %v1977, %v1921
    %v1985 = vsel %vm1965, %v1979, %v1922
    %v1986 = vsel %vm1966, %v1981, %v1923
    %v1987 = vsel %vm1967, %v1983, %v1924
    %s1988 = scalar_lea.vmem %s0, 992
    %v1989 = vld [vmem:[%s1988] sm:$0xff]
    %v1990 = vld [vmem:[%s1988 + $0x8] sm:$0xff]
    %v1991 = vld [vmem:[%s1988 + $0x10] sm:$0xff]
    %v1992 = vld [vmem:[%s1988 + $0x18] sm:$0xff]
    %vm1993 = vcmp.gt.s32.totalorder %v1989, 0
    %vm1994 = vcmp.gt.s32.totalorder %v1990, 0
    %vm1995 = vcmp.gt.s32.totalorder %v1991, 0
    %vm1996 = vcmp.gt.s32.totalorder %v1992, 0
    %v1997 = vld [vmem:[%s1 + $0x1f] sm:$0x1]
    %v1998 = vld [vmem:[%s2 + $0x1f] sm:$0x1]
    %v1999 = vlaneseq
    %v2000 = vshrl.u32 %v1999, 7
    %v2001 = vsub.s32 0, %v2000
    %v2002 = vrot.slane %v1997, %v2001
    %vm2003 = vcmp.lt.s32.totalorder %v1968, %v2002
    %v2004 = vsel %vm2003, %v1968, %v2002
    %vm2005 = vcmp.lt.s32.totalorder %v1969, %v2002
    %v2006 = vsel %vm2005, %v1969, %v2002
    %vm2007 = vcmp.lt.s32.totalorder %v1970, %v2002
    %v2008 = vsel %vm2007, %v1970, %v2002
    %vm2009 = vcmp.lt.s32.totalorder %v1971, %v2002
    %v2010 = vsel %vm2009, %v1971, %v2002
    %v2011 = vsel %vm1993, 1, 0
    %v2012 = vsel %vm1994, 1, 0
    %v2013 = vsel %vm1995, 1, 0
    %v2014 = vsel %vm1996, 1, 0
    %2015 = vset.pattern.permute.xlu0 0
    %2016 = vperm.xlu0 %2015, %v2011
    %v2017 = vpop.permute.xlu0 %2016
    %2018 = vset.pattern.permute.xlu0 0
    %2019 = vperm.xlu0 %2018, %v2012
    %v2020 = vpop.permute.xlu0 %2019
    %2021 = vset.pattern.permute.xlu0 0
    %2022 = vperm.xlu0 %2021, %v2013
    %v2023 = vpop.permute.xlu0 %2022
    %2024 = vset.pattern.permute.xlu0 0
    %2025 = vperm.xlu0 %2024, %v2014
    %v2026 = vpop.permute.xlu0 %2025
    %vm2027 = vcmp.eq.s32.totalorder %v2017, 1
    %vm2028 = vcmp.eq.s32.totalorder %v2020, 1
    %vm2029 = vcmp.eq.s32.totalorder %v2023, 1
    %vm2030 = vcmp.eq.s32.totalorder %v2026, 1
    %v2031 = vsel %vm2027, %v2004, %v1968
    %v2032 = vsel %vm2028, %v2006, %v1969
    %v2033 = vsel %vm2029, %v2008, %v1970
    %v2034 = vsel %vm2030, %v2010, %v1971
    %v2035 = vlaneseq
    %v2036 = vshrl.u32 %v2035, 7
    %v2037 = vsub.s32 0, %v2036
    %v2038 = vrot.slane %v1998, %v2037
    %vm2039 = vcmp.gt.s32.totalorder %v1984, %v2038
    %v2040 = vsel %vm2039, %v1984, %v2038
    %vm2041 = vcmp.gt.s32.totalorder %v1985, %v2038
    %v2042 = vsel %vm2041, %v1985, %v2038
    %vm2043 = vcmp.gt.s32.totalorder %v1986, %v2038
    %v2044 = vsel %vm2043, %v1986, %v2038
    %vm2045 = vcmp.gt.s32.totalorder %v1987, %v2038
    %v2046 = vsel %vm2045, %v1987, %v2038
    %v2047 = vsel %vm2027, %v2040, %v1984
    %v2048 = vsel %vm2028, %v2042, %v1985
    %v2049 = vsel %vm2029, %v2044, %v1986
    %v2050 = vsel %vm2030, %v2046, %v1987
    %2051 = vst [vmem:[#allocation3] sm:$0xff] %v2031
    %2052 = vst [vmem:[#allocation3 + $0x8] sm:$0xff] %v2032
    %2053 = vst [vmem:[#allocation3 + $0x10] sm:$0xff] %v2033
    %2054 = vst [vmem:[#allocation3 + $0x18] sm:$0xff] %v2034
    %v2055 = vpack.c.b16 %v2048, %v2047
    %v2056 = vpack.c.b16 %v2050, %v2049
    %v2057 = vpack.c.b8 %v2056, %v2055
    %2058 = vst [vmem:[#allocation5] sm:$0xff] %v2057
    %v2059 = vcvt.s32.f32 %v2047
    %v2060 = vcvt.s32.f32 %v2048
    %v2061 = vcvt.s32.f32 %v2049
    %v2062 = vcvt.s32.f32 %v2050
    %v2063 = vsub.f32 0.0, %v2059
    %v2064 = vsub.f32 0.0, %v2060
    %v2065 = vsub.f32 0.0, %v2061
    %v2066 = vsub.f32 0.0, %v2062
    %v2067 = vmul.f32 %v2063, 0.6931472
    %v2068 = vmul.f32 %v2064, 0.6931472
    %v2069 = vmul.f32 %v2065, 0.6931472
    %v2070 = vmul.f32 %v2066, 0.6931472
    %v2071 = vmul.f32 %v2067, 1.442695
    %v2072 = vpow.pop %v2071
    %v2073 = vmul.f32 %v2068, 1.442695
    %v2074 = vpow.pop %v2073
    %v2075 = vmul.f32 %v2069, 1.442695
    %v2076 = vpow.pop %v2075
    %v2077 = vmul.f32 %v2070, 1.442695
    %v2078 = vpow.pop %v2077
    %2079 = vadd.xlane.f32.xlu0 %v2072
    %v2080 = vpop.xlane.xlu0 %2079
    %2081 = vadd.xlane.f32.xlu0 %v2074
    %v2082 = vpop.xlane.xlu0 %2081
    %2083 = vadd.xlane.f32.xlu0 %v2076
    %v2084 = vpop.xlane.xlu0 %2083
    %2085 = vadd.xlane.f32.xlu0 %v2078
    %v2086 = vpop.xlane.xlu0 %2085
    %v2087 = vrcp.pop %v2080
    %v2088 = vrcp.pop %v2082
    %v2089 = vrcp.pop %v2084
    %v2090 = vrcp.pop %v2086
    %v2091 = vmul.f32 %v2087, 11718.992
    %v2092 = vmul.f32 %v2088, 11718.992
    %v2093 = vmul.f32 %v2089, 11718.992
    %v2094 = vmul.f32 %v2090, 11718.992
    %vm2095 = vcmp.eq.s32.totalorder %v2047, 0
    %vm2096 = vcmp.eq.s32.totalorder %v2048, 0
    %vm2097 = vcmp.eq.s32.totalorder %v2049, 0
    %vm2098 = vcmp.eq.s32.totalorder %v2050, 0
    %v2099 = vsel %vm2095, 1, 0
    %v2100 = vsel %vm2096, 1, 0
    %v2101 = vsel %vm2097, 1, 0
    %v2102 = vsel %vm2098, 1, 0
    %v2103 = vcvt.s32.f32 %v2099
    %v2104 = vcvt.s32.f32 %v2100
    %v2105 = vcvt.s32.f32 %v2101
    %v2106 = vcvt.s32.f32 %v2102
    %2107 = vadd.xlane.f32.xlu0 %v2103
    %v2108 = vpop.xlane.xlu0 %2107
    %2109 = vadd.xlane.f32.xlu0 %v2104
    %v2110 = vpop.xlane.xlu0 %2109
    %2111 = vadd.xlane.f32.xlu0 %v2105
    %v2112 = vpop.xlane.xlu0 %2111
    %2113 = vadd.xlane.f32.xlu0 %v2106
    %v2114 = vpop.xlane.xlu0 %2113
    %v2115 = vmax.f32 %v2108, 1.0
    %v2116 = vmax.f32 %v2110, 1.0
    %v2117 = vmax.f32 %v2112, 1.0
    %v2118 = vmax.f32 %v2114, 1.0
    %v2119 = vrcp.pop %v2115
    %v2120 = vmul.f32 128.0, %v2119
    %v2121 = vrcp.pop %v2116
    %v2122 = vmul.f32 128.0, %v2121
    %v2123 = vrcp.pop %v2117
    %v2124 = vmul.f32 128.0, %v2123
    %v2125 = vrcp.pop %v2118
    %v2126 = vmul.f32 128.0, %v2125
    %v2127 = vlog2.pop %v2120
    %v2128 = vmul.f32 %v2127, 0.6931472
    %v2129 = vlog2.pop %v2122
    %v2130 = vmul.f32 %v2129, 0.6931472
    %v2131 = vlog2.pop %v2124
    %v2132 = vmul.f32 %v2131, 0.6931472
    %v2133 = vlog2.pop %v2126
    %v2134 = vmul.f32 %v2133, 0.6931472
    %v2135 = vmul.f32 %v2128, 128.0
    %v2136 = vmul.f32 %v2130, 128.0
    %v2137 = vmul.f32 %v2132, 128.0
    %v2138 = vmul.f32 %v2134, 128.0
    %vm2139 = vcmp.le.f32.partialorder %v2091, 320.0
    %vm2140 = vcmp.le.f32.partialorder %v2092, 320.0
    %vm2141 = vcmp.le.f32.partialorder %v2093, 320.0
    %vm2142 = vcmp.le.f32.partialorder %v2094, 320.0
    %vm2143 = vcmp.gt.f32.partialorder %v2108, 0.0
    %vm2144 = vcmp.gt.f32.partialorder %v2110, 0.0
    %vm2145 = vcmp.gt.f32.partialorder %v2112, 0.0
    %vm2146 = vcmp.gt.f32.partialorder %v2114, 0.0
    %vm2147 = vmand %vm2139, %vm2143
    %vm2148 = vmand %vm2140, %vm2144
    %vm2149 = vmand %vm2141, %vm2145
    %vm2150 = vmand %vm2142, %vm2146
    %v2151 = vsel %vm2147, %v2135, %v2091
    %v2152 = vsel %vm2148, %v2136, %v2092
    %v2153 = vsel %vm2149, %v2137, %v2093
    %v2154 = vsel %vm2150, %v2138, %v2094
    %v2155 = vld [vmem:[%s5] sm:$0xf]
    %v2156 = vld [vmem:[%s5 + $0x4] sm:$0xf]
    %v2161 = vunpack.c.l.b16 %v46
    %v2162 = vunpack.c.l.b16 %v47
    %v2163 = vunpack.c.l.b16 %v48
    %v2164 = vunpack.c.l.b16 %v49
    %v2165 = vpack.c.b16 %v2162, %v2161
    %v2166 = vpack.c.b16 %v2164, %v2163
    %v2169 = vunpack.c.l.b16 %v2155
    %v2170 = vunpack.c.l.b16 %v2156
    %v2171 = vpack.c.b16 %v2170, %v2169
    %vm2173 = vcmask 130048
    %v2175 = vsel %vm2173, %v2165, 0
    %v2178 = vsel %vm2173, %v2166, 0
    %2180 = vmatprep.subr.bf16.mxu0 0
    %2181 = vmatpush1.bf16.msra.mxu0 %v2171
    %2182 = vmatprep.subr.bf16.mxu0 0
    %2183 = vmatpush1.bf16.msra.mxu0 0
    %2184 = vmatprep.subr.bf16.mxu0 0
    %2185 = vmatpush1.bf16.msra.mxu0 0
    %2186 = vmatprep.subr.bf16.mxu0 0
    %2187 = vmatpush1.bf16.msra.mxu0 0
    %2188 = vmatprep.subr.bf16.mxu0 0
    %2189 = vmatpush1.bf16.msra.mxu0 0
    %2190 = vmatprep.subr.bf16.mxu0 0
    %2191 = vmatpush1.bf16.msra.mxu0 0
    %2192 = vmatprep.subr.bf16.mxu0 0
    %2193 = vmatpush1.bf16.msra.mxu0 0
    %2194 = vmatprep.subr.bf16.mxu0 0
    %2195 = vmatpush1.bf16.msra.mxu0 0
    %2196 = vmatprep.subr.bf16.mxu0 0
    %2197 = vmatpush1.bf16.msra.mxu0 0
    %2198 = vmatprep.subr.bf16.mxu0 0
    %2199 = vmatpush1.bf16.msra.mxu0 0
    %2200 = vmatprep.subr.bf16.mxu0 0
    %2201 = vmatpush1.bf16.msra.mxu0 0
    %2202 = vmatprep.subr.bf16.mxu0 0
    %2203 = vmatpush1.bf16.msra.mxu0 0
    %2204 = vmatprep.subr.bf16.mxu0 0
    %2205 = vmatpush1.bf16.msra.mxu0 0
    %2206 = vmatprep.subr.bf16.mxu0 0
    %2207 = vmatpush1.bf16.msra.mxu0 0
    %2208 = vmatprep.subr.bf16.mxu0 0
    %2209 = vmatpush1.bf16.msra.mxu0 0
    %2210 = vmatprep.subr.bf16.mxu0 0
    %2211 = vmatpush1.bf16.msra.mxu0 0
    %2212 = vmatprep.mubr.bf16.mxu0 0
    %2213 = vmatmul.mubr.bf16.gmra.mrb[0].mxu0 %v2175
    %v2214 = vpop.f32.mrb[0].mxu0
    %v2215 = vadd.f32 0.0, %v2214
    %v2216 = vpop.f32.mrb[0].mxu0
    %v2217 = vpop.f32.mrb[0].mxu0
    %v2218 = vadd.f32 0.0, %v2217
    %v2219 = vpop.f32.mrb[0].mxu0
    %2220 = vmatprep.mubr.bf16.mxu0 0
    %2221 = vmatmul.mubr.bf16.gmra.mrb[0].mxu0 %v2178
    %v2222 = vpop.f32.mrb[0].mxu0
    %v2223 = vadd.f32 0.0, %v2222
    %v2224 = vpop.f32.mrb[0].mxu0
    %v2225 = vpop.f32.mrb[0].mxu0
    %v2226 = vadd.f32 0.0, %v2225
    %v2227 = vpop.f32.mrb[0].mxu0
    %2228 = vdwg.mxu0
    %v2229 = vpack.c.bf16 %v2218, %v2215
    %v2230 = vpack.c.bf16 %v2226, %v2223
    %v2231 = vld [vmem:[%s6] sm:$0xff]
    %v2232 = vld [vmem:[%s6 + $0x8] sm:$0xff]
    %v2233 = vld [vmem:[%s6 + $0x10] sm:$0xff]
    %v2234 = vld [vmem:[%s6 + $0x18] sm:$0xff]
    %v2239 = vunpack.c.l.b16 %v42
    %v2240 = vunpack.c.l.b16 %v43
    %v2241 = vunpack.c.l.b16 %v44
    %v2242 = vunpack.c.l.b16 %v45
    %v2243 = vpack.c.b16 %v2240, %v2239
    %v2244 = vpack.c.b16 %v2242, %v2241
    %vm2245 = vcmask 261120
    %v2247 = vsel %vm2245, %v2243, 0
    %v2250 = vsel %vm2245, %v2244, 0
    %2252 = vmatprep.subr.bf16.mxu0 0
    %2253 = vmatpush1.bf16.msra.mxu0 %v2229
    %2254 = vmatprep.subr.bf16.mxu0 0
    %2255 = vmatpush1.bf16.msra.mxu0 %v2230
    %2256 = vmatprep.subr.bf16.mxu0 0
    %2257 = vmatpush1.bf16.msra.mxu0 0
    %2258 = vmatprep.subr.bf16.mxu0 0
    %2259 = vmatpush1.bf16.msra.mxu0 0
    %2260 = vmatprep.subr.bf16.mxu0 0
    %2261 = vmatpush1.bf16.msra.mxu0 0
    %2262 = vmatprep.subr.bf16.mxu0 0
    %2263 = vmatpush1.bf16.msra.mxu0 0
    %2264 = vmatprep.subr.bf16.mxu0 0
    %2265 = vmatpush1.bf16.msra.mxu0 0
    %2266 = vmatprep.subr.bf16.mxu0 0
    %2267 = vmatpush1.bf16.msra.mxu0 0
    %2268 = vmatprep.subr.bf16.mxu0 0
    %2269 = vmatpush1.bf16.msra.mxu0 0
    %2270 = vmatprep.subr.bf16.mxu0 0
    %2271 = vmatpush1.bf16.msra.mxu0 0
    %2272 = vmatprep.subr.bf16.mxu0 0
    %2273 = vmatpush1.bf16.msra.mxu0 0
    %2274 = vmatprep.subr.bf16.mxu0 0
    %2275 = vmatpush1.bf16.msra.mxu0 0
    %2276 = vmatprep.subr.bf16.mxu0 0
    %2277 = vmatpush1.bf16.msra.mxu0 0
    %2278 = vmatprep.subr.bf16.mxu0 0
    %2279 = vmatpush1.bf16.msra.mxu0 0
    %2280 = vmatprep.subr.bf16.mxu0 0
    %2281 = vmatpush1.bf16.msra.mxu0 0
    %2282 = vmatprep.subr.bf16.mxu0 0
    %2283 = vmatpush1.bf16.msra.mxu0 0
    %2284 = vmatprep.mubr.bf16.mxu0 0
    %2285 = vmatmul.mubr.bf16.gmra.mrb[0].mxu0 %v2247
    %v2286 = vpop.f32.mrb[0].mxu0
    %v2287 = vadd.f32 %v2231, %v2286
    %v2288 = vpop.f32.mrb[0].mxu0
    %v2289 = vpop.f32.mrb[0].mxu0
    %v2290 = vadd.f32 %v2232, %v2289
    %v2291 = vpop.f32.mrb[0].mxu0
    %2292 = vmatprep.mubr.bf16.mxu0 0
    %2293 = vmatmul.mubr.bf16.gmra.mrb[0].mxu0 %v2250
    %v2294 = vpop.f32.mrb[0].mxu0
    %v2295 = vadd.f32 %v2233, %v2294
    %v2296 = vpop.f32.mrb[0].mxu0
    %v2297 = vpop.f32.mrb[0].mxu0
    %v2298 = vadd.f32 %v2234, %v2297
    %v2299 = vpop.f32.mrb[0].mxu0
    %2300 = vdwg.mxu0
    %v2301 = vmax.f32 %v2287, 0.0
    %v2302 = vmax.f32 %v2290, 0.0
    %v2303 = vmax.f32 %v2295, 0.0
    %v2304 = vmax.f32 %v2298, 0.0
    %2305 = vst [vmem:[#allocation2] sm:$0xff] %v2047
    %2306 = vst [vmem:[#allocation2 + $0x8] sm:$0xff] %v2048
    %2307 = vst [vmem:[#allocation2 + $0x10] sm:$0xff] %v2049
    %2308 = vst [vmem:[#allocation2 + $0x18] sm:$0xff] %v2050
    %v2309 = vld [vmem:[%s0] sm:$0xff]
    %v2310 = vld [vmem:[%s0 + $0x8] sm:$0xff]
    %v2311 = vld [vmem:[%s0 + $0x10] sm:$0xff]
    %v2312 = vld [vmem:[%s0 + $0x18] sm:$0xff]
    %vm2313 = vcmp.gt.s32.totalorder %v2309, 0
    %vm2314 = vcmp.gt.s32.totalorder %v2310, 0
    %vm2315 = vcmp.gt.s32.totalorder %v2311, 0
    %vm2316 = vcmp.gt.s32.totalorder %v2312, 0
    %v2317 = vld [vmem:[#allocation3] sm:$0x1]
    %v2318 = vld [vmem:[#allocation2] sm:$0x1]
    %v2319 = vlaneseq
    %v2320 = vshrl.u32 %v2319, 7
    %v2321 = vsub.s32 0, %v2320
    %v2322 = vrot.slane %v2317, %v2321
    %v2323 = vsel %vm2313, 1, 0
    %v2324 = vsel %vm2314, 1, 0
    %v2325 = vsel %vm2315, 1, 0
    %v2326 = vsel %vm2316, 1, 0
    %2327 = vset.pattern.permute.xlu0 0
    %2328 = vperm.xlu0 %2327, %v2323
    %v2329 = vpop.permute.xlu0 %2328
    %2330 = vset.pattern.permute.xlu0 0
    %2331 = vperm.xlu0 %2330, %v2324
    %v2332 = vpop.permute.xlu0 %2331
    %2333 = vset.pattern.permute.xlu0 0
    %2334 = vperm.xlu0 %2333, %v2325
    %v2335 = vpop.permute.xlu0 %2334
    %2336 = vset.pattern.permute.xlu0 0
    %2337 = vperm.xlu0 %2336, %v2326
    %v2338 = vpop.permute.xlu0 %2337
    %vm2339 = vcmp.eq.s32.totalorder %v2329, 1
    %vm2340 = vcmp.eq.s32.totalorder %v2332, 1
    %vm2341 = vcmp.eq.s32.totalorder %v2335, 1
    %vm2342 = vcmp.eq.s32.totalorder %v2338, 1
    %v2343 = vsel %vm2339, %v2322, 2147483647
    %v2344 = vsel %vm2340, %v2322, 2147483647
    %v2345 = vsel %vm2341, %v2322, 2147483647
    %v2346 = vsel %vm2342, %v2322, 2147483647
    %v2347 = vlaneseq
    %v2348 = vshrl.u32 %v2347, 7
    %v2349 = vsub.s32 0, %v2348
    %v2350 = vrot.slane %v2318, %v2349
    %vm2351 = vcmp.gt.s32.totalorder %v2350, 0
    %v2352 = vsel %vm2351, %v2350, 0
    %v2353 = vsel %vm2339, %v2352, 0
    %v2354 = vsel %vm2340, %v2352, 0
    %v2355 = vsel %vm2341, %v2352, 0
    %v2356 = vsel %vm2342, %v2352, 0
    %v2357 = vld [vmem:[%s98] sm:$0xff]
    %v2358 = vld [vmem:[%s98 + $0x8] sm:$0xff]
    %v2359 = vld [vmem:[%s98 + $0x10] sm:$0xff]
    %v2360 = vld [vmem:[%s98 + $0x18] sm:$0xff]
    %vm2361 = vcmp.gt.s32.totalorder %v2357, 0
    %vm2362 = vcmp.gt.s32.totalorder %v2358, 0
    %vm2363 = vcmp.gt.s32.totalorder %v2359, 0
    %vm2364 = vcmp.gt.s32.totalorder %v2360, 0
    %v2365 = vld [vmem:[#allocation3 + $0x1] sm:$0x1]
    %v2366 = vld [vmem:[#allocation2 + $0x1] sm:$0x1]
    %v2367 = vlaneseq
    %v2368 = vshrl.u32 %v2367, 7
    %v2369 = vsub.s32 0, %v2368
    %v2370 = vrot.slane %v2365, %v2369
    %vm2371 = vcmp.lt.s32.totalorder %v2343, %v2370
    %v2372 = vsel %vm2371, %v2343, %v2370
    %vm2373 = vcmp.lt.s32.totalorder %v2344, %v2370
    %v2374 = vsel %vm2373, %v2344, %v2370
    %vm2375 = vcmp.lt.s32.totalorder %v2345, %v2370
    %v2376 = vsel %vm2375, %v2345, %v2370
    %vm2377 = vcmp.lt.s32.totalorder %v2346, %v2370
    %v2378 = vsel %vm2377, %v2346, %v2370
    %v2379 = vsel %vm2361, 1, 0
    %v2380 = vsel %vm2362, 1, 0
    %v2381 = vsel %vm2363, 1, 0
    %v2382 = vsel %vm2364, 1, 0
    %2383 = vset.pattern.permute.xlu0 0
    %2384 = vperm.xlu0 %2383, %v2379
    %v2385 = vpop.permute.xlu0 %2384
    %2386 = vset.pattern.permute.xlu0 0
    %2387 = vperm.xlu0 %2386, %v2380
    %v2388 = vpop.permute.xlu0 %2387
    %2389 = vset.pattern.permute.xlu0 0
    %2390 = vperm.xlu0 %2389, %v2381
    %v2391 = vpop.permute.xlu0 %2390
    %2392 = vset.pattern.permute.xlu0 0
    %2393 = vperm.xlu0 %2392, %v2382
    %v2394 = vpop.permute.xlu0 %2393
    %vm2395 = vcmp.eq.s32.totalorder %v2385, 1
    %vm2396 = vcmp.eq.s32.totalorder %v2388, 1
    %vm2397 = vcmp.eq.s32.totalorder %v2391, 1
    %vm2398 = vcmp.eq.s32.totalorder %v2394, 1
    %v2399 = vsel %vm2395, %v2372, %v2343
    %v2400 = vsel %vm2396, %v2374, %v2344
    %v2401 = vsel %vm2397, %v2376, %v2345
    %v2402 = vsel %vm2398, %v2378, %v2346
    %v2403 = vlaneseq
    %v2404 = vshrl.u32 %v2403, 7
    %v2405 = vsub.s32 0, %v2404
    %v2406 = vrot.slane %v2366, %v2405
    %vm2407 = vcmp.gt.s32.totalorder %v2353, %v2406
    %v2408 = vsel %vm2407, %v2353, %v2406
    %vm2409 = vcmp.gt.s32.totalorder %v2354, %v2406
    %v2410 = vsel %vm2409, %v2354, %v2406
    %vm2411 = vcmp.gt.s32.totalorder %v2355, %v2406
    %v2412 = vsel %vm2411, %v2355, %v2406
    %vm2413 = vcmp.gt.s32.totalorder %v2356, %v2406
    %v2414 = vsel %vm2413, %v2356, %v2406
    %v2415 = vsel %vm2395, %v2408, %v2353
    %v2416 = vsel %vm2396, %v2410, %v2354
    %v2417 = vsel %vm2397, %v2412, %v2355
    %v2418 = vsel %vm2398, %v2414, %v2356
    %v2419 = vld [vmem:[%s161] sm:$0xff]
    %v2420 = vld [vmem:[%s161 + $0x8] sm:$0xff]
    %v2421 = vld [vmem:[%s161 + $0x10] sm:$0xff]
    %v2422 = vld [vmem:[%s161 + $0x18] sm:$0xff]
    %vm2423 = vcmp.gt.s32.totalorder %v2419, 0
    %vm2424 = vcmp.gt.s32.totalorder %v2420, 0
    %vm2425 = vcmp.gt.s32.totalorder %v2421, 0
    %vm2426 = vcmp.gt.s32.totalorder %v2422, 0
    %v2427 = vld [vmem:[#allocation3 + $0x2] sm:$0x1]
    %v2428 = vld [vmem:[#allocation2 + $0x2] sm:$0x1]
    %v2429 = vlaneseq
    %v2430 = vshrl.u32 %v2429, 7
    %v2431 = vsub.s32 0, %v2430
    %v2432 = vrot.slane %v2427, %v2431
    %vm2433 = vcmp.lt.s32.totalorder %v2399, %v2432
    %v2434 = vsel %vm2433, %v2399, %v2432
    %vm2435 = vcmp.lt.s32.totalorder %v2400, %v2432
    %v2436 = vsel %vm2435, %v2400, %v2432
    %vm2437 = vcmp.lt.s32.totalorder %v2401, %v2432
    %v2438 = vsel %vm2437, %v2401, %v2432
    %vm2439 = vcmp.lt.s32.totalorder %v2402, %v2432
    %v2440 = vsel %vm2439, %v2402, %v2432
    %v2441 = vsel %vm2423, 1, 0
    %v2442 = vsel %vm2424, 1, 0
    %v2443 = vsel %vm2425, 1, 0
    %v2444 = vsel %vm2426, 1, 0
    %2445 = vset.pattern.permute.xlu0 0
    %2446 = vperm.xlu0 %2445, %v2441
    %v2447 = vpop.permute.xlu0 %2446
    %2448 = vset.pattern.permute.xlu0 0
    %2449 = vperm.xlu0 %2448, %v2442
    %v2450 = vpop.permute.xlu0 %2449
    %2451 = vset.pattern.permute.xlu0 0
    %2452 = vperm.xlu0 %2451, %v2443
    %v2453 = vpop.permute.xlu0 %2452
    %2454 = vset.pattern.permute.xlu0 0
    %2455 = vperm.xlu0 %2454, %v2444
    %v2456 = vpop.permute.xlu0 %2455
    %vm2457 = vcmp.eq.s32.totalorder %v2447, 1
    %vm2458 = vcmp.eq.s32.totalorder %v2450, 1
    %vm2459 = vcmp.eq.s32.totalorder %v2453, 1
    %vm2460 = vcmp.eq.s32.totalorder %v2456, 1
    %v2461 = vsel %vm2457, %v2434, %v2399
    %v2462 = vsel %vm2458, %v2436, %v2400
    %v2463 = vsel %vm2459, %v2438, %v2401
    %v2464 = vsel %vm2460, %v2440, %v2402
    %v2465 = vlaneseq
    %v2466 = vshrl.u32 %v2465, 7
    %v2467 = vsub.s32 0, %v2466
    %v2468 = vrot.slane %v2428, %v2467
    %vm2469 = vcmp.gt.s32.totalorder %v2415, %v2468
    %v2470 = vsel %vm2469, %v2415, %v2468
    %vm2471 = vcmp.gt.s32.totalorder %v2416, %v2468
    %v2472 = vsel %vm2471, %v2416, %v2468
    %vm2473 = vcmp.gt.s32.totalorder %v2417, %v2468
    %v2474 = vsel %vm2473, %v2417, %v2468
    %vm2475 = vcmp.gt.s32.totalorder %v2418, %v2468
    %v2476 = vsel %vm2475, %v2418, %v2468
    %v2477 = vsel %vm2457, %v2470, %v2415
    %v2478 = vsel %vm2458, %v2472, %v2416
    %v2479 = vsel %vm2459, %v2474, %v2417
    %v2480 = vsel %vm2460, %v2476, %v2418
    %v2481 = vld [vmem:[%s224] sm:$0xff]
    %v2482 = vld [vmem:[%s224 + $0x8] sm:$0xff]
    %v2483 = vld [vmem:[%s224 + $0x10] sm:$0xff]
    %v2484 = vld [vmem:[%s224 + $0x18] sm:$0xff]
    %vm2485 = vcmp.gt.s32.totalorder %v2481, 0
    %vm2486 = vcmp.gt.s32.totalorder %v2482, 0
    %vm2487 = vcmp.gt.s32.totalorder %v2483, 0
    %vm2488 = vcmp.gt.s32.totalorder %v2484, 0
    %v2489 = vld [vmem:[#allocation3 + $0x3] sm:$0x1]
    %v2490 = vld [vmem:[#allocation2 + $0x3] sm:$0x1]
    %v2491 = vlaneseq
    %v2492 = vshrl.u32 %v2491, 7
    %v2493 = vsub.s32 0, %v2492
    %v2494 = vrot.slane %v2489, %v2493
    %vm2495 = vcmp.lt.s32.totalorder %v2461, %v2494
    %v2496 = vsel %vm2495, %v2461, %v2494
    %vm2497 = vcmp.lt.s32.totalorder %v2462, %v2494
    %v2498 = vsel %vm2497, %v2462, %v2494
    %vm2499 = vcmp.lt.s32.totalorder %v2463, %v2494
    %v2500 = vsel %vm2499, %v2463, %v2494
    %vm2501 = vcmp.lt.s32.totalorder %v2464, %v2494
    %v2502 = vsel %vm2501, %v2464, %v2494
    %v2503 = vsel %vm2485, 1, 0
    %v2504 = vsel %vm2486, 1, 0
    %v2505 = vsel %vm2487, 1, 0
    %v2506 = vsel %vm2488, 1, 0
    %2507 = vset.pattern.permute.xlu0 0
    %2508 = vperm.xlu0 %2507, %v2503
    %v2509 = vpop.permute.xlu0 %2508
    %2510 = vset.pattern.permute.xlu0 0
    %2511 = vperm.xlu0 %2510, %v2504
    %v2512 = vpop.permute.xlu0 %2511
    %2513 = vset.pattern.permute.xlu0 0
    %2514 = vperm.xlu0 %2513, %v2505
    %v2515 = vpop.permute.xlu0 %2514
    %2516 = vset.pattern.permute.xlu0 0
    %2517 = vperm.xlu0 %2516, %v2506
    %v2518 = vpop.permute.xlu0 %2517
    %vm2519 = vcmp.eq.s32.totalorder %v2509, 1
    %vm2520 = vcmp.eq.s32.totalorder %v2512, 1
    %vm2521 = vcmp.eq.s32.totalorder %v2515, 1
    %vm2522 = vcmp.eq.s32.totalorder %v2518, 1
    %v2523 = vsel %vm2519, %v2496, %v2461
    %v2524 = vsel %vm2520, %v2498, %v2462
    %v2525 = vsel %vm2521, %v2500, %v2463
    %v2526 = vsel %vm2522, %v2502, %v2464
    %v2527 = vlaneseq
    %v2528 = vshrl.u32 %v2527, 7
    %v2529 = vsub.s32 0, %v2528
    %v2530 = vrot.slane %v2490, %v2529
    %vm2531 = vcmp.gt.s32.totalorder %v2477, %v2530
    %v2532 = vsel %vm2531, %v2477, %v2530
    %vm2533 = vcmp.gt.s32.totalorder %v2478, %v2530
    %v2534 = vsel %vm2533, %v2478, %v2530
    %vm2535 = vcmp.gt.s32.totalorder %v2479, %v2530
    %v2536 = vsel %vm2535, %v2479, %v2530
    %vm2537 = vcmp.gt.s32.totalorder %v2480, %v2530
    %v2538 = vsel %vm2537, %v2480, %v2530
    %v2539 = vsel %vm2519, %v2532, %v2477
    %v2540 = vsel %vm2520, %v2534, %v2478
    %v2541 = vsel %vm2521, %v2536, %v2479
    %v2542 = vsel %vm2522, %v2538, %v2480
    %v2543 = vld [vmem:[%s287] sm:$0xff]
    %v2544 = vld [vmem:[%s287 + $0x8] sm:$0xff]
    %v2545 = vld [vmem:[%s287 + $0x10] sm:$0xff]
    %v2546 = vld [vmem:[%s287 + $0x18] sm:$0xff]
    %vm2547 = vcmp.gt.s32.totalorder %v2543, 0
    %vm2548 = vcmp.gt.s32.totalorder %v2544, 0
    %vm2549 = vcmp.gt.s32.totalorder %v2545, 0
    %vm2550 = vcmp.gt.s32.totalorder %v2546, 0
    %v2551 = vld [vmem:[#allocation3 + $0x4] sm:$0x1]
    %v2552 = vld [vmem:[#allocation2 + $0x4] sm:$0x1]
    %v2553 = vlaneseq
    %v2554 = vshrl.u32 %v2553, 7
    %v2555 = vsub.s32 0, %v2554
    %v2556 = vrot.slane %v2551, %v2555
    %vm2557 = vcmp.lt.s32.totalorder %v2523, %v2556
    %v2558 = vsel %vm2557, %v2523, %v2556
    %vm2559 = vcmp.lt.s32.totalorder %v2524, %v2556
    %v2560 = vsel %vm2559, %v2524, %v2556
    %vm2561 = vcmp.lt.s32.totalorder %v2525, %v2556
    %v2562 = vsel %vm2561, %v2525, %v2556
    %vm2563 = vcmp.lt.s32.totalorder %v2526, %v2556
    %v2564 = vsel %vm2563, %v2526, %v2556
    %v2565 = vsel %vm2547, 1, 0
    %v2566 = vsel %vm2548, 1, 0
    %v2567 = vsel %vm2549, 1, 0
    %v2568 = vsel %vm2550, 1, 0
    %2569 = vset.pattern.permute.xlu0 0
    %2570 = vperm.xlu0 %2569, %v2565
    %v2571 = vpop.permute.xlu0 %2570
    %2572 = vset.pattern.permute.xlu0 0
    %2573 = vperm.xlu0 %2572, %v2566
    %v2574 = vpop.permute.xlu0 %2573
    %2575 = vset.pattern.permute.xlu0 0
    %2576 = vperm.xlu0 %2575, %v2567
    %v2577 = vpop.permute.xlu0 %2576
    %2578 = vset.pattern.permute.xlu0 0
    %2579 = vperm.xlu0 %2578, %v2568
    %v2580 = vpop.permute.xlu0 %2579
    %vm2581 = vcmp.eq.s32.totalorder %v2571, 1
    %vm2582 = vcmp.eq.s32.totalorder %v2574, 1
    %vm2583 = vcmp.eq.s32.totalorder %v2577, 1
    %vm2584 = vcmp.eq.s32.totalorder %v2580, 1
    %v2585 = vsel %vm2581, %v2558, %v2523
    %v2586 = vsel %vm2582, %v2560, %v2524
    %v2587 = vsel %vm2583, %v2562, %v2525
    %v2588 = vsel %vm2584, %v2564, %v2526
    %v2589 = vlaneseq
    %v2590 = vshrl.u32 %v2589, 7
    %v2591 = vsub.s32 0, %v2590
    %v2592 = vrot.slane %v2552, %v2591
    %vm2593 = vcmp.gt.s32.totalorder %v2539, %v2592
    %v2594 = vsel %vm2593, %v2539, %v2592
    %vm2595 = vcmp.gt.s32.totalorder %v2540, %v2592
    %v2596 = vsel %vm2595, %v2540, %v2592
    %vm2597 = vcmp.gt.s32.totalorder %v2541, %v2592
    %v2598 = vsel %vm2597, %v2541, %v2592
    %vm2599 = vcmp.gt.s32.totalorder %v2542, %v2592
    %v2600 = vsel %vm2599, %v2542, %v2592
    %v2601 = vsel %vm2581, %v2594, %v2539
    %v2602 = vsel %vm2582, %v2596, %v2540
    %v2603 = vsel %vm2583, %v2598, %v2541
    %v2604 = vsel %vm2584, %v2600, %v2542
    %v2605 = vld [vmem:[%s350] sm:$0xff]
    %v2606 = vld [vmem:[%s350 + $0x8] sm:$0xff]
    %v2607 = vld [vmem:[%s350 + $0x10] sm:$0xff]
    %v2608 = vld [vmem:[%s350 + $0x18] sm:$0xff]
    %vm2609 = vcmp.gt.s32.totalorder %v2605, 0
    %vm2610 = vcmp.gt.s32.totalorder %v2606, 0
    %vm2611 = vcmp.gt.s32.totalorder %v2607, 0
    %vm2612 = vcmp.gt.s32.totalorder %v2608, 0
    %v2613 = vld [vmem:[#allocation3 + $0x5] sm:$0x1]
    %v2614 = vld [vmem:[#allocation2 + $0x5] sm:$0x1]
    %v2615 = vlaneseq
    %v2616 = vshrl.u32 %v2615, 7
    %v2617 = vsub.s32 0, %v2616
    %v2618 = vrot.slane %v2613, %v2617
    %vm2619 = vcmp.lt.s32.totalorder %v2585, %v2618
    %v2620 = vsel %vm2619, %v2585, %v2618
    %vm2621 = vcmp.lt.s32.totalorder %v2586, %v2618
    %v2622 = vsel %vm2621, %v2586, %v2618
    %vm2623 = vcmp.lt.s32.totalorder %v2587, %v2618
    %v2624 = vsel %vm2623, %v2587, %v2618
    %vm2625 = vcmp.lt.s32.totalorder %v2588, %v2618
    %v2626 = vsel %vm2625, %v2588, %v2618
    %v2627 = vsel %vm2609, 1, 0
    %v2628 = vsel %vm2610, 1, 0
    %v2629 = vsel %vm2611, 1, 0
    %v2630 = vsel %vm2612, 1, 0
    %2631 = vset.pattern.permute.xlu0 0
    %2632 = vperm.xlu0 %2631, %v2627
    %v2633 = vpop.permute.xlu0 %2632
    %2634 = vset.pattern.permute.xlu0 0
    %2635 = vperm.xlu0 %2634, %v2628
    %v2636 = vpop.permute.xlu0 %2635
    %2637 = vset.pattern.permute.xlu0 0
    %2638 = vperm.xlu0 %2637, %v2629
    %v2639 = vpop.permute.xlu0 %2638
    %2640 = vset.pattern.permute.xlu0 0
    %2641 = vperm.xlu0 %2640, %v2630
    %v2642 = vpop.permute.xlu0 %2641
    %vm2643 = vcmp.eq.s32.totalorder %v2633, 1
    %vm2644 = vcmp.eq.s32.totalorder %v2636, 1
    %vm2645 = vcmp.eq.s32.totalorder %v2639, 1
    %vm2646 = vcmp.eq.s32.totalorder %v2642, 1
    %v2647 = vsel %vm2643, %v2620, %v2585
    %v2648 = vsel %vm2644, %v2622, %v2586
    %v2649 = vsel %vm2645, %v2624, %v2587
    %v2650 = vsel %vm2646, %v2626, %v2588
    %v2651 = vlaneseq
    %v2652 = vshrl.u32 %v2651, 7
    %v2653 = vsub.s32 0, %v2652
    %v2654 = vrot.slane %v2614, %v2653
    %vm2655 = vcmp.gt.s32.totalorder %v2601, %v2654
    %v2656 = vsel %vm2655, %v2601, %v2654
    %vm2657 = vcmp.gt.s32.totalorder %v2602, %v2654
    %v2658 = vsel %vm2657, %v2602, %v2654
    %vm2659 = vcmp.gt.s32.totalorder %v2603, %v2654
    %v2660 = vsel %vm2659, %v2603, %v2654
    %vm2661 = vcmp.gt.s32.totalorder %v2604, %v2654
    %v2662 = vsel %vm2661, %v2604, %v2654
    %v2663 = vsel %vm2643, %v2656, %v2601
    %v2664 = vsel %vm2644, %v2658, %v2602
    %v2665 = vsel %vm2645, %v2660, %v2603
    %v2666 = vsel %vm2646, %v2662, %v2604
    %v2667 = vld [vmem:[%s413] sm:$0xff]
    %v2668 = vld [vmem:[%s413 + $0x8] sm:$0xff]
    %v2669 = vld [vmem:[%s413 + $0x10] sm:$0xff]
    %v2670 = vld [vmem:[%s413 + $0x18] sm:$0xff]
    %vm2671 = vcmp.gt.s32.totalorder %v2667, 0
    %vm2672 = vcmp.gt.s32.totalorder %v2668, 0
    %vm2673 = vcmp.gt.s32.totalorder %v2669, 0
    %vm2674 = vcmp.gt.s32.totalorder %v2670, 0
    %v2675 = vld [vmem:[#allocation3 + $0x6] sm:$0x1]
    %v2676 = vld [vmem:[#allocation2 + $0x6] sm:$0x1]
    %v2677 = vlaneseq
    %v2678 = vshrl.u32 %v2677, 7
    %v2679 = vsub.s32 0, %v2678
    %v2680 = vrot.slane %v2675, %v2679
    %vm2681 = vcmp.lt.s32.totalorder %v2647, %v2680
    %v2682 = vsel %vm2681, %v2647, %v2680
    %vm2683 = vcmp.lt.s32.totalorder %v2648, %v2680
    %v2684 = vsel %vm2683, %v2648, %v2680
    %vm2685 = vcmp.lt.s32.totalorder %v2649, %v2680
    %v2686 = vsel %vm2685, %v2649, %v2680
    %vm2687 = vcmp.lt.s32.totalorder %v2650, %v2680
    %v2688 = vsel %vm2687, %v2650, %v2680
    %v2689 = vsel %vm2671, 1, 0
    %v2690 = vsel %vm2672, 1, 0
    %v2691 = vsel %vm2673, 1, 0
    %v2692 = vsel %vm2674, 1, 0
    %2693 = vset.pattern.permute.xlu0 0
    %2694 = vperm.xlu0 %2693, %v2689
    %v2695 = vpop.permute.xlu0 %2694
    %2696 = vset.pattern.permute.xlu0 0
    %2697 = vperm.xlu0 %2696, %v2690
    %v2698 = vpop.permute.xlu0 %2697
    %2699 = vset.pattern.permute.xlu0 0
    %2700 = vperm.xlu0 %2699, %v2691
    %v2701 = vpop.permute.xlu0 %2700
    %2702 = vset.pattern.permute.xlu0 0
    %2703 = vperm.xlu0 %2702, %v2692
    %v2704 = vpop.permute.xlu0 %2703
    %vm2705 = vcmp.eq.s32.totalorder %v2695, 1
    %vm2706 = vcmp.eq.s32.totalorder %v2698, 1
    %vm2707 = vcmp.eq.s32.totalorder %v2701, 1
    %vm2708 = vcmp.eq.s32.totalorder %v2704, 1
    %v2709 = vsel %vm2705, %v2682, %v2647
    %v2710 = vsel %vm2706, %v2684, %v2648
    %v2711 = vsel %vm2707, %v2686, %v2649
    %v2712 = vsel %vm2708, %v2688, %v2650
    %v2713 = vlaneseq
    %v2714 = vshrl.u32 %v2713, 7
    %v2715 = vsub.s32 0, %v2714
    %v2716 = vrot.slane %v2676, %v2715
    %vm2717 = vcmp.gt.s32.totalorder %v2663, %v2716
    %v2718 = vsel %vm2717, %v2663, %v2716
    %vm2719 = vcmp.gt.s32.totalorder %v2664, %v2716
    %v2720 = vsel %vm2719, %v2664, %v2716
    %vm2721 = vcmp.gt.s32.totalorder %v2665, %v2716
    %v2722 = vsel %vm2721, %v2665, %v2716
    %vm2723 = vcmp.gt.s32.totalorder %v2666, %v2716
    %v2724 = vsel %vm2723, %v2666, %v2716
    %v2725 = vsel %vm2705, %v2718, %v2663
    %v2726 = vsel %vm2706, %v2720, %v2664
    %v2727 = vsel %vm2707, %v2722, %v2665
    %v2728 = vsel %vm2708, %v2724, %v2666
    %v2729 = vld [vmem:[%s476] sm:$0xff]
    %v2730 = vld [vmem:[%s476 + $0x8] sm:$0xff]
    %v2731 = vld [vmem:[%s476 + $0x10] sm:$0xff]
    %v2732 = vld [vmem:[%s476 + $0x18] sm:$0xff]
    %vm2733 = vcmp.gt.s32.totalorder %v2729, 0
    %vm2734 = vcmp.gt.s32.totalorder %v2730, 0
    %vm2735 = vcmp.gt.s32.totalorder %v2731, 0
    %vm2736 = vcmp.gt.s32.totalorder %v2732, 0
    %v2737 = vld [vmem:[#allocation3 + $0x7] sm:$0x1]
    %v2738 = vld [vmem:[#allocation2 + $0x7] sm:$0x1]
    %v2739 = vlaneseq
    %v2740 = vshrl.u32 %v2739, 7
    %v2741 = vsub.s32 0, %v2740
    %v2742 = vrot.slane %v2737, %v2741
    %vm2743 = vcmp.lt.s32.totalorder %v2709, %v2742
    %v2744 = vsel %vm2743, %v2709, %v2742
    %vm2745 = vcmp.lt.s32.totalorder %v2710, %v2742
    %v2746 = vsel %vm2745, %v2710, %v2742
    %vm2747 = vcmp.lt.s32.totalorder %v2711, %v2742
    %v2748 = vsel %vm2747, %v2711, %v2742
    %vm2749 = vcmp.lt.s32.totalorder %v2712, %v2742
    %v2750 = vsel %vm2749, %v2712, %v2742
    %v2751 = vsel %vm2733, 1, 0
    %v2752 = vsel %vm2734, 1, 0
    %v2753 = vsel %vm2735, 1, 0
    %v2754 = vsel %vm2736, 1, 0
    %2755 = vset.pattern.permute.xlu0 0
    %2756 = vperm.xlu0 %2755, %v2751
    %v2757 = vpop.permute.xlu0 %2756
    %2758 = vset.pattern.permute.xlu0 0
    %2759 = vperm.xlu0 %2758, %v2752
    %v2760 = vpop.permute.xlu0 %2759
    %2761 = vset.pattern.permute.xlu0 0
    %2762 = vperm.xlu0 %2761, %v2753
    %v2763 = vpop.permute.xlu0 %2762
    %2764 = vset.pattern.permute.xlu0 0
    %2765 = vperm.xlu0 %2764, %v2754
    %v2766 = vpop.permute.xlu0 %2765
    %vm2767 = vcmp.eq.s32.totalorder %v2757, 1
    %vm2768 = vcmp.eq.s32.totalorder %v2760, 1
    %vm2769 = vcmp.eq.s32.totalorder %v2763, 1
    %vm2770 = vcmp.eq.s32.totalorder %v2766, 1
    %v2771 = vsel %vm2767, %v2744, %v2709
    %v2772 = vsel %vm2768, %v2746, %v2710
    %v2773 = vsel %vm2769, %v2748, %v2711
    %v2774 = vsel %vm2770, %v2750, %v2712
    %v2775 = vlaneseq
    %v2776 = vshrl.u32 %v2775, 7
    %v2777 = vsub.s32 0, %v2776
    %v2778 = vrot.slane %v2738, %v2777
    %vm2779 = vcmp.gt.s32.totalorder %v2725, %v2778
    %v2780 = vsel %vm2779, %v2725, %v2778
    %vm2781 = vcmp.gt.s32.totalorder %v2726, %v2778
    %v2782 = vsel %vm2781, %v2726, %v2778
    %vm2783 = vcmp.gt.s32.totalorder %v2727, %v2778
    %v2784 = vsel %vm2783, %v2727, %v2778
    %vm2785 = vcmp.gt.s32.totalorder %v2728, %v2778
    %v2786 = vsel %vm2785, %v2728, %v2778
    %v2787 = vsel %vm2767, %v2780, %v2725
    %v2788 = vsel %vm2768, %v2782, %v2726
    %v2789 = vsel %vm2769, %v2784, %v2727
    %v2790 = vsel %vm2770, %v2786, %v2728
    %v2791 = vld [vmem:[%s539] sm:$0xff]
    %v2792 = vld [vmem:[%s539 + $0x8] sm:$0xff]
    %v2793 = vld [vmem:[%s539 + $0x10] sm:$0xff]
    %v2794 = vld [vmem:[%s539 + $0x18] sm:$0xff]
    %vm2795 = vcmp.gt.s32.totalorder %v2791, 0
    %vm2796 = vcmp.gt.s32.totalorder %v2792, 0
    %vm2797 = vcmp.gt.s32.totalorder %v2793, 0
    %vm2798 = vcmp.gt.s32.totalorder %v2794, 0
    %v2799 = vld [vmem:[#allocation3 + $0x8] sm:$0x1]
    %v2800 = vld [vmem:[#allocation2 + $0x8] sm:$0x1]
    %v2801 = vlaneseq
    %v2802 = vshrl.u32 %v2801, 7
    %v2803 = vsub.s32 0, %v2802
    %v2804 = vrot.slane %v2799, %v2803
    %vm2805 = vcmp.lt.s32.totalorder %v2771, %v2804
    %v2806 = vsel %vm2805, %v2771, %v2804
    %vm2807 = vcmp.lt.s32.totalorder %v2772, %v2804
    %v2808 = vsel %vm2807, %v2772, %v2804
    %vm2809 = vcmp.lt.s32.totalorder %v2773, %v2804
    %v2810 = vsel %vm2809, %v2773, %v2804
    %vm2811 = vcmp.lt.s32.totalorder %v2774, %v2804
    %v2812 = vsel %vm2811, %v2774, %v2804
    %v2813 = vsel %vm2795, 1, 0
    %v2814 = vsel %vm2796, 1, 0
    %v2815 = vsel %vm2797, 1, 0
    %v2816 = vsel %vm2798, 1, 0
    %2817 = vset.pattern.permute.xlu0 0
    %2818 = vperm.xlu0 %2817, %v2813
    %v2819 = vpop.permute.xlu0 %2818
    %2820 = vset.pattern.permute.xlu0 0
    %2821 = vperm.xlu0 %2820, %v2814
    %v2822 = vpop.permute.xlu0 %2821
    %2823 = vset.pattern.permute.xlu0 0
    %2824 = vperm.xlu0 %2823, %v2815
    %v2825 = vpop.permute.xlu0 %2824
    %2826 = vset.pattern.permute.xlu0 0
    %2827 = vperm.xlu0 %2826, %v2816
    %v2828 = vpop.permute.xlu0 %2827
    %vm2829 = vcmp.eq.s32.totalorder %v2819, 1
    %vm2830 = vcmp.eq.s32.totalorder %v2822, 1
    %vm2831 = vcmp.eq.s32.totalorder %v2825, 1
    %vm2832 = vcmp.eq.s32.totalorder %v2828, 1
    %v2833 = vsel %vm2829, %v2806, %v2771
    %v2834 = vsel %vm2830, %v2808, %v2772
    %v2835 = vsel %vm2831, %v2810, %v2773
    %v2836 = vsel %vm2832, %v2812, %v2774
    %v2837 = vlaneseq
    %v2838 = vshrl.u32 %v2837, 7
    %v2839 = vsub.s32 0, %v2838
    %v2840 = vrot.slane %v2800, %v2839
    %vm2841 = vcmp.gt.s32.totalorder %v2787, %v2840
    %v2842 = vsel %vm2841, %v2787, %v2840
    %vm2843 = vcmp.gt.s32.totalorder %v2788, %v2840
    %v2844 = vsel %vm2843, %v2788, %v2840
    %vm2845 = vcmp.gt.s32.totalorder %v2789, %v2840
    %v2846 = vsel %vm2845, %v2789, %v2840
    %vm2847 = vcmp.gt.s32.totalorder %v2790, %v2840
    %v2848 = vsel %vm2847, %v2790, %v2840
    %v2849 = vsel %vm2829, %v2842, %v2787
    %v2850 = vsel %vm2830, %v2844, %v2788
    %v2851 = vsel %vm2831, %v2846, %v2789
    %v2852 = vsel %vm2832, %v2848, %v2790
    %v2853 = vld [vmem:[%s602] sm:$0xff]
    %v2854 = vld [vmem:[%s602 + $0x8] sm:$0xff]
    %v2855 = vld [vmem:[%s602 + $0x10] sm:$0xff]
    %v2856 = vld [vmem:[%s602 + $0x18] sm:$0xff]
    %vm2857 = vcmp.gt.s32.totalorder %v2853, 0
    %vm2858 = vcmp.gt.s32.totalorder %v2854, 0
    %vm2859 = vcmp.gt.s32.totalorder %v2855, 0
    %vm2860 = vcmp.gt.s32.totalorder %v2856, 0
    %v2861 = vld [vmem:[#allocation3 + $0x9] sm:$0x1]
    %v2862 = vld [vmem:[#allocation2 + $0x9] sm:$0x1]
    %v2863 = vlaneseq
    %v2864 = vshrl.u32 %v2863, 7
    %v2865 = vsub.s32 0, %v2864
    %v2866 = vrot.slane %v2861, %v2865
    %vm2867 = vcmp.lt.s32.totalorder %v2833, %v2866
    %v2868 = vsel %vm2867, %v2833, %v2866
    %vm2869 = vcmp.lt.s32.totalorder %v2834, %v2866
    %v2870 = vsel %vm2869, %v2834, %v2866
    %vm2871 = vcmp.lt.s32.totalorder %v2835, %v2866
    %v2872 = vsel %vm2871, %v2835, %v2866
    %vm2873 = vcmp.lt.s32.totalorder %v2836, %v2866
    %v2874 = vsel %vm2873, %v2836, %v2866
    %v2875 = vsel %vm2857, 1, 0
    %v2876 = vsel %vm2858, 1, 0
    %v2877 = vsel %vm2859, 1, 0
    %v2878 = vsel %vm2860, 1, 0
    %2879 = vset.pattern.permute.xlu0 0
    %2880 = vperm.xlu0 %2879, %v2875
    %v2881 = vpop.permute.xlu0 %2880
    %2882 = vset.pattern.permute.xlu0 0
    %2883 = vperm.xlu0 %2882, %v2876
    %v2884 = vpop.permute.xlu0 %2883
    %2885 = vset.pattern.permute.xlu0 0
    %2886 = vperm.xlu0 %2885, %v2877
    %v2887 = vpop.permute.xlu0 %2886
    %2888 = vset.pattern.permute.xlu0 0
    %2889 = vperm.xlu0 %2888, %v2878
    %v2890 = vpop.permute.xlu0 %2889
    %vm2891 = vcmp.eq.s32.totalorder %v2881, 1
    %vm2892 = vcmp.eq.s32.totalorder %v2884, 1
    %vm2893 = vcmp.eq.s32.totalorder %v2887, 1
    %vm2894 = vcmp.eq.s32.totalorder %v2890, 1
    %v2895 = vsel %vm2891, %v2868, %v2833
    %v2896 = vsel %vm2892, %v2870, %v2834
    %v2897 = vsel %vm2893, %v2872, %v2835
    %v2898 = vsel %vm2894, %v2874, %v2836
    %v2899 = vlaneseq
    %v2900 = vshrl.u32 %v2899, 7
    %v2901 = vsub.s32 0, %v2900
    %v2902 = vrot.slane %v2862, %v2901
    %vm2903 = vcmp.gt.s32.totalorder %v2849, %v2902
    %v2904 = vsel %vm2903, %v2849, %v2902
    %vm2905 = vcmp.gt.s32.totalorder %v2850, %v2902
    %v2906 = vsel %vm2905, %v2850, %v2902
    %vm2907 = vcmp.gt.s32.totalorder %v2851, %v2902
    %v2908 = vsel %vm2907, %v2851, %v2902
    %vm2909 = vcmp.gt.s32.totalorder %v2852, %v2902
    %v2910 = vsel %vm2909, %v2852, %v2902
    %v2911 = vsel %vm2891, %v2904, %v2849
    %v2912 = vsel %vm2892, %v2906, %v2850
    %v2913 = vsel %vm2893, %v2908, %v2851
    %v2914 = vsel %vm2894, %v2910, %v2852
    %v2915 = vld [vmem:[%s665] sm:$0xff]
    %v2916 = vld [vmem:[%s665 + $0x8] sm:$0xff]
    %v2917 = vld [vmem:[%s665 + $0x10] sm:$0xff]
    %v2918 = vld [vmem:[%s665 + $0x18] sm:$0xff]
    %vm2919 = vcmp.gt.s32.totalorder %v2915, 0
    %vm2920 = vcmp.gt.s32.totalorder %v2916, 0
    %vm2921 = vcmp.gt.s32.totalorder %v2917, 0
    %vm2922 = vcmp.gt.s32.totalorder %v2918, 0
    %v2923 = vld [vmem:[#allocation3 + $0xa] sm:$0x1]
    %v2924 = vld [vmem:[#allocation2 + $0xa] sm:$0x1]
    %v2925 = vlaneseq
    %v2926 = vshrl.u32 %v2925, 7
    %v2927 = vsub.s32 0, %v2926
    %v2928 = vrot.slane %v2923, %v2927
    %vm2929 = vcmp.lt.s32.totalorder %v2895, %v2928
    %v2930 = vsel %vm2929, %v2895, %v2928
    %vm2931 = vcmp.lt.s32.totalorder %v2896, %v2928
    %v2932 = vsel %vm2931, %v2896, %v2928
    %vm2933 = vcmp.lt.s32.totalorder %v2897, %v2928
    %v2934 = vsel %vm2933, %v2897, %v2928
    %vm2935 = vcmp.lt.s32.totalorder %v2898, %v2928
    %v2936 = vsel %vm2935, %v2898, %v2928
    %v2937 = vsel %vm2919, 1, 0
    %v2938 = vsel %vm2920, 1, 0
    %v2939 = vsel %vm2921, 1, 0
    %v2940 = vsel %vm2922, 1, 0
    %2941 = vset.pattern.permute.xlu0 0
    %2942 = vperm.xlu0 %2941, %v2937
    %v2943 = vpop.permute.xlu0 %2942
    %2944 = vset.pattern.permute.xlu0 0
    %2945 = vperm.xlu0 %2944, %v2938
    %v2946 = vpop.permute.xlu0 %2945
    %2947 = vset.pattern.permute.xlu0 0
    %2948 = vperm.xlu0 %2947, %v2939
    %v2949 = vpop.permute.xlu0 %2948
    %2950 = vset.pattern.permute.xlu0 0
    %2951 = vperm.xlu0 %2950, %v2940
    %v2952 = vpop.permute.xlu0 %2951
    %vm2953 = vcmp.eq.s32.totalorder %v2943, 1
    %vm2954 = vcmp.eq.s32.totalorder %v2946, 1
    %vm2955 = vcmp.eq.s32.totalorder %v2949, 1
    %vm2956 = vcmp.eq.s32.totalorder %v2952, 1
    %v2957 = vsel %vm2953, %v2930, %v2895
    %v2958 = vsel %vm2954, %v2932, %v2896
    %v2959 = vsel %vm2955, %v2934, %v2897
    %v2960 = vsel %vm2956, %v2936, %v2898
    %v2961 = vlaneseq
    %v2962 = vshrl.u32 %v2961, 7
    %v2963 = vsub.s32 0, %v2962
    %v2964 = vrot.slane %v2924, %v2963
    %vm2965 = vcmp.gt.s32.totalorder %v2911, %v2964
    %v2966 = vsel %vm2965, %v2911, %v2964
    %vm2967 = vcmp.gt.s32.totalorder %v2912, %v2964
    %v2968 = vsel %vm2967, %v2912, %v2964
    %vm2969 = vcmp.gt.s32.totalorder %v2913, %v2964
    %v2970 = vsel %vm2969, %v2913, %v2964
    %vm2971 = vcmp.gt.s32.totalorder %v2914, %v2964
    %v2972 = vsel %vm2971, %v2914, %v2964
    %v2973 = vsel %vm2953, %v2966, %v2911
    %v2974 = vsel %vm2954, %v2968, %v2912
    %v2975 = vsel %vm2955, %v2970, %v2913
    %v2976 = vsel %vm2956, %v2972, %v2914
    %v2977 = vld [vmem:[%s728] sm:$0xff]
    %v2978 = vld [vmem:[%s728 + $0x8] sm:$0xff]
    %v2979 = vld [vmem:[%s728 + $0x10] sm:$0xff]
    %v2980 = vld [vmem:[%s728 + $0x18] sm:$0xff]
    %vm2981 = vcmp.gt.s32.totalorder %v2977, 0
    %vm2982 = vcmp.gt.s32.totalorder %v2978, 0
    %vm2983 = vcmp.gt.s32.totalorder %v2979, 0
    %vm2984 = vcmp.gt.s32.totalorder %v2980, 0
    %v2985 = vld [vmem:[#allocation3 + $0xb] sm:$0x1]
    %v2986 = vld [vmem:[#allocation2 + $0xb] sm:$0x1]
    %v2987 = vlaneseq
    %v2988 = vshrl.u32 %v2987, 7
    %v2989 = vsub.s32 0, %v2988
    %v2990 = vrot.slane %v2985, %v2989
    %vm2991 = vcmp.lt.s32.totalorder %v2957, %v2990
    %v2992 = vsel %vm2991, %v2957, %v2990
    %vm2993 = vcmp.lt.s32.totalorder %v2958, %v2990
    %v2994 = vsel %vm2993, %v2958, %v2990
    %vm2995 = vcmp.lt.s32.totalorder %v2959, %v2990
    %v2996 = vsel %vm2995, %v2959, %v2990
    %vm2997 = vcmp.lt.s32.totalorder %v2960, %v2990
    %v2998 = vsel %vm2997, %v2960, %v2990
    %v2999 = vsel %vm2981, 1, 0
    %v3000 = vsel %vm2982, 1, 0
    %v3001 = vsel %vm2983, 1, 0
    %v3002 = vsel %vm2984, 1, 0
    %3003 = vset.pattern.permute.xlu0 0
    %3004 = vperm.xlu0 %3003, %v2999
    %v3005 = vpop.permute.xlu0 %3004
    %3006 = vset.pattern.permute.xlu0 0
    %3007 = vperm.xlu0 %3006, %v3000
    %v3008 = vpop.permute.xlu0 %3007
    %3009 = vset.pattern.permute.xlu0 0
    %3010 = vperm.xlu0 %3009, %v3001
    %v3011 = vpop.permute.xlu0 %3010
    %3012 = vset.pattern.permute.xlu0 0
    %3013 = vperm.xlu0 %3012, %v3002
    %v3014 = vpop.permute.xlu0 %3013
    %vm3015 = vcmp.eq.s32.totalorder %v3005, 1
    %vm3016 = vcmp.eq.s32.totalorder %v3008, 1
    %vm3017 = vcmp.eq.s32.totalorder %v3011, 1
    %vm3018 = vcmp.eq.s32.totalorder %v3014, 1
    %v3019 = vsel %vm3015, %v2992, %v2957
    %v3020 = vsel %vm3016, %v2994, %v2958
    %v3021 = vsel %vm3017, %v2996, %v2959
    %v3022 = vsel %vm3018, %v2998, %v2960
    %v3023 = vlaneseq
    %v3024 = vshrl.u32 %v3023, 7
    %v3025 = vsub.s32 0, %v3024
    %v3026 = vrot.slane %v2986, %v3025
    %vm3027 = vcmp.gt.s32.totalorder %v2973, %v3026
    %v3028 = vsel %vm3027, %v2973, %v3026
    %vm3029 = vcmp.gt.s32.totalorder %v2974, %v3026
    %v3030 = vsel %vm3029, %v2974, %v3026
    %vm3031 = vcmp.gt.s32.totalorder %v2975, %v3026
    %v3032 = vsel %vm3031, %v2975, %v3026
    %vm3033 = vcmp.gt.s32.totalorder %v2976, %v3026
    %v3034 = vsel %vm3033, %v2976, %v3026
    %v3035 = vsel %vm3015, %v3028, %v2973
    %v3036 = vsel %vm3016, %v3030, %v2974
    %v3037 = vsel %vm3017, %v3032, %v2975
    %v3038 = vsel %vm3018, %v3034, %v2976
    %v3039 = vld [vmem:[%s791] sm:$0xff]
    %v3040 = vld [vmem:[%s791 + $0x8] sm:$0xff]
    %v3041 = vld [vmem:[%s791 + $0x10] sm:$0xff]
    %v3042 = vld [vmem:[%s791 + $0x18] sm:$0xff]
    %vm3043 = vcmp.gt.s32.totalorder %v3039, 0
    %vm3044 = vcmp.gt.s32.totalorder %v3040, 0
    %vm3045 = vcmp.gt.s32.totalorder %v3041, 0
    %vm3046 = vcmp.gt.s32.totalorder %v3042, 0
    %v3047 = vld [vmem:[#allocation3 + $0xc] sm:$0x1]
    %v3048 = vld [vmem:[#allocation2 + $0xc] sm:$0x1]
    %v3049 = vlaneseq
    %v3050 = vshrl.u32 %v3049, 7
    %v3051 = vsub.s32 0, %v3050
    %v3052 = vrot.slane %v3047, %v3051
    %vm3053 = vcmp.lt.s32.totalorder %v3019, %v3052
    %v3054 = vsel %vm3053, %v3019, %v3052
    %vm3055 = vcmp.lt.s32.totalorder %v3020, %v3052
    %v3056 = vsel %vm3055, %v3020, %v3052
    %vm3057 = vcmp.lt.s32.totalorder %v3021, %v3052
    %v3058 = vsel %vm3057, %v3021, %v3052
    %vm3059 = vcmp.lt.s32.totalorder %v3022, %v3052
    %v3060 = vsel %vm3059, %v3022, %v3052
    %v3061 = vsel %vm3043, 1, 0
    %v3062 = vsel %vm3044, 1, 0
    %v3063 = vsel %vm3045, 1, 0
    %v3064 = vsel %vm3046, 1, 0
    %3065 = vset.pattern.permute.xlu0 0
    %3066 = vperm.xlu0 %3065, %v3061
    %v3067 = vpop.permute.xlu0 %3066
    %3068 = vset.pattern.permute.xlu0 0
    %3069 = vperm.xlu0 %3068, %v3062
    %v3070 = vpop.permute.xlu0 %3069
    %3071 = vset.pattern.permute.xlu0 0
    %3072 = vperm.xlu0 %3071, %v3063
    %v3073 = vpop.permute.xlu0 %3072
    %3074 = vset.pattern.permute.xlu0 0
    %3075 = vperm.xlu0 %3074, %v3064
    %v3076 = vpop.permute.xlu0 %3075
    %vm3077 = vcmp.eq.s32.totalorder %v3067, 1
    %vm3078 = vcmp.eq.s32.totalorder %v3070, 1
    %vm3079 = vcmp.eq.s32.totalorder %v3073, 1
    %vm3080 = vcmp.eq.s32.totalorder %v3076, 1
    %v3081 = vsel %vm3077, %v3054, %v3019
    %v3082 = vsel %vm3078, %v3056, %v3020
    %v3083 = vsel %vm3079, %v3058, %v3021
    %v3084 = vsel %vm3080, %v3060, %v3022
    %v3085 = vlaneseq
    %v3086 = vshrl.u32 %v3085, 7
    %v3087 = vsub.s32 0, %v3086
    %v3088 = vrot.slane %v3048, %v3087
    %vm3089 = vcmp.gt.s32.totalorder %v3035, %v3088
    %v3090 = vsel %vm3089, %v3035, %v3088
    %vm3091 = vcmp.gt.s32.totalorder %v3036, %v3088
    %v3092 = vsel %vm3091, %v3036, %v3088
    %vm3093 = vcmp.gt.s32.totalorder %v3037, %v3088
    %v3094 = vsel %vm3093, %v3037, %v3088
    %vm3095 = vcmp.gt.s32.totalorder %v3038, %v3088
    %v3096 = vsel %vm3095, %v3038, %v3088
    %v3097 = vsel %vm3077, %v3090, %v3035
    %v3098 = vsel %vm3078, %v3092, %v3036
    %v3099 = vsel %vm3079, %v3094, %v3037
    %v3100 = vsel %vm3080, %v3096, %v3038
    %v3101 = vld [vmem:[%s854] sm:$0xff]
    %v3102 = vld [vmem:[%s854 + $0x8] sm:$0xff]
    %v3103 = vld [vmem:[%s854 + $0x10] sm:$0xff]
    %v3104 = vld [vmem:[%s854 + $0x18] sm:$0xff]
    %vm3105 = vcmp.gt.s32.totalorder %v3101, 0
    %vm3106 = vcmp.gt.s32.totalorder %v3102, 0
    %vm3107 = vcmp.gt.s32.totalorder %v3103, 0
    %vm3108 = vcmp.gt.s32.totalorder %v3104, 0
    %v3109 = vld [vmem:[#allocation3 + $0xd] sm:$0x1]
    %v3110 = vld [vmem:[#allocation2 + $0xd] sm:$0x1]
    %v3111 = vlaneseq
    %v3112 = vshrl.u32 %v3111, 7
    %v3113 = vsub.s32 0, %v3112
    %v3114 = vrot.slane %v3109, %v3113
    %vm3115 = vcmp.lt.s32.totalorder %v3081, %v3114
    %v3116 = vsel %vm3115, %v3081, %v3114
    %vm3117 = vcmp.lt.s32.totalorder %v3082, %v3114
    %v3118 = vsel %vm3117, %v3082, %v3114
    %vm3119 = vcmp.lt.s32.totalorder %v3083, %v3114
    %v3120 = vsel %vm3119, %v3083, %v3114
    %vm3121 = vcmp.lt.s32.totalorder %v3084, %v3114
    %v3122 = vsel %vm3121, %v3084, %v3114
    %v3123 = vsel %vm3105, 1, 0
    %v3124 = vsel %vm3106, 1, 0
    %v3125 = vsel %vm3107, 1, 0
    %v3126 = vsel %vm3108, 1, 0
    %3127 = vset.pattern.permute.xlu0 0
    %3128 = vperm.xlu0 %3127, %v3123
    %v3129 = vpop.permute.xlu0 %3128
    %3130 = vset.pattern.permute.xlu0 0
    %3131 = vperm.xlu0 %3130, %v3124
    %v3132 = vpop.permute.xlu0 %3131
    %3133 = vset.pattern.permute.xlu0 0
    %3134 = vperm.xlu0 %3133, %v3125
    %v3135 = vpop.permute.xlu0 %3134
    %3136 = vset.pattern.permute.xlu0 0
    %3137 = vperm.xlu0 %3136, %v3126
    %v3138 = vpop.permute.xlu0 %3137
    %vm3139 = vcmp.eq.s32.totalorder %v3129, 1
    %vm3140 = vcmp.eq.s32.totalorder %v3132, 1
    %vm3141 = vcmp.eq.s32.totalorder %v3135, 1
    %vm3142 = vcmp.eq.s32.totalorder %v3138, 1
    %v3143 = vsel %vm3139, %v3116, %v3081
    %v3144 = vsel %vm3140, %v3118, %v3082
    %v3145 = vsel %vm3141, %v3120, %v3083
    %v3146 = vsel %vm3142, %v3122, %v3084
    %v3147 = vlaneseq
    %v3148 = vshrl.u32 %v3147, 7
    %v3149 = vsub.s32 0, %v3148
    %v3150 = vrot.slane %v3110, %v3149
    %vm3151 = vcmp.gt.s32.totalorder %v3097, %v3150
    %v3152 = vsel %vm3151, %v3097, %v3150
    %vm3153 = vcmp.gt.s32.totalorder %v3098, %v3150
    %v3154 = vsel %vm3153, %v3098, %v3150
    %vm3155 = vcmp.gt.s32.totalorder %v3099, %v3150
    %v3156 = vsel %vm3155, %v3099, %v3150
    %vm3157 = vcmp.gt.s32.totalorder %v3100, %v3150
    %v3158 = vsel %vm3157, %v3100, %v3150
    %v3159 = vsel %vm3139, %v3152, %v3097
    %v3160 = vsel %vm3140, %v3154, %v3098
    %v3161 = vsel %vm3141, %v3156, %v3099
    %v3162 = vsel %vm3142, %v3158, %v3100
    %v3163 = vld [vmem:[%s917] sm:$0xff]
    %v3164 = vld [vmem:[%s917 + $0x8] sm:$0xff]
    %v3165 = vld [vmem:[%s917 + $0x10] sm:$0xff]
    %v3166 = vld [vmem:[%s917 + $0x18] sm:$0xff]
    %vm3167 = vcmp.gt.s32.totalorder %v3163, 0
    %vm3168 = vcmp.gt.s32.totalorder %v3164, 0
    %vm3169 = vcmp.gt.s32.totalorder %v3165, 0
    %vm3170 = vcmp.gt.s32.totalorder %v3166, 0
    %v3171 = vld [vmem:[#allocation3 + $0xe] sm:$0x1]
    %v3172 = vld [vmem:[#allocation2 + $0xe] sm:$0x1]
    %v3173 = vlaneseq
    %v3174 = vshrl.u32 %v3173, 7
    %v3175 = vsub.s32 0, %v3174
    %v3176 = vrot.slane %v3171, %v3175
    %vm3177 = vcmp.lt.s32.totalorder %v3143, %v3176
    %v3178 = vsel %vm3177, %v3143, %v3176
    %vm3179 = vcmp.lt.s32.totalorder %v3144, %v3176
    %v3180 = vsel %vm3179, %v3144, %v3176
    %vm3181 = vcmp.lt.s32.totalorder %v3145, %v3176
    %v3182 = vsel %vm3181, %v3145, %v3176
    %vm3183 = vcmp.lt.s32.totalorder %v3146, %v3176
    %v3184 = vsel %vm3183, %v3146, %v3176
    %v3185 = vsel %vm3167, 1, 0
    %v3186 = vsel %vm3168, 1, 0
    %v3187 = vsel %vm3169, 1, 0
    %v3188 = vsel %vm3170, 1, 0
    %3189 = vset.pattern.permute.xlu0 0
    %3190 = vperm.xlu0 %3189, %v3185
    %v3191 = vpop.permute.xlu0 %3190
    %3192 = vset.pattern.permute.xlu0 0
    %3193 = vperm.xlu0 %3192, %v3186
    %v3194 = vpop.permute.xlu0 %3193
    %3195 = vset.pattern.permute.xlu0 0
    %3196 = vperm.xlu0 %3195, %v3187
    %v3197 = vpop.permute.xlu0 %3196
    %3198 = vset.pattern.permute.xlu0 0
    %3199 = vperm.xlu0 %3198, %v3188
    %v3200 = vpop.permute.xlu0 %3199
    %vm3201 = vcmp.eq.s32.totalorder %v3191, 1
    %vm3202 = vcmp.eq.s32.totalorder %v3194, 1
    %vm3203 = vcmp.eq.s32.totalorder %v3197, 1
    %vm3204 = vcmp.eq.s32.totalorder %v3200, 1
    %v3205 = vsel %vm3201, %v3178, %v3143
    %v3206 = vsel %vm3202, %v3180, %v3144
    %v3207 = vsel %vm3203, %v3182, %v3145
    %v3208 = vsel %vm3204, %v3184, %v3146
    %v3209 = vlaneseq
    %v3210 = vshrl.u32 %v3209, 7
    %v3211 = vsub.s32 0, %v3210
    %v3212 = vrot.slane %v3172, %v3211
    %vm3213 = vcmp.gt.s32.totalorder %v3159, %v3212
    %v3214 = vsel %vm3213, %v3159, %v3212
    %vm3215 = vcmp.gt.s32.totalorder %v3160, %v3212
    %v3216 = vsel %vm3215, %v3160, %v3212
    %vm3217 = vcmp.gt.s32.totalorder %v3161, %v3212
    %v3218 = vsel %vm3217, %v3161, %v3212
    %vm3219 = vcmp.gt.s32.totalorder %v3162, %v3212
    %v3220 = vsel %vm3219, %v3162, %v3212
    %v3221 = vsel %vm3201, %v3214, %v3159
    %v3222 = vsel %vm3202, %v3216, %v3160
    %v3223 = vsel %vm3203, %v3218, %v3161
    %v3224 = vsel %vm3204, %v3220, %v3162
    %v3225 = vld [vmem:[%s980] sm:$0xff]
    %v3226 = vld [vmem:[%s980 + $0x8] sm:$0xff]
    %v3227 = vld [vmem:[%s980 + $0x10] sm:$0xff]
    %v3228 = vld [vmem:[%s980 + $0x18] sm:$0xff]
    %vm3229 = vcmp.gt.s32.totalorder %v3225, 0
    %vm3230 = vcmp.gt.s32.totalorder %v3226, 0
    %vm3231 = vcmp.gt.s32.totalorder %v3227, 0
    %vm3232 = vcmp.gt.s32.totalorder %v3228, 0
    %v3233 = vld [vmem:[#allocation3 + $0xf] sm:$0x1]
    %v3234 = vld [vmem:[#allocation2 + $0xf] sm:$0x1]
    %v3235 = vlaneseq
    %v3236 = vshrl.u32 %v3235, 7
    %v3237 = vsub.s32 0, %v3236
    %v3238 = vrot.slane %v3233, %v3237
    %vm3239 = vcmp.lt.s32.totalorder %v3205, %v3238
    %v3240 = vsel %vm3239, %v3205, %v3238
    %vm3241 = vcmp.lt.s32.totalorder %v3206, %v3238
    %v3242 = vsel %vm3241, %v3206, %v3238
    %vm3243 = vcmp.lt.s32.totalorder %v3207, %v3238
    %v3244 = vsel %vm3243, %v3207, %v3238
    %vm3245 = vcmp.lt.s32.totalorder %v3208, %v3238
    %v3246 = vsel %vm3245, %v3208, %v3238
    %v3247 = vsel %vm3229, 1, 0
    %v3248 = vsel %vm3230, 1, 0
    %v3249 = vsel %vm3231, 1, 0
    %v3250 = vsel %vm3232, 1, 0
    %3251 = vset.pattern.permute.xlu0 0
    %3252 = vperm.xlu0 %3251, %v3247
    %v3253 = vpop.permute.xlu0 %3252
    %3254 = vset.pattern.permute.xlu0 0
    %3255 = vperm.xlu0 %3254, %v3248
    %v3256 = vpop.permute.xlu0 %3255
    %3257 = vset.pattern.permute.xlu0 0
    %3258 = vperm.xlu0 %3257, %v3249
    %v3259 = vpop.permute.xlu0 %3258
    %3260 = vset.pattern.permute.xlu0 0
    %3261 = vperm.xlu0 %3260, %v3250
    %v3262 = vpop.permute.xlu0 %3261
    %vm3263 = vcmp.eq.s32.totalorder %v3253, 1
    %vm3264 = vcmp.eq.s32.totalorder %v3256, 1
    %vm3265 = vcmp.eq.s32.totalorder %v3259, 1
    %vm3266 = vcmp.eq.s32.totalorder %v3262, 1
    %v3267 = vsel %vm3263, %v3240, %v3205
    %v3268 = vsel %vm3264, %v3242, %v3206
    %v3269 = vsel %vm3265, %v3244, %v3207
    %v3270 = vsel %vm3266, %v3246, %v3208
    %v3271 = vlaneseq
    %v3272 = vshrl.u32 %v3271, 7
    %v3273 = vsub.s32 0, %v3272
    %v3274 = vrot.slane %v3234, %v3273
    %vm3275 = vcmp.gt.s32.totalorder %v3221, %v3274
    %v3276 = vsel %vm3275, %v3221, %v3274
    %vm3277 = vcmp.gt.s32.totalorder %v3222, %v3274
    %v3278 = vsel %vm3277, %v3222, %v3274
    %vm3279 = vcmp.gt.s32.totalorder %v3223, %v3274
    %v3280 = vsel %vm3279, %v3223, %v3274
    %vm3281 = vcmp.gt.s32.totalorder %v3224, %v3274
    %v3282 = vsel %vm3281, %v3224, %v3274
    %v3283 = vsel %vm3263, %v3276, %v3221
    %v3284 = vsel %vm3264, %v3278, %v3222
    %v3285 = vsel %vm3265, %v3280, %v3223
    %v3286 = vsel %vm3266, %v3282, %v3224
    %v3287 = vld [vmem:[%s1043] sm:$0xff]
    %v3288 = vld [vmem:[%s1043 + $0x8] sm:$0xff]
    %v3289 = vld [vmem:[%s1043 + $0x10] sm:$0xff]
    %v3290 = vld [vmem:[%s1043 + $0x18] sm:$0xff]
    %vm3291 = vcmp.gt.s32.totalorder %v3287, 0
    %vm3292 = vcmp.gt.s32.totalorder %v3288, 0
    %vm3293 = vcmp.gt.s32.totalorder %v3289, 0
    %vm3294 = vcmp.gt.s32.totalorder %v3290, 0
    %v3295 = vld [vmem:[#allocation3 + $0x10] sm:$0x1]
    %v3296 = vld [vmem:[#allocation2 + $0x10] sm:$0x1]
    %v3297 = vlaneseq
    %v3298 = vshrl.u32 %v3297, 7
    %v3299 = vsub.s32 0, %v3298
    %v3300 = vrot.slane %v3295, %v3299
    %vm3301 = vcmp.lt.s32.totalorder %v3267, %v3300
    %v3302 = vsel %vm3301, %v3267, %v3300
    %vm3303 = vcmp.lt.s32.totalorder %v3268, %v3300
    %v3304 = vsel %vm3303, %v3268, %v3300
    %vm3305 = vcmp.lt.s32.totalorder %v3269, %v3300
    %v3306 = vsel %vm3305, %v3269, %v3300
    %vm3307 = vcmp.lt.s32.totalorder %v3270, %v3300
    %v3308 = vsel %vm3307, %v3270, %v3300
    %v3309 = vsel %vm3291, 1, 0
    %v3310 = vsel %vm3292, 1, 0
    %v3311 = vsel %vm3293, 1, 0
    %v3312 = vsel %vm3294, 1, 0
    %3313 = vset.pattern.permute.xlu0 0
    %3314 = vperm.xlu0 %3313, %v3309
    %v3315 = vpop.permute.xlu0 %3314
    %3316 = vset.pattern.permute.xlu0 0
    %3317 = vperm.xlu0 %3316, %v3310
    %v3318 = vpop.permute.xlu0 %3317
    %3319 = vset.pattern.permute.xlu0 0
    %3320 = vperm.xlu0 %3319, %v3311
    %v3321 = vpop.permute.xlu0 %3320
    %3322 = vset.pattern.permute.xlu0 0
    %3323 = vperm.xlu0 %3322, %v3312
    %v3324 = vpop.permute.xlu0 %3323
    %vm3325 = vcmp.eq.s32.totalorder %v3315, 1
    %vm3326 = vcmp.eq.s32.totalorder %v3318, 1
    %vm3327 = vcmp.eq.s32.totalorder %v3321, 1
    %vm3328 = vcmp.eq.s32.totalorder %v3324, 1
    %v3329 = vsel %vm3325, %v3302, %v3267
    %v3330 = vsel %vm3326, %v3304, %v3268
    %v3331 = vsel %vm3327, %v3306, %v3269
    %v3332 = vsel %vm3328, %v3308, %v3270
    %v3333 = vlaneseq
    %v3334 = vshrl.u32 %v3333, 7
    %v3335 = vsub.s32 0, %v3334
    %v3336 = vrot.slane %v3296, %v3335
    %vm3337 = vcmp.gt.s32.totalorder %v3283, %v3336
    %v3338 = vsel %vm3337, %v3283, %v3336
    %vm3339 = vcmp.gt.s32.totalorder %v3284, %v3336
    %v3340 = vsel %vm3339, %v3284, %v3336
    %vm3341 = vcmp.gt.s32.totalorder %v3285, %v3336
    %v3342 = vsel %vm3341, %v3285, %v3336
    %vm3343 = vcmp.gt.s32.totalorder %v3286, %v3336
    %v3344 = vsel %vm3343, %v3286, %v3336
    %v3345 = vsel %vm3325, %v3338, %v3283
    %v3346 = vsel %vm3326, %v3340, %v3284
    %v3347 = vsel %vm3327, %v3342, %v3285
    %v3348 = vsel %vm3328, %v3344, %v3286
    %v3349 = vld [vmem:[%s1106] sm:$0xff]
    %v3350 = vld [vmem:[%s1106 + $0x8] sm:$0xff]
    %v3351 = vld [vmem:[%s1106 + $0x10] sm:$0xff]
    %v3352 = vld [vmem:[%s1106 + $0x18] sm:$0xff]
    %vm3353 = vcmp.gt.s32.totalorder %v3349, 0
    %vm3354 = vcmp.gt.s32.totalorder %v3350, 0
    %vm3355 = vcmp.gt.s32.totalorder %v3351, 0
    %vm3356 = vcmp.gt.s32.totalorder %v3352, 0
    %v3357 = vld [vmem:[#allocation3 + $0x11] sm:$0x1]
    %v3358 = vld [vmem:[#allocation2 + $0x11] sm:$0x1]
    %v3359 = vlaneseq
    %v3360 = vshrl.u32 %v3359, 7
    %v3361 = vsub.s32 0, %v3360
    %v3362 = vrot.slane %v3357, %v3361
    %vm3363 = vcmp.lt.s32.totalorder %v3329, %v3362
    %v3364 = vsel %vm3363, %v3329, %v3362
    %vm3365 = vcmp.lt.s32.totalorder %v3330, %v3362
    %v3366 = vsel %vm3365, %v3330, %v3362
    %vm3367 = vcmp.lt.s32.totalorder %v3331, %v3362
    %v3368 = vsel %vm3367, %v3331, %v3362
    %vm3369 = vcmp.lt.s32.totalorder %v3332, %v3362
    %v3370 = vsel %vm3369, %v3332, %v3362
    %v3371 = vsel %vm3353, 1, 0
    %v3372 = vsel %vm3354, 1, 0
    %v3373 = vsel %vm3355, 1, 0
    %v3374 = vsel %vm3356, 1, 0
    %3375 = vset.pattern.permute.xlu0 0
    %3376 = vperm.xlu0 %3375, %v3371
    %v3377 = vpop.permute.xlu0 %3376
    %3378 = vset.pattern.permute.xlu0 0
    %3379 = vperm.xlu0 %3378, %v3372
    %v3380 = vpop.permute.xlu0 %3379
    %3381 = vset.pattern.permute.xlu0 0
    %3382 = vperm.xlu0 %3381, %v3373
    %v3383 = vpop.permute.xlu0 %3382
    %3384 = vset.pattern.permute.xlu0 0
    %3385 = vperm.xlu0 %3384, %v3374
    %v3386 = vpop.permute.xlu0 %3385
    %vm3387 = vcmp.eq.s32.totalorder %v3377, 1
    %vm3388 = vcmp.eq.s32.totalorder %v3380, 1
    %vm3389 = vcmp.eq.s32.totalorder %v3383, 1
    %vm3390 = vcmp.eq.s32.totalorder %v3386, 1
    %v3391 = vsel %vm3387, %v3364, %v3329
    %v3392 = vsel %vm3388, %v3366, %v3330
    %v3393 = vsel %vm3389, %v3368, %v3331
    %v3394 = vsel %vm3390, %v3370, %v3332
    %v3395 = vlaneseq
    %v3396 = vshrl.u32 %v3395, 7
    %v3397 = vsub.s32 0, %v3396
    %v3398 = vrot.slane %v3358, %v3397
    %vm3399 = vcmp.gt.s32.totalorder %v3345, %v3398
    %v3400 = vsel %vm3399, %v3345, %v3398
    %vm3401 = vcmp.gt.s32.totalorder %v3346, %v3398
    %v3402 = vsel %vm3401, %v3346, %v3398
    %vm3403 = vcmp.gt.s32.totalorder %v3347, %v3398
    %v3404 = vsel %vm3403, %v3347, %v3398
    %vm3405 = vcmp.gt.s32.totalorder %v3348, %v3398
    %v3406 = vsel %vm3405, %v3348, %v3398
    %v3407 = vsel %vm3387, %v3400, %v3345
    %v3408 = vsel %vm3388, %v3402, %v3346
    %v3409 = vsel %vm3389, %v3404, %v3347
    %v3410 = vsel %vm3390, %v3406, %v3348
    %v3411 = vld [vmem:[%s1169] sm:$0xff]
    %v3412 = vld [vmem:[%s1169 + $0x8] sm:$0xff]
    %v3413 = vld [vmem:[%s1169 + $0x10] sm:$0xff]
    %v3414 = vld [vmem:[%s1169 + $0x18] sm:$0xff]
    %vm3415 = vcmp.gt.s32.totalorder %v3411, 0
    %vm3416 = vcmp.gt.s32.totalorder %v3412, 0
    %vm3417 = vcmp.gt.s32.totalorder %v3413, 0
    %vm3418 = vcmp.gt.s32.totalorder %v3414, 0
    %v3419 = vld [vmem:[#allocation3 + $0x12] sm:$0x1]
    %v3420 = vld [vmem:[#allocation2 + $0x12] sm:$0x1]
    %v3421 = vlaneseq
    %v3422 = vshrl.u32 %v3421, 7
    %v3423 = vsub.s32 0, %v3422
    %v3424 = vrot.slane %v3419, %v3423
    %vm3425 = vcmp.lt.s32.totalorder %v3391, %v3424
    %v3426 = vsel %vm3425, %v3391, %v3424
    %vm3427 = vcmp.lt.s32.totalorder %v3392, %v3424
    %v3428 = vsel %vm3427, %v3392, %v3424
    %vm3429 = vcmp.lt.s32.totalorder %v3393, %v3424
    %v3430 = vsel %vm3429, %v3393, %v3424
    %vm3431 = vcmp.lt.s32.totalorder %v3394, %v3424
    %v3432 = vsel %vm3431, %v3394, %v3424
    %v3433 = vsel %vm3415, 1, 0
    %v3434 = vsel %vm3416, 1, 0
    %v3435 = vsel %vm3417, 1, 0
    %v3436 = vsel %vm3418, 1, 0
    %3437 = vset.pattern.permute.xlu0 0
    %3438 = vperm.xlu0 %3437, %v3433
    %v3439 = vpop.permute.xlu0 %3438
    %3440 = vset.pattern.permute.xlu0 0
    %3441 = vperm.xlu0 %3440, %v3434
    %v3442 = vpop.permute.xlu0 %3441
    %3443 = vset.pattern.permute.xlu0 0
    %3444 = vperm.xlu0 %3443, %v3435
    %v3445 = vpop.permute.xlu0 %3444
    %3446 = vset.pattern.permute.xlu0 0
    %3447 = vperm.xlu0 %3446, %v3436
    %v3448 = vpop.permute.xlu0 %3447
    %vm3449 = vcmp.eq.s32.totalorder %v3439, 1
    %vm3450 = vcmp.eq.s32.totalorder %v3442, 1
    %vm3451 = vcmp.eq.s32.totalorder %v3445, 1
    %vm3452 = vcmp.eq.s32.totalorder %v3448, 1
    %v3453 = vsel %vm3449, %v3426, %v3391
    %v3454 = vsel %vm3450, %v3428, %v3392
    %v3455 = vsel %vm3451, %v3430, %v3393
    %v3456 = vsel %vm3452, %v3432, %v3394
    %v3457 = vlaneseq
    %v3458 = vshrl.u32 %v3457, 7
    %v3459 = vsub.s32 0, %v3458
    %v3460 = vrot.slane %v3420, %v3459
    %vm3461 = vcmp.gt.s32.totalorder %v3407, %v3460
    %v3462 = vsel %vm3461, %v3407, %v3460
    %vm3463 = vcmp.gt.s32.totalorder %v3408, %v3460
    %v3464 = vsel %vm3463, %v3408, %v3460
    %vm3465 = vcmp.gt.s32.totalorder %v3409, %v3460
    %v3466 = vsel %vm3465, %v3409, %v3460
    %vm3467 = vcmp.gt.s32.totalorder %v3410, %v3460
    %v3468 = vsel %vm3467, %v3410, %v3460
    %v3469 = vsel %vm3449, %v3462, %v3407
    %v3470 = vsel %vm3450, %v3464, %v3408
    %v3471 = vsel %vm3451, %v3466, %v3409
    %v3472 = vsel %vm3452, %v3468, %v3410
    %v3473 = vld [vmem:[%s1232] sm:$0xff]
    %v3474 = vld [vmem:[%s1232 + $0x8] sm:$0xff]
    %v3475 = vld [vmem:[%s1232 + $0x10] sm:$0xff]
    %v3476 = vld [vmem:[%s1232 + $0x18] sm:$0xff]
    %vm3477 = vcmp.gt.s32.totalorder %v3473, 0
    %vm3478 = vcmp.gt.s32.totalorder %v3474, 0
    %vm3479 = vcmp.gt.s32.totalorder %v3475, 0
    %vm3480 = vcmp.gt.s32.totalorder %v3476, 0
    %v3481 = vld [vmem:[#allocation3 + $0x13] sm:$0x1]
    %v3482 = vld [vmem:[#allocation2 + $0x13] sm:$0x1]
    %v3483 = vlaneseq
    %v3484 = vshrl.u32 %v3483, 7
    %v3485 = vsub.s32 0, %v3484
    %v3486 = vrot.slane %v3481, %v3485
    %vm3487 = vcmp.lt.s32.totalorder %v3453, %v3486
    %v3488 = vsel %vm3487, %v3453, %v3486
    %vm3489 = vcmp.lt.s32.totalorder %v3454, %v3486
    %v3490 = vsel %vm3489, %v3454, %v3486
    %vm3491 = vcmp.lt.s32.totalorder %v3455, %v3486
    %v3492 = vsel %vm3491, %v3455, %v3486
    %vm3493 = vcmp.lt.s32.totalorder %v3456, %v3486
    %v3494 = vsel %vm3493, %v3456, %v3486
    %v3495 = vsel %vm3477, 1, 0
    %v3496 = vsel %vm3478, 1, 0
    %v3497 = vsel %vm3479, 1, 0
    %v3498 = vsel %vm3480, 1, 0
    %3499 = vset.pattern.permute.xlu0 0
    %3500 = vperm.xlu0 %3499, %v3495
    %v3501 = vpop.permute.xlu0 %3500
    %3502 = vset.pattern.permute.xlu0 0
    %3503 = vperm.xlu0 %3502, %v3496
    %v3504 = vpop.permute.xlu0 %3503
    %3505 = vset.pattern.permute.xlu0 0
    %3506 = vperm.xlu0 %3505, %v3497
    %v3507 = vpop.permute.xlu0 %3506
    %3508 = vset.pattern.permute.xlu0 0
    %3509 = vperm.xlu0 %3508, %v3498
    %v3510 = vpop.permute.xlu0 %3509
    %vm3511 = vcmp.eq.s32.totalorder %v3501, 1
    %vm3512 = vcmp.eq.s32.totalorder %v3504, 1
    %vm3513 = vcmp.eq.s32.totalorder %v3507, 1
    %vm3514 = vcmp.eq.s32.totalorder %v3510, 1
    %v3515 = vsel %vm3511, %v3488, %v3453
    %v3516 = vsel %vm3512, %v3490, %v3454
    %v3517 = vsel %vm3513, %v3492, %v3455
    %v3518 = vsel %vm3514, %v3494, %v3456
    %v3519 = vlaneseq
    %v3520 = vshrl.u32 %v3519, 7
    %v3521 = vsub.s32 0, %v3520
    %v3522 = vrot.slane %v3482, %v3521
    %vm3523 = vcmp.gt.s32.totalorder %v3469, %v3522
    %v3524 = vsel %vm3523, %v3469, %v3522
    %vm3525 = vcmp.gt.s32.totalorder %v3470, %v3522
    %v3526 = vsel %vm3525, %v3470, %v3522
    %vm3527 = vcmp.gt.s32.totalorder %v3471, %v3522
    %v3528 = vsel %vm3527, %v3471, %v3522
    %vm3529 = vcmp.gt.s32.totalorder %v3472, %v3522
    %v3530 = vsel %vm3529, %v3472, %v3522
    %v3531 = vsel %vm3511, %v3524, %v3469
    %v3532 = vsel %vm3512, %v3526, %v3470
    %v3533 = vsel %vm3513, %v3528, %v3471
    %v3534 = vsel %vm3514, %v3530, %v3472
    %v3535 = vld [vmem:[%s1295] sm:$0xff]
    %v3536 = vld [vmem:[%s1295 + $0x8] sm:$0xff]
    %v3537 = vld [vmem:[%s1295 + $0x10] sm:$0xff]
    %v3538 = vld [vmem:[%s1295 + $0x18] sm:$0xff]
    %vm3539 = vcmp.gt.s32.totalorder %v3535, 0
    %vm3540 = vcmp.gt.s32.totalorder %v3536, 0
    %vm3541 = vcmp.gt.s32.totalorder %v3537, 0
    %vm3542 = vcmp.gt.s32.totalorder %v3538, 0
    %v3543 = vld [vmem:[#allocation3 + $0x14] sm:$0x1]
    %v3544 = vld [vmem:[#allocation2 + $0x14] sm:$0x1]
    %v3545 = vlaneseq
    %v3546 = vshrl.u32 %v3545, 7
    %v3547 = vsub.s32 0, %v3546
    %v3548 = vrot.slane %v3543, %v3547
    %vm3549 = vcmp.lt.s32.totalorder %v3515, %v3548
    %v3550 = vsel %vm3549, %v3515, %v3548
    %vm3551 = vcmp.lt.s32.totalorder %v3516, %v3548
    %v3552 = vsel %vm3551, %v3516, %v3548
    %vm3553 = vcmp.lt.s32.totalorder %v3517, %v3548
    %v3554 = vsel %vm3553, %v3517, %v3548
    %vm3555 = vcmp.lt.s32.totalorder %v3518, %v3548
    %v3556 = vsel %vm3555, %v3518, %v3548
    %v3557 = vsel %vm3539, 1, 0
    %v3558 = vsel %vm3540, 1, 0
    %v3559 = vsel %vm3541, 1, 0
    %v3560 = vsel %vm3542, 1, 0
    %3561 = vset.pattern.permute.xlu0 0
    %3562 = vperm.xlu0 %3561, %v3557
    %v3563 = vpop.permute.xlu0 %3562
    %3564 = vset.pattern.permute.xlu0 0
    %3565 = vperm.xlu0 %3564, %v3558
    %v3566 = vpop.permute.xlu0 %3565
    %3567 = vset.pattern.permute.xlu0 0
    %3568 = vperm.xlu0 %3567, %v3559
    %v3569 = vpop.permute.xlu0 %3568
    %3570 = vset.pattern.permute.xlu0 0
    %3571 = vperm.xlu0 %3570, %v3560
    %v3572 = vpop.permute.xlu0 %3571
    %vm3573 = vcmp.eq.s32.totalorder %v3563, 1
    %vm3574 = vcmp.eq.s32.totalorder %v3566, 1
    %vm3575 = vcmp.eq.s32.totalorder %v3569, 1
    %vm3576 = vcmp.eq.s32.totalorder %v3572, 1
    %v3577 = vsel %vm3573, %v3550, %v3515
    %v3578 = vsel %vm3574, %v3552, %v3516
    %v3579 = vsel %vm3575, %v3554, %v3517
    %v3580 = vsel %vm3576, %v3556, %v3518
    %v3581 = vlaneseq
    %v3582 = vshrl.u32 %v3581, 7
    %v3583 = vsub.s32 0, %v3582
    %v3584 = vrot.slane %v3544, %v3583
    %vm3585 = vcmp.gt.s32.totalorder %v3531, %v3584
    %v3586 = vsel %vm3585, %v3531, %v3584
    %vm3587 = vcmp.gt.s32.totalorder %v3532, %v3584
    %v3588 = vsel %vm3587, %v3532, %v3584
    %vm3589 = vcmp.gt.s32.totalorder %v3533, %v3584
    %v3590 = vsel %vm3589, %v3533, %v3584
    %vm3591 = vcmp.gt.s32.totalorder %v3534, %v3584
    %v3592 = vsel %vm3591, %v3534, %v3584
    %v3593 = vsel %vm3573, %v3586, %v3531
    %v3594 = vsel %vm3574, %v3588, %v3532
    %v3595 = vsel %vm3575, %v3590, %v3533
    %v3596 = vsel %vm3576, %v3592, %v3534
    %v3597 = vld [vmem:[%s1358] sm:$0xff]
    %v3598 = vld [vmem:[%s1358 + $0x8] sm:$0xff]
    %v3599 = vld [vmem:[%s1358 + $0x10] sm:$0xff]
    %v3600 = vld [vmem:[%s1358 + $0x18] sm:$0xff]
    %vm3601 = vcmp.gt.s32.totalorder %v3597, 0
    %vm3602 = vcmp.gt.s32.totalorder %v3598, 0
    %vm3603 = vcmp.gt.s32.totalorder %v3599, 0
    %vm3604 = vcmp.gt.s32.totalorder %v3600, 0
    %v3605 = vld [vmem:[#allocation3 + $0x15] sm:$0x1]
    %v3606 = vld [vmem:[#allocation2 + $0x15] sm:$0x1]
    %v3607 = vlaneseq
    %v3608 = vshrl.u32 %v3607, 7
    %v3609 = vsub.s32 0, %v3608
    %v3610 = vrot.slane %v3605, %v3609
    %vm3611 = vcmp.lt.s32.totalorder %v3577, %v3610
    %v3612 = vsel %vm3611, %v3577, %v3610
    %vm3613 = vcmp.lt.s32.totalorder %v3578, %v3610
    %v3614 = vsel %vm3613, %v3578, %v3610
    %vm3615 = vcmp.lt.s32.totalorder %v3579, %v3610
    %v3616 = vsel %vm3615, %v3579, %v3610
    %vm3617 = vcmp.lt.s32.totalorder %v3580, %v3610
    %v3618 = vsel %vm3617, %v3580, %v3610
    %v3619 = vsel %vm3601, 1, 0
    %v3620 = vsel %vm3602, 1, 0
    %v3621 = vsel %vm3603, 1, 0
    %v3622 = vsel %vm3604, 1, 0
    %3623 = vset.pattern.permute.xlu0 0
    %3624 = vperm.xlu0 %3623, %v3619
    %v3625 = vpop.permute.xlu0 %3624
    %3626 = vset.pattern.permute.xlu0 0
    %3627 = vperm.xlu0 %3626, %v3620
    %v3628 = vpop.permute.xlu0 %3627
    %3629 = vset.pattern.permute.xlu0 0
    %3630 = vperm.xlu0 %3629, %v3621
    %v3631 = vpop.permute.xlu0 %3630
    %3632 = vset.pattern.permute.xlu0 0
    %3633 = vperm.xlu0 %3632, %v3622
    %v3634 = vpop.permute.xlu0 %3633
    %vm3635 = vcmp.eq.s32.totalorder %v3625, 1
    %vm3636 = vcmp.eq.s32.totalorder %v3628, 1
    %vm3637 = vcmp.eq.s32.totalorder %v3631, 1
    %vm3638 = vcmp.eq.s32.totalorder %v3634, 1
    %v3639 = vsel %vm3635, %v3612, %v3577
    %v3640 = vsel %vm3636, %v3614, %v3578
    %v3641 = vsel %vm3637, %v3616, %v3579
    %v3642 = vsel %vm3638, %v3618, %v3580
    %v3643 = vlaneseq
    %v3644 = vshrl.u32 %v3643, 7
    %v3645 = vsub.s32 0, %v3644
    %v3646 = vrot.slane %v3606, %v3645
    %vm3647 = vcmp.gt.s32.totalorder %v3593, %v3646
    %v3648 = vsel %vm3647, %v3593, %v3646
    %vm3649 = vcmp.gt.s32.totalorder %v3594, %v3646
    %v3650 = vsel %vm3649, %v3594, %v3646
    %vm3651 = vcmp.gt.s32.totalorder %v3595, %v3646
    %v3652 = vsel %vm3651, %v3595, %v3646
    %vm3653 = vcmp.gt.s32.totalorder %v3596, %v3646
    %v3654 = vsel %vm3653, %v3596, %v3646
    %v3655 = vsel %vm3635, %v3648, %v3593
    %v3656 = vsel %vm3636, %v3650, %v3594
    %v3657 = vsel %vm3637, %v3652, %v3595
    %v3658 = vsel %vm3638, %v3654, %v3596
    %v3659 = vld [vmem:[%s1421] sm:$0xff]
    %v3660 = vld [vmem:[%s1421 + $0x8] sm:$0xff]
    %v3661 = vld [vmem:[%s1421 + $0x10] sm:$0xff]
    %v3662 = vld [vmem:[%s1421 + $0x18] sm:$0xff]
    %vm3663 = vcmp.gt.s32.totalorder %v3659, 0
    %vm3664 = vcmp.gt.s32.totalorder %v3660, 0
    %vm3665 = vcmp.gt.s32.totalorder %v3661, 0
    %vm3666 = vcmp.gt.s32.totalorder %v3662, 0
    %v3667 = vld [vmem:[#allocation3 + $0x16] sm:$0x1]
    %v3668 = vld [vmem:[#allocation2 + $0x16] sm:$0x1]
    %v3669 = vlaneseq
    %v3670 = vshrl.u32 %v3669, 7
    %v3671 = vsub.s32 0, %v3670
    %v3672 = vrot.slane %v3667, %v3671
    %vm3673 = vcmp.lt.s32.totalorder %v3639, %v3672
    %v3674 = vsel %vm3673, %v3639, %v3672
    %vm3675 = vcmp.lt.s32.totalorder %v3640, %v3672
    %v3676 = vsel %vm3675, %v3640, %v3672
    %vm3677 = vcmp.lt.s32.totalorder %v3641, %v3672
    %v3678 = vsel %vm3677, %v3641, %v3672
    %vm3679 = vcmp.lt.s32.totalorder %v3642, %v3672
    %v3680 = vsel %vm3679, %v3642, %v3672
    %v3681 = vsel %vm3663, 1, 0
    %v3682 = vsel %vm3664, 1, 0
    %v3683 = vsel %vm3665, 1, 0
    %v3684 = vsel %vm3666, 1, 0
    %3685 = vset.pattern.permute.xlu0 0
    %3686 = vperm.xlu0 %3685, %v3681
    %v3687 = vpop.permute.xlu0 %3686
    %3688 = vset.pattern.permute.xlu0 0
    %3689 = vperm.xlu0 %3688, %v3682
    %v3690 = vpop.permute.xlu0 %3689
    %3691 = vset.pattern.permute.xlu0 0
    %3692 = vperm.xlu0 %3691, %v3683
    %v3693 = vpop.permute.xlu0 %3692
    %3694 = vset.pattern.permute.xlu0 0
    %3695 = vperm.xlu0 %3694, %v3684
    %v3696 = vpop.permute.xlu0 %3695
    %vm3697 = vcmp.eq.s32.totalorder %v3687, 1
    %vm3698 = vcmp.eq.s32.totalorder %v3690, 1
    %vm3699 = vcmp.eq.s32.totalorder %v3693, 1
    %vm3700 = vcmp.eq.s32.totalorder %v3696, 1
    %v3701 = vsel %vm3697, %v3674, %v3639
    %v3702 = vsel %vm3698, %v3676, %v3640
    %v3703 = vsel %vm3699, %v3678, %v3641
    %v3704 = vsel %vm3700, %v3680, %v3642
    %v3705 = vlaneseq
    %v3706 = vshrl.u32 %v3705, 7
    %v3707 = vsub.s32 0, %v3706
    %v3708 = vrot.slane %v3668, %v3707
    %vm3709 = vcmp.gt.s32.totalorder %v3655, %v3708
    %v3710 = vsel %vm3709, %v3655, %v3708
    %vm3711 = vcmp.gt.s32.totalorder %v3656, %v3708
    %v3712 = vsel %vm3711, %v3656, %v3708
    %vm3713 = vcmp.gt.s32.totalorder %v3657, %v3708
    %v3714 = vsel %vm3713, %v3657, %v3708
    %vm3715 = vcmp.gt.s32.totalorder %v3658, %v3708
    %v3716 = vsel %vm3715, %v3658, %v3708
    %v3717 = vsel %vm3697, %v3710, %v3655
    %v3718 = vsel %vm3698, %v3712, %v3656
    %v3719 = vsel %vm3699, %v3714, %v3657
    %v3720 = vsel %vm3700, %v3716, %v3658
    %v3721 = vld [vmem:[%s1484] sm:$0xff]
    %v3722 = vld [vmem:[%s1484 + $0x8] sm:$0xff]
    %v3723 = vld [vmem:[%s1484 + $0x10] sm:$0xff]
    %v3724 = vld [vmem:[%s1484 + $0x18] sm:$0xff]
    %vm3725 = vcmp.gt.s32.totalorder %v3721, 0
    %vm3726 = vcmp.gt.s32.totalorder %v3722, 0
    %vm3727 = vcmp.gt.s32.totalorder %v3723, 0
    %vm3728 = vcmp.gt.s32.totalorder %v3724, 0
    %v3729 = vld [vmem:[#allocation3 + $0x17] sm:$0x1]
    %v3730 = vld [vmem:[#allocation2 + $0x17] sm:$0x1]
    %v3731 = vlaneseq
    %v3732 = vshrl.u32 %v3731, 7
    %v3733 = vsub.s32 0, %v3732
    %v3734 = vrot.slane %v3729, %v3733
    %vm3735 = vcmp.lt.s32.totalorder %v3701, %v3734
    %v3736 = vsel %vm3735, %v3701, %v3734
    %vm3737 = vcmp.lt.s32.totalorder %v3702, %v3734
    %v3738 = vsel %vm3737, %v3702, %v3734
    %vm3739 = vcmp.lt.s32.totalorder %v3703, %v3734
    %v3740 = vsel %vm3739, %v3703, %v3734
    %vm3741 = vcmp.lt.s32.totalorder %v3704, %v3734
    %v3742 = vsel %vm3741, %v3704, %v3734
    %v3743 = vsel %vm3725, 1, 0
    %v3744 = vsel %vm3726, 1, 0
    %v3745 = vsel %vm3727, 1, 0
    %v3746 = vsel %vm3728, 1, 0
    %3747 = vset.pattern.permute.xlu0 0
    %3748 = vperm.xlu0 %3747, %v3743
    %v3749 = vpop.permute.xlu0 %3748
    %3750 = vset.pattern.permute.xlu0 0
    %3751 = vperm.xlu0 %3750, %v3744
    %v3752 = vpop.permute.xlu0 %3751
    %3753 = vset.pattern.permute.xlu0 0
    %3754 = vperm.xlu0 %3753, %v3745
    %v3755 = vpop.permute.xlu0 %3754
    %3756 = vset.pattern.permute.xlu0 0
    %3757 = vperm.xlu0 %3756, %v3746
    %v3758 = vpop.permute.xlu0 %3757
    %vm3759 = vcmp.eq.s32.totalorder %v3749, 1
    %vm3760 = vcmp.eq.s32.totalorder %v3752, 1
    %vm3761 = vcmp.eq.s32.totalorder %v3755, 1
    %vm3762 = vcmp.eq.s32.totalorder %v3758, 1
    %v3763 = vsel %vm3759, %v3736, %v3701
    %v3764 = vsel %vm3760, %v3738, %v3702
    %v3765 = vsel %vm3761, %v3740, %v3703
    %v3766 = vsel %vm3762, %v3742, %v3704
    %v3767 = vlaneseq
    %v3768 = vshrl.u32 %v3767, 7
    %v3769 = vsub.s32 0, %v3768
    %v3770 = vrot.slane %v3730, %v3769
    %vm3771 = vcmp.gt.s32.totalorder %v3717, %v3770
    %v3772 = vsel %vm3771, %v3717, %v3770
    %vm3773 = vcmp.gt.s32.totalorder %v3718, %v3770
    %v3774 = vsel %vm3773, %v3718, %v3770
    %vm3775 = vcmp.gt.s32.totalorder %v3719, %v3770
    %v3776 = vsel %vm3775, %v3719, %v3770
    %vm3777 = vcmp.gt.s32.totalorder %v3720, %v3770
    %v3778 = vsel %vm3777, %v3720, %v3770
    %v3779 = vsel %vm3759, %v3772, %v3717
    %v3780 = vsel %vm3760, %v3774, %v3718
    %v3781 = vsel %vm3761, %v3776, %v3719
    %v3782 = vsel %vm3762, %v3778, %v3720
    %v3783 = vld [vmem:[%s1547] sm:$0xff]
    %v3784 = vld [vmem:[%s1547 + $0x8] sm:$0xff]
    %v3785 = vld [vmem:[%s1547 + $0x10] sm:$0xff]
    %v3786 = vld [vmem:[%s1547 + $0x18] sm:$0xff]
    %vm3787 = vcmp.gt.s32.totalorder %v3783, 0
    %vm3788 = vcmp.gt.s32.totalorder %v3784, 0
    %vm3789 = vcmp.gt.s32.totalorder %v3785, 0
    %vm3790 = vcmp.gt.s32.totalorder %v3786, 0
    %v3791 = vld [vmem:[#allocation3 + $0x18] sm:$0x1]
    %v3792 = vld [vmem:[#allocation2 + $0x18] sm:$0x1]
    %v3793 = vlaneseq
    %v3794 = vshrl.u32 %v3793, 7
    %v3795 = vsub.s32 0, %v3794
    %v3796 = vrot.slane %v3791, %v3795
    %vm3797 = vcmp.lt.s32.totalorder %v3763, %v3796
    %v3798 = vsel %vm3797, %v3763, %v3796
    %vm3799 = vcmp.lt.s32.totalorder %v3764, %v3796
    %v3800 = vsel %vm3799, %v3764, %v3796
    %vm3801 = vcmp.lt.s32.totalorder %v3765, %v3796
    %v3802 = vsel %vm3801, %v3765, %v3796
    %vm3803 = vcmp.lt.s32.totalorder %v3766, %v3796
    %v3804 = vsel %vm3803, %v3766, %v3796
    %v3805 = vsel %vm3787, 1, 0
    %v3806 = vsel %vm3788, 1, 0
    %v3807 = vsel %vm3789, 1, 0
    %v3808 = vsel %vm3790, 1, 0
    %3809 = vset.pattern.permute.xlu0 0
    %3810 = vperm.xlu0 %3809, %v3805
    %v3811 = vpop.permute.xlu0 %3810
    %3812 = vset.pattern.permute.xlu0 0
    %3813 = vperm.xlu0 %3812, %v3806
    %v3814 = vpop.permute.xlu0 %3813
    %3815 = vset.pattern.permute.xlu0 0
    %3816 = vperm.xlu0 %3815, %v3807
    %v3817 = vpop.permute.xlu0 %3816
    %3818 = vset.pattern.permute.xlu0 0
    %3819 = vperm.xlu0 %3818, %v3808
    %v3820 = vpop.permute.xlu0 %3819
    %vm3821 = vcmp.eq.s32.totalorder %v3811, 1
    %vm3822 = vcmp.eq.s32.totalorder %v3814, 1
    %vm3823 = vcmp.eq.s32.totalorder %v3817, 1
    %vm3824 = vcmp.eq.s32.totalorder %v3820, 1
    %v3825 = vsel %vm3821, %v3798, %v3763
    %v3826 = vsel %vm3822, %v3800, %v3764
    %v3827 = vsel %vm3823, %v3802, %v3765
    %v3828 = vsel %vm3824, %v3804, %v3766
    %v3829 = vlaneseq
    %v3830 = vshrl.u32 %v3829, 7
    %v3831 = vsub.s32 0, %v3830
    %v3832 = vrot.slane %v3792, %v3831
    %vm3833 = vcmp.gt.s32.totalorder %v3779, %v3832
    %v3834 = vsel %vm3833, %v3779, %v3832
    %vm3835 = vcmp.gt.s32.totalorder %v3780, %v3832
    %v3836 = vsel %vm3835, %v3780, %v3832
    %vm3837 = vcmp.gt.s32.totalorder %v3781, %v3832
    %v3838 = vsel %vm3837, %v3781, %v3832
    %vm3839 = vcmp.gt.s32.totalorder %v3782, %v3832
    %v3840 = vsel %vm3839, %v3782, %v3832
    %v3841 = vsel %vm3821, %v3834, %v3779
    %v3842 = vsel %vm3822, %v3836, %v3780
    %v3843 = vsel %vm3823, %v3838, %v3781
    %v3844 = vsel %vm3824, %v3840, %v3782
    %v3845 = vld [vmem:[%s1610] sm:$0xff]
    %v3846 = vld [vmem:[%s1610 + $0x8] sm:$0xff]
    %v3847 = vld [vmem:[%s1610 + $0x10] sm:$0xff]
    %v3848 = vld [vmem:[%s1610 + $0x18] sm:$0xff]
    %vm3849 = vcmp.gt.s32.totalorder %v3845, 0
    %vm3850 = vcmp.gt.s32.totalorder %v3846, 0
    %vm3851 = vcmp.gt.s32.totalorder %v3847, 0
    %vm3852 = vcmp.gt.s32.totalorder %v3848, 0
    %v3853 = vld [vmem:[#allocation3 + $0x19] sm:$0x1]
    %v3854 = vld [vmem:[#allocation2 + $0x19] sm:$0x1]
    %v3855 = vlaneseq
    %v3856 = vshrl.u32 %v3855, 7
    %v3857 = vsub.s32 0, %v3856
    %v3858 = vrot.slane %v3853, %v3857
    %vm3859 = vcmp.lt.s32.totalorder %v3825, %v3858
    %v3860 = vsel %vm3859, %v3825, %v3858
    %vm3861 = vcmp.lt.s32.totalorder %v3826, %v3858
    %v3862 = vsel %vm3861, %v3826, %v3858
    %vm3863 = vcmp.lt.s32.totalorder %v3827, %v3858
    %v3864 = vsel %vm3863, %v3827, %v3858
    %vm3865 = vcmp.lt.s32.totalorder %v3828, %v3858
    %v3866 = vsel %vm3865, %v3828, %v3858
    %v3867 = vsel %vm3849, 1, 0
    %v3868 = vsel %vm3850, 1, 0
    %v3869 = vsel %vm3851, 1, 0
    %v3870 = vsel %vm3852, 1, 0
    %3871 = vset.pattern.permute.xlu0 0
    %3872 = vperm.xlu0 %3871, %v3867
    %v3873 = vpop.permute.xlu0 %3872
    %3874 = vset.pattern.permute.xlu0 0
    %3875 = vperm.xlu0 %3874, %v3868
    %v3876 = vpop.permute.xlu0 %3875
    %3877 = vset.pattern.permute.xlu0 0
    %3878 = vperm.xlu0 %3877, %v3869
    %v3879 = vpop.permute.xlu0 %3878
    %3880 = vset.pattern.permute.xlu0 0
    %3881 = vperm.xlu0 %3880, %v3870
    %v3882 = vpop.permute.xlu0 %3881
    %vm3883 = vcmp.eq.s32.totalorder %v3873, 1
    %vm3884 = vcmp.eq.s32.totalorder %v3876, 1
    %vm3885 = vcmp.eq.s32.totalorder %v3879, 1
    %vm3886 = vcmp.eq.s32.totalorder %v3882, 1
    %v3887 = vsel %vm3883, %v3860, %v3825
    %v3888 = vsel %vm3884, %v3862, %v3826
    %v3889 = vsel %vm3885, %v3864, %v3827
    %v3890 = vsel %vm3886, %v3866, %v3828
    %v3891 = vlaneseq
    %v3892 = vshrl.u32 %v3891, 7
    %v3893 = vsub.s32 0, %v3892
    %v3894 = vrot.slane %v3854, %v3893
    %vm3895 = vcmp.gt.s32.totalorder %v3841, %v3894
    %v3896 = vsel %vm3895, %v3841, %v3894
    %vm3897 = vcmp.gt.s32.totalorder %v3842, %v3894
    %v3898 = vsel %vm3897, %v3842, %v3894
    %vm3899 = vcmp.gt.s32.totalorder %v3843, %v3894
    %v3900 = vsel %vm3899, %v3843, %v3894
    %vm3901 = vcmp.gt.s32.totalorder %v3844, %v3894
    %v3902 = vsel %vm3901, %v3844, %v3894
    %v3903 = vsel %vm3883, %v3896, %v3841
    %v3904 = vsel %vm3884, %v3898, %v3842
    %v3905 = vsel %vm3885, %v3900, %v3843
    %v3906 = vsel %vm3886, %v3902, %v3844
    %v3907 = vld [vmem:[%s1673] sm:$0xff]
    %v3908 = vld [vmem:[%s1673 + $0x8] sm:$0xff]
    %v3909 = vld [vmem:[%s1673 + $0x10] sm:$0xff]
    %v3910 = vld [vmem:[%s1673 + $0x18] sm:$0xff]
    %vm3911 = vcmp.gt.s32.totalorder %v3907, 0
    %vm3912 = vcmp.gt.s32.totalorder %v3908, 0
    %vm3913 = vcmp.gt.s32.totalorder %v3909, 0
    %vm3914 = vcmp.gt.s32.totalorder %v3910, 0
    %v3915 = vld [vmem:[#allocation3 + $0x1a] sm:$0x1]
    %v3916 = vld [vmem:[#allocation2 + $0x1a] sm:$0x1]
    %v3917 = vlaneseq
    %v3918 = vshrl.u32 %v3917, 7
    %v3919 = vsub.s32 0, %v3918
    %v3920 = vrot.slane %v3915, %v3919
    %vm3921 = vcmp.lt.s32.totalorder %v3887, %v3920
    %v3922 = vsel %vm3921, %v3887, %v3920
    %vm3923 = vcmp.lt.s32.totalorder %v3888, %v3920
    %v3924 = vsel %vm3923, %v3888, %v3920
    %vm3925 = vcmp.lt.s32.totalorder %v3889, %v3920
    %v3926 = vsel %vm3925, %v3889, %v3920
    %vm3927 = vcmp.lt.s32.totalorder %v3890, %v3920
    %v3928 = vsel %vm3927, %v3890, %v3920
    %v3929 = vsel %vm3911, 1, 0
    %v3930 = vsel %vm3912, 1, 0
    %v3931 = vsel %vm3913, 1, 0
    %v3932 = vsel %vm3914, 1, 0
    %3933 = vset.pattern.permute.xlu0 0
    %3934 = vperm.xlu0 %3933, %v3929
    %v3935 = vpop.permute.xlu0 %3934
    %3936 = vset.pattern.permute.xlu0 0
    %3937 = vperm.xlu0 %3936, %v3930
    %v3938 = vpop.permute.xlu0 %3937
    %3939 = vset.pattern.permute.xlu0 0
    %3940 = vperm.xlu0 %3939, %v3931
    %v3941 = vpop.permute.xlu0 %3940
    %3942 = vset.pattern.permute.xlu0 0
    %3943 = vperm.xlu0 %3942, %v3932
    %v3944 = vpop.permute.xlu0 %3943
    %vm3945 = vcmp.eq.s32.totalorder %v3935, 1
    %vm3946 = vcmp.eq.s32.totalorder %v3938, 1
    %vm3947 = vcmp.eq.s32.totalorder %v3941, 1
    %vm3948 = vcmp.eq.s32.totalorder %v3944, 1
    %v3949 = vsel %vm3945, %v3922, %v3887
    %v3950 = vsel %vm3946, %v3924, %v3888
    %v3951 = vsel %vm3947, %v3926, %v3889
    %v3952 = vsel %vm3948, %v3928, %v3890
    %v3953 = vlaneseq
    %v3954 = vshrl.u32 %v3953, 7
    %v3955 = vsub.s32 0, %v3954
    %v3956 = vrot.slane %v3916, %v3955
    %vm3957 = vcmp.gt.s32.totalorder %v3903, %v3956
    %v3958 = vsel %vm3957, %v3903, %v3956
    %vm3959 = vcmp.gt.s32.totalorder %v3904, %v3956
    %v3960 = vsel %vm3959, %v3904, %v3956
    %vm3961 = vcmp.gt.s32.totalorder %v3905, %v3956
    %v3962 = vsel %vm3961, %v3905, %v3956
    %vm3963 = vcmp.gt.s32.totalorder %v3906, %v3956
    %v3964 = vsel %vm3963, %v3906, %v3956
    %v3965 = vsel %vm3945, %v3958, %v3903
    %v3966 = vsel %vm3946, %v3960, %v3904
    %v3967 = vsel %vm3947, %v3962, %v3905
    %v3968 = vsel %vm3948, %v3964, %v3906
    %v3969 = vld [vmem:[%s1736] sm:$0xff]
    %v3970 = vld [vmem:[%s1736 + $0x8] sm:$0xff]
    %v3971 = vld [vmem:[%s1736 + $0x10] sm:$0xff]
    %v3972 = vld [vmem:[%s1736 + $0x18] sm:$0xff]
    %vm3973 = vcmp.gt.s32.totalorder %v3969, 0
    %vm3974 = vcmp.gt.s32.totalorder %v3970, 0
    %vm3975 = vcmp.gt.s32.totalorder %v3971, 0
    %vm3976 = vcmp.gt.s32.totalorder %v3972, 0
    %v3977 = vld [vmem:[#allocation3 + $0x1b] sm:$0x1]
    %v3978 = vld [vmem:[#allocation2 + $0x1b] sm:$0x1]
    %v3979 = vlaneseq
    %v3980 = vshrl.u32 %v3979, 7
    %v3981 = vsub.s32 0, %v3980
    %v3982 = vrot.slane %v3977, %v3981
    %vm3983 = vcmp.lt.s32.totalorder %v3949, %v3982
    %v3984 = vsel %vm3983, %v3949, %v3982
    %vm3985 = vcmp.lt.s32.totalorder %v3950, %v3982
    %v3986 = vsel %vm3985, %v3950, %v3982
    %vm3987 = vcmp.lt.s32.totalorder %v3951, %v3982
    %v3988 = vsel %vm3987, %v3951, %v3982
    %vm3989 = vcmp.lt.s32.totalorder %v3952, %v3982
    %v3990 = vsel %vm3989, %v3952, %v3982
    %v3991 = vsel %vm3973, 1, 0
    %v3992 = vsel %vm3974, 1, 0
    %v3993 = vsel %vm3975, 1, 0
    %v3994 = vsel %vm3976, 1, 0
    %3995 = vset.pattern.permute.xlu0 0
    %3996 = vperm.xlu0 %3995, %v3991
    %v3997 = vpop.permute.xlu0 %3996
    %3998 = vset.pattern.permute.xlu0 0
    %3999 = vperm.xlu0 %3998, %v3992
    %v4000 = vpop.permute.xlu0 %3999
    %4001 = vset.pattern.permute.xlu0 0
    %4002 = vperm.xlu0 %4001, %v3993
    %v4003 = vpop.permute.xlu0 %4002
    %4004 = vset.pattern.permute.xlu0 0
    %4005 = vperm.xlu0 %4004, %v3994
    %v4006 = vpop.permute.xlu0 %4005
    %vm4007 = vcmp.eq.s32.totalorder %v3997, 1
    %vm4008 = vcmp.eq.s32.totalorder %v4000, 1
    %vm4009 = vcmp.eq.s32.totalorder %v4003, 1
    %vm4010 = vcmp.eq.s32.totalorder %v4006, 1
    %v4011 = vsel %vm4007, %v3984, %v3949
    %v4012 = vsel %vm4008, %v3986, %v3950
    %v4013 = vsel %vm4009, %v3988, %v3951
    %v4014 = vsel %vm4010, %v3990, %v3952
    %v4015 = vlaneseq
    %v4016 = vshrl.u32 %v4015, 7
    %v4017 = vsub.s32 0, %v4016
    %v4018 = vrot.slane %v3978, %v4017
    %vm4019 = vcmp.gt.s32.totalorder %v3965, %v4018
    %v4020 = vsel %vm4019, %v3965, %v4018
    %vm4021 = vcmp.gt.s32.totalorder %v3966, %v4018
    %v4022 = vsel %vm4021, %v3966, %v4018
    %vm4023 = vcmp.gt.s32.totalorder %v3967, %v4018
    %v4024 = vsel %vm4023, %v3967, %v4018
    %vm4025 = vcmp.gt.s32.totalorder %v3968, %v4018
    %v4026 = vsel %vm4025, %v3968, %v4018
    %v4027 = vsel %vm4007, %v4020, %v3965
    %v4028 = vsel %vm4008, %v4022, %v3966
    %v4029 = vsel %vm4009, %v4024, %v3967
    %v4030 = vsel %vm4010, %v4026, %v3968
    %v4031 = vld [vmem:[%s1799] sm:$0xff]
    %v4032 = vld [vmem:[%s1799 + $0x8] sm:$0xff]
    %v4033 = vld [vmem:[%s1799 + $0x10] sm:$0xff]
    %v4034 = vld [vmem:[%s1799 + $0x18] sm:$0xff]
    %vm4035 = vcmp.gt.s32.totalorder %v4031, 0
    %vm4036 = vcmp.gt.s32.totalorder %v4032, 0
    %vm4037 = vcmp.gt.s32.totalorder %v4033, 0
    %vm4038 = vcmp.gt.s32.totalorder %v4034, 0
    %v4039 = vld [vmem:[#allocation3 + $0x1c] sm:$0x1]
    %v4040 = vld [vmem:[#allocation2 + $0x1c] sm:$0x1]
    %v4041 = vlaneseq
    %v4042 = vshrl.u32 %v4041, 7
    %v4043 = vsub.s32 0, %v4042
    %v4044 = vrot.slane %v4039, %v4043
    %vm4045 = vcmp.lt.s32.totalorder %v4011, %v4044
    %v4046 = vsel %vm4045, %v4011, %v4044
    %vm4047 = vcmp.lt.s32.totalorder %v4012, %v4044
    %v4048 = vsel %vm4047, %v4012, %v4044
    %vm4049 = vcmp.lt.s32.totalorder %v4013, %v4044
    %v4050 = vsel %vm4049, %v4013, %v4044
    %vm4051 = vcmp.lt.s32.totalorder %v4014, %v4044
    %v4052 = vsel %vm4051, %v4014, %v4044
    %v4053 = vsel %vm4035, 1, 0
    %v4054 = vsel %vm4036, 1, 0
    %v4055 = vsel %vm4037, 1, 0
    %v4056 = vsel %vm4038, 1, 0
    %4057 = vset.pattern.permute.xlu0 0
    %4058 = vperm.xlu0 %4057, %v4053
    %v4059 = vpop.permute.xlu0 %4058
    %4060 = vset.pattern.permute.xlu0 0
    %4061 = vperm.xlu0 %4060, %v4054
    %v4062 = vpop.permute.xlu0 %4061
    %4063 = vset.pattern.permute.xlu0 0
    %4064 = vperm.xlu0 %4063, %v4055
    %v4065 = vpop.permute.xlu0 %4064
    %4066 = vset.pattern.permute.xlu0 0
    %4067 = vperm.xlu0 %4066, %v4056
    %v4068 = vpop.permute.xlu0 %4067
    %vm4069 = vcmp.eq.s32.totalorder %v4059, 1
    %vm4070 = vcmp.eq.s32.totalorder %v4062, 1
    %vm4071 = vcmp.eq.s32.totalorder %v4065, 1
    %vm4072 = vcmp.eq.s32.totalorder %v4068, 1
    %v4073 = vsel %vm4069, %v4046, %v4011
    %v4074 = vsel %vm4070, %v4048, %v4012
    %v4075 = vsel %vm4071, %v4050, %v4013
    %v4076 = vsel %vm4072, %v4052, %v4014
    %v4077 = vlaneseq
    %v4078 = vshrl.u32 %v4077, 7
    %v4079 = vsub.s32 0, %v4078
    %v4080 = vrot.slane %v4040, %v4079
    %vm4081 = vcmp.gt.s32.totalorder %v4027, %v4080
    %v4082 = vsel %vm4081, %v4027, %v4080
    %vm4083 = vcmp.gt.s32.totalorder %v4028, %v4080
    %v4084 = vsel %vm4083, %v4028, %v4080
    %vm4085 = vcmp.gt.s32.totalorder %v4029, %v4080
    %v4086 = vsel %vm4085, %v4029, %v4080
    %vm4087 = vcmp.gt.s32.totalorder %v4030, %v4080
    %v4088 = vsel %vm4087, %v4030, %v4080
    %v4089 = vsel %vm4069, %v4082, %v4027
    %v4090 = vsel %vm4070, %v4084, %v4028
    %v4091 = vsel %vm4071, %v4086, %v4029
    %v4092 = vsel %vm4072, %v4088, %v4030
    %v4093 = vld [vmem:[%s1862] sm:$0xff]
    %v4094 = vld [vmem:[%s1862 + $0x8] sm:$0xff]
    %v4095 = vld [vmem:[%s1862 + $0x10] sm:$0xff]
    %v4096 = vld [vmem:[%s1862 + $0x18] sm:$0xff]
    %vm4097 = vcmp.gt.s32.totalorder %v4093, 0
    %vm4098 = vcmp.gt.s32.totalorder %v4094, 0
    %vm4099 = vcmp.gt.s32.totalorder %v4095, 0
    %vm4100 = vcmp.gt.s32.totalorder %v4096, 0
    %v4101 = vld [vmem:[#allocation3 + $0x1d] sm:$0x1]
    %v4102 = vld [vmem:[#allocation2 + $0x1d] sm:$0x1]
    %v4103 = vlaneseq
    %v4104 = vshrl.u32 %v4103, 7
    %v4105 = vsub.s32 0, %v4104
    %v4106 = vrot.slane %v4101, %v4105
    %vm4107 = vcmp.lt.s32.totalorder %v4073, %v4106
    %v4108 = vsel %vm4107, %v4073, %v4106
    %vm4109 = vcmp.lt.s32.totalorder %v4074, %v4106
    %v4110 = vsel %vm4109, %v4074, %v4106
    %vm4111 = vcmp.lt.s32.totalorder %v4075, %v4106
    %v4112 = vsel %vm4111, %v4075, %v4106
    %vm4113 = vcmp.lt.s32.totalorder %v4076, %v4106
    %v4114 = vsel %vm4113, %v4076, %v4106
    %v4115 = vsel %vm4097, 1, 0
    %v4116 = vsel %vm4098, 1, 0
    %v4117 = vsel %vm4099, 1, 0
    %v4118 = vsel %vm4100, 1, 0
    %4119 = vset.pattern.permute.xlu0 0
    %4120 = vperm.xlu0 %4119, %v4115
    %v4121 = vpop.permute.xlu0 %4120
    %4122 = vset.pattern.permute.xlu0 0
    %4123 = vperm.xlu0 %4122, %v4116
    %v4124 = vpop.permute.xlu0 %4123
    %4125 = vset.pattern.permute.xlu0 0
    %4126 = vperm.xlu0 %4125, %v4117
    %v4127 = vpop.permute.xlu0 %4126
    %4128 = vset.pattern.permute.xlu0 0
    %4129 = vperm.xlu0 %4128, %v4118
    %v4130 = vpop.permute.xlu0 %4129
    %vm4131 = vcmp.eq.s32.totalorder %v4121, 1
    %vm4132 = vcmp.eq.s32.totalorder %v4124, 1
    %vm4133 = vcmp.eq.s32.totalorder %v4127, 1
    %vm4134 = vcmp.eq.s32.totalorder %v4130, 1
    %v4135 = vsel %vm4131, %v4108, %v4073
    %v4136 = vsel %vm4132, %v4110, %v4074
    %v4137 = vsel %vm4133, %v4112, %v4075
    %v4138 = vsel %vm4134, %v4114, %v4076
    %v4139 = vlaneseq
    %v4140 = vshrl.u32 %v4139, 7
    %v4141 = vsub.s32 0, %v4140
    %v4142 = vrot.slane %v4102, %v4141
    %vm4143 = vcmp.gt.s32.totalorder %v4089, %v4142
    %v4144 = vsel %vm4143, %v4089, %v4142
    %vm4145 = vcmp.gt.s32.totalorder %v4090, %v4142
    %v4146 = vsel %vm4145, %v4090, %v4142
    %vm4147 = vcmp.gt.s32.totalorder %v4091, %v4142
    %v4148 = vsel %vm4147, %v4091, %v4142
    %vm4149 = vcmp.gt.s32.totalorder %v4092, %v4142
    %v4150 = vsel %vm4149, %v4092, %v4142
    %v4151 = vsel %vm4131, %v4144, %v4089
    %v4152 = vsel %vm4132, %v4146, %v4090
    %v4153 = vsel %vm4133, %v4148, %v4091
    %v4154 = vsel %vm4134, %v4150, %v4092
    %v4155 = vld [vmem:[%s1925] sm:$0xff]
    %v4156 = vld [vmem:[%s1925 + $0x8] sm:$0xff]
    %v4157 = vld [vmem:[%s1925 + $0x10] sm:$0xff]
    %v4158 = vld [vmem:[%s1925 + $0x18] sm:$0xff]
    %vm4159 = vcmp.gt.s32.totalorder %v4155, 0
    %vm4160 = vcmp.gt.s32.totalorder %v4156, 0
    %vm4161 = vcmp.gt.s32.totalorder %v4157, 0
    %vm4162 = vcmp.gt.s32.totalorder %v4158, 0
    %v4163 = vld [vmem:[#allocation3 + $0x1e] sm:$0x1]
    %v4164 = vld [vmem:[#allocation2 + $0x1e] sm:$0x1]
    %v4165 = vlaneseq
    %v4166 = vshrl.u32 %v4165, 7
    %v4167 = vsub.s32 0, %v4166
    %v4168 = vrot.slane %v4163, %v4167
    %vm4169 = vcmp.lt.s32.totalorder %v4135, %v4168
    %v4170 = vsel %vm4169, %v4135, %v4168
    %vm4171 = vcmp.lt.s32.totalorder %v4136, %v4168
    %v4172 = vsel %vm4171, %v4136, %v4168
    %vm4173 = vcmp.lt.s32.totalorder %v4137, %v4168
    %v4174 = vsel %vm4173, %v4137, %v4168
    %vm4175 = vcmp.lt.s32.totalorder %v4138, %v4168
    %v4176 = vsel %vm4175, %v4138, %v4168
    %v4177 = vsel %vm4159, 1, 0
    %v4178 = vsel %vm4160, 1, 0
    %v4179 = vsel %vm4161, 1, 0
    %v4180 = vsel %vm4162, 1, 0
    %4181 = vset.pattern.permute.xlu0 0
    %4182 = vperm.xlu0 %4181, %v4177
    %v4183 = vpop.permute.xlu0 %4182
    %4184 = vset.pattern.permute.xlu0 0
    %4185 = vperm.xlu0 %4184, %v4178
    %v4186 = vpop.permute.xlu0 %4185
    %4187 = vset.pattern.permute.xlu0 0
    %4188 = vperm.xlu0 %4187, %v4179
    %v4189 = vpop.permute.xlu0 %4188
    %4190 = vset.pattern.permute.xlu0 0
    %4191 = vperm.xlu0 %4190, %v4180
    %v4192 = vpop.permute.xlu0 %4191
    %vm4193 = vcmp.eq.s32.totalorder %v4183, 1
    %vm4194 = vcmp.eq.s32.totalorder %v4186, 1
    %vm4195 = vcmp.eq.s32.totalorder %v4189, 1
    %vm4196 = vcmp.eq.s32.totalorder %v4192, 1
    %v4197 = vsel %vm4193, %v4170, %v4135
    %v4198 = vsel %vm4194, %v4172, %v4136
    %v4199 = vsel %vm4195, %v4174, %v4137
    %v4200 = vsel %vm4196, %v4176, %v4138
    %v4201 = vlaneseq
    %v4202 = vshrl.u32 %v4201, 7
    %v4203 = vsub.s32 0, %v4202
    %v4204 = vrot.slane %v4164, %v4203
    %vm4205 = vcmp.gt.s32.totalorder %v4151, %v4204
    %v4206 = vsel %vm4205, %v4151, %v4204
    %vm4207 = vcmp.gt.s32.totalorder %v4152, %v4204
    %v4208 = vsel %vm4207, %v4152, %v4204
    %vm4209 = vcmp.gt.s32.totalorder %v4153, %v4204
    %v4210 = vsel %vm4209, %v4153, %v4204
    %vm4211 = vcmp.gt.s32.totalorder %v4154, %v4204
    %v4212 = vsel %vm4211, %v4154, %v4204
    %v4213 = vsel %vm4193, %v4206, %v4151
    %v4214 = vsel %vm4194, %v4208, %v4152
    %v4215 = vsel %vm4195, %v4210, %v4153
    %v4216 = vsel %vm4196, %v4212, %v4154
    %v4217 = vld [vmem:[%s1988] sm:$0xff]
    %v4218 = vld [vmem:[%s1988 + $0x8] sm:$0xff]
    %v4219 = vld [vmem:[%s1988 + $0x10] sm:$0xff]
    %v4220 = vld [vmem:[%s1988 + $0x18] sm:$0xff]
    %vm4221 = vcmp.gt.s32.totalorder %v4217, 0
    %vm4222 = vcmp.gt.s32.totalorder %v4218, 0
    %vm4223 = vcmp.gt.s32.totalorder %v4219, 0
    %vm4224 = vcmp.gt.s32.totalorder %v4220, 0
    %v4225 = vld [vmem:[#allocation3 + $0x1f] sm:$0x1]
    %v4226 = vld [vmem:[#allocation2 + $0x1f] sm:$0x1]
    %v4227 = vlaneseq
    %v4228 = vshrl.u32 %v4227, 7
    %v4229 = vsub.s32 0, %v4228
    %v4230 = vrot.slane %v4225, %v4229
    %vm4231 = vcmp.lt.s32.totalorder %v4197, %v4230
    %v4232 = vsel %vm4231, %v4197, %v4230
    %vm4233 = vcmp.lt.s32.totalorder %v4198, %v4230
    %v4234 = vsel %vm4233, %v4198, %v4230
    %vm4235 = vcmp.lt.s32.totalorder %v4199, %v4230
    %v4236 = vsel %vm4235, %v4199, %v4230
    %vm4237 = vcmp.lt.s32.totalorder %v4200, %v4230
    %v4238 = vsel %vm4237, %v4200, %v4230
    %v4239 = vsel %vm4221, 1, 0
    %v4240 = vsel %vm4222, 1, 0
    %v4241 = vsel %vm4223, 1, 0
    %v4242 = vsel %vm4224, 1, 0
    %4243 = vset.pattern.permute.xlu0 0
    %4244 = vperm.xlu0 %4243, %v4239
    %v4245 = vpop.permute.xlu0 %4244
    %4246 = vset.pattern.permute.xlu0 0
    %4247 = vperm.xlu0 %4246, %v4240
    %v4248 = vpop.permute.xlu0 %4247
    %4249 = vset.pattern.permute.xlu0 0
    %4250 = vperm.xlu0 %4249, %v4241
    %v4251 = vpop.permute.xlu0 %4250
    %4252 = vset.pattern.permute.xlu0 0
    %4253 = vperm.xlu0 %4252, %v4242
    %v4254 = vpop.permute.xlu0 %4253
    %vm4255 = vcmp.eq.s32.totalorder %v4245, 1
    %vm4256 = vcmp.eq.s32.totalorder %v4248, 1
    %vm4257 = vcmp.eq.s32.totalorder %v4251, 1
    %vm4258 = vcmp.eq.s32.totalorder %v4254, 1
    %v4259 = vsel %vm4255, %v4232, %v4197
    %v4260 = vsel %vm4256, %v4234, %v4198
    %v4261 = vsel %vm4257, %v4236, %v4199
    %v4262 = vsel %vm4258, %v4238, %v4200
    %v4263 = vlaneseq
    %v4264 = vshrl.u32 %v4263, 7
    %v4265 = vsub.s32 0, %v4264
    %v4266 = vrot.slane %v4226, %v4265
    %vm4267 = vcmp.gt.s32.totalorder %v4213, %v4266
    %v4268 = vsel %vm4267, %v4213, %v4266
    %vm4269 = vcmp.gt.s32.totalorder %v4214, %v4266
    %v4270 = vsel %vm4269, %v4214, %v4266
    %vm4271 = vcmp.gt.s32.totalorder %v4215, %v4266
    %v4272 = vsel %vm4271, %v4215, %v4266
    %vm4273 = vcmp.gt.s32.totalorder %v4216, %v4266
    %v4274 = vsel %vm4273, %v4216, %v4266
    %v4275 = vsel %vm4255, %v4268, %v4213
    %v4276 = vsel %vm4256, %v4270, %v4214
    %v4277 = vsel %vm4257, %v4272, %v4215
    %v4278 = vsel %vm4258, %v4274, %v4216
    %4279 = vst [vmem:[#allocation7] sm:$0xff] %v4259
    %4280 = vst [vmem:[#allocation7 + $0x8] sm:$0xff] %v4260
    %4281 = vst [vmem:[#allocation7 + $0x10] sm:$0xff] %v4261
    %4282 = vst [vmem:[#allocation7 + $0x18] sm:$0xff] %v4262
    %v4283 = vpack.c.b16 %v4276, %v4275
    %v4284 = vpack.c.b16 %v4278, %v4277
    %v4285 = vpack.c.b8 %v4284, %v4283
    %4286 = vst [vmem:[#allocation8] sm:$0xff] %v4285
    %v4287 = vcvt.s32.f32 %v4275
    %v4288 = vcvt.s32.f32 %v4276
    %v4289 = vcvt.s32.f32 %v4277
    %v4290 = vcvt.s32.f32 %v4278
    %v4291 = vsub.f32 0.0, %v4287
    %v4292 = vsub.f32 0.0, %v4288
    %v4293 = vsub.f32 0.0, %v4289
    %v4294 = vsub.f32 0.0, %v4290
    %v4295 = vmul.f32 %v4291, 0.6931472
    %v4296 = vmul.f32 %v4292, 0.6931472
    %v4297 = vmul.f32 %v4293, 0.6931472
    %v4298 = vmul.f32 %v4294, 0.6931472
    %v4299 = vmul.f32 %v4295, 1.442695
    %v4300 = vpow.pop %v4299
    %v4301 = vmul.f32 %v4296, 1.442695
    %v4302 = vpow.pop %v4301
    %v4303 = vmul.f32 %v4297, 1.442695
    %v4304 = vpow.pop %v4303
    %v4305 = vmul.f32 %v4298, 1.442695
    %v4306 = vpow.pop %v4305
    %4307 = vadd.xlane.f32.xlu0 %v4300
    %v4308 = vpop.xlane.xlu0 %4307
    %4309 = vadd.xlane.f32.xlu0 %v4302
    %v4310 = vpop.xlane.xlu0 %4309
    %4311 = vadd.xlane.f32.xlu0 %v4304
    %v4312 = vpop.xlane.xlu0 %4311
    %4313 = vadd.xlane.f32.xlu0 %v4306
    %v4314 = vpop.xlane.xlu0 %4313
    %v4315 = vrcp.pop %v4308
    %v4316 = vrcp.pop %v4310
    %v4317 = vrcp.pop %v4312
    %v4318 = vrcp.pop %v4314
    %v4319 = vmul.f32 %v4315, 11718.992
    %v4320 = vmul.f32 %v4316, 11718.992
    %v4321 = vmul.f32 %v4317, 11718.992
    %v4322 = vmul.f32 %v4318, 11718.992
    %vm4323 = vcmp.eq.s32.totalorder %v4275, 0
    %vm4324 = vcmp.eq.s32.totalorder %v4276, 0
    %vm4325 = vcmp.eq.s32.totalorder %v4277, 0
    %vm4326 = vcmp.eq.s32.totalorder %v4278, 0
    %v4327 = vsel %vm4323, 1, 0
    %v4328 = vsel %vm4324, 1, 0
    %v4329 = vsel %vm4325, 1, 0
    %v4330 = vsel %vm4326, 1, 0
    %v4331 = vcvt.s32.f32 %v4327
    %v4332 = vcvt.s32.f32 %v4328
    %v4333 = vcvt.s32.f32 %v4329
    %v4334 = vcvt.s32.f32 %v4330
    %4335 = vadd.xlane.f32.xlu0 %v4331
    %v4336 = vpop.xlane.xlu0 %4335
    %4337 = vadd.xlane.f32.xlu0 %v4332
    %v4338 = vpop.xlane.xlu0 %4337
    %4339 = vadd.xlane.f32.xlu0 %v4333
    %v4340 = vpop.xlane.xlu0 %4339
    %4341 = vadd.xlane.f32.xlu0 %v4334
    %v4342 = vpop.xlane.xlu0 %4341
    %v4343 = vmax.f32 %v4336, 1.0
    %v4344 = vmax.f32 %v4338, 1.0
    %v4345 = vmax.f32 %v4340, 1.0
    %v4346 = vmax.f32 %v4342, 1.0
    %v4347 = vrcp.pop %v4343
    %v4348 = vmul.f32 128.0, %v4347
    %v4349 = vrcp.pop %v4344
    %v4350 = vmul.f32 128.0, %v4349
    %v4351 = vrcp.pop %v4345
    %v4352 = vmul.f32 128.0, %v4351
    %v4353 = vrcp.pop %v4346
    %v4354 = vmul.f32 128.0, %v4353
    %v4355 = vlog2.pop %v4348
    %v4356 = vmul.f32 %v4355, 0.6931472
    %v4357 = vlog2.pop %v4350
    %v4358 = vmul.f32 %v4357, 0.6931472
    %v4359 = vlog2.pop %v4352
    %v4360 = vmul.f32 %v4359, 0.6931472
    %v4361 = vlog2.pop %v4354
    %v4362 = vmul.f32 %v4361, 0.6931472
    %v4363 = vmul.f32 %v4356, 128.0
    %v4364 = vmul.f32 %v4358, 128.0
    %v4365 = vmul.f32 %v4360, 128.0
    %v4366 = vmul.f32 %v4362, 128.0
    %vm4367 = vcmp.le.f32.partialorder %v4319, 320.0
    %vm4368 = vcmp.le.f32.partialorder %v4320, 320.0
    %vm4369 = vcmp.le.f32.partialorder %v4321, 320.0
    %vm4370 = vcmp.le.f32.partialorder %v4322, 320.0
    %vm4371 = vcmp.gt.f32.partialorder %v4336, 0.0
    %vm4372 = vcmp.gt.f32.partialorder %v4338, 0.0
    %vm4373 = vcmp.gt.f32.partialorder %v4340, 0.0
    %vm4374 = vcmp.gt.f32.partialorder %v4342, 0.0
    %vm4375 = vmand %vm4367, %vm4371
    %vm4376 = vmand %vm4368, %vm4372
    %vm4377 = vmand %vm4369, %vm4373
    %vm4378 = vmand %vm4370, %vm4374
    %v4379 = vsel %vm4375, %v4363, %v4319
    %v4380 = vsel %vm4376, %v4364, %v4320
    %v4381 = vsel %vm4377, %v4365, %v4321
    %v4382 = vsel %vm4378, %v4366, %v4322
    %v4383 = vpack.c.bf16 %v2302, %v2301
    %v4384 = vpack.c.bf16 %v2304, %v2303
    %v4385 = vld [vmem:[%s7] sm:$0xf]
    %v4386 = vld [vmem:[%s7 + $0x4] sm:$0xf]
    %v4387 = vld [vmem:[%s7 + $0x8] sm:$0xf]
    %v4388 = vld [vmem:[%s7 + $0xc] sm:$0xf]
    %v4389 = vld [vmem:[%s7 + $0x10] sm:$0xf]
    %v4390 = vld [vmem:[%s7 + $0x14] sm:$0xf]
    %v4391 = vld [vmem:[%s7 + $0x18] sm:$0xf]
    %v4392 = vld [vmem:[%s7 + $0x1c] sm:$0xf]
    %v4401 = vunpack.c.l.b16 %v4385
    %v4402 = vunpack.c.l.b16 %v4386
    %v4403 = vunpack.c.l.b16 %v4387
    %v4404 = vunpack.c.l.b16 %v4388
    %v4405 = vunpack.c.l.b16 %v4389
    %v4406 = vunpack.c.l.b16 %v4390
    %v4407 = vunpack.c.l.b16 %v4391
    %v4408 = vunpack.c.l.b16 %v4392
    %v4409 = vpack.c.b16 %v4402, %v4401
    %v4410 = vpack.c.b16 %v4404, %v4403
    %v4411 = vpack.c.b16 %v4406, %v4405
    %v4412 = vpack.c.b16 %v4408, %v4407
    %vm4417 = vcmask 523264
    %v4419 = vsel %vm4417, %v4383, 0
    %v4422 = vsel %vm4417, %v4384, 0
    %4424 = vmatprep.subr.bf16.mxu0 0
    %4425 = vmatpush1.bf16.msra.mxu0 %v4409
    %4426 = vmatprep.subr.bf16.mxu0 0
    %4427 = vmatpush1.bf16.msra.mxu0 %v4410
    %4428 = vmatprep.subr.bf16.mxu0 0
    %4429 = vmatpush1.bf16.msra.mxu0 %v4411
    %4430 = vmatprep.subr.bf16.mxu0 0
    %4431 = vmatpush1.bf16.msra.mxu0 %v4412
    %4432 = vmatprep.subr.bf16.mxu0 0
    %4433 = vmatpush1.bf16.msra.mxu0 0
    %4434 = vmatprep.subr.bf16.mxu0 0
    %4435 = vmatpush1.bf16.msra.mxu0 0
    %4436 = vmatprep.subr.bf16.mxu0 0
    %4437 = vmatpush1.bf16.msra.mxu0 0
    %4438 = vmatprep.subr.bf16.mxu0 0
    %4439 = vmatpush1.bf16.msra.mxu0 0
    %4440 = vmatprep.subr.bf16.mxu0 0
    %4441 = vmatpush1.bf16.msra.mxu0 0
    %4442 = vmatprep.subr.bf16.mxu0 0
    %4443 = vmatpush1.bf16.msra.mxu0 0
    %4444 = vmatprep.subr.bf16.mxu0 0
    %4445 = vmatpush1.bf16.msra.mxu0 0
    %4446 = vmatprep.subr.bf16.mxu0 0
    %4447 = vmatpush1.bf16.msra.mxu0 0
    %4448 = vmatprep.subr.bf16.mxu0 0
    %4449 = vmatpush1.bf16.msra.mxu0 0
    %4450 = vmatprep.subr.bf16.mxu0 0
    %4451 = vmatpush1.bf16.msra.mxu0 0
    %4452 = vmatprep.subr.bf16.mxu0 0
    %4453 = vmatpush1.bf16.msra.mxu0 0
    %4454 = vmatprep.subr.bf16.mxu0 0
    %4455 = vmatpush1.bf16.msra.mxu0 0
    %4456 = vmatprep.mubr.bf16.mxu0 0
    %4457 = vmatmul.mubr.bf16.gmra.mrb[0].mxu0 %v4419
    %v4458 = vpop.f32.mrb[0].mxu0
    %v4459 = vadd.f32 0.0, %v4458
    %v4460 = vpop.f32.mrb[0].mxu0
    %v4461 = vpop.f32.mrb[0].mxu0
    %v4462 = vadd.f32 0.0, %v4461
    %v4463 = vpop.f32.mrb[0].mxu0
    %4464 = vmatprep.mubr.bf16.mxu0 0
    %4465 = vmatmul.mubr.bf16.gmra.mrb[0].mxu0 %v4422
    %v4466 = vpop.f32.mrb[0].mxu0
    %v4467 = vadd.f32 0.0, %v4466
    %v4468 = vpop.f32.mrb[0].mxu0
    %v4469 = vpop.f32.mrb[0].mxu0
    %v4470 = vadd.f32 0.0, %v4469
    %v4471 = vpop.f32.mrb[0].mxu0
    %4472 = vdwg.mxu0
    %v4473 = vpack.c.bf16 %v4462, %v4459
    %v4474 = vpack.c.bf16 %v4470, %v4467
    %v4475 = vld [vmem:[%s8] sm:$0x1]
    %v4477 = vlaneseq
    %v4478 = vshrl.u32 %v4477, 7
    %v4479 = vsub.s32 0, %v4478
    %v4480 = vrot.slane %v4475, %v4479
    %4482 = vmatprep.subr.bf16.mxu0 0
    %4483 = vmatpush1.bf16.msra.mxu0 %v4473
    %4484 = vmatprep.subr.bf16.mxu0 0
    %4485 = vmatpush1.bf16.msra.mxu0 %v4474
    %4486 = vmatprep.subr.bf16.mxu0 0
    %4487 = vmatpush1.bf16.msra.mxu0 0
    %4488 = vmatprep.subr.bf16.mxu0 0
    %4489 = vmatpush1.bf16.msra.mxu0 0
    %4490 = vmatprep.subr.bf16.mxu0 0
    %4491 = vmatpush1.bf16.msra.mxu0 0
    %4492 = vmatprep.subr.bf16.mxu0 0
    %4493 = vmatpush1.bf16.msra.mxu0 0
    %4494 = vmatprep.subr.bf16.mxu0 0
    %4495 = vmatpush1.bf16.msra.mxu0 0
    %4496 = vmatprep.subr.bf16.mxu0 0
    %4497 = vmatpush1.bf16.msra.mxu0 0
    %4498 = vmatprep.subr.bf16.mxu0 0
    %4499 = vmatpush1.bf16.msra.mxu0 0
    %4500 = vmatprep.subr.bf16.mxu0 0
    %4501 = vmatpush1.bf16.msra.mxu0 0
    %4502 = vmatprep.subr.bf16.mxu0 0
    %4503 = vmatpush1.bf16.msra.mxu0 0
    %4504 = vmatprep.subr.bf16.mxu0 0
    %4505 = vmatpush1.bf16.msra.mxu0 0
    %4506 = vmatprep.subr.bf16.mxu0 0
    %4507 = vmatpush1.bf16.msra.mxu0 0
    %4508 = vmatprep.subr.bf16.mxu0 0
    %4509 = vmatpush1.bf16.msra.mxu0 0
    %4510 = vmatprep.subr.bf16.mxu0 0
    %4511 = vmatpush1.bf16.msra.mxu0 0
    %4512 = vmatprep.subr.bf16.mxu0 0
    %4513 = vmatpush1.bf16.msra.mxu0 0
    %4514 = vmatprep.mubr.bf16.mxu0 0
    %4515 = vmatmul.mubr.bf16.gmra.mrb[0].mxu0 %v2247
    %v4516 = vpop.f32.mrb[0].mxu0
    %v4517 = vadd.f32 %v4480, %v4516
    %v4518 = vpop.f32.mrb[0].mxu0
    %v4519 = vpop.f32.mrb[0].mxu0
    %v4520 = vadd.f32 %v4480, %v4519
    %v4521 = vpop.f32.mrb[0].mxu0
    %4522 = vmatprep.mubr.bf16.mxu0 0
    %4523 = vmatmul.mubr.bf16.gmra.mrb[0].mxu0 %v2250
    %v4524 = vpop.f32.mrb[0].mxu0
    %v4525 = vadd.f32 %v4480, %v4524
    %v4526 = vpop.f32.mrb[0].mxu0
    %v4527 = vpop.f32.mrb[0].mxu0
    %v4528 = vadd.f32 %v4480, %v4527
    %v4529 = vpop.f32.mrb[0].mxu0
    %4530 = vdwg.mxu0
    %vm4531 = vcmask 7168
    %v4532 = vsel %vm4531, %v2151, %v4379
    %v4533 = vsel %vm4531, %v2152, %v4380
    %v4534 = vsel %vm4531, %v2153, %v4381
    %v4535 = vsel %vm4531, %v2154, %v4382
    %vm4536 = vcmask 15360
    %4537 = vst.msk [vmem:[%s13] sm:$0xff] %vm4536, %v4532
    %4538 = vst.msk [vmem:[%s13 + $0x8] sm:$0xff] %vm4536, %v4533
    %4539 = vst.msk [vmem:[%s13 + $0x10] sm:$0xff] %vm4536, %v4534
    %4540 = vst.msk [vmem:[%s13 + $0x18] sm:$0xff] %vm4536, %v4535
    %4541 = vst.msk [vmem:[#allocation10] sm:$0xff] %vm2245, %v4517
    %4542 = vst.msk [vmem:[#allocation10 + $0x8] sm:$0xff] %vm2245, %v4520
    %4543 = vst.msk [vmem:[#allocation10 + $0x10] sm:$0xff] %vm2245, %v4525
    %4544 = vst.msk [vmem:[#allocation10 + $0x18] sm:$0xff] %vm2245, %v4528
    // Predicated region
    $region38: #{elph_forward.1} parent=1 // pred_check
      _
    $region39: #{elph_forward.1} parent=1 // pred_check_branch
      %4546 = sbr.rel (0) target = $region41
    $region40: #{elph_forward.1} parent=1 // pred_region
      %s4548 = ssub.s32 512, 512
      %4549 = vsyncadd [#allocation4], %s4548
      %s4550 = sshll.u32 [#allocation3], 4
      %s4551 = int_to_ptr.vmem [resolvable:$true] %s4550
      %4556 = dma.vmem_to_hbm [thread:$0]  %s4551, 512, %s9, [#allocation4], 128, 128, 8
    $region41: #{elph_forward.1} parent=1 // pred_fallthru
      _
    // Predicated region
    $region42: #{elph_forward.1} parent=1 // pred_check
      _
    $region43: #{elph_forward.1} parent=1 // pred_check_branch
      %4558 = sbr.rel (0) target = $region45
    $region44: #{elph_forward.1} parent=1 // pred_region
      %s4560 = ssub.s32 128, 128
      %4561 = vsyncadd [#allocation6], %s4560
      %s4563 = sshll.u32 [#allocation5], 4
      %s4564 = int_to_ptr.vmem [resolvable:$true] %s4563
      %4566 = dma.vmem_to_hbm [thread:$0]  %s4564, 128, %s10, [#allocation6]
    $region45: #{elph_forward.1} parent=1 // pred_fallthru
      _
    // Predicated region
    $region46: #{elph_forward.1} parent=1 // pred_check
      _
    $region47: #{elph_forward.1} parent=1 // pred_check_branch
      %4568 = sbr.rel (0) target = $region49
    $region48: #{elph_forward.1} parent=1 // pred_region
      %s4570 = ssub.s32 512, 512
      %4571 = vsyncadd [#allocation6], %s4570
      %s4572 = sshll.u32 [#allocation7], 4
      %s4573 = int_to_ptr.vmem [resolvable:$true] %s4572
      %4578 = dma.vmem_to_hbm [thread:$0]  %s4573, 512, %s11, [#allocation6], 128, 128, 8
    $region49: #{elph_forward.1} parent=1 // pred_fallthru
      _
    // Predicated region
    $region50: #{elph_forward.1} parent=1 // pred_check
      _
    $region51: #{elph_forward.1} parent=1 // pred_check_branch
      %4580 = sbr.rel (0) target = $region53
    $region52: #{elph_forward.1} parent=1 // pred_region
      %s4582 = ssub.s32 128, 128
      %4583 = vsyncadd [#allocation9], %s4582
      %s4585 = sshll.u32 [#allocation8], 4
      %s4586 = int_to_ptr.vmem [resolvable:$true] %s4585
      %4588 = dma.vmem_to_hbm [thread:$0]  %s4586, 128, %s12, [#allocation9]
    $region53: #{elph_forward.1} parent=1 // pred_fallthru
      _
    // Predicated region
    $region54: #{elph_forward.1} parent=1 // pred_check
      _
    $region55: #{elph_forward.1} parent=1 // pred_check_branch
      %4590 = sbr.rel (0) target = $region57
    $region56: #{elph_forward.1} parent=1 // pred_region
      _
    $region57: #{elph_forward.1} parent=1 // pred_fallthru
      _
    // Predicated region
    $region58: #{elph_forward.1} parent=1 // pred_check
      _
    $region59: #{elph_forward.1} parent=1 // pred_check_branch
      %4592 = sbr.rel (0) target = $region61
    $region60: #{elph_forward.1} parent=1 // pred_region
      %s4594 = ssub.s32 512, 512
      %4595 = vsyncadd [#allocation9], %s4594
      %s4596 = sshll.u32 [#allocation10], 4
      %s4597 = int_to_ptr.vmem [resolvable:$true] %s4596
      %4602 = dma.vmem_to_hbm [thread:$0]  %s4597, 512, %s14, [#allocation9], 128, 128, 8
    $region61: #{elph_forward.1} parent=1 // pred_fallthru
      _
    // Predicated region
    $region62: #{elph_forward.1} parent=1 // pred_check
      _
    $region63: #{elph_forward.1} parent=1 // pred_check_branch
      %4604 = sbr.rel (0) target = $region65
    $region64: #{elph_forward.1} parent=1 // pred_region
      %4605 = dma.done [#allocation4], 512
    $region65: #{elph_forward.1} parent=1 // pred_fallthru
      _
    // Predicated region
    $region66: #{elph_forward.1} parent=1 // pred_check
      _
    $region67: #{elph_forward.1} parent=1 // pred_check_branch
      %4607 = sbr.rel (0) target = $region69
    $region68: #{elph_forward.1} parent=1 // pred_region
      %4608 = dma.done [#allocation6], 128
    $region69: #{elph_forward.1} parent=1 // pred_fallthru
      _
    // Predicated region
    $region70: #{elph_forward.1} parent=1 // pred_check
      _
    $region71: #{elph_forward.1} parent=1 // pred_check_branch
      %4610 = sbr.rel (0) target = $region73
    $region72: #{elph_forward.1} parent=1 // pred_region
      %4611 = dma.done [#allocation6], 512
    $region73: #{elph_forward.1} parent=1 // pred_fallthru
      _
    // Predicated region
    $region74: #{elph_forward.1} parent=1 // pred_check
      _
    $region75: #{elph_forward.1} parent=1 // pred_check_branch
      %4613 = sbr.rel (0) target = $region77
    $region76: #{elph_forward.1} parent=1 // pred_region
      %4614 = dma.done [#allocation9], 128
    $region77: #{elph_forward.1} parent=1 // pred_fallthru
      _
    // Predicated region
    $region78: #{elph_forward.1} parent=1 // pred_check
      _
    $region79: #{elph_forward.1} parent=1 // pred_check_branch
      %4616 = sbr.rel (0) target = $region81
    $region80: #{elph_forward.1} parent=1 // pred_region
      _
    $region81: #{elph_forward.1} parent=1 // pred_fallthru
      _
    // Predicated region
    $region82: #{elph_forward.1} parent=1 // pred_check
      _
    $region83: #{elph_forward.1} parent=1 // pred_check_branch
      %4618 = sbr.rel (0) target = $region85
    $region84: #{elph_forward.1} parent=1 // pred_region
      %4619 = dma.done [#allocation9], 512
    $region85: #{elph_forward.1} parent=1 // pred_fallthru
      _
    %4620 = vsyncpa [#allocation4], 1
    %4621 = vsyncpa [#allocation6], 1
    %4622 = vsyncpa [#allocation9], 1

</llo_original>
